<compile_context>
chip_gen: v5e
topology: v5e:2x2
jax: 0.10.0
libtpu: 0.0.40
codegen_flags: <defaults>
</compile_context>

<pallas_src>
import math

import jax
import jax.numpy as jnp
import numpy as np
from jax.experimental import pallas as pl
from jax.experimental.pallas import tpu as pltpu


# ----------------------------- small math helpers -----------------------------

def _layer_norm(x, gamma, beta, eps=1e-5):
    m = jnp.mean(x, axis=-1, keepdims=True)
    xc = x - m                                   # reuse centered x (single VPU pass)
    v = jnp.mean(xc * xc, axis=-1, keepdims=True)
    return xc * jax.lax.rsqrt(v + eps) * gamma + beta


def _gelu_exact(x):
    # PyTorch nn.GELU() default (approximate='none'): exact erf GELU (reference only).
    return 0.5 * x * (1.0 + jax.lax.erf(x * (1.0 / math.sqrt(2.0))))


def _gelu_tanh(x):
    # tanh-approx GELU in the kernel: tanh uses the otherwise-idle EUP slot.
    c = math.sqrt(2.0 / math.pi)
    return 0.5 * x * (1.0 + jnp.tanh(c * (x + 0.044715 * x * x * x)))


# --------------------------------- the kernel ---------------------------------

def _make_kernel(num_heads, dim_model, batch_block, seq_len):
    H, D, Bb, S = num_heads, dim_model, batch_block, seq_len
    N = Bb * S            # rows fed to every linear layer
    HS = H * S            # stacked (head, key) axis -> lane-dense when H*S == 128
    bf16 = jnp.bfloat16

    def kernel(src_ref, pos_ref, hmask_ref, seg_ref,
               ln_in_g, ln_in_b,
               ln1_g, ln1_b, qkv_w, qkv_b, ao_w, ao_b,
               ln2_g, ln2_b, ff1_w, ff1_b, ff2_w, ff2_b,
               lnf_g, lnf_b, eo_w, eo_b,
               out_ref, x_ref):
        l = pl.program_id(1)

        # ---- first layer step of this batch block: pos add + input LayerNorm ----
        @pl.when(l == 0)
        def _():
            x0 = src_ref[...] + pos_ref[...][None, :, :]              # (Bb, S, D)
            x_ref[...] = _layer_norm(x0.reshape(N, D), ln_in_g[...], ln_in_b[...])

        x = x_ref[...]                                                 # (N, D) f32 carry

        # ---------------- one pre-LN encoder layer (layer == grid axis 1) --------
        # --- self-attention: x = x + out_proj(MHA(norm1(x))) ---
        h = _layer_norm(x, ln1_g[0], ln1_b[0])
        qkv = jnp.dot(h.astype(bf16), qkv_w[0],
                      preferred_element_type=jnp.float32) + qkv_b[0]   # (N, 3D)
        q3 = qkv[:, :D].reshape(Bb, S, D)            # Q pre-scaled (folded into W/b)
        k3 = qkv[:, D:2 * D].reshape(Bb, S, D)
        v3 = qkv[:, 2 * D:].reshape(Bb, S, D)

        # Per-head lane masks, stacked along the key axis: row h*S+j of k_st/v_st is
        # K/V token j with only head h's lanes kept.  Full-D contraction against the
        # unmasked Q then yields exactly the per-head scores / concat-context.
        hmask = hmask_ref[...]                                         # (H, 1, D) {0,1}
        k_st = (k3[:, None, :, :] * hmask).reshape(Bb, HS, D).astype(bf16)
        v_st = (v3[:, None, :, :] * hmask).reshape(Bb, HS, D).astype(bf16)

        # scores: one batched matmul, lane-dense output (last dim H*S = 128)
        sc = jax.lax.dot_general(q3.astype(bf16), k_st,
                                 (((2,), (2,)), ((0,), (0,))),
                                 preferred_element_type=jnp.float32)   # (Bb, S, HS)

        # Per-head softmax, fully lane-dense:
        #  * stabilizer = per-row max over ALL heads (mathematically exact for softmax;
        #    only a numerical-range choice — fine unless per-row head logits differ by ~88).
        #  * per-head denominators via a block-diagonal segment-sum matmul, which lands
        #    already broadcast across each head's 16 lanes.
        sc2 = sc.reshape(N, HS)
        sc2 = sc2 - jnp.max(sc2, axis=-1, keepdims=True)
        e2 = jnp.exp(sc2)
        denom = jnp.dot(e2, seg_ref[...], preferred_element_type=jnp.float32)  # (N, HS)
        p2 = e2 * pl.reciprocal(denom, approx=True)
        p = p2.reshape(Bb, S, HS).astype(bf16)

        # context: one batched matmul with a 128-deep (H*S) contraction
        ctx = jax.lax.dot_general(p, v_st, (((2,), (1,)), ((0,), (0,))),
                                  preferred_element_type=jnp.float32)  # (Bb, S, D)

        attn = jnp.dot(ctx.reshape(N, D).astype(bf16), ao_w[0],
                       preferred_element_type=jnp.float32) + ao_b[0]
        x = x + attn

        # --- feed-forward: x = x + FFN(norm2(x)) ---
        h = _layer_norm(x, ln2_g[0], ln2_b[0])
        h = jnp.dot(h.astype(bf16), ff1_w[0],
                    preferred_element_type=jnp.float32) + ff1_b[0]
        h = _gelu_tanh(h)
        h = jnp.dot(h.astype(bf16), ff2_w[0],
                    preferred_element_type=jnp.float32) + ff2_b[0]
        x = x + h

        x_ref[...] = x                                                  # carry to next layer

        # ---- last layer step: final encoder norm + embed_out, lane-dense store ----
        @pl.when(l == pl.num_programs(1) - 1)
        def _():
            xf = _layer_norm(x, lnf_g[...], lnf_b[...])
            y = jnp.dot(xf.astype(bf16), eo_w[...],
                        preferred_element_type=jnp.float32) + eo_b[...]
            out_ref[...] = y.reshape(Bb, S, D)

    return kernel


# ----------------------------- wrapper helpers --------------------------------

def _pick_batch_block(B, S, target_rows=256):
    """Generation-aware batch block.

    Fill MXU rows (batch_block*S toward target_rows) and amortise per-grid-step
    overhead, but keep >= 2 steps on the parallel batch axis on 2-TensorCore chips
    (v7x) so dimension_semantics=("parallel", ...) can shard across cores.
    """
    try:
        kind = jax.devices()[0].device_kind.lower()
    except Exception:
        kind = ""
    two_tc = ("v7" in kind) or ("7x" in kind)
    max_bb = max(1, B // 2) if two_tc else B
    want = max(1, -(-target_rows // S))          # ceil(target_rows / S)
    bb = min(max_bb, want)
    while B % bb:
        bb -= 1
    return max(1, bb)


def _vmem_limit_bytes(operands, kinds, num_layers, batch_block, S, D, FF, H,
                      single_buffered_invariants):
    """Explicit scoped-VMEM budget from the actual block footprint (+headroom)."""
    def nbytes(a):
        return int(np.prod(a.shape)) * a.dtype.itemsize

    per_layer = sum(nbytes(a) // num_layers for a, k in zip(operands, kinds) if k == "layer")
    invariant = sum(nbytes(a) for a, k in zip(operands, kinds) if k == "inv")
    io_blocks = 2 * 2 * batch_block * S * D * 4        # src + out blocks, double-buffered f32
    scratch = batch_block * S * D * 4                  # carried activation
    n, hs = batch_block * S, H * S
    temps = 4 * (n * 3 * D                             # qkv
                 + 3 * batch_block * hs * D            # masked K/V stacks (+f32 temp)
                 + 3 * n * hs                          # scores / exp / probs
                 + n * FF                              # ff hidden
                 + 6 * n * D)                          # residual / ctx / LN temps
    est = (2 * per_layer                               # next-layer prefetch double-buffer
           + (1 if single_buffered_invariants else 2) * invariant
           + io_blocks + scratch + temps)
    est = int(1.3 * est) + (1 << 20)                   # headroom + compiler-internal scratch
    return max(16 * 1024 * 1024, min(est, 64 * 1024 * 1024))


# --------------------------------- wrapper ------------------------------------

def glue_note_forward(params, src_tokens, config, return_confidence_matrix=False,
                      batch_block=None):
    S = config["pos_len"]          # 2 * self.position_number
    D = config["dim_model"]
    L = config["num_layers"]
    H = config["num_heads"]
    hd = D // H
    P = S // 2
    FF = params["ff1_w"].shape[-1]
    B = src_tokens.shape[0]

    if batch_block is None:
        batch_block = _pick_batch_block(B, S)
    assert B % batch_block == 0

    # nn.Embedding gather + "sum groups of 4 tokens" (data-dependent gather: keep in XLA)
    emb = jnp.take(params["embedding"], src_tokens, axis=0)            # (B, 4S, D)
    src = emb.reshape(B, S, 4, D).sum(axis=2).astype(jnp.float32)      # (B, S, D)
    pos = params["pos_embedding"].astype(jnp.float32)                  # (S, D)

    # fold 1/sqrt(head_dim) into the Q columns of the packed in_proj weight & bias
    scale = 1.0 / math.sqrt(hd)
    qscale = jnp.concatenate([jnp.full((D,), scale, jnp.float32),
                              jnp.ones((2 * D,), jnp.float32)])
    bf16 = jnp.bfloat16
    qkv_w = (params["qkv_w"] * qscale).astype(bf16)
    qkv_b = params["qkv_b"] * qscale

    # static per-head lane masks (H, 1, D): 1 on head h's columns, 0 elsewhere
    head_mask = (jnp.arange(D)[None, :] // hd == jnp.arange(H)[:, None])
    head_mask = head_mask.astype(jnp.float32).reshape(H, 1, D)

    # block-diagonal (H*S, H*S) segment-sum matrix: per-head softmax denominators
    HS = H * S
    head_of_row = jnp.arange(HS) // S
    seg_mask = (head_of_row[:, None] == head_of_row[None, :]).astype(jnp.float32)

    operands = [src, pos, head_mask, seg_mask,
                params["ln_in_g"], params["ln_in_b"],
                params["ln1_g"], params["ln1_b"], qkv_w, qkv_b,
                params["ao_w"].astype(bf16), params["ao_b"],
                params["ln2_g"], params["ln2_b"],
                params["ff1_w"].astype(bf16), params["ff1_b"],
                params["ff2_w"].astype(bf16), params["ff2_b"],
                params["lnf_g"], params["lnf_b"],
                params["eo_w"].astype(bf16), params["eo_b"]]
    kinds = (["batch"] + ["inv"] * 5 + ["layer"] * 12 + ["inv"] * 4)

    kernel = _make_kernel(H, D, batch_block, S)
    grid = (B // batch_block, L)

    def _build_specs(single_buffer_invariants):
        def inv_spec(a):
            idx = lambda b, l, _nd=a.ndim: (0,) * _nd
            if single_buffer_invariants:
                # grid-invariant block: single VMEM buffer instead of default double
                return pl.BlockSpec(a.shape, idx, pipeline_mode=pl.Buffered(1))
            return pl.BlockSpec(a.shape, idx)

        def layer_spec(a):
            tail = a.shape[1:]
            idx = lambda b, l, _r=len(tail): (l,) + (0,) * _r
            return pl.BlockSpec((1,) + tail, idx)       # streamed + prefetched per layer

        in_specs = []
        for a, k in zip(operands, kinds):
            if k == "batch":
                in_specs.append(pl.BlockSpec((batch_block, S, D), lambda b, l: (b, 0, 0)))
            elif k == "layer":
                in_specs.append(layer_spec(a))
            else:
                in_specs.append(inv_spec(a))
        return in_specs

    out_spec = pl.BlockSpec((batch_block, S, D), lambda b, l: (b, 0, 0))

    def _run(single_buffer_invariants):
        vmem_limit = _vmem_limit_bytes(operands, kinds, L, batch_block, S, D, FF, H,
                                       single_buffer_invariants)
        call = pl.pallas_call(
            kernel,
            out_shape=jax.ShapeDtypeStruct((B, S, D), jnp.float32),
            grid_spec=pltpu.PrefetchScalarGridSpec(
                num_scalar_prefetch=0,
                grid=grid,
                in_specs=_build_specs(single_buffer_invariants),
                out_specs=out_spec,
                scratch_shapes=[pltpu.VMEM((batch_block * S, D), jnp.float32)]),
            compiler_params=pltpu.CompilerParams(
                dimension_semantics=("parallel", "arbitrary"),
                vmem_limit_bytes=vmem_limit),
        )
        return call(*operands)

    if hasattr(pl, "Buffered"):
        try:
            y = _run(True)
        except Exception:
            # pl.Buffered(1) not accepted by this jax/Mosaic build -> default buffering
            y = _run(False)
    else:
        y = _run(False)

    # predictions: tiny (P x D) @ (D x P) per batch — done in f32 in XLA so the kernel
    # never stores a lane-sparse (P=8-wide) output.
    pred = jnp.einsum('bik,bjk->bij', y[:, :P], y[:, P:])
    mlp_out = jnp.transpose(y, (1, 0, 2))                  # (S, B, D), PyTorch convention

    if return_confidence_matrix:
        return jax.nn.softmax(pred, axis=1) * jax.nn.softmax(pred, axis=2)
    return pred, mlp_out


# ------------------------- deterministic parameter setup ----------------------

def init_params(key, token_number, pos_len, D, FF, L):
    keys = jax.random.split(key, 16)

    def w(k, shape, scale=0.02):
        return (scale * jax.random.normal(k, shape)).astype(jnp.float32)

    return {
        "embedding": w(keys[0], (token_number, D)),
        "pos_embedding": w(keys[1], (pos_len, D)),
        "ln_in_g": jnp.ones((1, D), jnp.float32),
        "ln_in_b": jnp.zeros((1, D), jnp.float32),
        "ln1_g": jnp.ones((L, 1, D), jnp.float32),
        "ln1_b": jnp.zeros((L, 1, D), jnp.float32),
        "qkv_w": w(keys[2], (L, D, 3 * D)),     # in_proj, pre-transposed: x @ W
        "qkv_b": w(keys[3], (L, 1, 3 * D)),
        "ao_w": w(keys[4], (L, D, D)),          # attn out_proj, pre-transposed
        "ao_b": w(keys[5], (L, 1, D)),
        "ln2_g": jnp.ones((L, 1, D), jnp.float32),
        "ln2_b": jnp.zeros((L, 1, D), jnp.float32),
        "ff1_w": w(keys[6], (L, D, FF)),
        "ff1_b": w(keys[7], (L, 1, FF)),
        "ff2_w": w(keys[8], (L, FF, D)),
        "ff2_b": w(keys[9], (L, 1, D)),
        "lnf_g": jnp.ones((1, D), jnp.float32),
        "lnf_b": jnp.zeros((1, D), jnp.float32),
        "eo_w": w(keys[10], (D, D)),
        "eo_b": w(keys[11], (1, D)),
    }


# ------------------------------ pure-JAX reference ----------------------------

def reference_forward(params, src_tokens, config):
    S = config["pos_len"]
    D = config["dim_model"]
    H = config["num_heads"]
    L = config["num_layers"]
    hd = D // H
    P = S // 2
    B = src_tokens.shape[0]

    emb = jnp.take(params["embedding"], src_tokens, axis=0)
    x = emb.reshape(B, S, 4, D).sum(axis=2) + params["pos_embedding"][None]
    x = _layer_norm(x, params["ln_in_g"][0], params["ln_in_b"][0])
    for l in range(L):
        h = _layer_norm(x, params["ln1_g"][l, 0], params["ln1_b"][l, 0])
        qkv = h @ params["qkv_w"][l] + params["qkv_b"][l, 0]
        q, k, v = qkv[..., :D], qkv[..., D:2 * D], qkv[..., 2 * D:]
        q = q.reshape(B, S, H, hd) / math.sqrt(hd)
        k = k.reshape(B, S, H, hd)
        v = v.reshape(B, S, H, hd)
        sc = jnp.einsum('bshd,bthd->bhst', q, k)
        p = jax.nn.softmax(sc, axis=-1)
        o = jnp.einsum('bhst,bthd->bshd', p, v).reshape(B, S, D)
        o = o @ params["ao_w"][l] + params["ao_b"][l, 0]
        x = x + o
        h = _layer_norm(x, params["ln2_g"][l, 0], params["ln2_b"][l, 0])
        h = _gelu_exact(h @ params["ff1_w"][l] + params["ff1_b"][l, 0])
        h = h @ params["ff2_w"][l] + params["ff2_b"][l, 0]
        x = x + h
    x = _layer_norm(x, params["lnf_g"][0], params["lnf_b"][0])
    y = x @ params["eo_w"] + params["eo_b"][0]
    pred = jnp.einsum('bik,bjk->bij', y[:, :P], y[:, P:])
    return pred, jnp.transpose(y, (1, 0, 2))


# ----------------------------------- main --------------------------------------

if __name__ == "__main__":
    # Small-shape configuration consistent with TheGlueNote's forward:
    #   position_number arg = 7  ->  self.position_number = 8
    #   transformer sequence S = 2 * 8 = 16, raw token sequence = 4 * S = 64
    B = 4
    token_number = 50
    position_number_arg = 7
    P_internal = position_number_arg + 1      # 8
    S = 2 * P_internal                        # 16
    D = 128                                   # dim_model
    H = 8                                     # num_heads (head_dim = 16)
    FF = 256                                  # dim_feedforward
    L = 2                                     # num_decoder_layers

    key = jax.random.PRNGKey(0)
    kp, kt = jax.random.split(key)
    params = init_params(kp, token_number, S, D, FF, L)
    src_tokens = jax.random.randint(kt, (B, 4 * S), 0, token_number, dtype=jnp.int32)

    config = dict(pos_len=S, dim_model=D, num_heads=H, num_layers=L)

    pred, mlp_out = glue_note_forward(params, src_tokens, config)
    jax.block_until_ready((pred, mlp_out))

    assert pred.shape == (B, P_internal, P_internal)
    assert mlp_out.shape == (S, B, D)

    pred_ref, mlp_ref = reference_forward(params, src_tokens, config)
    np.testing.assert_allclose(np.asarray(pred), np.asarray(pred_ref), rtol=2e-2, atol=2e-2)
    np.testing.assert_allclose(np.asarray(mlp_out), np.asarray(mlp_ref), rtol=2e-2, atol=2e-2)

    print("KERNEL_OK")
</pallas_src>

<mosaic_0001>
module attributes {stable_mosaic.version = 11 : i64} {
  func.func @kernel(%arg0: i32, %arg1: i32, %arg2: memref<4x16x128xf32, #tpu.memory_space<vmem>>, %arg3: memref<16x128xf32, #tpu.memory_space<vmem>>, %arg4: memref<8x1x128xf32, #tpu.memory_space<vmem>>, %arg5: memref<128x128xf32, #tpu.memory_space<vmem>>, %arg6: memref<1x128xf32, #tpu.memory_space<vmem>>, %arg7: memref<1x128xf32, #tpu.memory_space<vmem>>, %arg8: memref<1x1x128xf32, #tpu.memory_space<vmem>>, %arg9: memref<1x1x128xf32, #tpu.memory_space<vmem>>, %arg10: memref<1x128x384xbf16, #tpu.memory_space<vmem>>, %arg11: memref<1x1x384xf32, #tpu.memory_space<vmem>>, %arg12: memref<1x128x128xbf16, #tpu.memory_space<vmem>>, %arg13: memref<1x1x128xf32, #tpu.memory_space<vmem>>, %arg14: memref<1x1x128xf32, #tpu.memory_space<vmem>>, %arg15: memref<1x1x128xf32, #tpu.memory_space<vmem>>, %arg16: memref<1x128x256xbf16, #tpu.memory_space<vmem>>, %arg17: memref<1x1x256xf32, #tpu.memory_space<vmem>>, %arg18: memref<1x256x128xbf16, #tpu.memory_space<vmem>>, %arg19: memref<1x1x128xf32, #tpu.memory_space<vmem>>, %arg20: memref<1x128xf32, #tpu.memory_space<vmem>>, %arg21: memref<1x128xf32, #tpu.memory_space<vmem>>, %arg22: memref<128x128xbf16, #tpu.memory_space<vmem>>, %arg23: memref<1x128xf32, #tpu.memory_space<vmem>>, %arg24: memref<4x16x128xf32, #tpu.memory_space<vmem>>, %arg25: memref<64x128xf32, #tpu.memory_space<vmem>>) attributes {dimension_semantics = [#tpu.dimension_semantics<parallel>, #tpu.dimension_semantics<arbitrary>], iteration_bounds = array<i64: 1, 2>, scalar_prefetch = 0 : i64, scratch_operands = 1 : i64, tpu.core_type = #tpu.core_type<tc>, window_params = [{transform_indices = @transform_0, window_bounds = array<i64: 4, 16, 128>}, {pipeline_mode = #tpu.pipeline_mode<synchronous>, transform_indices = @transform_1, window_bounds = array<i64: 16, 128>}, {pipeline_mode = #tpu.pipeline_mode<synchronous>, transform_indices = @transform_2, window_bounds = array<i64: 8, 1, 128>}, {pipeline_mode = #tpu.pipeline_mode<synchronous>, transform_indices = @transform_3, window_bounds = array<i64: 128, 128>}, {pipeline_mode = #tpu.pipeline_mode<synchronous>, transform_indices = @transform_4, window_bounds = array<i64: 1, 128>}, {pipeline_mode = #tpu.pipeline_mode<synchronous>, transform_indices = @transform_5, window_bounds = array<i64: 1, 128>}, {transform_indices = @transform_6, window_bounds = array<i64: 1, 1, 128>}, {transform_indices = @transform_7, window_bounds = array<i64: 1, 1, 128>}, {transform_indices = @transform_8, window_bounds = array<i64: 1, 128, 384>}, {transform_indices = @transform_9, window_bounds = array<i64: 1, 1, 384>}, {transform_indices = @transform_10, window_bounds = array<i64: 1, 128, 128>}, {transform_indices = @transform_11, window_bounds = array<i64: 1, 1, 128>}, {transform_indices = @transform_12, window_bounds = array<i64: 1, 1, 128>}, {transform_indices = @transform_13, window_bounds = array<i64: 1, 1, 128>}, {transform_indices = @transform_14, window_bounds = array<i64: 1, 128, 256>}, {transform_indices = @transform_15, window_bounds = array<i64: 1, 1, 256>}, {transform_indices = @transform_16, window_bounds = array<i64: 1, 256, 128>}, {transform_indices = @transform_17, window_bounds = array<i64: 1, 1, 128>}, {pipeline_mode = #tpu.pipeline_mode<synchronous>, transform_indices = @transform_18, window_bounds = array<i64: 1, 128>}, {pipeline_mode = #tpu.pipeline_mode<synchronous>, transform_indices = @transform_19, window_bounds = array<i64: 1, 128>}, {pipeline_mode = #tpu.pipeline_mode<synchronous>, transform_indices = @transform_20, window_bounds = array<i64: 128, 128>}, {pipeline_mode = #tpu.pipeline_mode<synchronous>, transform_indices = @transform_21, window_bounds = array<i64: 1, 128>}, {transform_indices = @transform_22, window_bounds = array<i64: 4, 16, 128>}]} {
    %c0_i32 = arith.constant 0 : i32
    %0 = arith.cmpi eq, %arg1, %c0_i32 : i32
    %1 = arith.extui %0 : i1 to i32
    %c0_i32_0 = arith.constant 0 : i32
    %2 = arith.cmpi ne, %1, %c0_i32_0 : i32
    scf.if %2 {
      %c0_67 = arith.constant 0 : index
      %c0_68 = arith.constant 0 : index
      %c0_69 = arith.constant 0 : index
      %140 = vector.load %arg2[%c0_67, %c0_68, %c0_69] : memref<4x16x128xf32, #tpu.memory_space<vmem>>, vector<4x16x128xf32>
      %c0_70 = arith.constant 0 : index
      %c0_71 = arith.constant 0 : index
      %141 = vector.load %arg3[%c0_70, %c0_71] : memref<16x128xf32, #tpu.memory_space<vmem>>, vector<16x128xf32>
      %142 = vector.shape_cast %141 : vector<16x128xf32> to vector<1x16x128xf32>
      %143 = vector.broadcast %142 : vector<1x16x128xf32> to vector<4x16x128xf32>
      %144 = arith.addf %140, %143 : vector<4x16x128xf32>
      %145 = vector.shape_cast %144 : vector<4x16x128xf32> to vector<64x128xf32>
      %c0_72 = arith.constant 0 : index
      %c0_73 = arith.constant 0 : index
      %146 = vector.load %arg6[%c0_72, %c0_73] : memref<1x128xf32, #tpu.memory_space<vmem>>, vector<1x128xf32>
      %c0_74 = arith.constant 0 : index
      %c0_75 = arith.constant 0 : index
      %147 = vector.load %arg7[%c0_74, %c0_75] : memref<1x128xf32, #tpu.memory_space<vmem>>, vector<1x128xf32>
      %cst_76 = arith.constant dense<0.000000e+00> : vector<64xf32>
      %148 = vector.multi_reduction <add>, %145, %cst_76 [1] : vector<64x128xf32> to vector<64xf32>
      %149 = vector.shape_cast %148 : vector<64xf32> to vector<64x1xf32>
      %cst_77 = arith.constant 1.280000e+02 : f32
      %150 = vector.broadcast %cst_77 : f32 to vector<64x1xf32>
      %151 = arith.divf %149, %150 : vector<64x1xf32>
      %152 = vector.broadcast %151 : vector<64x1xf32> to vector<64x128xf32>
      %153 = arith.subf %145, %152 : vector<64x128xf32>
      %154 = arith.mulf %153, %153 : vector<64x128xf32>
      %cst_78 = arith.constant dense<0.000000e+00> : vector<64xf32>
      %155 = vector.multi_reduction <add>, %154, %cst_78 [1] : vector<64x128xf32> to vector<64xf32>
      %156 = vector.shape_cast %155 : vector<64xf32> to vector<64x1xf32>
      %cst_79 = arith.constant 1.280000e+02 : f32
      %157 = vector.broadcast %cst_79 : f32 to vector<64x1xf32>
      %158 = arith.divf %156, %157 : vector<64x1xf32>
      %cst_80 = arith.constant 9.99999974E-6 : f32
      %159 = vector.broadcast %cst_80 : f32 to vector<64x1xf32>
      %160 = arith.addf %158, %159 : vector<64x1xf32>
      %161 = math.rsqrt %160 : vector<64x1xf32>
      %162 = vector.broadcast %161 : vector<64x1xf32> to vector<64x128xf32>
      %163 = arith.mulf %153, %162 : vector<64x128xf32>
      %164 = vector.broadcast %146 : vector<1x128xf32> to vector<64x128xf32>
      %165 = arith.mulf %163, %164 : vector<64x128xf32>
      %166 = vector.broadcast %147 : vector<1x128xf32> to vector<64x128xf32>
      %167 = arith.addf %165, %166 : vector<64x128xf32>
      %c0_81 = arith.constant 0 : index
      %c0_82 = arith.constant 0 : index
      %168 = vector.load %arg25[%c0_81, %c0_82] : memref<64x128xf32, #tpu.memory_space<vmem>>, vector<64x128xf32>
      tpu.vector_store %arg25[%c0_81, %c0_82], %167 {strides = array<i32>} : memref<64x128xf32, #tpu.memory_space<vmem>>, vector<64x128xf32>,
    } else {
    }
    %c0 = arith.constant 0 : index
    %c0_1 = arith.constant 0 : index
    %3 = vector.load %arg25[%c0, %c0_1] : memref<64x128xf32, #tpu.memory_space<vmem>>, vector<64x128xf32>
    %c0_2 = arith.constant 0 : index
    %c0_3 = arith.constant 0 : index
    %c0_4 = arith.constant 0 : index
    %4 = vector.load %arg8[%c0_2, %c0_3, %c0_4] : memref<1x1x128xf32, #tpu.memory_space<vmem>>, vector<1x1x128xf32>
    %5 = vector.shape_cast %4 : vector<1x1x128xf32> to vector<1x128xf32>
    %c0_5 = arith.constant 0 : index
    %c0_6 = arith.constant 0 : index
    %c0_7 = arith.constant 0 : index
    %6 = vector.load %arg9[%c0_5, %c0_6, %c0_7] : memref<1x1x128xf32, #tpu.memory_space<vmem>>, vector<1x1x128xf32>
    %7 = vector.shape_cast %6 : vector<1x1x128xf32> to vector<1x128xf32>
    %cst = arith.constant dense<0.000000e+00> : vector<64xf32>
    %8 = vector.multi_reduction <add>, %3, %cst [1] : vector<64x128xf32> to vector<64xf32>
    %9 = vector.shape_cast %8 : vector<64xf32> to vector<64x1xf32>
    %cst_8 = arith.constant 1.280000e+02 : f32
    %10 = vector.broadcast %cst_8 : f32 to vector<64x1xf32>
    %11 = arith.divf %9, %10 : vector<64x1xf32>
    %12 = vector.broadcast %11 : vector<64x1xf32> to vector<64x128xf32>
    %13 = arith.subf %3, %12 : vector<64x128xf32>
    %14 = arith.mulf %13, %13 : vector<64x128xf32>
    %cst_9 = arith.constant dense<0.000000e+00> : vector<64xf32>
    %15 = vector.multi_reduction <add>, %14, %cst_9 [1] : vector<64x128xf32> to vector<64xf32>
    %16 = vector.shape_cast %15 : vector<64xf32> to vector<64x1xf32>
    %cst_10 = arith.constant 1.280000e+02 : f32
    %17 = vector.broadcast %cst_10 : f32 to vector<64x1xf32>
    %18 = arith.divf %16, %17 : vector<64x1xf32>
    %cst_11 = arith.constant 9.99999974E-6 : f32
    %19 = vector.broadcast %cst_11 : f32 to vector<64x1xf32>
    %20 = arith.addf %18, %19 : vector<64x1xf32>
    %21 = math.rsqrt %20 : vector<64x1xf32>
    %22 = vector.broadcast %21 : vector<64x1xf32> to vector<64x128xf32>
    %23 = arith.mulf %13, %22 : vector<64x128xf32>
    %24 = vector.broadcast %5 : vector<1x128xf32> to vector<64x128xf32>
    %25 = arith.mulf %23, %24 : vector<64x128xf32>
    %26 = vector.broadcast %7 : vector<1x128xf32> to vector<64x128xf32>
    %27 = arith.addf %25, %26 : vector<64x128xf32>
    %28 = arith.truncf %27 : vector<64x128xf32> to vector<64x128xbf16>
    %c0_12 = arith.constant 0 : index
    %c0_13 = arith.constant 0 : index
    %c0_14 = arith.constant 0 : index
    %29 = vector.load %arg10[%c0_12, %c0_13, %c0_14] : memref<1x128x384xbf16, #tpu.memory_space<vmem>>, vector<1x128x384xbf16>
    %30 = vector.shape_cast %29 : vector<1x128x384xbf16> to vector<128x384xbf16>
    %cst_15 = arith.constant dense<0.000000e+00> : vector<64x384xf32>
    %31 = tpu.matmul %28, %30, %cst_15 {dimension_numbers = #tpu.dot_dimension_numbers<[1], [0], [0], [1], [0, 0, 1, 1], [], []>} : vector<64x128xbf16>, vector<128x384xbf16>, vector<64x384xf32> -> vector<64x384xf32>
    %c0_16 = arith.constant 0 : index
    %c0_17 = arith.constant 0 : index
    %c0_18 = arith.constant 0 : index
    %32 = vector.load %arg11[%c0_16, %c0_17, %c0_18] : memref<1x1x384xf32, #tpu.memory_space<vmem>>, vector<1x1x384xf32>
    %33 = vector.shape_cast %32 : vector<1x1x384xf32> to vector<1x384xf32>
    %34 = vector.broadcast %33 : vector<1x384xf32> to vector<64x384xf32>
    %35 = arith.addf %31, %34 : vector<64x384xf32>
    %36 = vector.extract_strided_slice %35 {offsets = [0, 0], sizes = [64, 128], strides = [1, 1]} : vector<64x384xf32> to vector<64x128xf32>
    %37 = vector.shape_cast %36 : vector<64x128xf32> to vector<4x16x128xf32>
    %38 = vector.extract_strided_slice %35 {offsets = [0, 128], sizes = [64, 128], strides = [1, 1]} : vector<64x384xf32> to vector<64x128xf32>
    %39 = vector.shape_cast %38 : vector<64x128xf32> to vector<4x16x128xf32>
    %40 = vector.extract_strided_slice %35 {offsets = [0, 256], sizes = [64, 128], strides = [1, 1]} : vector<64x384xf32> to vector<64x128xf32>
    %41 = vector.shape_cast %40 : vector<64x128xf32> to vector<4x16x128xf32>
    %c0_19 = arith.constant 0 : index
    %c0_20 = arith.constant 0 : index
    %c0_21 = arith.constant 0 : index
    %42 = vector.load %arg4[%c0_19, %c0_20, %c0_21] : memref<8x1x128xf32, #tpu.memory_space<vmem>>, vector<8x1x128xf32>
    %43 = vector.shape_cast %39 : vector<4x16x128xf32> to vector<4x1x16x128xf32>
    %44 = vector.shape_cast %42 : vector<8x1x128xf32> to vector<1x8x1x128xf32>
    %45 = vector.broadcast %43 : vector<4x1x16x128xf32> to vector<4x8x16x128xf32>
    %46 = vector.broadcast %44 : vector<1x8x1x128xf32> to vector<4x8x16x128xf32>
    %47 = arith.mulf %45, %46 : vector<4x8x16x128xf32>
    %48 = vector.shape_cast %47 : vector<4x8x16x128xf32> to vector<4x128x128xf32>
    %49 = arith.truncf %48 : vector<4x128x128xf32> to vector<4x128x128xbf16>
    %50 = vector.shape_cast %41 : vector<4x16x128xf32> to vector<4x1x16x128xf32>
    %51 = vector.shape_cast %42 : vector<8x1x128xf32> to vector<1x8x1x128xf32>
    %52 = vector.broadcast %50 : vector<4x1x16x128xf32> to vector<4x8x16x128xf32>
    %53 = vector.broadcast %51 : vector<1x8x1x128xf32> to vector<4x8x16x128xf32>
    %54 = arith.mulf %52, %53 : vector<4x8x16x128xf32>
    %55 = vector.shape_cast %54 : vector<4x8x16x128xf32> to vector<4x128x128xf32>
    %56 = arith.truncf %55 : vector<4x128x128xf32> to vector<4x128x128xbf16>
    %57 = arith.truncf %37 : vector<4x16x128xf32> to vector<4x16x128xbf16>
    %cst_22 = arith.constant dense<0.000000e+00> : vector<4x16x128xf32>
    %58 = tpu.matmul %57, %49, %cst_22 {dimension_numbers = #tpu.dot_dimension_numbers<[2], [2], [1], [1], [0, 0, 0, 1, 1, 1], [0], [0]>} : vector<4x16x128xbf16>, vector<4x128x128xbf16>, vector<4x16x128xf32> -> vector<4x16x128xf32>
    %59 = vector.shape_cast %58 : vector<4x16x128xf32> to vector<64x128xf32>
    %cst_23 = arith.constant dense<0xFF800000> : vector<64xf32>
    %60 = vector.multi_reduction <maximumf>, %59, %cst_23 [1] : vector<64x128xf32> to vector<64xf32>
    %61 = vector.shape_cast %60 : vector<64xf32> to vector<64x1xf32>
    %62 = vector.broadcast %61 : vector<64x1xf32> to vector<64x128xf32>
    %63 = arith.subf %59, %62 : vector<64x128xf32>
    %64 = math.exp %63 : vector<64x128xf32>
    %c0_24 = arith.constant 0 : index
    %c0_25 = arith.constant 0 : index
    %65 = vector.load %arg5[%c0_24, %c0_25] : memref<128x128xf32, #tpu.memory_space<vmem>>, vector<128x128xf32>
    %cst_26 = arith.constant dense<0.000000e+00> : vector<64x128xf32>
    %66 = tpu.matmul %64, %65, %cst_26 {dimension_numbers = #tpu.dot_dimension_numbers<[1], [0], [0], [1], [0, 0, 1, 1], [], []>} : vector<64x128xf32>, vector<128x128xf32>, vector<64x128xf32> -> vector<64x128xf32>
    %67 = tpu.reciprocal %66 {approx = true} : vector<64x128xf32> -> vector<64x128xf32>
    %68 = arith.mulf %64, %67 : vector<64x128xf32>
    %69 = vector.shape_cast %68 : vector<64x128xf32> to vector<4x16x128xf32>
    %70 = arith.truncf %69 : vector<4x16x128xf32> to vector<4x16x128xbf16>
    %cst_27 = arith.constant dense<0.000000e+00> : vector<4x16x128xf32>
    %71 = tpu.matmul %70, %56, %cst_27 {dimension_numbers = #tpu.dot_dimension_numbers<[2], [1], [1], [2], [0, 0, 0, 1, 1, 2], [0], [0]>} : vector<4x16x128xbf16>, vector<4x128x128xbf16>, vector<4x16x128xf32> -> vector<4x16x128xf32>
    %72 = vector.shape_cast %71 : vector<4x16x128xf32> to vector<64x128xf32>
    %73 = arith.truncf %72 : vector<64x128xf32> to vector<64x128xbf16>
    %c0_28 = arith.constant 0 : index
    %c0_29 = arith.constant 0 : index
    %c0_30 = arith.constant 0 : index
    %74 = vector.load %arg12[%c0_28, %c0_29, %c0_30] : memref<1x128x128xbf16, #tpu.memory_space<vmem>>, vector<1x128x128xbf16>
    %75 = vector.shape_cast %74 : vector<1x128x128xbf16> to vector<128x128xbf16>
    %cst_31 = arith.constant dense<0.000000e+00> : vector<64x128xf32>
    %76 = tpu.matmul %73, %75, %cst_31 {dimension_numbers = #tpu.dot_dimension_numbers<[1], [0], [0], [1], [0, 0, 1, 1], [], []>} : vector<64x128xbf16>, vector<128x128xbf16>, vector<64x128xf32> -> vector<64x128xf32>
    %c0_32 = arith.constant 0 : index
    %c0_33 = arith.constant 0 : index
    %c0_34 = arith.constant 0 : index
    %77 = vector.load %arg13[%c0_32, %c0_33, %c0_34] : memref<1x1x128xf32, #tpu.memory_space<vmem>>, vector<1x1x128xf32>
    %78 = vector.shape_cast %77 : vector<1x1x128xf32> to vector<1x128xf32>
    %79 = vector.broadcast %78 : vector<1x128xf32> to vector<64x128xf32>
    %80 = arith.addf %76, %79 : vector<64x128xf32>
    %81 = arith.addf %3, %80 : vector<64x128xf32>
    %c0_35 = arith.constant 0 : index
    %c0_36 = arith.constant 0 : index
    %c0_37 = arith.constant 0 : index
    %82 = vector.load %arg14[%c0_35, %c0_36, %c0_37] : memref<1x1x128xf32, #tpu.memory_space<vmem>>, vector<1x1x128xf32>
    %83 = vector.shape_cast %82 : vector<1x1x128xf32> to vector<1x128xf32>
    %c0_38 = arith.constant 0 : index
    %c0_39 = arith.constant 0 : index
    %c0_40 = arith.constant 0 : index
    %84 = vector.load %arg15[%c0_38, %c0_39, %c0_40] : memref<1x1x128xf32, #tpu.memory_space<vmem>>, vector<1x1x128xf32>
    %85 = vector.shape_cast %84 : vector<1x1x128xf32> to vector<1x128xf32>
    %cst_41 = arith.constant dense<0.000000e+00> : vector<64xf32>
    %86 = vector.multi_reduction <add>, %81, %cst_41 [1] : vector<64x128xf32> to vector<64xf32>
    %87 = vector.shape_cast %86 : vector<64xf32> to vector<64x1xf32>
    %cst_42 = arith.constant 1.280000e+02 : f32
    %88 = vector.broadcast %cst_42 : f32 to vector<64x1xf32>
    %89 = arith.divf %87, %88 : vector<64x1xf32>
    %90 = vector.broadcast %89 : vector<64x1xf32> to vector<64x128xf32>
    %91 = arith.subf %81, %90 : vector<64x128xf32>
    %92 = arith.mulf %91, %91 : vector<64x128xf32>
    %cst_43 = arith.constant dense<0.000000e+00> : vector<64xf32>
    %93 = vector.multi_reduction <add>, %92, %cst_43 [1] : vector<64x128xf32> to vector<64xf32>
    %94 = vector.shape_cast %93 : vector<64xf32> to vector<64x1xf32>
    %cst_44 = arith.constant 1.280000e+02 : f32
    %95 = vector.broadcast %cst_44 : f32 to vector<64x1xf32>
    %96 = arith.divf %94, %95 : vector<64x1xf32>
    %cst_45 = arith.constant 9.99999974E-6 : f32
    %97 = vector.broadcast %cst_45 : f32 to vector<64x1xf32>
    %98 = arith.addf %96, %97 : vector<64x1xf32>
    %99 = math.rsqrt %98 : vector<64x1xf32>
    %100 = vector.broadcast %99 : vector<64x1xf32> to vector<64x128xf32>
    %101 = arith.mulf %91, %100 : vector<64x128xf32>
    %102 = vector.broadcast %83 : vector<1x128xf32> to vector<64x128xf32>
    %103 = arith.mulf %101, %102 : vector<64x128xf32>
    %104 = vector.broadcast %85 : vector<1x128xf32> to vector<64x128xf32>
    %105 = arith.addf %103, %104 : vector<64x128xf32>
    %106 = arith.truncf %105 : vector<64x128xf32> to vector<64x128xbf16>
    %c0_46 = arith.constant 0 : index
    %c0_47 = arith.constant 0 : index
    %c0_48 = arith.constant 0 : index
    %107 = vector.load %arg16[%c0_46, %c0_47, %c0_48] : memref<1x128x256xbf16, #tpu.memory_space<vmem>>, vector<1x128x256xbf16>
    %108 = vector.shape_cast %107 : vector<1x128x256xbf16> to vector<128x256xbf16>
    %cst_49 = arith.constant dense<0.000000e+00> : vector<64x256xf32>
    %109 = tpu.matmul %106, %108, %cst_49 {dimension_numbers = #tpu.dot_dimension_numbers<[1], [0], [0], [1], [0, 0, 1, 1], [], []>} : vector<64x128xbf16>, vector<128x256xbf16>, vector<64x256xf32> -> vector<64x256xf32>
    %c0_50 = arith.constant 0 : index
    %c0_51 = arith.constant 0 : index
    %c0_52 = arith.constant 0 : index
    %110 = vector.load %arg17[%c0_50, %c0_51, %c0_52] : memref<1x1x256xf32, #tpu.memory_space<vmem>>, vector<1x1x256xf32>
    %111 = vector.shape_cast %110 : vector<1x1x256xf32> to vector<1x256xf32>
    %112 = vector.broadcast %111 : vector<1x256xf32> to vector<64x256xf32>
    %113 = arith.addf %109, %112 : vector<64x256xf32>
    %cst_53 = arith.constant 5.000000e-01 : f32
    %114 = vector.broadcast %cst_53 : f32 to vector<64x256xf32>
    %115 = arith.mulf %114, %113 : vector<64x256xf32>
    %cst_54 = arith.constant 4.471500e-02 : f32
    %116 = vector.broadcast %cst_54 : f32 to vector<64x256xf32>
    %117 = arith.mulf %116, %113 : vector<64x256xf32>
    %118 = arith.mulf %117, %113 : vector<64x256xf32>
    %119 = arith.mulf %118, %113 : vector<64x256xf32>
    %120 = arith.addf %113, %119 : vector<64x256xf32>
    %cst_55 = arith.constant 0.797884583 : f32
    %121 = vector.broadcast %cst_55 : f32 to vector<64x256xf32>
    %122 = arith.mulf %121, %120 : vector<64x256xf32>
    %123 = math.tanh %122 : vector<64x256xf32>
    %cst_56 = arith.constant 1.000000e+00 : f32
    %124 = vector.broadcast %cst_56 : f32 to vector<64x256xf32>
    %125 = arith.addf %124, %123 : vector<64x256xf32>
    %126 = arith.mulf %115, %125 : vector<64x256xf32>
    %127 = arith.truncf %126 : vector<64x256xf32> to vector<64x256xbf16>
    %c0_57 = arith.constant 0 : index
    %c0_58 = arith.constant 0 : index
    %c0_59 = arith.constant 0 : index
    %128 = vector.load %arg18[%c0_57, %c0_58, %c0_59] : memref<1x256x128xbf16, #tpu.memory_space<vmem>>, vector<1x256x128xbf16>
    %129 = vector.shape_cast %128 : vector<1x256x128xbf16> to vector<256x128xbf16>
    %cst_60 = arith.constant dense<0.000000e+00> : vector<64x128xf32>
    %130 = tpu.matmul %127, %129, %cst_60 {dimension_numbers = #tpu.dot_dimension_numbers<[1], [0], [0], [1], [0, 0, 1, 1], [], []>} : vector<64x256xbf16>, vector<256x128xbf16>, vector<64x128xf32> -> vector<64x128xf32>
    %c0_61 = arith.constant 0 : index
    %c0_62 = arith.constant 0 : index
    %c0_63 = arith.constant 0 : index
    %131 = vector.load %arg19[%c0_61, %c0_62, %c0_63] : memref<1x1x128xf32, #tpu.memory_space<vmem>>, vector<1x1x128xf32>
    %132 = vector.shape_cast %131 : vector<1x1x128xf32> to vector<1x128xf32>
    %133 = vector.broadcast %132 : vector<1x128xf32> to vector<64x128xf32>
    %134 = arith.addf %130, %133 : vector<64x128xf32>
    %135 = arith.addf %81, %134 : vector<64x128xf32>
    %c0_64 = arith.constant 0 : index
    %c0_65 = arith.constant 0 : index
    %136 = vector.load %arg25[%c0_64, %c0_65] : memref<64x128xf32, #tpu.memory_space<vmem>>, vector<64x128xf32>
    tpu.vector_store %arg25[%c0_64, %c0_65], %135 {strides = array<i32>} : memref<64x128xf32, #tpu.memory_space<vmem>>, vector<64x128xf32>,
    %c1_i32 = arith.constant 1 : i32
    %137 = arith.cmpi eq, %arg1, %c1_i32 : i32
    %138 = arith.extui %137 : i1 to i32
    %c0_i32_66 = arith.constant 0 : i32
    %139 = arith.cmpi ne, %138, %c0_i32_66 : i32
    scf.if %139 {
      %c0_67 = arith.constant 0 : index
      %c0_68 = arith.constant 0 : index
      %140 = vector.load %arg20[%c0_67, %c0_68] : memref<1x128xf32, #tpu.memory_space<vmem>>, vector<1x128xf32>
      %c0_69 = arith.constant 0 : index
      %c0_70 = arith.constant 0 : index
      %141 = vector.load %arg21[%c0_69, %c0_70] : memref<1x128xf32, #tpu.memory_space<vmem>>, vector<1x128xf32>
      %cst_71 = arith.constant dense<0.000000e+00> : vector<64xf32>
      %142 = vector.multi_reduction <add>, %135, %cst_71 [1] : vector<64x128xf32> to vector<64xf32>
      %143 = vector.shape_cast %142 : vector<64xf32> to vector<64x1xf32>
      %cst_72 = arith.constant 1.280000e+02 : f32
      %144 = vector.broadcast %cst_72 : f32 to vector<64x1xf32>
      %145 = arith.divf %143, %144 : vector<64x1xf32>
      %146 = vector.broadcast %145 : vector<64x1xf32> to vector<64x128xf32>
      %147 = arith.subf %135, %146 : vector<64x128xf32>
      %148 = arith.mulf %147, %147 : vector<64x128xf32>
      %cst_73 = arith.constant dense<0.000000e+00> : vector<64xf32>
      %149 = vector.multi_reduction <add>, %148, %cst_73 [1] : vector<64x128xf32> to vector<64xf32>
      %150 = vector.shape_cast %149 : vector<64xf32> to vector<64x1xf32>
      %cst_74 = arith.constant 1.280000e+02 : f32
      %151 = vector.broadcast %cst_74 : f32 to vector<64x1xf32>
      %152 = arith.divf %150, %151 : vector<64x1xf32>
      %cst_75 = arith.constant 9.99999974E-6 : f32
      %153 = vector.broadcast %cst_75 : f32 to vector<64x1xf32>
      %154 = arith.addf %152, %153 : vector<64x1xf32>
      %155 = math.rsqrt %154 : vector<64x1xf32>
      %156 = vector.broadcast %155 : vector<64x1xf32> to vector<64x128xf32>
      %157 = arith.mulf %147, %156 : vector<64x128xf32>
      %158 = vector.broadcast %140 : vector<1x128xf32> to vector<64x128xf32>
      %159 = arith.mulf %157, %158 : vector<64x128xf32>
      %160 = vector.broadcast %141 : vector<1x128xf32> to vector<64x128xf32>
      %161 = arith.addf %159, %160 : vector<64x128xf32>
      %162 = arith.truncf %161 : vector<64x128xf32> to vector<64x128xbf16>
      %c0_76 = arith.constant 0 : index
      %c0_77 = arith.constant 0 : index
      %163 = vector.load %arg22[%c0_76, %c0_77] : memref<128x128xbf16, #tpu.memory_space<vmem>>, vector<128x128xbf16>
      %cst_78 = arith.constant dense<0.000000e+00> : vector<64x128xf32>
      %164 = tpu.matmul %162, %163, %cst_78 {dimension_numbers = #tpu.dot_dimension_numbers<[1], [0], [0], [1], [0, 0, 1, 1], [], []>} : vector<64x128xbf16>, vector<128x128xbf16>, vector<64x128xf32> -> vector<64x128xf32>
      %c0_79 = arith.constant 0 : index
      %c0_80 = arith.constant 0 : index
      %165 = vector.load %arg23[%c0_79, %c0_80] : memref<1x128xf32, #tpu.memory_space<vmem>>, vector<1x128xf32>
      %166 = vector.broadcast %165 : vector<1x128xf32> to vector<64x128xf32>
      %167 = arith.addf %164, %166 : vector<64x128xf32>
      %168 = vector.shape_cast %167 : vector<64x128xf32> to vector<4x16x128xf32>
      %c0_81 = arith.constant 0 : index
      %c0_82 = arith.constant 0 : index
      %c0_83 = arith.constant 0 : index
      %169 = vector.load %arg24[%c0_81, %c0_82, %c0_83] : memref<4x16x128xf32, #tpu.memory_space<vmem>>, vector<4x16x128xf32>
      tpu.vector_store %arg24[%c0_81, %c0_82, %c0_83], %168 {strides = array<i32>} : memref<4x16x128xf32, #tpu.memory_space<vmem>>, vector<4x16x128xf32>,
    } else {
    }
    return
  }
  func.func @transform_0(%arg0: i32, %arg1: i32) -> (i32, i32, i32) {
    %c0_i32 = arith.constant 0 : i32
    %c0_i32_0 = arith.constant 0 : i32
    %c0_i32_1 = arith.constant 0 : i32
    return %arg0, %c0_i32, %c0_i32_0 : i32, i32, i32
  }
  func.func @transform_1(%arg0: i32, %arg1: i32) -> (i32, i32) {
    %c0_i32 = arith.constant 0 : i32
    %c0_i32_0 = arith.constant 0 : i32
    %c0_i32_1 = arith.constant 0 : i32
    return %c0_i32, %c0_i32_0 : i32, i32
  }
  func.func @transform_2(%arg0: i32, %arg1: i32) -> (i32, i32, i32) {
    %c0_i32 = arith.constant 0 : i32
    %c0_i32_0 = arith.constant 0 : i32
    %c0_i32_1 = arith.constant 0 : i32
    %c0_i32_2 = arith.constant 0 : i32
    return %c0_i32, %c0_i32_0, %c0_i32_1 : i32, i32, i32
  }
  func.func @transform_3(%arg0: i32, %arg1: i32) -> (i32, i32) {
    %c0_i32 = arith.constant 0 : i32
    %c0_i32_0 = arith.constant 0 : i32
    %c0_i32_1 = arith.constant 0 : i32
    return %c0_i32, %c0_i32_0 : i32, i32
  }
  func.func @transform_4(%arg0: i32, %arg1: i32) -> (i32, i32) {
    %c0_i32 = arith.constant 0 : i32
    %c0_i32_0 = arith.constant 0 : i32
    %c0_i32_1 = arith.constant 0 : i32
    return %c0_i32, %c0_i32_0 : i32, i32
  }
  func.func @transform_5(%arg0: i32, %arg1: i32) -> (i32, i32) {
    %c0_i32 = arith.constant 0 : i32
    %c0_i32_0 = arith.constant 0 : i32
    %c0_i32_1 = arith.constant 0 : i32
    return %c0_i32, %c0_i32_0 : i32, i32
  }
  func.func @transform_6(%arg0: i32, %arg1: i32) -> (i32, i32, i32) {
    %c0_i32 = arith.constant 0 : i32
    %c0_i32_0 = arith.constant 0 : i32
    %c0_i32_1 = arith.constant 0 : i32
    return %arg1, %c0_i32, %c0_i32_0 : i32, i32, i32
  }
  func.func @transform_7(%arg0: i32, %arg1: i32) -> (i32, i32, i32) {
    %c0_i32 = arith.constant 0 : i32
    %c0_i32_0 = arith.constant 0 : i32
    %c0_i32_1 = arith.constant 0 : i32
    return %arg1, %c0_i32, %c0_i32_0 : i32, i32, i32
  }
  func.func @transform_8(%arg0: i32, %arg1: i32) -> (i32, i32, i32) {
    %c0_i32 = arith.constant 0 : i32
    %c0_i32_0 = arith.constant 0 : i32
    %c0_i32_1 = arith.constant 0 : i32
    return %arg1, %c0_i32, %c0_i32_0 : i32, i32, i32
  }
  func.func @transform_9(%arg0: i32, %arg1: i32) -> (i32, i32, i32) {
    %c0_i32 = arith.constant 0 : i32
    %c0_i32_0 = arith.constant 0 : i32
    %c0_i32_1 = arith.constant 0 : i32
    return %arg1, %c0_i32, %c0_i32_0 : i32, i32, i32
  }
  func.func @transform_10(%arg0: i32, %arg1: i32) -> (i32, i32, i32) {
    %c0_i32 = arith.constant 0 : i32
    %c0_i32_0 = arith.constant 0 : i32
    %c0_i32_1 = arith.constant 0 : i32
    return %arg1, %c0_i32, %c0_i32_0 : i32, i32, i32
  }
  func.func @transform_11(%arg0: i32, %arg1: i32) -> (i32, i32, i32) {
    %c0_i32 = arith.constant 0 : i32
    %c0_i32_0 = arith.constant 0 : i32
    %c0_i32_1 = arith.constant 0 : i32
    return %arg1, %c0_i32, %c0_i32_0 : i32, i32, i32
  }
  func.func @transform_12(%arg0: i32, %arg1: i32) -> (i32, i32, i32) {
    %c0_i32 = arith.constant 0 : i32
    %c0_i32_0 = arith.constant 0 : i32
    %c0_i32_1 = arith.constant 0 : i32
    return %arg1, %c0_i32, %c0_i32_0 : i32, i32, i32
  }
  func.func @transform_13(%arg0: i32, %arg1: i32) -> (i32, i32, i32) {
    %c0_i32 = arith.constant 0 : i32
    %c0_i32_0 = arith.constant 0 : i32
    %c0_i32_1 = arith.constant 0 : i32
    return %arg1, %c0_i32, %c0_i32_0 : i32, i32, i32
  }
  func.func @transform_14(%arg0: i32, %arg1: i32) -> (i32, i32, i32) {
    %c0_i32 = arith.constant 0 : i32
    %c0_i32_0 = arith.constant 0 : i32
    %c0_i32_1 = arith.constant 0 : i32
    return %arg1, %c0_i32, %c0_i32_0 : i32, i32, i32
  }
  func.func @transform_15(%arg0: i32, %arg1: i32) -> (i32, i32, i32) {
    %c0_i32 = arith.constant 0 : i32
    %c0_i32_0 = arith.constant 0 : i32
    %c0_i32_1 = arith.constant 0 : i32
    return %arg1, %c0_i32, %c0_i32_0 : i32, i32, i32
  }
  func.func @transform_16(%arg0: i32, %arg1: i32) -> (i32, i32, i32) {
    %c0_i32 = arith.constant 0 : i32
    %c0_i32_0 = arith.constant 0 : i32
    %c0_i32_1 = arith.constant 0 : i32
    return %arg1, %c0_i32, %c0_i32_0 : i32, i32, i32
  }
  func.func @transform_17(%arg0: i32, %arg1: i32) -> (i32, i32, i32) {
    %c0_i32 = arith.constant 0 : i32
    %c0_i32_0 = arith.constant 0 : i32
    %c0_i32_1 = arith.constant 0 : i32
    return %arg1, %c0_i32, %c0_i32_0 : i32, i32, i32
  }
  func.func @transform_18(%arg0: i32, %arg1: i32) -> (i32, i32) {
    %c0_i32 = arith.constant 0 : i32
    %c0_i32_0 = arith.constant 0 : i32
    %c0_i32_1 = arith.constant 0 : i32
    return %c0_i32, %c0_i32_0 : i32, i32
  }
  func.func @transform_19(%arg0: i32, %arg1: i32) -> (i32, i32) {
    %c0_i32 = arith.constant 0 : i32
    %c0_i32_0 = arith.constant 0 : i32
    %c0_i32_1 = arith.constant 0 : i32
    return %c0_i32, %c0_i32_0 : i32, i32
  }
  func.func @transform_20(%arg0: i32, %arg1: i32) -> (i32, i32) {
    %c0_i32 = arith.constant 0 : i32
    %c0_i32_0 = arith.constant 0 : i32
    %c0_i32_1 = arith.constant 0 : i32
    return %c0_i32, %c0_i32_0 : i32, i32
  }
  func.func @transform_21(%arg0: i32, %arg1: i32) -> (i32, i32) {
    %c0_i32 = arith.constant 0 : i32
    %c0_i32_0 = arith.constant 0 : i32
    %c0_i32_1 = arith.constant 0 : i32
    return %c0_i32, %c0_i32_0 : i32, i32
  }
  func.func @transform_22(%arg0: i32, %arg1: i32) -> (i32, i32, i32) {
    %c0_i32 = arith.constant 0 : i32
    %c0_i32_0 = arith.constant 0 : i32
    %c0_i32_1 = arith.constant 0 : i32
    return %arg0, %c0_i32, %c0_i32_0 : i32, i32, i32
  }
}

module attributes {stable_mosaic.version = 11 : i64} {
  func.func @kernel(%arg0: i32, %arg1: i32, %arg2: memref<4x16x128xf32, #tpu.memory_space<vmem>>, %arg3: memref<16x128xf32, #tpu.memory_space<vmem>>, %arg4: memref<8x1x128xf32, #tpu.memory_space<vmem>>, %arg5: memref<128x128xf32, #tpu.memory_space<vmem>>, %arg6: memref<1x128xf32, #tpu.memory_space<vmem>>, %arg7: memref<1x128xf32, #tpu.memory_space<vmem>>, %arg8: memref<1x1x128xf32, #tpu.memory_space<vmem>>, %arg9: memref<1x1x128xf32, #tpu.memory_space<vmem>>, %arg10: memref<1x128x384xbf16, #tpu.memory_space<vmem>>, %arg11: memref<1x1x384xf32, #tpu.memory_space<vmem>>, %arg12: memref<1x128x128xbf16, #tpu.memory_space<vmem>>, %arg13: memref<1x1x128xf32, #tpu.memory_space<vmem>>, %arg14: memref<1x1x128xf32, #tpu.memory_space<vmem>>, %arg15: memref<1x1x128xf32, #tpu.memory_space<vmem>>, %arg16: memref<1x128x256xbf16, #tpu.memory_space<vmem>>, %arg17: memref<1x1x256xf32, #tpu.memory_space<vmem>>, %arg18: memref<1x256x128xbf16, #tpu.memory_space<vmem>>, %arg19: memref<1x1x128xf32, #tpu.memory_space<vmem>>, %arg20: memref<1x128xf32, #tpu.memory_space<vmem>>, %arg21: memref<1x128xf32, #tpu.memory_space<vmem>>, %arg22: memref<128x128xbf16, #tpu.memory_space<vmem>>, %arg23: memref<1x128xf32, #tpu.memory_space<vmem>>, %arg24: memref<4x16x128xf32, #tpu.memory_space<vmem>>, %arg25: memref<64x128xf32, #tpu.memory_space<vmem>>) attributes {dimension_semantics = [#tpu.dimension_semantics<parallel>, #tpu.dimension_semantics<arbitrary>], iteration_bounds = array<i64: 1, 2>, scalar_prefetch = 0 : i64, scratch_operands = 1 : i64, tpu.core_type = #tpu.core_type<tc>, window_params = [{transform_indices = @transform_0, window_bounds = array<i64: 4, 16, 128>}, {pipeline_mode = #tpu.pipeline_mode<synchronous>, transform_indices = @transform_1, window_bounds = array<i64: 16, 128>}, {pipeline_mode = #tpu.pipeline_mode<synchronous>, transform_indices = @transform_2, window_bounds = array<i64: 8, 1, 128>}, {pipeline_mode = #tpu.pipeline_mode<synchronous>, transform_indices = @transform_3, window_bounds = array<i64: 128, 128>}, {pipeline_mode = #tpu.pipeline_mode<synchronous>, transform_indices = @transform_4, window_bounds = array<i64: 1, 128>}, {pipeline_mode = #tpu.pipeline_mode<synchronous>, transform_indices = @transform_5, window_bounds = array<i64: 1, 128>}, {transform_indices = @transform_6, window_bounds = array<i64: 1, 1, 128>}, {transform_indices = @transform_7, window_bounds = array<i64: 1, 1, 128>}, {transform_indices = @transform_8, window_bounds = array<i64: 1, 128, 384>}, {transform_indices = @transform_9, window_bounds = array<i64: 1, 1, 384>}, {transform_indices = @transform_10, window_bounds = array<i64: 1, 128, 128>}, {transform_indices = @transform_11, window_bounds = array<i64: 1, 1, 128>}, {transform_indices = @transform_12, window_bounds = array<i64: 1, 1, 128>}, {transform_indices = @transform_13, window_bounds = array<i64: 1, 1, 128>}, {transform_indices = @transform_14, window_bounds = array<i64: 1, 128, 256>}, {transform_indices = @transform_15, window_bounds = array<i64: 1, 1, 256>}, {transform_indices = @transform_16, window_bounds = array<i64: 1, 256, 128>}, {transform_indices = @transform_17, window_bounds = array<i64: 1, 1, 128>}, {pipeline_mode = #tpu.pipeline_mode<synchronous>, transform_indices = @transform_18, window_bounds = array<i64: 1, 128>}, {pipeline_mode = #tpu.pipeline_mode<synchronous>, transform_indices = @transform_19, window_bounds = array<i64: 1, 128>}, {pipeline_mode = #tpu.pipeline_mode<synchronous>, transform_indices = @transform_20, window_bounds = array<i64: 128, 128>}, {pipeline_mode = #tpu.pipeline_mode<synchronous>, transform_indices = @transform_21, window_bounds = array<i64: 1, 128>}, {transform_indices = @transform_22, window_bounds = array<i64: 4, 16, 128>}]} {
    %c0_i32 = arith.constant 0 : i32
    %0 = arith.cmpi eq, %arg1, %c0_i32 : i32
    %1 = arith.extui %0 : i1 to i32
    %c0_i32_0 = arith.constant 0 : i32
    %2 = arith.cmpi ne, %1, %c0_i32_0 : i32
    scf.if %2 {
      %c0_67 = arith.constant 0 : index
      %c0_68 = arith.constant 0 : index
      %c0_69 = arith.constant 0 : index
      %140 = vector.load %arg2[%c0_67, %c0_68, %c0_69] : memref<4x16x128xf32, #tpu.memory_space<vmem>>, vector<4x16x128xf32>
      %c0_70 = arith.constant 0 : index
      %c0_71 = arith.constant 0 : index
      %141 = vector.load %arg3[%c0_70, %c0_71] : memref<16x128xf32, #tpu.memory_space<vmem>>, vector<16x128xf32>
      %142 = vector.shape_cast %141 : vector<16x128xf32> to vector<1x16x128xf32>
      %143 = vector.broadcast %142 : vector<1x16x128xf32> to vector<4x16x128xf32>
      %144 = arith.addf %140, %143 : vector<4x16x128xf32>
      %145 = vector.shape_cast %144 : vector<4x16x128xf32> to vector<64x128xf32>
      %c0_72 = arith.constant 0 : index
      %c0_73 = arith.constant 0 : index
      %146 = vector.load %arg6[%c0_72, %c0_73] : memref<1x128xf32, #tpu.memory_space<vmem>>, vector<1x128xf32>
      %c0_74 = arith.constant 0 : index
      %c0_75 = arith.constant 0 : index
      %147 = vector.load %arg7[%c0_74, %c0_75] : memref<1x128xf32, #tpu.memory_space<vmem>>, vector<1x128xf32>
      %cst_76 = arith.constant dense<0.000000e+00> : vector<64xf32>
      %148 = vector.multi_reduction <add>, %145, %cst_76 [1] : vector<64x128xf32> to vector<64xf32>
      %149 = vector.shape_cast %148 : vector<64xf32> to vector<64x1xf32>
      %cst_77 = arith.constant 1.280000e+02 : f32
      %150 = vector.broadcast %cst_77 : f32 to vector<64x1xf32>
      %151 = arith.divf %149, %150 : vector<64x1xf32>
      %152 = vector.broadcast %151 : vector<64x1xf32> to vector<64x128xf32>
      %153 = arith.subf %145, %152 : vector<64x128xf32>
      %154 = arith.mulf %153, %153 : vector<64x128xf32>
      %cst_78 = arith.constant dense<0.000000e+00> : vector<64xf32>
      %155 = vector.multi_reduction <add>, %154, %cst_78 [1] : vector<64x128xf32> to vector<64xf32>
      %156 = vector.shape_cast %155 : vector<64xf32> to vector<64x1xf32>
      %cst_79 = arith.constant 1.280000e+02 : f32
      %157 = vector.broadcast %cst_79 : f32 to vector<64x1xf32>
      %158 = arith.divf %156, %157 : vector<64x1xf32>
      %cst_80 = arith.constant 9.99999974E-6 : f32
      %159 = vector.broadcast %cst_80 : f32 to vector<64x1xf32>
      %160 = arith.addf %158, %159 : vector<64x1xf32>
      %161 = math.rsqrt %160 : vector<64x1xf32>
      %162 = vector.broadcast %161 : vector<64x1xf32> to vector<64x128xf32>
      %163 = arith.mulf %153, %162 : vector<64x128xf32>
      %164 = vector.broadcast %146 : vector<1x128xf32> to vector<64x128xf32>
      %165 = arith.mulf %163, %164 : vector<64x128xf32>
      %166 = vector.broadcast %147 : vector<1x128xf32> to vector<64x128xf32>
      %167 = arith.addf %165, %166 : vector<64x128xf32>
      %c0_81 = arith.constant 0 : index
      %c0_82 = arith.constant 0 : index
      %168 = vector.load %arg25[%c0_81, %c0_82] : memref<64x128xf32, #tpu.memory_space<vmem>>, vector<64x128xf32>
      tpu.vector_store %arg25[%c0_81, %c0_82], %167 {strides = array<i32>} : memref<64x128xf32, #tpu.memory_space<vmem>>, vector<64x128xf32>,
    } else {
    }
    %c0 = arith.constant 0 : index
    %c0_1 = arith.constant 0 : index
    %3 = vector.load %arg25[%c0, %c0_1] : memref<64x128xf32, #tpu.memory_space<vmem>>, vector<64x128xf32>
    %c0_2 = arith.constant 0 : index
    %c0_3 = arith.constant 0 : index
    %c0_4 = arith.constant 0 : index
    %4 = vector.load %arg8[%c0_2, %c0_3, %c0_4] : memref<1x1x128xf32, #tpu.memory_space<vmem>>, vector<1x1x128xf32>
    %5 = vector.shape_cast %4 : vector<1x1x128xf32> to vector<1x128xf32>
    %c0_5 = arith.constant 0 : index
    %c0_6 = arith.constant 0 : index
    %c0_7 = arith.constant 0 : index
    %6 = vector.load %arg9[%c0_5, %c0_6, %c0_7] : memref<1x1x128xf32, #tpu.memory_space<vmem>>, vector<1x1x128xf32>
    %7 = vector.shape_cast %6 : vector<1x1x128xf32> to vector<1x128xf32>
    %cst = arith.constant dense<0.000000e+00> : vector<64xf32>
    %8 = vector.multi_reduction <add>, %3, %cst [1] : vector<64x128xf32> to vector<64xf32>
    %9 = vector.shape_cast %8 : vector<64xf32> to vector<64x1xf32>
    %cst_8 = arith.constant 1.280000e+02 : f32
    %10 = vector.broadcast %cst_8 : f32 to vector<64x1xf32>
    %11 = arith.divf %9, %10 : vector<64x1xf32>
    %12 = vector.broadcast %11 : vector<64x1xf32> to vector<64x128xf32>
    %13 = arith.subf %3, %12 : vector<64x128xf32>
    %14 = arith.mulf %13, %13 : vector<64x128xf32>
    %cst_9 = arith.constant dense<0.000000e+00> : vector<64xf32>
    %15 = vector.multi_reduction <add>, %14, %cst_9 [1] : vector<64x128xf32> to vector<64xf32>
    %16 = vector.shape_cast %15 : vector<64xf32> to vector<64x1xf32>
    %cst_10 = arith.constant 1.280000e+02 : f32
    %17 = vector.broadcast %cst_10 : f32 to vector<64x1xf32>
    %18 = arith.divf %16, %17 : vector<64x1xf32>
    %cst_11 = arith.constant 9.99999974E-6 : f32
    %19 = vector.broadcast %cst_11 : f32 to vector<64x1xf32>
    %20 = arith.addf %18, %19 : vector<64x1xf32>
    %21 = math.rsqrt %20 : vector<64x1xf32>
    %22 = vector.broadcast %21 : vector<64x1xf32> to vector<64x128xf32>
    %23 = arith.mulf %13, %22 : vector<64x128xf32>
    %24 = vector.broadcast %5 : vector<1x128xf32> to vector<64x128xf32>
    %25 = arith.mulf %23, %24 : vector<64x128xf32>
    %26 = vector.broadcast %7 : vector<1x128xf32> to vector<64x128xf32>
    %27 = arith.addf %25, %26 : vector<64x128xf32>
    %28 = arith.truncf %27 : vector<64x128xf32> to vector<64x128xbf16>
    %c0_12 = arith.constant 0 : index
    %c0_13 = arith.constant 0 : index
    %c0_14 = arith.constant 0 : index
    %29 = vector.load %arg10[%c0_12, %c0_13, %c0_14] : memref<1x128x384xbf16, #tpu.memory_space<vmem>>, vector<1x128x384xbf16>
    %30 = vector.shape_cast %29 : vector<1x128x384xbf16> to vector<128x384xbf16>
    %cst_15 = arith.constant dense<0.000000e+00> : vector<64x384xf32>
    %31 = tpu.matmul %28, %30, %cst_15 {dimension_numbers = #tpu.dot_dimension_numbers<[1], [0], [0], [1], [0, 0, 1, 1], [], []>} : vector<64x128xbf16>, vector<128x384xbf16>, vector<64x384xf32> -> vector<64x384xf32>
    %c0_16 = arith.constant 0 : index
    %c0_17 = arith.constant 0 : index
    %c0_18 = arith.constant 0 : index
    %32 = vector.load %arg11[%c0_16, %c0_17, %c0_18] : memref<1x1x384xf32, #tpu.memory_space<vmem>>, vector<1x1x384xf32>
    %33 = vector.shape_cast %32 : vector<1x1x384xf32> to vector<1x384xf32>
    %34 = vector.broadcast %33 : vector<1x384xf32> to vector<64x384xf32>
    %35 = arith.addf %31, %34 : vector<64x384xf32>
    %36 = vector.extract_strided_slice %35 {offsets = [0, 0], sizes = [64, 128], strides = [1, 1]} : vector<64x384xf32> to vector<64x128xf32>
    %37 = vector.shape_cast %36 : vector<64x128xf32> to vector<4x16x128xf32>
    %38 = vector.extract_strided_slice %35 {offsets = [0, 128], sizes = [64, 128], strides = [1, 1]} : vector<64x384xf32> to vector<64x128xf32>
    %39 = vector.shape_cast %38 : vector<64x128xf32> to vector<4x16x128xf32>
    %40 = vector.extract_strided_slice %35 {offsets = [0, 256], sizes = [64, 128], strides = [1, 1]} : vector<64x384xf32> to vector<64x128xf32>
    %41 = vector.shape_cast %40 : vector<64x128xf32> to vector<4x16x128xf32>
    %c0_19 = arith.constant 0 : index
    %c0_20 = arith.constant 0 : index
    %c0_21 = arith.constant 0 : index
    %42 = vector.load %arg4[%c0_19, %c0_20, %c0_21] : memref<8x1x128xf32, #tpu.memory_space<vmem>>, vector<8x1x128xf32>
    %43 = vector.shape_cast %39 : vector<4x16x128xf32> to vector<4x1x16x128xf32>
    %44 = vector.shape_cast %42 : vector<8x1x128xf32> to vector<1x8x1x128xf32>
    %45 = vector.broadcast %43 : vector<4x1x16x128xf32> to vector<4x8x16x128xf32>
    %46 = vector.broadcast %44 : vector<1x8x1x128xf32> to vector<4x8x16x128xf32>
    %47 = arith.mulf %45, %46 : vector<4x8x16x128xf32>
    %48 = vector.shape_cast %47 : vector<4x8x16x128xf32> to vector<4x128x128xf32>
    %49 = arith.truncf %48 : vector<4x128x128xf32> to vector<4x128x128xbf16>
    %50 = vector.shape_cast %41 : vector<4x16x128xf32> to vector<4x1x16x128xf32>
    %51 = vector.shape_cast %42 : vector<8x1x128xf32> to vector<1x8x1x128xf32>
    %52 = vector.broadcast %50 : vector<4x1x16x128xf32> to vector<4x8x16x128xf32>
    %53 = vector.broadcast %51 : vector<1x8x1x128xf32> to vector<4x8x16x128xf32>
    %54 = arith.mulf %52, %53 : vector<4x8x16x128xf32>
    %55 = vector.shape_cast %54 : vector<4x8x16x128xf32> to vector<4x128x128xf32>
    %56 = arith.truncf %55 : vector<4x128x128xf32> to vector<4x128x128xbf16>
    %57 = arith.truncf %37 : vector<4x16x128xf32> to vector<4x16x128xbf16>
    %cst_22 = arith.constant dense<0.000000e+00> : vector<4x16x128xf32>
    %58 = tpu.matmul %57, %49, %cst_22 {dimension_numbers = #tpu.dot_dimension_numbers<[2], [2], [1], [1], [0, 0, 0, 1, 1, 1], [0], [0]>} : vector<4x16x128xbf16>, vector<4x128x128xbf16>, vector<4x16x128xf32> -> vector<4x16x128xf32>
    %59 = vector.shape_cast %58 : vector<4x16x128xf32> to vector<64x128xf32>
    %cst_23 = arith.constant dense<0xFF800000> : vector<64xf32>
    %60 = vector.multi_reduction <maximumf>, %59, %cst_23 [1] : vector<64x128xf32> to vector<64xf32>
    %61 = vector.shape_cast %60 : vector<64xf32> to vector<64x1xf32>
    %62 = vector.broadcast %61 : vector<64x1xf32> to vector<64x128xf32>
    %63 = arith.subf %59, %62 : vector<64x128xf32>
    %64 = math.exp %63 : vector<64x128xf32>
    %c0_24 = arith.constant 0 : index
    %c0_25 = arith.constant 0 : index
    %65 = vector.load %arg5[%c0_24, %c0_25] : memref<128x128xf32, #tpu.memory_space<vmem>>, vector<128x128xf32>
    %cst_26 = arith.constant dense<0.000000e+00> : vector<64x128xf32>
    %66 = tpu.matmul %64, %65, %cst_26 {dimension_numbers = #tpu.dot_dimension_numbers<[1], [0], [0], [1], [0, 0, 1, 1], [], []>} : vector<64x128xf32>, vector<128x128xf32>, vector<64x128xf32> -> vector<64x128xf32>
    %67 = tpu.reciprocal %66 {approx = true} : vector<64x128xf32> -> vector<64x128xf32>
    %68 = arith.mulf %64, %67 : vector<64x128xf32>
    %69 = vector.shape_cast %68 : vector<64x128xf32> to vector<4x16x128xf32>
    %70 = arith.truncf %69 : vector<4x16x128xf32> to vector<4x16x128xbf16>
    %cst_27 = arith.constant dense<0.000000e+00> : vector<4x16x128xf32>
    %71 = tpu.matmul %70, %56, %cst_27 {dimension_numbers = #tpu.dot_dimension_numbers<[2], [1], [1], [2], [0, 0, 0, 1, 1, 2], [0], [0]>} : vector<4x16x128xbf16>, vector<4x128x128xbf16>, vector<4x16x128xf32> -> vector<4x16x128xf32>
    %72 = vector.shape_cast %71 : vector<4x16x128xf32> to vector<64x128xf32>
    %73 = arith.truncf %72 : vector<64x128xf32> to vector<64x128xbf16>
    %c0_28 = arith.constant 0 : index
    %c0_29 = arith.constant 0 : index
    %c0_30 = arith.constant 0 : index
    %74 = vector.load %arg12[%c0_28, %c0_29, %c0_30] : memref<1x128x128xbf16, #tpu.memory_space<vmem>>, vector<1x128x128xbf16>
    %75 = vector.shape_cast %74 : vector<1x128x128xbf16> to vector<128x128xbf16>
    %cst_31 = arith.constant dense<0.000000e+00> : vector<64x128xf32>
    %76 = tpu.matmul %73, %75, %cst_31 {dimension_numbers = #tpu.dot_dimension_numbers<[1], [0], [0], [1], [0, 0, 1, 1], [], []>} : vector<64x128xbf16>, vector<128x128xbf16>, vector<64x128xf32> -> vector<64x128xf32>
    %c0_32 = arith.constant 0 : index
    %c0_33 = arith.constant 0 : index
    %c0_34 = arith.constant 0 : index
    %77 = vector.load %arg13[%c0_32, %c0_33, %c0_34] : memref<1x1x128xf32, #tpu.memory_space<vmem>>, vector<1x1x128xf32>
    %78 = vector.shape_cast %77 : vector<1x1x128xf32> to vector<1x128xf32>
    %79 = vector.broadcast %78 : vector<1x128xf32> to vector<64x128xf32>
    %80 = arith.addf %76, %79 : vector<64x128xf32>
    %81 = arith.addf %3, %80 : vector<64x128xf32>
    %c0_35 = arith.constant 0 : index
    %c0_36 = arith.constant 0 : index
    %c0_37 = arith.constant 0 : index
    %82 = vector.load %arg14[%c0_35, %c0_36, %c0_37] : memref<1x1x128xf32, #tpu.memory_space<vmem>>, vector<1x1x128xf32>
    %83 = vector.shape_cast %82 : vector<1x1x128xf32> to vector<1x128xf32>
    %c0_38 = arith.constant 0 : index
    %c0_39 = arith.constant 0 : index
    %c0_40 = arith.constant 0 : index
    %84 = vector.load %arg15[%c0_38, %c0_39, %c0_40] : memref<1x1x128xf32, #tpu.memory_space<vmem>>, vector<1x1x128xf32>
    %85 = vector.shape_cast %84 : vector<1x1x128xf32> to vector<1x128xf32>
    %cst_41 = arith.constant dense<0.000000e+00> : vector<64xf32>
    %86 = vector.multi_reduction <add>, %81, %cst_41 [1] : vector<64x128xf32> to vector<64xf32>
    %87 = vector.shape_cast %86 : vector<64xf32> to vector<64x1xf32>
    %cst_42 = arith.constant 1.280000e+02 : f32
    %88 = vector.broadcast %cst_42 : f32 to vector<64x1xf32>
    %89 = arith.divf %87, %88 : vector<64x1xf32>
    %90 = vector.broadcast %89 : vector<64x1xf32> to vector<64x128xf32>
    %91 = arith.subf %81, %90 : vector<64x128xf32>
    %92 = arith.mulf %91, %91 : vector<64x128xf32>
    %cst_43 = arith.constant dense<0.000000e+00> : vector<64xf32>
    %93 = vector.multi_reduction <add>, %92, %cst_43 [1] : vector<64x128xf32> to vector<64xf32>
    %94 = vector.shape_cast %93 : vector<64xf32> to vector<64x1xf32>
    %cst_44 = arith.constant 1.280000e+02 : f32
    %95 = vector.broadcast %cst_44 : f32 to vector<64x1xf32>
    %96 = arith.divf %94, %95 : vector<64x1xf32>
    %cst_45 = arith.constant 9.99999974E-6 : f32
    %97 = vector.broadcast %cst_45 : f32 to vector<64x1xf32>
    %98 = arith.addf %96, %97 : vector<64x1xf32>
    %99 = math.rsqrt %98 : vector<64x1xf32>
    %100 = vector.broadcast %99 : vector<64x1xf32> to vector<64x128xf32>
    %101 = arith.mulf %91, %100 : vector<64x128xf32>
    %102 = vector.broadcast %83 : vector<1x128xf32> to vector<64x128xf32>
    %103 = arith.mulf %101, %102 : vector<64x128xf32>
    %104 = vector.broadcast %85 : vector<1x128xf32> to vector<64x128xf32>
    %105 = arith.addf %103, %104 : vector<64x128xf32>
    %106 = arith.truncf %105 : vector<64x128xf32> to vector<64x128xbf16>
    %c0_46 = arith.constant 0 : index
    %c0_47 = arith.constant 0 : index
    %c0_48 = arith.constant 0 : index
    %107 = vector.load %arg16[%c0_46, %c0_47, %c0_48] : memref<1x128x256xbf16, #tpu.memory_space<vmem>>, vector<1x128x256xbf16>
    %108 = vector.shape_cast %107 : vector<1x128x256xbf16> to vector<128x256xbf16>
    %cst_49 = arith.constant dense<0.000000e+00> : vector<64x256xf32>
    %109 = tpu.matmul %106, %108, %cst_49 {dimension_numbers = #tpu.dot_dimension_numbers<[1], [0], [0], [1], [0, 0, 1, 1], [], []>} : vector<64x128xbf16>, vector<128x256xbf16>, vector<64x256xf32> -> vector<64x256xf32>
    %c0_50 = arith.constant 0 : index
    %c0_51 = arith.constant 0 : index
    %c0_52 = arith.constant 0 : index
    %110 = vector.load %arg17[%c0_50, %c0_51, %c0_52] : memref<1x1x256xf32, #tpu.memory_space<vmem>>, vector<1x1x256xf32>
    %111 = vector.shape_cast %110 : vector<1x1x256xf32> to vector<1x256xf32>
    %112 = vector.broadcast %111 : vector<1x256xf32> to vector<64x256xf32>
    %113 = arith.addf %109, %112 : vector<64x256xf32>
    %cst_53 = arith.constant 5.000000e-01 : f32
    %114 = vector.broadcast %cst_53 : f32 to vector<64x256xf32>
    %115 = arith.mulf %114, %113 : vector<64x256xf32>
    %cst_54 = arith.constant 4.471500e-02 : f32
    %116 = vector.broadcast %cst_54 : f32 to vector<64x256xf32>
    %117 = arith.mulf %116, %113 : vector<64x256xf32>
    %118 = arith.mulf %117, %113 : vector<64x256xf32>
    %119 = arith.mulf %118, %113 : vector<64x256xf32>
    %120 = arith.addf %113, %119 : vector<64x256xf32>
    %cst_55 = arith.constant 0.797884583 : f32
    %121 = vector.broadcast %cst_55 : f32 to vector<64x256xf32>
    %122 = arith.mulf %121, %120 : vector<64x256xf32>
    %123 = math.tanh %122 : vector<64x256xf32>
    %cst_56 = arith.constant 1.000000e+00 : f32
    %124 = vector.broadcast %cst_56 : f32 to vector<64x256xf32>
    %125 = arith.addf %124, %123 : vector<64x256xf32>
    %126 = arith.mulf %115, %125 : vector<64x256xf32>
    %127 = arith.truncf %126 : vector<64x256xf32> to vector<64x256xbf16>
    %c0_57 = arith.constant 0 : index
    %c0_58 = arith.constant 0 : index
    %c0_59 = arith.constant 0 : index
    %128 = vector.load %arg18[%c0_57, %c0_58, %c0_59] : memref<1x256x128xbf16, #tpu.memory_space<vmem>>, vector<1x256x128xbf16>
    %129 = vector.shape_cast %128 : vector<1x256x128xbf16> to vector<256x128xbf16>
    %cst_60 = arith.constant dense<0.000000e+00> : vector<64x128xf32>
    %130 = tpu.matmul %127, %129, %cst_60 {dimension_numbers = #tpu.dot_dimension_numbers<[1], [0], [0], [1], [0, 0, 1, 1], [], []>} : vector<64x256xbf16>, vector<256x128xbf16>, vector<64x128xf32> -> vector<64x128xf32>
    %c0_61 = arith.constant 0 : index
    %c0_62 = arith.constant 0 : index
    %c0_63 = arith.constant 0 : index
    %131 = vector.load %arg19[%c0_61, %c0_62, %c0_63] : memref<1x1x128xf32, #tpu.memory_space<vmem>>, vector<1x1x128xf32>
    %132 = vector.shape_cast %131 : vector<1x1x128xf32> to vector<1x128xf32>
    %133 = vector.broadcast %132 : vector<1x128xf32> to vector<64x128xf32>
    %134 = arith.addf %130, %133 : vector<64x128xf32>
    %135 = arith.addf %81, %134 : vector<64x128xf32>
    %c0_64 = arith.constant 0 : index
    %c0_65 = arith.constant 0 : index
    %136 = vector.load %arg25[%c0_64, %c0_65] : memref<64x128xf32, #tpu.memory_space<vmem>>, vector<64x128xf32>
    tpu.vector_store %arg25[%c0_64, %c0_65], %135 {strides = array<i32>} : memref<64x128xf32, #tpu.memory_space<vmem>>, vector<64x128xf32>,
    %c1_i32 = arith.constant 1 : i32
    %137 = arith.cmpi eq, %arg1, %c1_i32 : i32
    %138 = arith.extui %137 : i1 to i32
    %c0_i32_66 = arith.constant 0 : i32
    %139 = arith.cmpi ne, %138, %c0_i32_66 : i32
    scf.if %139 {
      %c0_67 = arith.constant 0 : index
      %c0_68 = arith.constant 0 : index
      %140 = vector.load %arg20[%c0_67, %c0_68] : memref<1x128xf32, #tpu.memory_space<vmem>>, vector<1x128xf32>
      %c0_69 = arith.constant 0 : index
      %c0_70 = arith.constant 0 : index
      %141 = vector.load %arg21[%c0_69, %c0_70] : memref<1x128xf32, #tpu.memory_space<vmem>>, vector<1x128xf32>
      %cst_71 = arith.constant dense<0.000000e+00> : vector<64xf32>
      %142 = vector.multi_reduction <add>, %135, %cst_71 [1] : vector<64x128xf32> to vector<64xf32>
      %143 = vector.shape_cast %142 : vector<64xf32> to vector<64x1xf32>
      %cst_72 = arith.constant 1.280000e+02 : f32
      %144 = vector.broadcast %cst_72 : f32 to vector<64x1xf32>
      %145 = arith.divf %143, %144 : vector<64x1xf32>
      %146 = vector.broadcast %145 : vector<64x1xf32> to vector<64x128xf32>
      %147 = arith.subf %135, %146 : vector<64x128xf32>
      %148 = arith.mulf %147, %147 : vector<64x128xf32>
      %cst_73 = arith.constant dense<0.000000e+00> : vector<64xf32>
      %149 = vector.multi_reduction <add>, %148, %cst_73 [1] : vector<64x128xf32> to vector<64xf32>
      %150 = vector.shape_cast %149 : vector<64xf32> to vector<64x1xf32>
      %cst_74 = arith.constant 1.280000e+02 : f32
      %151 = vector.broadcast %cst_74 : f32 to vector<64x1xf32>
      %152 = arith.divf %150, %151 : vector<64x1xf32>
      %cst_75 = arith.constant 9.99999974E-6 : f32
      %153 = vector.broadcast %cst_75 : f32 to vector<64x1xf32>
      %154 = arith.addf %152, %153 : vector<64x1xf32>
      %155 = math.rsqrt %154 : vector<64x1xf32>
      %156 = vector.broadcast %155 : vector<64x1xf32> to vector<64x128xf32>
      %157 = arith.mulf %147, %156 : vector<64x128xf32>
      %158 = vector.broadcast %140 : vector<1x128xf32> to vector<64x128xf32>
      %159 = arith.mulf %157, %158 : vector<64x128xf32>
      %160 = vector.broadcast %141 : vector<1x128xf32> to vector<64x128xf32>
      %161 = arith.addf %159, %160 : vector<64x128xf32>
      %162 = arith.truncf %161 : vector<64x128xf32> to vector<64x128xbf16>
      %c0_76 = arith.constant 0 : index
      %c0_77 = arith.constant 0 : index
      %163 = vector.load %arg22[%c0_76, %c0_77] : memref<128x128xbf16, #tpu.memory_space<vmem>>, vector<128x128xbf16>
      %cst_78 = arith.constant dense<0.000000e+00> : vector<64x128xf32>
      %164 = tpu.matmul %162, %163, %cst_78 {dimension_numbers = #tpu.dot_dimension_numbers<[1], [0], [0], [1], [0, 0, 1, 1], [], []>} : vector<64x128xbf16>, vector<128x128xbf16>, vector<64x128xf32> -> vector<64x128xf32>
      %c0_79 = arith.constant 0 : index
      %c0_80 = arith.constant 0 : index
      %165 = vector.load %arg23[%c0_79, %c0_80] : memref<1x128xf32, #tpu.memory_space<vmem>>, vector<1x128xf32>
      %166 = vector.broadcast %165 : vector<1x128xf32> to vector<64x128xf32>
      %167 = arith.addf %164, %166 : vector<64x128xf32>
      %168 = vector.shape_cast %167 : vector<64x128xf32> to vector<4x16x128xf32>
      %c0_81 = arith.constant 0 : index
      %c0_82 = arith.constant 0 : index
      %c0_83 = arith.constant 0 : index
      %169 = vector.load %arg24[%c0_81, %c0_82, %c0_83] : memref<4x16x128xf32, #tpu.memory_space<vmem>>, vector<4x16x128xf32>
      tpu.vector_store %arg24[%c0_81, %c0_82, %c0_83], %168 {strides = array<i32>} : memref<4x16x128xf32, #tpu.memory_space<vmem>>, vector<4x16x128xf32>,
    } else {
    }
    return
  }
  func.func @transform_0(%arg0: i32, %arg1: i32) -> (i32, i32, i32) {
    %c0_i32 = arith.constant 0 : i32
    %c0_i32_0 = arith.constant 0 : i32
    %c0_i32_1 = arith.constant 0 : i32
    return %arg0, %c0_i32, %c0_i32_0 : i32, i32, i32
  }
  func.func @transform_1(%arg0: i32, %arg1: i32) -> (i32, i32) {
    %c0_i32 = arith.constant 0 : i32
    %c0_i32_0 = arith.constant 0 : i32
    %c0_i32_1 = arith.constant 0 : i32
    return %c0_i32, %c0_i32_0 : i32, i32
  }
  func.func @transform_2(%arg0: i32, %arg1: i32) -> (i32, i32, i32) {
    %c0_i32 = arith.constant 0 : i32
    %c0_i32_0 = arith.constant 0 : i32
    %c0_i32_1 = arith.constant 0 : i32
    %c0_i32_2 = arith.constant 0 : i32
    return %c0_i32, %c0_i32_0, %c0_i32_1 : i32, i32, i32
  }
  func.func @transform_3(%arg0: i32, %arg1: i32) -> (i32, i32) {
    %c0_i32 = arith.constant 0 : i32
    %c0_i32_0 = arith.constant 0 : i32
    %c0_i32_1 = arith.constant 0 : i32
    return %c0_i32, %c0_i32_0 : i32, i32
  }
  func.func @transform_4(%arg0: i32, %arg1: i32) -> (i32, i32) {
    %c0_i32 = arith.constant 0 : i32
    %c0_i32_0 = arith.constant 0 : i32
    %c0_i32_1 = arith.constant 0 : i32
    return %c0_i32, %c0_i32_0 : i32, i32
  }
  func.func @transform_5(%arg0: i32, %arg1: i32) -> (i32, i32) {
    %c0_i32 = arith.constant 0 : i32
    %c0_i32_0 = arith.constant 0 : i32
    %c0_i32_1 = arith.constant 0 : i32
    return %c0_i32, %c0_i32_0 : i32, i32
  }
  func.func @transform_6(%arg0: i32, %arg1: i32) -> (i32, i32, i32) {
    %c0_i32 = arith.constant 0 : i32
    %c0_i32_0 = arith.constant 0 : i32
    %c0_i32_1 = arith.constant 0 : i32
    return %arg1, %c0_i32, %c0_i32_0 : i32, i32, i32
  }
  func.func @transform_7(%arg0: i32, %arg1: i32) -> (i32, i32, i32) {
    %c0_i32 = arith.constant 0 : i32
    %c0_i32_0 = arith.constant 0 : i32
    %c0_i32_1 = arith.constant 0 : i32
    return %arg1, %c0_i32, %c0_i32_0 : i32, i32, i32
  }
  func.func @transform_8(%arg0: i32, %arg1: i32) -> (i32, i32, i32) {
    %c0_i32 = arith.constant 0 : i32
    %c0_i32_0 = arith.constant 0 : i32
    %c0_i32_1 = arith.constant 0 : i32
    return %arg1, %c0_i32, %c0_i32_0 : i32, i32, i32
  }
  func.func @transform_9(%arg0: i32, %arg1: i32) -> (i32, i32, i32) {
    %c0_i32 = arith.constant 0 : i32
    %c0_i32_0 = arith.constant 0 : i32
    %c0_i32_1 = arith.constant 0 : i32
    return %arg1, %c0_i32, %c0_i32_0 : i32, i32, i32
  }
  func.func @transform_10(%arg0: i32, %arg1: i32) -> (i32, i32, i32) {
    %c0_i32 = arith.constant 0 : i32
    %c0_i32_0 = arith.constant 0 : i32
    %c0_i32_1 = arith.constant 0 : i32
    return %arg1, %c0_i32, %c0_i32_0 : i32, i32, i32
  }
  func.func @transform_11(%arg0: i32, %arg1: i32) -> (i32, i32, i32) {
    %c0_i32 = arith.constant 0 : i32
    %c0_i32_0 = arith.constant 0 : i32
    %c0_i32_1 = arith.constant 0 : i32
    return %arg1, %c0_i32, %c0_i32_0 : i32, i32, i32
  }
  func.func @transform_12(%arg0: i32, %arg1: i32) -> (i32, i32, i32) {
    %c0_i32 = arith.constant 0 : i32
    %c0_i32_0 = arith.constant 0 : i32
    %c0_i32_1 = arith.constant 0 : i32
    return %arg1, %c0_i32, %c0_i32_0 : i32, i32, i32
  }
  func.func @transform_13(%arg0: i32, %arg1: i32) -> (i32, i32, i32) {
    %c0_i32 = arith.constant 0 : i32
    %c0_i32_0 = arith.constant 0 : i32
    %c0_i32_1 = arith.constant 0 : i32
    return %arg1, %c0_i32, %c0_i32_0 : i32, i32, i32
  }
  func.func @transform_14(%arg0: i32, %arg1: i32) -> (i32, i32, i32) {
    %c0_i32 = arith.constant 0 : i32
    %c0_i32_0 = arith.constant 0 : i32
    %c0_i32_1 = arith.constant 0 : i32
    return %arg1, %c0_i32, %c0_i32_0 : i32, i32, i32
  }
  func.func @transform_15(%arg0: i32, %arg1: i32) -> (i32, i32, i32) {
    %c0_i32 = arith.constant 0 : i32
    %c0_i32_0 = arith.constant 0 : i32
    %c0_i32_1 = arith.constant 0 : i32
    return %arg1, %c0_i32, %c0_i32_0 : i32, i32, i32
  }
  func.func @transform_16(%arg0: i32, %arg1: i32) -> (i32, i32, i32) {
    %c0_i32 = arith.constant 0 : i32
    %c0_i32_0 = arith.constant 0 : i32
    %c0_i32_1 = arith.constant 0 : i32
    return %arg1, %c0_i32, %c0_i32_0 : i32, i32, i32
  }
  func.func @transform_17(%arg0: i32, %arg1: i32) -> (i32, i32, i32) {
    %c0_i32 = arith.constant 0 : i32
    %c0_i32_0 = arith.constant 0 : i32
    %c0_i32_1 = arith.constant 0 : i32
    return %arg1, %c0_i32, %c0_i32_0 : i32, i32, i32
  }
  func.func @transform_18(%arg0: i32, %arg1: i32) -> (i32, i32) {
    %c0_i32 = arith.constant 0 : i32
    %c0_i32_0 = arith.constant 0 : i32
    %c0_i32_1 = arith.constant 0 : i32
    return %c0_i32, %c0_i32_0 : i32, i32
  }
  func.func @transform_19(%arg0: i32, %arg1: i32) -> (i32, i32) {
    %c0_i32 = arith.constant 0 : i32
    %c0_i32_0 = arith.constant 0 : i32
    %c0_i32_1 = arith.constant 0 : i32
    return %c0_i32, %c0_i32_0 : i32, i32
  }
  func.func @transform_20(%arg0: i32, %arg1: i32) -> (i32, i32) {
    %c0_i32 = arith.constant 0 : i32
    %c0_i32_0 = arith.constant 0 : i32
    %c0_i32_1 = arith.constant 0 : i32
    return %c0_i32, %c0_i32_0 : i32, i32
  }
  func.func @transform_21(%arg0: i32, %arg1: i32) -> (i32, i32) {
    %c0_i32 = arith.constant 0 : i32
    %c0_i32_0 = arith.constant 0 : i32
    %c0_i32_1 = arith.constant 0 : i32
    return %c0_i32, %c0_i32_0 : i32, i32
  }
  func.func @transform_22(%arg0: i32, %arg1: i32) -> (i32, i32, i32) {
    %c0_i32 = arith.constant 0 : i32
    %c0_i32_0 = arith.constant 0 : i32
    %c0_i32_1 = arith.constant 0 : i32
    return %arg0, %c0_i32, %c0_i32_0 : i32, i32, i32
  }
}

</mosaic_0001>

<llo_original>
// kernel: tpu_custom_call.1
$region0: #{tpu_custom_call.1}
  #allocation0 [shape = 'u32[]', space=smem, size = 0x4, offset = 0x4, fixed_abs, tag = 'smem constant byte address 0x4 - core index']
  #allocation1 [shape = 'u32[72,128]{1,0:T(1,128)}', space=vmem, size = 0x9000, scoped, tag = 'internal scratch']
  #allocation2 [shape = 'f32[64,128]{1,0:T(8,128)}', space=vmem, size = 0x8000, scoped, tag = 'scratch operand']
  %s0 = inlined_call_operand.hbm [shape: f32[4,16,128], index: 0, kind: input, shape index: {}]
  %s1 = inlined_call_operand.hbm [shape: f32[16,128], index: 1, kind: input, shape index: {}]
  %s2 = inlined_call_operand.hbm [shape: f32[8,1,128], index: 2, kind: input, shape index: {}]
  %s3 = inlined_call_operand.hbm [shape: f32[128,128], index: 3, kind: input, shape index: {}]
  %s4 = inlined_call_operand.hbm [shape: f32[1,128], index: 4, kind: input, shape index: {}]
  %s5 = inlined_call_operand.hbm [shape: f32[1,128], index: 5, kind: input, shape index: {}]
  %s6 = inlined_call_operand.hbm [shape: f32[2,1,128], index: 6, kind: input, shape index: {}]
  %s7 = inlined_call_operand.hbm [shape: f32[2,1,128], index: 7, kind: input, shape index: {}]
  %s8 = inlined_call_operand.hbm [shape: bf16[2,128,384], index: 8, kind: input, shape index: {}]
  %s9 = inlined_call_operand.vmem [shape: f32[2,1,384], index: 9, kind: input, shape index: {}]
  %s10 = inlined_call_operand.hbm [shape: bf16[2,128,128], index: 10, kind: input, shape index: {}]
  %s11 = inlined_call_operand.hbm [shape: f32[2,1,128], index: 11, kind: input, shape index: {}]
  %s12 = inlined_call_operand.hbm [shape: f32[2,1,128], index: 12, kind: input, shape index: {}]
  %s13 = inlined_call_operand.vmem [shape: f32[2,1,128], index: 13, kind: input, shape index: {}]
  %s14 = inlined_call_operand.hbm [shape: bf16[2,128,256], index: 14, kind: input, shape index: {}]
  %s15 = inlined_call_operand.vmem [shape: f32[2,1,256], index: 15, kind: input, shape index: {}]
  %s16 = inlined_call_operand.hbm [shape: bf16[2,256,128], index: 16, kind: input, shape index: {}]
  %s17 = inlined_call_operand.vmem [shape: f32[2,1,128], index: 17, kind: input, shape index: {}]
  %s18 = inlined_call_operand.vmem [shape: f32[1,128], index: 18, kind: input, shape index: {}]
  %s19 = inlined_call_operand.vmem [shape: f32[1,128], index: 19, kind: input, shape index: {}]
  %s20 = inlined_call_operand.hbm [shape: bf16[128,128], index: 20, kind: input, shape index: {}]
  %s21 = inlined_call_operand.vmem [shape: f32[1,128], index: 21, kind: input, shape index: {}]
  %s22 = inlined_call_operand.hbm [shape: f32[4,16,128], index: 22, kind: output, shape index: {}]
  %s23 = sld [smem:[#allocation0]]
  $region189: #{tpu_custom_call.1} parent=0
    _
  %s25 = ssub.s32 1, %s23
  %s26 = scalar_select 0, %s25, %s23
  $region1: #{tpu_custom_call.1} parent=0
    #allocation3 [shape = 'u8[32768]{0}', space=vmem, size = 0x8000, scoped, tag = 'input window, operand 0, single buffered']
    #allocation4 [shape = 's32[2]{0}', space=sflag, size = 0x8, scoped, tag = 'scoped memory for tpu_custom_call.1']
    #allocation5 [shape = 's32[2]{0}', space=sflag, size = 0x8, scoped, tag = 'scoped memory for tpu_custom_call.1']
    #allocation6 [shape = 'u8[8192]{0}', space=vmem, size = 0x2000, scoped, tag = 'input window, operand 1, single buffered']
    #allocation7 [shape = 's32[1]{0}', space=sflag, size = 0x4, scoped, tag = 'scoped memory for tpu_custom_call.1']
    #allocation8 [shape = 'u8[4096]{0}', space=vmem, size = 0x1000, scoped, tag = 'input window, operand 2, single buffered']
    #allocation9 [shape = 'u8[65536]{0}', space=vmem, size = 0x10000, scoped, tag = 'input window, operand 3, single buffered']
    #allocation10 [shape = 's32[1]{0}', space=sflag, size = 0x4, scoped, tag = 'scoped memory for tpu_custom_call.1']
    #allocation11 [shape = 'u8[512]{0}', space=vmem, size = 0x400, scoped, tag = 'input window, operand 4, single buffered']
    #allocation12 [shape = 'u8[512]{0}', space=vmem, size = 0x400, scoped, tag = 'input window, operand 5, single buffered']
    #allocation13 [shape = 's32[1]{0}', space=sflag, size = 0x4, scoped, tag = 'scoped memory for tpu_custom_call.1']
    #allocation14 [shape = 'u8[1024]{0}', space=vmem, size = 0x400, scoped, tag = 'input window, operand 6']
    #allocation15 [shape = 'u8[1024]{0}', space=vmem, size = 0x400, scoped, tag = 'input window, operand 7']
    #allocation16 [shape = 'u8[196608]{0}', space=vmem, size = 0x30000, scoped, tag = 'input window, operand 8']
    #allocation17 [shape = 'u8[65536]{0}', space=vmem, size = 0x10000, scoped, tag = 'input window, operand 10']
    #allocation18 [shape = 'u8[1024]{0}', space=vmem, size = 0x400, scoped, tag = 'input window, operand 11']
    #allocation19 [shape = 'u8[1024]{0}', space=vmem, size = 0x400, scoped, tag = 'input window, operand 12']
    #allocation20 [shape = 'u8[131072]{0}', space=vmem, size = 0x20000, scoped, tag = 'input window, operand 14']
    #allocation21 [shape = 'u8[131072]{0}', space=vmem, size = 0x20000, scoped, tag = 'input window, operand 16']
    #allocation22 [shape = 'u8[32768]{0}', space=vmem, size = 0x8000, scoped, tag = 'input window, operand 20, single buffered']
    #allocation23 [shape = 'u8[32768]{0}', space=vmem, size = 0x8000, scoped, tag = 'output window, operand 0, single buffered']
    %27 = vsyncpa [#allocation4], 0
    %28 = vsyncpa [#allocation7], 0
    %29 = vsyncpa [#allocation10], 0
    %30 = vsyncpa [#allocation13], 0
    %31 = vsyncpa [#allocation5], 0
    loop: start=0, step=1, limit=4
    $region2: #{tpu_custom_call.1} parent=1 // loop_pre_header
      _
    $region3: #{tpu_custom_call.1} parent=1 // loop_header
      %s33 = sphi 0, %s37
      %p34 = scmp.ge.s32.totalorder %s33, 4
      %s40 = sphi 0, %s52
      %s41 = sphi 0, %s48
      %s42 = sphi 0, %s40
      %s43 = sphi 0, %s41
      %s44 = sphi 0, %s42
      %s45 = sphi 0, %s43
      %s55 = sphi 0, %s57
      %s58 = sphi 0, %s55
      %s59 = sphi 0, %s58
      %s75 = sphi 0, %s59
      %s79 = sphi 0, %s79
      %s81 = sphi 0, %s79
      %s82 = sphi 0, %s81
      %s96 = sphi 0, %s82
      %s100 = sphi 0, %s100
      %s102 = sphi 0, %s100
      %s103 = sphi 0, %s102
      %s117 = sphi 0, %s103
      %s121 = sphi 0, %s121
      %s123 = sphi 0, %s121
      %s124 = sphi 0, %s123
      %s138 = sphi 0, %s124
      %s142 = sphi 0, %s142
      %s144 = sphi 0, %s142
      %s145 = sphi 0, %s144
      %s159 = sphi 0, %s145
      %s163 = sphi 0, %s163
      %s165 = sphi 0, %s163
      %s166 = sphi 0, %s165
      %s180 = sphi 0, %s166
      %s186 = sphi 0, %s188
      %s189 = sphi 0, %s186
      %s190 = sphi 0, %s189
      %s206 = sphi 0, %s190
      %s212 = sphi 0, %s214
      %s215 = sphi 0, %s212
      %s216 = sphi 0, %s215
      %s232 = sphi 0, %s216
      %s238 = sphi 0, %s240
      %s241 = sphi 0, %s238
      %s242 = sphi 0, %s241
      %s258 = sphi 0, %s242
      %s264 = sphi 0, %s266
      %s267 = sphi 0, %s264
      %s268 = sphi 0, %s267
      %s284 = sphi 0, %s268
      %s290 = sphi 0, %s292
      %s293 = sphi 0, %s290
      %s294 = sphi 0, %s293
      %s310 = sphi 0, %s294
      %s316 = sphi 0, %s318
      %s319 = sphi 0, %s316
      %s320 = sphi 0, %s319
      %s336 = sphi 0, %s320
      %s342 = sphi 0, %s344
      %s345 = sphi 0, %s342
      %s346 = sphi 0, %s345
      %s362 = sphi 0, %s346
      %s368 = sphi 0, %s370
      %s371 = sphi 0, %s368
      %s372 = sphi 0, %s371
      %s388 = sphi 0, %s372
      %s394 = sphi 0, %s396
      %s397 = sphi 0, %s394
      %s398 = sphi 0, %s397
      %s414 = sphi 0, %s398
      %s420 = sphi 0, %s422
      %s423 = sphi 0, %s420
      %s424 = sphi 0, %s423
      %s440 = sphi 0, %s424
      %s446 = sphi 0, %s448
      %s449 = sphi 0, %s446
      %s450 = sphi 0, %s449
      %s466 = sphi 0, %s450
      %s472 = sphi 0, %s474
      %s475 = sphi 0, %s472
      %s476 = sphi 0, %s475
      %s492 = sphi 0, %s476
      %s496 = sphi 0, %s496
      %s498 = sphi 0, %s496
      %s499 = sphi 0, %s498
      %s513 = sphi 0, %s499
      %s517 = sphi 0, %s517
      %s519 = sphi 0, %s517
      %s520 = sphi 0, %s519
      %s534 = sphi 0, %s520
      %s538 = sphi 0, %s538
      %s540 = sphi 0, %s538
      %s541 = sphi 0, %s540
      %s555 = sphi 0, %s541
      %s559 = sphi 0, %s559
      %s561 = sphi 0, %s559
      %s562 = sphi 0, %s561
      %s576 = sphi 0, %s562
      %s582 = sphi 0, %s584
      %s585 = sphi 0, %s582
      %s586 = sphi 0, %s585
      %s602 = sphi 0, %s586
    $region4: #{tpu_custom_call.1} parent=1 // loop_header_branch
      %36 = sbr.rel (%p34) target = $region8
    $region5: #{tpu_custom_call.1} parent=1 // loop_body
      %s38 = ssub.s32 %s33, 1
      %s39 = ssub.s32 %s33, 2
      %s46 = sadd.s32 1, %s41
      %p47 = scmp.ge.s32.totalorder %s46, 2
      %s48 = scalar_select %p47, 0, %s46
      %s49 = sadd.s32 1, %s40
      %s50 = scalar_select %p47, %s49, %s40
      %p51 = scmp.ge.s32.totalorder %s50, 1
      %s52 = scalar_select %p51, 0, %s50
      %s53 = ssub.s32 %s40, %s52
      %p54 = scmp.eq.s32.totalorder %s53, 0
      %s56 = sadd.s32 %s55, 1
      %s57 = scalar_select %p54, %s55, %s56
      %p60 = pneg %p54
      %p61 = scmp.eq.s32.totalorder %s33, 1
      %p62 = por %p60, %p61
      %p63 = scmp.ne.s32.totalorder %s55, %s58
      %p64 = scmp.eq.s32.totalorder %s33, 0
      %p65 = por %p63, %p64
      %p66 = scmp.ne.s32.totalorder %s55, %s58
      %p67 = scmp.eq.s32.totalorder %s38, 1
      %p68 = por %p66, %p67
      %p69 = scmp.ne.s32.totalorder %s58, %s59
      %p70 = scmp.eq.s32.totalorder %s38, 0
      %p71 = por %p69, %p70
      %p72 = scmp.ne.s32.totalorder %s58, %s59
      %p73 = scmp.eq.s32.totalorder %s39, 1
      %p74 = por %p72, %p73
      %p76 = scmp.ne.s32.totalorder %s59, %s75
      %p77 = scmp.eq.s32.totalorder %s39, 0
      %p78 = por %p76, %p77
      %s80 = sadd.s32 %s79, 1
      %p83 = scmp.eq.s32.totalorder %s33, 1
      %p84 = scmp.ne.s32.totalorder %s79, %s81
      %p85 = scmp.eq.s32.totalorder %s33, 0
      %p86 = por %p84, %p85
      %p87 = scmp.ne.s32.totalorder %s79, %s81
      %p88 = scmp.eq.s32.totalorder %s38, 1
      %p89 = por %p87, %p88
      %p90 = scmp.ne.s32.totalorder %s81, %s82
      %p91 = scmp.eq.s32.totalorder %s38, 0
      %p92 = por %p90, %p91
      %p93 = scmp.ne.s32.totalorder %s81, %s82
      %p94 = scmp.eq.s32.totalorder %s39, 1
      %p95 = por %p93, %p94
      %p97 = scmp.ne.s32.totalorder %s82, %s96
      %p98 = scmp.eq.s32.totalorder %s39, 0
      %p99 = por %p97, %p98
      %s101 = sadd.s32 %s100, 1
      %p104 = scmp.eq.s32.totalorder %s33, 1
      %p105 = scmp.ne.s32.totalorder %s100, %s102
      %p106 = scmp.eq.s32.totalorder %s33, 0
      %p107 = por %p105, %p106
      %p108 = scmp.ne.s32.totalorder %s100, %s102
      %p109 = scmp.eq.s32.totalorder %s38, 1
      %p110 = por %p108, %p109
      %p111 = scmp.ne.s32.totalorder %s102, %s103
      %p112 = scmp.eq.s32.totalorder %s38, 0
      %p113 = por %p111, %p112
      %p114 = scmp.ne.s32.totalorder %s102, %s103
      %p115 = scmp.eq.s32.totalorder %s39, 1
      %p116 = por %p114, %p115
      %p118 = scmp.ne.s32.totalorder %s103, %s117
      %p119 = scmp.eq.s32.totalorder %s39, 0
      %p120 = por %p118, %p119
      %s122 = sadd.s32 %s121, 1
      %p125 = scmp.eq.s32.totalorder %s33, 1
      %p126 = scmp.ne.s32.totalorder %s121, %s123
      %p127 = scmp.eq.s32.totalorder %s33, 0
      %p128 = por %p126, %p127
      %p129 = scmp.ne.s32.totalorder %s121, %s123
      %p130 = scmp.eq.s32.totalorder %s38, 1
      %p131 = por %p129, %p130
      %p132 = scmp.ne.s32.totalorder %s123, %s124
      %p133 = scmp.eq.s32.totalorder %s38, 0
      %p134 = por %p132, %p133
      %p135 = scmp.ne.s32.totalorder %s123, %s124
      %p136 = scmp.eq.s32.totalorder %s39, 1
      %p137 = por %p135, %p136
      %p139 = scmp.ne.s32.totalorder %s124, %s138
      %p140 = scmp.eq.s32.totalorder %s39, 0
      %p141 = por %p139, %p140
      %s143 = sadd.s32 %s142, 1
      %p146 = scmp.eq.s32.totalorder %s33, 1
      %p147 = scmp.ne.s32.totalorder %s142, %s144
      %p148 = scmp.eq.s32.totalorder %s33, 0
      %p149 = por %p147, %p148
      %p150 = scmp.ne.s32.totalorder %s142, %s144
      %p151 = scmp.eq.s32.totalorder %s38, 1
      %p152 = por %p150, %p151
      %p153 = scmp.ne.s32.totalorder %s144, %s145
      %p154 = scmp.eq.s32.totalorder %s38, 0
      %p155 = por %p153, %p154
      %p156 = scmp.ne.s32.totalorder %s144, %s145
      %p157 = scmp.eq.s32.totalorder %s39, 1
      %p158 = por %p156, %p157
      %p160 = scmp.ne.s32.totalorder %s145, %s159
      %p161 = scmp.eq.s32.totalorder %s39, 0
      %p162 = por %p160, %p161
      %s164 = sadd.s32 %s163, 1
      %p167 = scmp.eq.s32.totalorder %s33, 1
      %p168 = scmp.ne.s32.totalorder %s163, %s165
      %p169 = scmp.eq.s32.totalorder %s33, 0
      %p170 = por %p168, %p169
      %p171 = scmp.ne.s32.totalorder %s163, %s165
      %p172 = scmp.eq.s32.totalorder %s38, 1
      %p173 = por %p171, %p172
      %p174 = scmp.ne.s32.totalorder %s165, %s166
      %p175 = scmp.eq.s32.totalorder %s38, 0
      %p176 = por %p174, %p175
      %p177 = scmp.ne.s32.totalorder %s165, %s166
      %p178 = scmp.eq.s32.totalorder %s39, 1
      %p179 = por %p177, %p178
      %p181 = scmp.ne.s32.totalorder %s166, %s180
      %p182 = scmp.eq.s32.totalorder %s39, 0
      %p183 = por %p181, %p182
      %s184 = ssub.s32 %s41, %s48
      %p185 = scmp.eq.s32.totalorder %s184, 0
      %s187 = sadd.s32 %s186, 1
      %s188 = scalar_select %p185, %s186, %s187
      %p191 = pneg %p185
      %p192 = scmp.eq.s32.totalorder %s33, 1
      %p193 = por %p191, %p192
      %p194 = scmp.ne.s32.totalorder %s186, %s189
      %p195 = scmp.eq.s32.totalorder %s33, 0
      %p196 = por %p194, %p195
      %p197 = scmp.ne.s32.totalorder %s186, %s189
      %p198 = scmp.eq.s32.totalorder %s38, 1
      %p199 = por %p197, %p198
      %p200 = scmp.ne.s32.totalorder %s189, %s190
      %p201 = scmp.eq.s32.totalorder %s38, 0
      %p202 = por %p200, %p201
      %p203 = scmp.ne.s32.totalorder %s189, %s190
      %p204 = scmp.eq.s32.totalorder %s39, 1
      %p205 = por %p203, %p204
      %p207 = scmp.ne.s32.totalorder %s190, %s206
      %p208 = scmp.eq.s32.totalorder %s39, 0
      %p209 = por %p207, %p208
      %s210 = ssub.s32 %s41, %s48
      %p211 = scmp.eq.s32.totalorder %s210, 0
      %s213 = sadd.s32 %s212, 1
      %s214 = scalar_select %p211, %s212, %s213
      %p217 = pneg %p211
      %p218 = scmp.eq.s32.totalorder %s33, 1
      %p219 = por %p217, %p218
      %p220 = scmp.ne.s32.totalorder %s212, %s215
      %p221 = scmp.eq.s32.totalorder %s33, 0
      %p222 = por %p220, %p221
      %p223 = scmp.ne.s32.totalorder %s212, %s215
      %p224 = scmp.eq.s32.totalorder %s38, 1
      %p225 = por %p223, %p224
      %p226 = scmp.ne.s32.totalorder %s215, %s216
      %p227 = scmp.eq.s32.totalorder %s38, 0
      %p228 = por %p226, %p227
      %p229 = scmp.ne.s32.totalorder %s215, %s216
      %p230 = scmp.eq.s32.totalorder %s39, 1
      %p231 = por %p229, %p230
      %p233 = scmp.ne.s32.totalorder %s216, %s232
      %p234 = scmp.eq.s32.totalorder %s39, 0
      %p235 = por %p233, %p234
      %s236 = ssub.s32 %s41, %s48
      %p237 = scmp.eq.s32.totalorder %s236, 0
      %s239 = sadd.s32 %s238, 1
      %s240 = scalar_select %p237, %s238, %s239
      %p243 = pneg %p237
      %p244 = scmp.eq.s32.totalorder %s33, 1
      %p245 = por %p243, %p244
      %p246 = scmp.ne.s32.totalorder %s238, %s241
      %p247 = scmp.eq.s32.totalorder %s33, 0
      %p248 = por %p246, %p247
      %p249 = scmp.ne.s32.totalorder %s238, %s241
      %p250 = scmp.eq.s32.totalorder %s38, 1
      %p251 = por %p249, %p250
      %p252 = scmp.ne.s32.totalorder %s241, %s242
      %p253 = scmp.eq.s32.totalorder %s38, 0
      %p254 = por %p252, %p253
      %p255 = scmp.ne.s32.totalorder %s241, %s242
      %p256 = scmp.eq.s32.totalorder %s39, 1
      %p257 = por %p255, %p256
      %p259 = scmp.ne.s32.totalorder %s242, %s258
      %p260 = scmp.eq.s32.totalorder %s39, 0
      %p261 = por %p259, %p260
      %s262 = ssub.s32 %s41, %s48
      %p263 = scmp.eq.s32.totalorder %s262, 0
      %s265 = sadd.s32 %s264, 1
      %s266 = scalar_select %p263, %s264, %s265
      %p269 = pneg %p263
      %p270 = scmp.eq.s32.totalorder %s33, 1
      %p271 = por %p269, %p270
      %p272 = scmp.ne.s32.totalorder %s264, %s267
      %p273 = scmp.eq.s32.totalorder %s33, 0
      %p274 = por %p272, %p273
      %p275 = scmp.ne.s32.totalorder %s264, %s267
      %p276 = scmp.eq.s32.totalorder %s38, 1
      %p277 = por %p275, %p276
      %p278 = scmp.ne.s32.totalorder %s267, %s268
      %p279 = scmp.eq.s32.totalorder %s38, 0
      %p280 = por %p278, %p279
      %p281 = scmp.ne.s32.totalorder %s267, %s268
      %p282 = scmp.eq.s32.totalorder %s39, 1
      %p283 = por %p281, %p282
      %p285 = scmp.ne.s32.totalorder %s268, %s284
      %p286 = scmp.eq.s32.totalorder %s39, 0
      %p287 = por %p285, %p286
      %s288 = ssub.s32 %s41, %s48
      %p289 = scmp.eq.s32.totalorder %s288, 0
      %s291 = sadd.s32 %s290, 1
      %s292 = scalar_select %p289, %s290, %s291
      %p295 = pneg %p289
      %p296 = scmp.eq.s32.totalorder %s33, 1
      %p297 = por %p295, %p296
      %p298 = scmp.ne.s32.totalorder %s290, %s293
      %p299 = scmp.eq.s32.totalorder %s33, 0
      %p300 = por %p298, %p299
      %p301 = scmp.ne.s32.totalorder %s290, %s293
      %p302 = scmp.eq.s32.totalorder %s38, 1
      %p303 = por %p301, %p302
      %p304 = scmp.ne.s32.totalorder %s293, %s294
      %p305 = scmp.eq.s32.totalorder %s38, 0
      %p306 = por %p304, %p305
      %p307 = scmp.ne.s32.totalorder %s293, %s294
      %p308 = scmp.eq.s32.totalorder %s39, 1
      %p309 = por %p307, %p308
      %p311 = scmp.ne.s32.totalorder %s294, %s310
      %p312 = scmp.eq.s32.totalorder %s39, 0
      %p313 = por %p311, %p312
      %s314 = ssub.s32 %s41, %s48
      %p315 = scmp.eq.s32.totalorder %s314, 0
      %s317 = sadd.s32 %s316, 1
      %s318 = scalar_select %p315, %s316, %s317
      %p321 = pneg %p315
      %p322 = scmp.eq.s32.totalorder %s33, 1
      %p323 = por %p321, %p322
      %p324 = scmp.ne.s32.totalorder %s316, %s319
      %p325 = scmp.eq.s32.totalorder %s33, 0
      %p326 = por %p324, %p325
      %p327 = scmp.ne.s32.totalorder %s316, %s319
      %p328 = scmp.eq.s32.totalorder %s38, 1
      %p329 = por %p327, %p328
      %p330 = scmp.ne.s32.totalorder %s319, %s320
      %p331 = scmp.eq.s32.totalorder %s38, 0
      %p332 = por %p330, %p331
      %p333 = scmp.ne.s32.totalorder %s319, %s320
      %p334 = scmp.eq.s32.totalorder %s39, 1
      %p335 = por %p333, %p334
      %p337 = scmp.ne.s32.totalorder %s320, %s336
      %p338 = scmp.eq.s32.totalorder %s39, 0
      %p339 = por %p337, %p338
      %s340 = ssub.s32 %s41, %s48
      %p341 = scmp.eq.s32.totalorder %s340, 0
      %s343 = sadd.s32 %s342, 1
      %s344 = scalar_select %p341, %s342, %s343
      %p347 = pneg %p341
      %p348 = scmp.eq.s32.totalorder %s33, 1
      %p349 = por %p347, %p348
      %p350 = scmp.ne.s32.totalorder %s342, %s345
      %p351 = scmp.eq.s32.totalorder %s33, 0
      %p352 = por %p350, %p351
      %p353 = scmp.ne.s32.totalorder %s342, %s345
      %p354 = scmp.eq.s32.totalorder %s38, 1
      %p355 = por %p353, %p354
      %p356 = scmp.ne.s32.totalorder %s345, %s346
      %p357 = scmp.eq.s32.totalorder %s38, 0
      %p358 = por %p356, %p357
      %p359 = scmp.ne.s32.totalorder %s345, %s346
      %p360 = scmp.eq.s32.totalorder %s39, 1
      %p361 = por %p359, %p360
      %p363 = scmp.ne.s32.totalorder %s346, %s362
      %p364 = scmp.eq.s32.totalorder %s39, 0
      %p365 = por %p363, %p364
      %s366 = ssub.s32 %s41, %s48
      %p367 = scmp.eq.s32.totalorder %s366, 0
      %s369 = sadd.s32 %s368, 1
      %s370 = scalar_select %p367, %s368, %s369
      %p373 = pneg %p367
      %p374 = scmp.eq.s32.totalorder %s33, 1
      %p375 = por %p373, %p374
      %p376 = scmp.ne.s32.totalorder %s368, %s371
      %p377 = scmp.eq.s32.totalorder %s33, 0
      %p378 = por %p376, %p377
      %p379 = scmp.ne.s32.totalorder %s368, %s371
      %p380 = scmp.eq.s32.totalorder %s38, 1
      %p381 = por %p379, %p380
      %p382 = scmp.ne.s32.totalorder %s371, %s372
      %p383 = scmp.eq.s32.totalorder %s38, 0
      %p384 = por %p382, %p383
      %p385 = scmp.ne.s32.totalorder %s371, %s372
      %p386 = scmp.eq.s32.totalorder %s39, 1
      %p387 = por %p385, %p386
      %p389 = scmp.ne.s32.totalorder %s372, %s388
      %p390 = scmp.eq.s32.totalorder %s39, 0
      %p391 = por %p389, %p390
      %s392 = ssub.s32 %s41, %s48
      %p393 = scmp.eq.s32.totalorder %s392, 0
      %s395 = sadd.s32 %s394, 1
      %s396 = scalar_select %p393, %s394, %s395
      %p399 = pneg %p393
      %p400 = scmp.eq.s32.totalorder %s33, 1
      %p401 = por %p399, %p400
      %p402 = scmp.ne.s32.totalorder %s394, %s397
      %p403 = scmp.eq.s32.totalorder %s33, 0
      %p404 = por %p402, %p403
      %p405 = scmp.ne.s32.totalorder %s394, %s397
      %p406 = scmp.eq.s32.totalorder %s38, 1
      %p407 = por %p405, %p406
      %p408 = scmp.ne.s32.totalorder %s397, %s398
      %p409 = scmp.eq.s32.totalorder %s38, 0
      %p410 = por %p408, %p409
      %p411 = scmp.ne.s32.totalorder %s397, %s398
      %p412 = scmp.eq.s32.totalorder %s39, 1
      %p413 = por %p411, %p412
      %p415 = scmp.ne.s32.totalorder %s398, %s414
      %p416 = scmp.eq.s32.totalorder %s39, 0
      %p417 = por %p415, %p416
      %s418 = ssub.s32 %s41, %s48
      %p419 = scmp.eq.s32.totalorder %s418, 0
      %s421 = sadd.s32 %s420, 1
      %s422 = scalar_select %p419, %s420, %s421
      %p425 = pneg %p419
      %p426 = scmp.eq.s32.totalorder %s33, 1
      %p427 = por %p425, %p426
      %p428 = scmp.ne.s32.totalorder %s420, %s423
      %p429 = scmp.eq.s32.totalorder %s33, 0
      %p430 = por %p428, %p429
      %p431 = scmp.ne.s32.totalorder %s420, %s423
      %p432 = scmp.eq.s32.totalorder %s38, 1
      %p433 = por %p431, %p432
      %p434 = scmp.ne.s32.totalorder %s423, %s424
      %p435 = scmp.eq.s32.totalorder %s38, 0
      %p436 = por %p434, %p435
      %p437 = scmp.ne.s32.totalorder %s423, %s424
      %p438 = scmp.eq.s32.totalorder %s39, 1
      %p439 = por %p437, %p438
      %p441 = scmp.ne.s32.totalorder %s424, %s440
      %p442 = scmp.eq.s32.totalorder %s39, 0
      %p443 = por %p441, %p442
      %s444 = ssub.s32 %s41, %s48
      %p445 = scmp.eq.s32.totalorder %s444, 0
      %s447 = sadd.s32 %s446, 1
      %s448 = scalar_select %p445, %s446, %s447
      %p451 = pneg %p445
      %p452 = scmp.eq.s32.totalorder %s33, 1
      %p453 = por %p451, %p452
      %p454 = scmp.ne.s32.totalorder %s446, %s449
      %p455 = scmp.eq.s32.totalorder %s33, 0
      %p456 = por %p454, %p455
      %p457 = scmp.ne.s32.totalorder %s446, %s449
      %p458 = scmp.eq.s32.totalorder %s38, 1
      %p459 = por %p457, %p458
      %p460 = scmp.ne.s32.totalorder %s449, %s450
      %p461 = scmp.eq.s32.totalorder %s38, 0
      %p462 = por %p460, %p461
      %p463 = scmp.ne.s32.totalorder %s449, %s450
      %p464 = scmp.eq.s32.totalorder %s39, 1
      %p465 = por %p463, %p464
      %p467 = scmp.ne.s32.totalorder %s450, %s466
      %p468 = scmp.eq.s32.totalorder %s39, 0
      %p469 = por %p467, %p468
      %s470 = ssub.s32 %s41, %s48
      %p471 = scmp.eq.s32.totalorder %s470, 0
      %s473 = sadd.s32 %s472, 1
      %s474 = scalar_select %p471, %s472, %s473
      %p477 = pneg %p471
      %p478 = scmp.eq.s32.totalorder %s33, 1
      %p479 = por %p477, %p478
      %p480 = scmp.ne.s32.totalorder %s472, %s475
      %p481 = scmp.eq.s32.totalorder %s33, 0
      %p482 = por %p480, %p481
      %p483 = scmp.ne.s32.totalorder %s472, %s475
      %p484 = scmp.eq.s32.totalorder %s38, 1
      %p485 = por %p483, %p484
      %p486 = scmp.ne.s32.totalorder %s475, %s476
      %p487 = scmp.eq.s32.totalorder %s38, 0
      %p488 = por %p486, %p487
      %p489 = scmp.ne.s32.totalorder %s475, %s476
      %p490 = scmp.eq.s32.totalorder %s39, 1
      %p491 = por %p489, %p490
      %p493 = scmp.ne.s32.totalorder %s476, %s492
      %p494 = scmp.eq.s32.totalorder %s39, 0
      %p495 = por %p493, %p494
      %s497 = sadd.s32 %s496, 1
      %p500 = scmp.eq.s32.totalorder %s33, 1
      %p501 = scmp.ne.s32.totalorder %s496, %s498
      %p502 = scmp.eq.s32.totalorder %s33, 0
      %p503 = por %p501, %p502
      %p504 = scmp.ne.s32.totalorder %s496, %s498
      %p505 = scmp.eq.s32.totalorder %s38, 1
      %p506 = por %p504, %p505
      %p507 = scmp.ne.s32.totalorder %s498, %s499
      %p508 = scmp.eq.s32.totalorder %s38, 0
      %p509 = por %p507, %p508
      %p510 = scmp.ne.s32.totalorder %s498, %s499
      %p511 = scmp.eq.s32.totalorder %s39, 1
      %p512 = por %p510, %p511
      %p514 = scmp.ne.s32.totalorder %s499, %s513
      %p515 = scmp.eq.s32.totalorder %s39, 0
      %p516 = por %p514, %p515
      %s518 = sadd.s32 %s517, 1
      %p521 = scmp.eq.s32.totalorder %s33, 1
      %p522 = scmp.ne.s32.totalorder %s517, %s519
      %p523 = scmp.eq.s32.totalorder %s33, 0
      %p524 = por %p522, %p523
      %p525 = scmp.ne.s32.totalorder %s517, %s519
      %p526 = scmp.eq.s32.totalorder %s38, 1
      %p527 = por %p525, %p526
      %p528 = scmp.ne.s32.totalorder %s519, %s520
      %p529 = scmp.eq.s32.totalorder %s38, 0
      %p530 = por %p528, %p529
      %p531 = scmp.ne.s32.totalorder %s519, %s520
      %p532 = scmp.eq.s32.totalorder %s39, 1
      %p533 = por %p531, %p532
      %p535 = scmp.ne.s32.totalorder %s520, %s534
      %p536 = scmp.eq.s32.totalorder %s39, 0
      %p537 = por %p535, %p536
      %s539 = sadd.s32 %s538, 1
      %p542 = scmp.eq.s32.totalorder %s33, 1
      %p543 = scmp.ne.s32.totalorder %s538, %s540
      %p544 = scmp.eq.s32.totalorder %s33, 0
      %p545 = por %p543, %p544
      %p546 = scmp.ne.s32.totalorder %s538, %s540
      %p547 = scmp.eq.s32.totalorder %s38, 1
      %p548 = por %p546, %p547
      %p549 = scmp.ne.s32.totalorder %s540, %s541
      %p550 = scmp.eq.s32.totalorder %s38, 0
      %p551 = por %p549, %p550
      %p552 = scmp.ne.s32.totalorder %s540, %s541
      %p553 = scmp.eq.s32.totalorder %s39, 1
      %p554 = por %p552, %p553
      %p556 = scmp.ne.s32.totalorder %s541, %s555
      %p557 = scmp.eq.s32.totalorder %s39, 0
      %p558 = por %p556, %p557
      %s560 = sadd.s32 %s559, 1
      %p563 = scmp.eq.s32.totalorder %s33, 1
      %p564 = scmp.ne.s32.totalorder %s559, %s561
      %p565 = scmp.eq.s32.totalorder %s33, 0
      %p566 = por %p564, %p565
      %p567 = scmp.ne.s32.totalorder %s559, %s561
      %p568 = scmp.eq.s32.totalorder %s38, 1
      %p569 = por %p567, %p568
      %p570 = scmp.ne.s32.totalorder %s561, %s562
      %p571 = scmp.eq.s32.totalorder %s38, 0
      %p572 = por %p570, %p571
      %p573 = scmp.ne.s32.totalorder %s561, %s562
      %p574 = scmp.eq.s32.totalorder %s39, 1
      %p575 = por %p573, %p574
      %p577 = scmp.ne.s32.totalorder %s562, %s576
      %p578 = scmp.eq.s32.totalorder %s39, 0
      %p579 = por %p577, %p578
      %s580 = ssub.s32 %s40, %s52
      %p581 = scmp.eq.s32.totalorder %s580, 0
      %s583 = sadd.s32 %s582, 1
      %s584 = scalar_select %p581, %s582, %s583
      %p587 = pneg %p581
      %p588 = scmp.eq.s32.totalorder %s33, 1
      %p589 = por %p587, %p588
      %p590 = scmp.ne.s32.totalorder %s582, %s585
      %p591 = scmp.eq.s32.totalorder %s33, 0
      %p592 = por %p590, %p591
      %p593 = scmp.ne.s32.totalorder %s582, %s585
      %p594 = scmp.eq.s32.totalorder %s38, 1
      %p595 = por %p593, %p594
      %p596 = scmp.ne.s32.totalorder %s585, %s586
      %p597 = scmp.eq.s32.totalorder %s38, 0
      %p598 = por %p596, %p597
      %p599 = scmp.ne.s32.totalorder %s585, %s586
      %p600 = scmp.eq.s32.totalorder %s39, 1
      %p601 = por %p599, %p600
      %p603 = scmp.ne.s32.totalorder %s586, %s602
      %p604 = scmp.eq.s32.totalorder %s39, 0
      %p605 = por %p603, %p604
      %p606 = scmp.le.s32.totalorder 1, %s33
      %p607 = scmp.lt.s32.totalorder %s33, 3
      %p608 = pnand %p606, %p607
      %p609 = pneg %p608
      // Predicated region
      $region9: #{tpu_custom_call.1} parent=5 // pred_check
        _
      $region10: #{tpu_custom_call.1} parent=5 // pred_check_branch
        %611 = sbr.rel (%p608) target = $region12
      $region11: #{tpu_custom_call.1} parent=5 // pred_region
        %s612 = ssub.s32 %s33, 1
        // Predicated region
        $region13: #{tpu_custom_call.1} parent=11 // pred_check
          %p613 = pneg %p71
        $region14: #{tpu_custom_call.1} parent=11 // pred_check_branch
          %615 = sbr.rel (%p613) target = $region16
        $region15: #{tpu_custom_call.1} parent=11 // pred_region
          %s616 = smul.u32 4, %s42
          %618 = vsyncadd [#allocation4], 0
          %s619 = smul.addr %s616, 2
          %s620 = smul.addr %s619, 8
          %s621 = scalar_lea.hbm %s0, %s620
          %s622 = sshll.u32 %s621, 4
          %s623 = int_to_ptr.hbm [resolvable:$true] %s622
          %s624 = sshll.u32 [#allocation3], 4
          %s625 = int_to_ptr.vmem [resolvable:$true] %s624
          %630 = dma.hbm_to_vmem [thread:$0]  %s623, 1024, %s625, [#allocation4], 128, 128, 8
        $region16: #{tpu_custom_call.1} parent=11 // pred_fallthru
          _
        // Predicated region
        $region17: #{tpu_custom_call.1} parent=11 // pred_check
          %p631 = pneg %p92
        $region18: #{tpu_custom_call.1} parent=11 // pred_check_branch
          %633 = sbr.rel (%p631) target = $region20
        $region19: #{tpu_custom_call.1} parent=11 // pred_region
          %635 = vsyncadd [#allocation7], 0
          %s636 = sshll.u32 %s1, 4
          %s637 = int_to_ptr.hbm [resolvable:$true] %s636
          %s638 = sshll.u32 [#allocation6], 4
          %s639 = int_to_ptr.vmem [resolvable:$true] %s638
          %644 = dma.hbm_to_vmem [thread:$0]  %s637, 256, %s639, [#allocation7], 128, 128, 8
        $region20: #{tpu_custom_call.1} parent=11 // pred_fallthru
          _
        // Predicated region
        $region21: #{tpu_custom_call.1} parent=11 // pred_check
          %p645 = pneg %p113
        $region22: #{tpu_custom_call.1} parent=11 // pred_check_branch
          %647 = sbr.rel (%p645) target = $region24
        $region23: #{tpu_custom_call.1} parent=11 // pred_region
          %649 = vsyncadd [#allocation7], 0
          %s650 = sshll.u32 %s2, 4
          %s651 = int_to_ptr.hbm [resolvable:$true] %s650
          %s652 = sshll.u32 [#allocation8], 4
          %s653 = int_to_ptr.vmem [resolvable:$true] %s652
          %658 = dma.hbm_to_vmem [thread:$0]  %s651, 128, %s653, [#allocation7], 16, 16, 1
        $region24: #{tpu_custom_call.1} parent=11 // pred_fallthru
          _
        // Predicated region
        $region25: #{tpu_custom_call.1} parent=11 // pred_check
          %p659 = pneg %p134
        $region26: #{tpu_custom_call.1} parent=11 // pred_check_branch
          %661 = sbr.rel (%p659) target = $region28
        $region27: #{tpu_custom_call.1} parent=11 // pred_region
          %663 = vsyncadd [#allocation10], 0
          %s664 = sshll.u32 %s3, 4
          %s665 = int_to_ptr.hbm [resolvable:$true] %s664
          %s666 = sshll.u32 [#allocation9], 4
          %s667 = int_to_ptr.vmem [resolvable:$true] %s666
          %672 = dma.hbm_to_vmem [thread:$0]  %s665, 2048, %s667, [#allocation10], 128, 128, 8
        $region28: #{tpu_custom_call.1} parent=11 // pred_fallthru
          _
        // Predicated region
        $region29: #{tpu_custom_call.1} parent=11 // pred_check
          %p673 = pneg %p155
        $region30: #{tpu_custom_call.1} parent=11 // pred_check_branch
          %675 = sbr.rel (%p673) target = $region32
        $region31: #{tpu_custom_call.1} parent=11 // pred_region
          %677 = vsyncadd [#allocation10], 0
          %s679 = sshll.u32 %s4, 4
          %s680 = int_to_ptr.hbm [resolvable:$true] %s679
          %s681 = sshll.u32 [#allocation11], 4
          %s682 = int_to_ptr.vmem [resolvable:$true] %s681
          %684 = dma.hbm_to_vmem [thread:$0]  %s680, 16, %s682, [#allocation10]
        $region32: #{tpu_custom_call.1} parent=11 // pred_fallthru
          _
        // Predicated region
        $region33: #{tpu_custom_call.1} parent=11 // pred_check
          %p685 = pneg %p176
        $region34: #{tpu_custom_call.1} parent=11 // pred_check_branch
          %687 = sbr.rel (%p685) target = $region36
        $region35: #{tpu_custom_call.1} parent=11 // pred_region
          %689 = vsyncadd [#allocation13], 0
          %s691 = sshll.u32 %s5, 4
          %s692 = int_to_ptr.hbm [resolvable:$true] %s691
          %s693 = sshll.u32 [#allocation12], 4
          %s694 = int_to_ptr.vmem [resolvable:$true] %s693
          %696 = dma.hbm_to_vmem [thread:$0]  %s692, 16, %s694, [#allocation13]
        $region36: #{tpu_custom_call.1} parent=11 // pred_fallthru
          _
        // Predicated region
        $region37: #{tpu_custom_call.1} parent=11 // pred_check
          %p697 = pneg %p509
        $region38: #{tpu_custom_call.1} parent=11 // pred_check_branch
          %699 = sbr.rel (%p697) target = $region40
        $region39: #{tpu_custom_call.1} parent=11 // pred_region
          _
        $region40: #{tpu_custom_call.1} parent=11 // pred_fallthru
          _
        // Predicated region
        $region41: #{tpu_custom_call.1} parent=11 // pred_check
          %p700 = pneg %p530
        $region42: #{tpu_custom_call.1} parent=11 // pred_check_branch
          %702 = sbr.rel (%p700) target = $region44
        $region43: #{tpu_custom_call.1} parent=11 // pred_region
          _
        $region44: #{tpu_custom_call.1} parent=11 // pred_fallthru
          _
        // Predicated region
        $region45: #{tpu_custom_call.1} parent=11 // pred_check
          %p703 = pneg %p551
        $region46: #{tpu_custom_call.1} parent=11 // pred_check_branch
          %705 = sbr.rel (%p703) target = $region48
        $region47: #{tpu_custom_call.1} parent=11 // pred_region
          %707 = vsyncadd [#allocation7], 0
          %s708 = sshll.u32 %s20, 4
          %s709 = int_to_ptr.hbm [resolvable:$true] %s708
          %s710 = sshll.u32 [#allocation22], 4
          %s711 = int_to_ptr.vmem [resolvable:$true] %s710
          %716 = dma.hbm_to_vmem [thread:$0]  %s709, 1024, %s711, [#allocation7], 64, 64, 4
        $region48: #{tpu_custom_call.1} parent=11 // pred_fallthru
          _
        // Predicated region
        $region49: #{tpu_custom_call.1} parent=11 // pred_check
          %p717 = pneg %p572
        $region50: #{tpu_custom_call.1} parent=11 // pred_check_branch
          %719 = sbr.rel (%p717) target = $region52
        $region51: #{tpu_custom_call.1} parent=11 // pred_region
          _
        $region52: #{tpu_custom_call.1} parent=11 // pred_fallthru
          _
      $region12: #{tpu_custom_call.1} parent=5 // pred_fallthru
        _
      %p720 = scmp.lt.s32.totalorder %s33, 2
      // Predicated region
      $region53: #{tpu_custom_call.1} parent=5 // pred_check
        %p721 = pneg %p720
      $region54: #{tpu_custom_call.1} parent=5 // pred_check_branch
        %723 = sbr.rel (%p721) target = $region56
      $region55: #{tpu_custom_call.1} parent=5 // pred_region
        // Predicated region
        $region57: #{tpu_custom_call.1} parent=55 // pred_check
          %p724 = pneg %p196
        $region58: #{tpu_custom_call.1} parent=55 // pred_check_branch
          %726 = sbr.rel (%p724) target = $region60
        $region59: #{tpu_custom_call.1} parent=55 // pred_region
          %s727 = sand.u32 %s33, 1
          %s728 = scalar_lea.sflag [#allocation4], %s727
          %s729 = sand.u32 %s186, 1
          %s730 = scalar_lea.vmem [#allocation14], %s729
          %732 = vsyncadd %s728, 0
          %s733 = scalar_lea.hbm %s6, %s41
          %s735 = sshll.u32 %s733, 4
          %s736 = int_to_ptr.hbm [resolvable:$true] %s735
          %s737 = sshll.u32 %s730, 4
          %s738 = int_to_ptr.vmem [resolvable:$true] %s737
          %740 = dma.hbm_to_vmem [thread:$0]  %s736, 16, %s738, %s728
        $region60: #{tpu_custom_call.1} parent=55 // pred_fallthru
          _
        // Predicated region
        $region61: #{tpu_custom_call.1} parent=55 // pred_check
          %p741 = pneg %p222
        $region62: #{tpu_custom_call.1} parent=55 // pred_check_branch
          %743 = sbr.rel (%p741) target = $region64
        $region63: #{tpu_custom_call.1} parent=55 // pred_region
          %s744 = sand.u32 %s33, 1
          %s745 = scalar_lea.sflag [#allocation4], %s744
          %s746 = sand.u32 %s212, 1
          %s747 = scalar_lea.vmem [#allocation15], %s746
          %749 = vsyncadd %s745, 0
          %s750 = scalar_lea.hbm %s7, %s41
          %s752 = sshll.u32 %s750, 4
          %s753 = int_to_ptr.hbm [resolvable:$true] %s752
          %s754 = sshll.u32 %s747, 4
          %s755 = int_to_ptr.vmem [resolvable:$true] %s754
          %757 = dma.hbm_to_vmem [thread:$0]  %s753, 16, %s755, %s745
        $region64: #{tpu_custom_call.1} parent=55 // pred_fallthru
          _
        // Predicated region
        $region65: #{tpu_custom_call.1} parent=55 // pred_check
          %p758 = pneg %p248
        $region66: #{tpu_custom_call.1} parent=55 // pred_check_branch
          %760 = sbr.rel (%p758) target = $region68
        $region67: #{tpu_custom_call.1} parent=55 // pred_region
          %s761 = sand.u32 %s33, 1
          %s762 = scalar_lea.sflag [#allocation4], %s761
          %s763 = sand.u32 %s238, 1
          %s764 = smul.addr %s763, 192
          %s765 = scalar_lea.vmem [#allocation16], %s764
          %767 = vsyncadd %s762, 0
          %s768 = smul.addr %s41, 48
          %s769 = smul.addr %s768, 4
          %s770 = scalar_lea.hbm %s8, %s769
          %s771 = sshll.u32 %s770, 4
          %s772 = int_to_ptr.hbm [resolvable:$true] %s771
          %s773 = sshll.u32 %s765, 4
          %s774 = int_to_ptr.vmem [resolvable:$true] %s773
          %779 = dma.hbm_to_vmem [thread:$0]  %s772, 3072, %s774, %s762, 192, 192, 12
        $region68: #{tpu_custom_call.1} parent=55 // pred_fallthru
          _
        // Predicated region
        $region69: #{tpu_custom_call.1} parent=55 // pred_check
          %p780 = pneg %p274
        $region70: #{tpu_custom_call.1} parent=55 // pred_check_branch
          %782 = sbr.rel (%p780) target = $region72
        $region71: #{tpu_custom_call.1} parent=55 // pred_region
          %p783 = scmp.lt.s32.totalorder %s41, 1
          %s784 = scalar_select %p783, %s41, 1
          %s785 = smul.addr %s784, 3
          %s786 = scalar_lea.vmem %s9, %s785
        $region72: #{tpu_custom_call.1} parent=55 // pred_fallthru
          _
        // Predicated region
        $region73: #{tpu_custom_call.1} parent=55 // pred_check
          %p787 = pneg %p300
        $region74: #{tpu_custom_call.1} parent=55 // pred_check_branch
          %789 = sbr.rel (%p787) target = $region76
        $region75: #{tpu_custom_call.1} parent=55 // pred_region
          %s790 = sand.u32 %s33, 1
          %s791 = scalar_lea.sflag [#allocation4], %s790
          %s792 = sand.u32 %s290, 1
          %s793 = smul.addr %s792, 64
          %s794 = scalar_lea.vmem [#allocation17], %s793
          %796 = vsyncadd %s791, 0
          %s797 = smul.addr %s41, 16
          %s798 = smul.addr %s797, 4
          %s799 = scalar_lea.hbm %s10, %s798
          %s800 = sshll.u32 %s799, 4
          %s801 = int_to_ptr.hbm [resolvable:$true] %s800
          %s802 = sshll.u32 %s794, 4
          %s803 = int_to_ptr.vmem [resolvable:$true] %s802
          %808 = dma.hbm_to_vmem [thread:$0]  %s801, 1024, %s803, %s791, 64, 64, 4
        $region76: #{tpu_custom_call.1} parent=55 // pred_fallthru
          _
        // Predicated region
        $region77: #{tpu_custom_call.1} parent=55 // pred_check
          %p809 = pneg %p326
        $region78: #{tpu_custom_call.1} parent=55 // pred_check_branch
          %811 = sbr.rel (%p809) target = $region80
        $region79: #{tpu_custom_call.1} parent=55 // pred_region
          %s812 = sand.u32 %s33, 1
          %s813 = scalar_lea.sflag [#allocation4], %s812
          %s814 = sand.u32 %s316, 1
          %s815 = scalar_lea.vmem [#allocation18], %s814
          %817 = vsyncadd %s813, 0
          %s818 = scalar_lea.hbm %s11, %s41
          %s820 = sshll.u32 %s818, 4
          %s821 = int_to_ptr.hbm [resolvable:$true] %s820
          %s822 = sshll.u32 %s815, 4
          %s823 = int_to_ptr.vmem [resolvable:$true] %s822
          %825 = dma.hbm_to_vmem [thread:$0]  %s821, 16, %s823, %s813
        $region80: #{tpu_custom_call.1} parent=55 // pred_fallthru
          _
        // Predicated region
        $region81: #{tpu_custom_call.1} parent=55 // pred_check
          %p826 = pneg %p352
        $region82: #{tpu_custom_call.1} parent=55 // pred_check_branch
          %828 = sbr.rel (%p826) target = $region84
        $region83: #{tpu_custom_call.1} parent=55 // pred_region
          %s829 = sand.u32 %s33, 1
          %s830 = scalar_lea.sflag [#allocation4], %s829
          %s831 = sand.u32 %s342, 1
          %s832 = scalar_lea.vmem [#allocation19], %s831
          %834 = vsyncadd %s830, 0
          %s835 = scalar_lea.hbm %s12, %s41
          %s837 = sshll.u32 %s835, 4
          %s838 = int_to_ptr.hbm [resolvable:$true] %s837
          %s839 = sshll.u32 %s832, 4
          %s840 = int_to_ptr.vmem [resolvable:$true] %s839
          %842 = dma.hbm_to_vmem [thread:$0]  %s838, 16, %s840, %s830
        $region84: #{tpu_custom_call.1} parent=55 // pred_fallthru
          _
        // Predicated region
        $region85: #{tpu_custom_call.1} parent=55 // pred_check
          %p843 = pneg %p378
        $region86: #{tpu_custom_call.1} parent=55 // pred_check_branch
          %845 = sbr.rel (%p843) target = $region88
        $region87: #{tpu_custom_call.1} parent=55 // pred_region
          %p846 = scmp.lt.s32.totalorder %s41, 1
          %s847 = scalar_select %p846, %s41, 1
          %s848 = scalar_lea.vmem %s13, %s847
        $region88: #{tpu_custom_call.1} parent=55 // pred_fallthru
          _
        // Predicated region
        $region89: #{tpu_custom_call.1} parent=55 // pred_check
          %p849 = pneg %p404
        $region90: #{tpu_custom_call.1} parent=55 // pred_check_branch
          %851 = sbr.rel (%p849) target = $region92
        $region91: #{tpu_custom_call.1} parent=55 // pred_region
          %s852 = sand.u32 %s33, 1
          %s853 = scalar_lea.sflag [#allocation4], %s852
          %s854 = sand.u32 %s394, 1
          %s855 = smul.addr %s854, 128
          %s856 = scalar_lea.vmem [#allocation20], %s855
          %858 = vsyncadd %s853, 0
          %s859 = smul.addr %s41, 32
          %s860 = smul.addr %s859, 4
          %s861 = scalar_lea.hbm %s14, %s860
          %s862 = sshll.u32 %s861, 4
          %s863 = int_to_ptr.hbm [resolvable:$true] %s862
          %s864 = sshll.u32 %s856, 4
          %s865 = int_to_ptr.vmem [resolvable:$true] %s864
          %870 = dma.hbm_to_vmem [thread:$0]  %s863, 2048, %s865, %s853, 128, 128, 8
        $region92: #{tpu_custom_call.1} parent=55 // pred_fallthru
          _
        // Predicated region
        $region93: #{tpu_custom_call.1} parent=55 // pred_check
          %p871 = pneg %p430
        $region94: #{tpu_custom_call.1} parent=55 // pred_check_branch
          %873 = sbr.rel (%p871) target = $region96
        $region95: #{tpu_custom_call.1} parent=55 // pred_region
          %p874 = scmp.lt.s32.totalorder %s41, 1
          %s875 = scalar_select %p874, %s41, 1
          %s876 = smul.addr %s875, 2
          %s877 = scalar_lea.vmem %s15, %s876
        $region96: #{tpu_custom_call.1} parent=55 // pred_fallthru
          _
        // Predicated region
        $region97: #{tpu_custom_call.1} parent=55 // pred_check
          %p878 = pneg %p456
        $region98: #{tpu_custom_call.1} parent=55 // pred_check_branch
          %880 = sbr.rel (%p878) target = $region100
        $region99: #{tpu_custom_call.1} parent=55 // pred_region
          %s881 = sand.u32 %s33, 1
          %s882 = scalar_lea.sflag [#allocation4], %s881
          %s883 = sand.u32 %s446, 1
          %s884 = smul.addr %s883, 128
          %s885 = scalar_lea.vmem [#allocation21], %s884
          %887 = vsyncadd %s882, 0
          %s888 = smul.addr %s41, 32
          %s889 = smul.addr %s888, 4
          %s890 = scalar_lea.hbm %s16, %s889
          %s891 = sshll.u32 %s890, 4
          %s892 = int_to_ptr.hbm [resolvable:$true] %s891
          %s893 = sshll.u32 %s885, 4
          %s894 = int_to_ptr.vmem [resolvable:$true] %s893
          %899 = dma.hbm_to_vmem [thread:$0]  %s892, 2048, %s894, %s882, 64, 64, 4
        $region100: #{tpu_custom_call.1} parent=55 // pred_fallthru
          _
        // Predicated region
        $region101: #{tpu_custom_call.1} parent=55 // pred_check
          %p900 = pneg %p482
        $region102: #{tpu_custom_call.1} parent=55 // pred_check_branch
          %902 = sbr.rel (%p900) target = $region104
        $region103: #{tpu_custom_call.1} parent=55 // pred_region
          %p903 = scmp.lt.s32.totalorder %s41, 1
          %s904 = scalar_select %p903, %s41, 1
          %s905 = scalar_lea.vmem %s17, %s904
        $region104: #{tpu_custom_call.1} parent=55 // pred_fallthru
          _
      $region56: #{tpu_custom_call.1} parent=5 // pred_fallthru
        _
      %p906 = scmp.le.s32.totalorder 1, %s33
      %p907 = scmp.lt.s32.totalorder %s33, 3
      %p908 = pnand %p906, %p907
      %p909 = pneg %p908
      // Predicated region
      $region105: #{tpu_custom_call.1} parent=5 // pred_check
        _
      $region106: #{tpu_custom_call.1} parent=5 // pred_check_branch
        %911 = sbr.rel (%p908) target = $region108
      $region107: #{tpu_custom_call.1} parent=5 // pred_region
        %s912 = ssub.s32 %s33, 1
        // Predicated region
        $region109: #{tpu_custom_call.1} parent=107 // pred_check
          %p913 = pneg %p71
        $region110: #{tpu_custom_call.1} parent=107 // pred_check_branch
          %915 = sbr.rel (%p913) target = $region112
        $region111: #{tpu_custom_call.1} parent=107 // pred_region
          %917 = dma.done [#allocation4], 1024
        $region112: #{tpu_custom_call.1} parent=107 // pred_fallthru
          _
        // Predicated region
        $region113: #{tpu_custom_call.1} parent=107 // pred_check
          %p918 = pneg %p92
        $region114: #{tpu_custom_call.1} parent=107 // pred_check_branch
          %920 = sbr.rel (%p918) target = $region116
        $region115: #{tpu_custom_call.1} parent=107 // pred_region
          %922 = dma.done [#allocation7], 256
        $region116: #{tpu_custom_call.1} parent=107 // pred_fallthru
          _
        // Predicated region
        $region117: #{tpu_custom_call.1} parent=107 // pred_check
          %p923 = pneg %p113
        $region118: #{tpu_custom_call.1} parent=107 // pred_check_branch
          %925 = sbr.rel (%p923) target = $region120
        $region119: #{tpu_custom_call.1} parent=107 // pred_region
          %927 = dma.done [#allocation7], 128
        $region120: #{tpu_custom_call.1} parent=107 // pred_fallthru
          _
        // Predicated region
        $region121: #{tpu_custom_call.1} parent=107 // pred_check
          %p928 = pneg %p134
        $region122: #{tpu_custom_call.1} parent=107 // pred_check_branch
          %930 = sbr.rel (%p928) target = $region124
        $region123: #{tpu_custom_call.1} parent=107 // pred_region
          %932 = dma.done [#allocation10], 2048
        $region124: #{tpu_custom_call.1} parent=107 // pred_fallthru
          _
        // Predicated region
        $region125: #{tpu_custom_call.1} parent=107 // pred_check
          %p933 = pneg %p155
        $region126: #{tpu_custom_call.1} parent=107 // pred_check_branch
          %935 = sbr.rel (%p933) target = $region128
        $region127: #{tpu_custom_call.1} parent=107 // pred_region
          %937 = dma.done [#allocation10], 16
        $region128: #{tpu_custom_call.1} parent=107 // pred_fallthru
          _
        // Predicated region
        $region129: #{tpu_custom_call.1} parent=107 // pred_check
          %p938 = pneg %p176
        $region130: #{tpu_custom_call.1} parent=107 // pred_check_branch
          %940 = sbr.rel (%p938) target = $region132
        $region131: #{tpu_custom_call.1} parent=107 // pred_region
          %942 = dma.done [#allocation13], 16
        $region132: #{tpu_custom_call.1} parent=107 // pred_fallthru
          _
        %s943 = sand.u32 %s38, 1
        %s944 = scalar_lea.sflag [#allocation4], %s943
        %s945 = sand.u32 %s189, 1
        %s946 = scalar_lea.vmem [#allocation14], %s945
        // Predicated region
        $region133: #{tpu_custom_call.1} parent=107 // pred_check
          %p947 = pneg %p202
        $region134: #{tpu_custom_call.1} parent=107 // pred_check_branch
          %949 = sbr.rel (%p947) target = $region136
        $region135: #{tpu_custom_call.1} parent=107 // pred_region
          %951 = dma.done %s944, 16
        $region136: #{tpu_custom_call.1} parent=107 // pred_fallthru
          _
        %s952 = sand.u32 %s38, 1
        %s953 = scalar_lea.sflag [#allocation4], %s952
        %s954 = sand.u32 %s215, 1
        %s955 = scalar_lea.vmem [#allocation15], %s954
        // Predicated region
        $region137: #{tpu_custom_call.1} parent=107 // pred_check
          %p956 = pneg %p228
        $region138: #{tpu_custom_call.1} parent=107 // pred_check_branch
          %958 = sbr.rel (%p956) target = $region140
        $region139: #{tpu_custom_call.1} parent=107 // pred_region
          %960 = dma.done %s953, 16
        $region140: #{tpu_custom_call.1} parent=107 // pred_fallthru
          _
        %s961 = sand.u32 %s38, 1
        %s962 = scalar_lea.sflag [#allocation4], %s961
        %s963 = sand.u32 %s241, 1
        %s964 = smul.addr %s963, 192
        %s965 = scalar_lea.vmem [#allocation16], %s964
        // Predicated region
        $region141: #{tpu_custom_call.1} parent=107 // pred_check
          %p966 = pneg %p254
        $region142: #{tpu_custom_call.1} parent=107 // pred_check_branch
          %968 = sbr.rel (%p966) target = $region144
        $region143: #{tpu_custom_call.1} parent=107 // pred_region
          %970 = dma.done %s962, 3072
        $region144: #{tpu_custom_call.1} parent=107 // pred_fallthru
          _
        %s971 = sand.u32 %s38, 1
        %s972 = scalar_lea.sflag [#allocation4], %s971
        %s973 = sand.u32 %s293, 1
        %s974 = smul.addr %s973, 64
        %s975 = scalar_lea.vmem [#allocation17], %s974
        // Predicated region
        $region145: #{tpu_custom_call.1} parent=107 // pred_check
          %p976 = pneg %p306
        $region146: #{tpu_custom_call.1} parent=107 // pred_check_branch
          %978 = sbr.rel (%p976) target = $region148
        $region147: #{tpu_custom_call.1} parent=107 // pred_region
          %980 = dma.done %s972, 1024
        $region148: #{tpu_custom_call.1} parent=107 // pred_fallthru
          _
        %s981 = sand.u32 %s38, 1
        %s982 = scalar_lea.sflag [#allocation4], %s981
        %s983 = sand.u32 %s319, 1
        %s984 = scalar_lea.vmem [#allocation18], %s983
        // Predicated region
        $region149: #{tpu_custom_call.1} parent=107 // pred_check
          %p985 = pneg %p332
        $region150: #{tpu_custom_call.1} parent=107 // pred_check_branch
          %987 = sbr.rel (%p985) target = $region152
        $region151: #{tpu_custom_call.1} parent=107 // pred_region
          %989 = dma.done %s982, 16
        $region152: #{tpu_custom_call.1} parent=107 // pred_fallthru
          _
        %s990 = sand.u32 %s38, 1
        %s991 = scalar_lea.sflag [#allocation4], %s990
        %s992 = sand.u32 %s345, 1
        %s993 = scalar_lea.vmem [#allocation19], %s992
        // Predicated region
        $region153: #{tpu_custom_call.1} parent=107 // pred_check
          %p994 = pneg %p358
        $region154: #{tpu_custom_call.1} parent=107 // pred_check_branch
          %996 = sbr.rel (%p994) target = $region156
        $region155: #{tpu_custom_call.1} parent=107 // pred_region
          %998 = dma.done %s991, 16
        $region156: #{tpu_custom_call.1} parent=107 // pred_fallthru
          _
        %s999 = sand.u32 %s38, 1
        %s1000 = scalar_lea.sflag [#allocation4], %s999
        %s1001 = sand.u32 %s397, 1
        %s1002 = smul.addr %s1001, 128
        %s1003 = scalar_lea.vmem [#allocation20], %s1002
        // Predicated region
        $region157: #{tpu_custom_call.1} parent=107 // pred_check
          %p1004 = pneg %p410
        $region158: #{tpu_custom_call.1} parent=107 // pred_check_branch
          %1006 = sbr.rel (%p1004) target = $region160
        $region159: #{tpu_custom_call.1} parent=107 // pred_region
          %1008 = dma.done %s1000, 2048
        $region160: #{tpu_custom_call.1} parent=107 // pred_fallthru
          _
        %s1009 = sand.u32 %s38, 1
        %s1010 = scalar_lea.sflag [#allocation4], %s1009
        %s1011 = sand.u32 %s449, 1
        %s1012 = smul.addr %s1011, 128
        %s1013 = scalar_lea.vmem [#allocation21], %s1012
        // Predicated region
        $region161: #{tpu_custom_call.1} parent=107 // pred_check
          %p1014 = pneg %p462
        $region162: #{tpu_custom_call.1} parent=107 // pred_check_branch
          %1016 = sbr.rel (%p1014) target = $region164
        $region163: #{tpu_custom_call.1} parent=107 // pred_region
          %1018 = dma.done %s1010, 2048
        $region164: #{tpu_custom_call.1} parent=107 // pred_fallthru
          _
        // Predicated region
        $region165: #{tpu_custom_call.1} parent=107 // pred_check
          %p1019 = pneg %p551
        $region166: #{tpu_custom_call.1} parent=107 // pred_check_branch
          %1021 = sbr.rel (%p1019) target = $region168
        $region167: #{tpu_custom_call.1} parent=107 // pred_region
          %1023 = dma.done [#allocation7], 1024
        $region168: #{tpu_custom_call.1} parent=107 // pred_fallthru
          _
        %p1024 = pneg %p71
        %p1025 = pneg %p68
        %p1026 = pneg %p92
        %p1027 = pneg %p89
        %p1028 = pneg %p113
        %p1029 = pneg %p110
        %p1030 = pneg %p134
        %p1031 = pneg %p131
        %p1032 = pneg %p155
        %p1033 = pneg %p152
        %p1034 = pneg %p176
        %p1035 = pneg %p173
        %s1036 = sand.u32 %s38, 1
        %s1037 = scalar_lea.sflag [#allocation4], %s1036
        %s1038 = sand.u32 %s189, 1
        %s1039 = scalar_lea.vmem [#allocation14], %s1038
        %p1040 = pneg %p202
        %p1041 = pneg %p199
        %s1042 = sand.u32 %s38, 1
        %s1043 = scalar_lea.sflag [#allocation4], %s1042
        %s1044 = sand.u32 %s215, 1
        %s1045 = scalar_lea.vmem [#allocation15], %s1044
        %p1046 = pneg %p228
        %p1047 = pneg %p225
        %s1048 = sand.u32 %s38, 1
        %s1049 = scalar_lea.sflag [#allocation4], %s1048
        %s1050 = sand.u32 %s241, 1
        %s1051 = smul.addr %s1050, 192
        %s1052 = scalar_lea.vmem [#allocation16], %s1051
        %p1053 = pneg %p254
        %p1054 = pneg %p251
        %p1055 = scmp.lt.s32.totalorder %s43, 1
        %s1056 = scalar_select %p1055, %s43, 1
        %s1057 = smul.addr %s1056, 3
        %s1058 = scalar_lea.vmem %s9, %s1057
        %p1059 = pneg %p280
        %p1060 = pneg %p277
        %s1061 = sand.u32 %s38, 1
        %s1062 = scalar_lea.sflag [#allocation4], %s1061
        %s1063 = sand.u32 %s293, 1
        %s1064 = smul.addr %s1063, 64
        %s1065 = scalar_lea.vmem [#allocation17], %s1064
        %p1066 = pneg %p306
        %p1067 = pneg %p303
        %s1068 = sand.u32 %s38, 1
        %s1069 = scalar_lea.sflag [#allocation4], %s1068
        %s1070 = sand.u32 %s319, 1
        %s1071 = scalar_lea.vmem [#allocation18], %s1070
        %p1072 = pneg %p332
        %p1073 = pneg %p329
        %s1074 = sand.u32 %s38, 1
        %s1075 = scalar_lea.sflag [#allocation4], %s1074
        %s1076 = sand.u32 %s345, 1
        %s1077 = scalar_lea.vmem [#allocation19], %s1076
        %p1078 = pneg %p358
        %p1079 = pneg %p355
        %p1080 = scmp.lt.s32.totalorder %s43, 1
        %s1081 = scalar_select %p1080, %s43, 1
        %s1082 = scalar_lea.vmem %s13, %s1081
        %p1083 = pneg %p384
        %p1084 = pneg %p381
        %s1085 = sand.u32 %s38, 1
        %s1086 = scalar_lea.sflag [#allocation4], %s1085
        %s1087 = sand.u32 %s397, 1
        %s1088 = smul.addr %s1087, 128
        %s1089 = scalar_lea.vmem [#allocation20], %s1088
        %p1090 = pneg %p410
        %p1091 = pneg %p407
        %p1092 = scmp.lt.s32.totalorder %s43, 1
        %s1093 = scalar_select %p1092, %s43, 1
        %s1094 = smul.addr %s1093, 2
        %s1095 = scalar_lea.vmem %s15, %s1094
        %p1096 = pneg %p436
        %p1097 = pneg %p433
        %s1098 = sand.u32 %s38, 1
        %s1099 = scalar_lea.sflag [#allocation4], %s1098
        %s1100 = sand.u32 %s449, 1
        %s1101 = smul.addr %s1100, 128
        %s1102 = scalar_lea.vmem [#allocation21], %s1101
        %p1103 = pneg %p462
        %p1104 = pneg %p459
        %p1105 = scmp.lt.s32.totalorder %s43, 1
        %s1106 = scalar_select %p1105, %s43, 1
        %s1107 = scalar_lea.vmem %s17, %s1106
        %p1108 = pneg %p488
        %p1109 = pneg %p485
        %p1110 = pneg %p509
        %p1111 = pneg %p506
        %p1112 = pneg %p530
        %p1113 = pneg %p527
        %p1114 = pneg %p551
        %p1115 = pneg %p548
        %p1116 = pneg %p572
        %p1117 = pneg %p569
        %p1118 = pneg %p598
        %p1119 = pneg %p595
        %s1120 = smul.u32 4, %s42
        %p1121 = scmp.lt.s32.totalorder %s43, 1
        %s1122 = scalar_select %p1121, %s43, 1
        %s1123 = smul.addr %s1122, 3
        %s1124 = scalar_lea.vmem %s9, %s1123
        %p1125 = scmp.lt.s32.totalorder %s43, 1
        %s1126 = scalar_select %p1125, %s43, 1
        %s1127 = scalar_lea.vmem %s13, %s1126
        %p1128 = scmp.lt.s32.totalorder %s43, 1
        %s1129 = scalar_select %p1128, %s43, 1
        %s1130 = smul.addr %s1129, 2
        %s1131 = scalar_lea.vmem %s15, %s1130
        %p1132 = scmp.lt.s32.totalorder %s43, 1
        %s1133 = scalar_select %p1132, %s43, 1
        %s1134 = scalar_lea.vmem %s17, %s1133
        %s1135 = smul.u32 4, %s42
        %p1136 = scmp.eq.s32.totalorder %s43, 0
        // Predicated region
        $region169: #{tpu_custom_call.1} parent=107 // pred_check
          %p1137 = pneg %p1136
        $region170: #{tpu_custom_call.1} parent=107 // pred_check_branch
          %1139 = sbr.rel (%p1137) target = $region172
        $region171: #{tpu_custom_call.1} parent=107 // pred_region
          %v1140 = vld [vmem:[#allocation3] sm:$0xff]
          %v1141 = vld [vmem:[#allocation3 + $0x8] sm:$0xff]
          %v1142 = vld [vmem:[#allocation3 + $0x10] sm:$0xff]
          %v1143 = vld [vmem:[#allocation3 + $0x18] sm:$0xff]
          %v1144 = vld [vmem:[#allocation3 + $0x20] sm:$0xff]
          %v1145 = vld [vmem:[#allocation3 + $0x28] sm:$0xff]
          %v1146 = vld [vmem:[#allocation3 + $0x30] sm:$0xff]
          %v1147 = vld [vmem:[#allocation3 + $0x38] sm:$0xff]
          %v1148 = vld [vmem:[#allocation6] sm:$0xff]
          %v1149 = vld [vmem:[#allocation6 + $0x8] sm:$0xff]
          %v1150 = vadd.f32 %v1140, %v1148
          %v1151 = vadd.f32 %v1141, %v1149
          %v1152 = vadd.f32 %v1142, %v1148
          %v1153 = vadd.f32 %v1143, %v1149
          %v1154 = vadd.f32 %v1144, %v1148
          %v1155 = vadd.f32 %v1145, %v1149
          %v1156 = vadd.f32 %v1146, %v1148
          %v1157 = vadd.f32 %v1147, %v1149
          %v1158 = vld [vmem:[#allocation11] sm:$0x1]
          %v1159 = vld [vmem:[#allocation12] sm:$0x1]
          %1160 = vadd.xlane.f32.xlu0 %v1150
          %v1161 = vpop.xlane.xlu0 %1160
          %1162 = vadd.xlane.f32.xlu0 %v1151
          %v1163 = vpop.xlane.xlu0 %1162
          %1164 = vadd.xlane.f32.xlu0 %v1152
          %v1165 = vpop.xlane.xlu0 %1164
          %1166 = vadd.xlane.f32.xlu0 %v1153
          %v1167 = vpop.xlane.xlu0 %1166
          %1168 = vadd.xlane.f32.xlu0 %v1154
          %v1169 = vpop.xlane.xlu0 %1168
          %1170 = vadd.xlane.f32.xlu0 %v1155
          %v1171 = vpop.xlane.xlu0 %1170
          %1172 = vadd.xlane.f32.xlu0 %v1156
          %v1173 = vpop.xlane.xlu0 %1172
          %1174 = vadd.xlane.f32.xlu0 %v1157
          %v1175 = vpop.xlane.xlu0 %1174
          %v1176 = vrcp.pop 128.0
          %v1177 = vmul.f32 128.0, %v1176
          %v1178 = vsub.f32 1.0, %v1177
          %v1179 = vmul.f32 %v1176, %v1178
          %v1180 = vadd.f32 %v1176, %v1179
          %vm1181 = vweird.f32 %v1176
          %v1182 = vsel %vm1181, %v1176, %v1180
          %v1183 = vmul.f32 %v1161, %v1182
          %v1184 = vmul.f32 %v1163, %v1182
          %v1185 = vmul.f32 %v1165, %v1182
          %v1186 = vmul.f32 %v1167, %v1182
          %v1187 = vmul.f32 %v1169, %v1182
          %v1188 = vmul.f32 %v1171, %v1182
          %v1189 = vmul.f32 %v1173, %v1182
          %v1190 = vmul.f32 %v1175, %v1182
          %v1191 = vsub.f32 %v1150, %v1183
          %v1192 = vsub.f32 %v1151, %v1184
          %v1193 = vsub.f32 %v1152, %v1185
          %v1194 = vsub.f32 %v1153, %v1186
          %v1195 = vsub.f32 %v1154, %v1187
          %v1196 = vsub.f32 %v1155, %v1188
          %v1197 = vsub.f32 %v1156, %v1189
          %v1198 = vsub.f32 %v1157, %v1190
          %v1199 = vmul.f32 %v1191, %v1191
          %v1200 = vmul.f32 %v1192, %v1192
          %v1201 = vmul.f32 %v1193, %v1193
          %v1202 = vmul.f32 %v1194, %v1194
          %v1203 = vmul.f32 %v1195, %v1195
          %v1204 = vmul.f32 %v1196, %v1196
          %v1205 = vmul.f32 %v1197, %v1197
          %v1206 = vmul.f32 %v1198, %v1198
          %1207 = vadd.xlane.f32.xlu0 %v1199
          %v1208 = vpop.xlane.xlu0 %1207
          %1209 = vadd.xlane.f32.xlu0 %v1200
          %v1210 = vpop.xlane.xlu0 %1209
          %1211 = vadd.xlane.f32.xlu0 %v1201
          %v1212 = vpop.xlane.xlu0 %1211
          %1213 = vadd.xlane.f32.xlu0 %v1202
          %v1214 = vpop.xlane.xlu0 %1213
          %1215 = vadd.xlane.f32.xlu0 %v1203
          %v1216 = vpop.xlane.xlu0 %1215
          %1217 = vadd.xlane.f32.xlu0 %v1204
          %v1218 = vpop.xlane.xlu0 %1217
          %1219 = vadd.xlane.f32.xlu0 %v1205
          %v1220 = vpop.xlane.xlu0 %1219
          %1221 = vadd.xlane.f32.xlu0 %v1206
          %v1222 = vpop.xlane.xlu0 %1221
          %v1223 = vmul.f32 %v1208, %v1182
          %v1224 = vmul.f32 %v1210, %v1182
          %v1225 = vmul.f32 %v1212, %v1182
          %v1226 = vmul.f32 %v1214, %v1182
          %v1227 = vmul.f32 %v1216, %v1182
          %v1228 = vmul.f32 %v1218, %v1182
          %v1229 = vmul.f32 %v1220, %v1182
          %v1230 = vmul.f32 %v1222, %v1182
          %v1231 = vadd.f32 %v1223, 1e-05
          %v1232 = vadd.f32 %v1224, 1e-05
          %v1233 = vadd.f32 %v1225, 1e-05
          %v1234 = vadd.f32 %v1226, 1e-05
          %v1235 = vadd.f32 %v1227, 1e-05
          %v1236 = vadd.f32 %v1228, 1e-05
          %v1237 = vadd.f32 %v1229, 1e-05
          %v1238 = vadd.f32 %v1230, 1e-05
          %v1239 = vrsqrt.pop %v1231
          %v1240 = vmul.f32 %v1239, %v1231
          %v1241 = vmul.f32 %v1240, %v1239
          %v1242 = vmul.f32 0.5, %v1241
          %v1243 = vsub.f32 1.5, %v1242
          %v1244 = vmul.f32 %v1239, %v1243
          %vm1245 = vweird.f32 %v1231
          %vm1246 = vweird.f32 %v1239
          %vm1247 = vmor %vm1245, %vm1246
          %v1248 = vsel %vm1247, %v1239, %v1244
          %v1249 = vrsqrt.pop %v1232
          %v1250 = vmul.f32 %v1249, %v1232
          %v1251 = vmul.f32 %v1250, %v1249
          %v1252 = vmul.f32 0.5, %v1251
          %v1253 = vsub.f32 1.5, %v1252
          %v1254 = vmul.f32 %v1249, %v1253
          %vm1255 = vweird.f32 %v1232
          %vm1256 = vweird.f32 %v1249
          %vm1257 = vmor %vm1255, %vm1256
          %v1258 = vsel %vm1257, %v1249, %v1254
          %v1259 = vrsqrt.pop %v1233
          %v1260 = vmul.f32 %v1259, %v1233
          %v1261 = vmul.f32 %v1260, %v1259
          %v1262 = vmul.f32 0.5, %v1261
          %v1263 = vsub.f32 1.5, %v1262
          %v1264 = vmul.f32 %v1259, %v1263
          %vm1265 = vweird.f32 %v1233
          %vm1266 = vweird.f32 %v1259
          %vm1267 = vmor %vm1265, %vm1266
          %v1268 = vsel %vm1267, %v1259, %v1264
          %v1269 = vrsqrt.pop %v1234
          %v1270 = vmul.f32 %v1269, %v1234
          %v1271 = vmul.f32 %v1270, %v1269
          %v1272 = vmul.f32 0.5, %v1271
          %v1273 = vsub.f32 1.5, %v1272
          %v1274 = vmul.f32 %v1269, %v1273
          %vm1275 = vweird.f32 %v1234
          %vm1276 = vweird.f32 %v1269
          %vm1277 = vmor %vm1275, %vm1276
          %v1278 = vsel %vm1277, %v1269, %v1274
          %v1279 = vrsqrt.pop %v1235
          %v1280 = vmul.f32 %v1279, %v1235
          %v1281 = vmul.f32 %v1280, %v1279
          %v1282 = vmul.f32 0.5, %v1281
          %v1283 = vsub.f32 1.5, %v1282
          %v1284 = vmul.f32 %v1279, %v1283
          %vm1285 = vweird.f32 %v1235
          %vm1286 = vweird.f32 %v1279
          %vm1287 = vmor %vm1285, %vm1286
          %v1288 = vsel %vm1287, %v1279, %v1284
          %v1289 = vrsqrt.pop %v1236
          %v1290 = vmul.f32 %v1289, %v1236
          %v1291 = vmul.f32 %v1290, %v1289
          %v1292 = vmul.f32 0.5, %v1291
          %v1293 = vsub.f32 1.5, %v1292
          %v1294 = vmul.f32 %v1289, %v1293
          %vm1295 = vweird.f32 %v1236
          %vm1296 = vweird.f32 %v1289
          %vm1297 = vmor %vm1295, %vm1296
          %v1298 = vsel %vm1297, %v1289, %v1294
          %v1299 = vrsqrt.pop %v1237
          %v1300 = vmul.f32 %v1299, %v1237
          %v1301 = vmul.f32 %v1300, %v1299
          %v1302 = vmul.f32 0.5, %v1301
          %v1303 = vsub.f32 1.5, %v1302
          %v1304 = vmul.f32 %v1299, %v1303
          %vm1305 = vweird.f32 %v1237
          %vm1306 = vweird.f32 %v1299
          %vm1307 = vmor %vm1305, %vm1306
          %v1308 = vsel %vm1307, %v1299, %v1304
          %v1309 = vrsqrt.pop %v1238
          %v1310 = vmul.f32 %v1309, %v1238
          %v1311 = vmul.f32 %v1310, %v1309
          %v1312 = vmul.f32 0.5, %v1311
          %v1313 = vsub.f32 1.5, %v1312
          %v1314 = vmul.f32 %v1309, %v1313
          %vm1315 = vweird.f32 %v1238
          %vm1316 = vweird.f32 %v1309
          %vm1317 = vmor %vm1315, %vm1316
          %v1318 = vsel %vm1317, %v1309, %v1314
          %v1319 = vmul.f32 %v1191, %v1248
          %v1320 = vmul.f32 %v1192, %v1258
          %v1321 = vmul.f32 %v1193, %v1268
          %v1322 = vmul.f32 %v1194, %v1278
          %v1323 = vmul.f32 %v1195, %v1288
          %v1324 = vmul.f32 %v1196, %v1298
          %v1325 = vmul.f32 %v1197, %v1308
          %v1326 = vmul.f32 %v1198, %v1318
          %v1328 = vperm.slane %v1158, 0
          %v1330 = vmul.f32 %v1319, %v1328
          %v1331 = vmul.f32 %v1320, %v1328
          %v1332 = vmul.f32 %v1321, %v1328
          %v1333 = vmul.f32 %v1322, %v1328
          %v1334 = vmul.f32 %v1323, %v1328
          %v1335 = vmul.f32 %v1324, %v1328
          %v1336 = vmul.f32 %v1325, %v1328
          %v1337 = vmul.f32 %v1326, %v1328
          %v1339 = vperm.slane %v1159, 0
          %v1341 = vadd.f32 %v1330, %v1339
          %v1342 = vadd.f32 %v1331, %v1339
          %v1343 = vadd.f32 %v1332, %v1339
          %v1344 = vadd.f32 %v1333, %v1339
          %v1345 = vadd.f32 %v1334, %v1339
          %v1346 = vadd.f32 %v1335, %v1339
          %v1347 = vadd.f32 %v1336, %v1339
          %v1348 = vadd.f32 %v1337, %v1339
          %1349 = vst [vmem:[#allocation2] sm:$0xff] %v1341
          %1350 = vst [vmem:[#allocation2 + $0x8] sm:$0xff] %v1342
          %1351 = vst [vmem:[#allocation2 + $0x10] sm:$0xff] %v1343
          %1352 = vst [vmem:[#allocation2 + $0x18] sm:$0xff] %v1344
          %1353 = vst [vmem:[#allocation2 + $0x20] sm:$0xff] %v1345
          %1354 = vst [vmem:[#allocation2 + $0x28] sm:$0xff] %v1346
          %1355 = vst [vmem:[#allocation2 + $0x30] sm:$0xff] %v1347
          %1356 = vst [vmem:[#allocation2 + $0x38] sm:$0xff] %v1348
        $region172: #{tpu_custom_call.1} parent=107 // pred_fallthru
          _
        %v1357 = vld [vmem:[#allocation2] sm:$0xff]
        %v1358 = vld [vmem:[#allocation2 + $0x8] sm:$0xff]
        %v1359 = vld [vmem:[#allocation2 + $0x10] sm:$0xff]
        %v1360 = vld [vmem:[#allocation2 + $0x18] sm:$0xff]
        %v1361 = vld [vmem:[#allocation2 + $0x20] sm:$0xff]
        %v1362 = vld [vmem:[#allocation2 + $0x28] sm:$0xff]
        %v1363 = vld [vmem:[#allocation2 + $0x30] sm:$0xff]
        %v1364 = vld [vmem:[#allocation2 + $0x38] sm:$0xff]
        %v1365 = vld [vmem:[%s946] sm:$0x1]
        %v1366 = vld [vmem:[%s955] sm:$0x1]
        %1367 = vadd.xlane.f32.xlu0 %v1357
        %v1368 = vpop.xlane.xlu0 %1367
        %1369 = vadd.xlane.f32.xlu0 %v1358
        %v1370 = vpop.xlane.xlu0 %1369
        %1371 = vadd.xlane.f32.xlu0 %v1359
        %v1372 = vpop.xlane.xlu0 %1371
        %1373 = vadd.xlane.f32.xlu0 %v1360
        %v1374 = vpop.xlane.xlu0 %1373
        %1375 = vadd.xlane.f32.xlu0 %v1361
        %v1376 = vpop.xlane.xlu0 %1375
        %1377 = vadd.xlane.f32.xlu0 %v1362
        %v1378 = vpop.xlane.xlu0 %1377
        %1379 = vadd.xlane.f32.xlu0 %v1363
        %v1380 = vpop.xlane.xlu0 %1379
        %1381 = vadd.xlane.f32.xlu0 %v1364
        %v1382 = vpop.xlane.xlu0 %1381
        %v1383 = vrcp.pop 128.0
        %v1384 = vmul.f32 128.0, %v1383
        %v1385 = vsub.f32 1.0, %v1384
        %v1386 = vmul.f32 %v1383, %v1385
        %v1387 = vadd.f32 %v1383, %v1386
        %vm1388 = vweird.f32 %v1383
        %v1389 = vsel %vm1388, %v1383, %v1387
        %v1390 = vmul.f32 %v1368, %v1389
        %v1391 = vmul.f32 %v1370, %v1389
        %v1392 = vmul.f32 %v1372, %v1389
        %v1393 = vmul.f32 %v1374, %v1389
        %v1394 = vmul.f32 %v1376, %v1389
        %v1395 = vmul.f32 %v1378, %v1389
        %v1396 = vmul.f32 %v1380, %v1389
        %v1397 = vmul.f32 %v1382, %v1389
        %v1398 = vsub.f32 %v1357, %v1390
        %v1399 = vsub.f32 %v1358, %v1391
        %v1400 = vsub.f32 %v1359, %v1392
        %v1401 = vsub.f32 %v1360, %v1393
        %v1402 = vsub.f32 %v1361, %v1394
        %v1403 = vsub.f32 %v1362, %v1395
        %v1404 = vsub.f32 %v1363, %v1396
        %v1405 = vsub.f32 %v1364, %v1397
        %v1406 = vmul.f32 %v1398, %v1398
        %v1407 = vmul.f32 %v1399, %v1399
        %v1408 = vmul.f32 %v1400, %v1400
        %v1409 = vmul.f32 %v1401, %v1401
        %v1410 = vmul.f32 %v1402, %v1402
        %v1411 = vmul.f32 %v1403, %v1403
        %v1412 = vmul.f32 %v1404, %v1404
        %v1413 = vmul.f32 %v1405, %v1405
        %1414 = vadd.xlane.f32.xlu0 %v1406
        %v1415 = vpop.xlane.xlu0 %1414
        %1416 = vadd.xlane.f32.xlu0 %v1407
        %v1417 = vpop.xlane.xlu0 %1416
        %1418 = vadd.xlane.f32.xlu0 %v1408
        %v1419 = vpop.xlane.xlu0 %1418
        %1420 = vadd.xlane.f32.xlu0 %v1409
        %v1421 = vpop.xlane.xlu0 %1420
        %1422 = vadd.xlane.f32.xlu0 %v1410
        %v1423 = vpop.xlane.xlu0 %1422
        %1424 = vadd.xlane.f32.xlu0 %v1411
        %v1425 = vpop.xlane.xlu0 %1424
        %1426 = vadd.xlane.f32.xlu0 %v1412
        %v1427 = vpop.xlane.xlu0 %1426
        %1428 = vadd.xlane.f32.xlu0 %v1413
        %v1429 = vpop.xlane.xlu0 %1428
        %v1430 = vmul.f32 %v1415, %v1389
        %v1431 = vmul.f32 %v1417, %v1389
        %v1432 = vmul.f32 %v1419, %v1389
        %v1433 = vmul.f32 %v1421, %v1389
        %v1434 = vmul.f32 %v1423, %v1389
        %v1435 = vmul.f32 %v1425, %v1389
        %v1436 = vmul.f32 %v1427, %v1389
        %v1437 = vmul.f32 %v1429, %v1389
        %v1438 = vadd.f32 %v1430, 1e-05
        %v1439 = vadd.f32 %v1431, 1e-05
        %v1440 = vadd.f32 %v1432, 1e-05
        %v1441 = vadd.f32 %v1433, 1e-05
        %v1442 = vadd.f32 %v1434, 1e-05
        %v1443 = vadd.f32 %v1435, 1e-05
        %v1444 = vadd.f32 %v1436, 1e-05
        %v1445 = vadd.f32 %v1437, 1e-05
        %v1446 = vrsqrt.pop %v1438
        %v1447 = vmul.f32 %v1446, %v1438
        %v1448 = vmul.f32 %v1447, %v1446
        %v1449 = vmul.f32 0.5, %v1448
        %v1450 = vsub.f32 1.5, %v1449
        %v1451 = vmul.f32 %v1446, %v1450
        %vm1452 = vweird.f32 %v1438
        %vm1453 = vweird.f32 %v1446
        %vm1454 = vmor %vm1452, %vm1453
        %v1455 = vsel %vm1454, %v1446, %v1451
        %v1456 = vrsqrt.pop %v1439
        %v1457 = vmul.f32 %v1456, %v1439
        %v1458 = vmul.f32 %v1457, %v1456
        %v1459 = vmul.f32 0.5, %v1458
        %v1460 = vsub.f32 1.5, %v1459
        %v1461 = vmul.f32 %v1456, %v1460
        %vm1462 = vweird.f32 %v1439
        %vm1463 = vweird.f32 %v1456
        %vm1464 = vmor %vm1462, %vm1463
        %v1465 = vsel %vm1464, %v1456, %v1461
        %v1466 = vrsqrt.pop %v1440
        %v1467 = vmul.f32 %v1466, %v1440
        %v1468 = vmul.f32 %v1467, %v1466
        %v1469 = vmul.f32 0.5, %v1468
        %v1470 = vsub.f32 1.5, %v1469
        %v1471 = vmul.f32 %v1466, %v1470
        %vm1472 = vweird.f32 %v1440
        %vm1473 = vweird.f32 %v1466
        %vm1474 = vmor %vm1472, %vm1473
        %v1475 = vsel %vm1474, %v1466, %v1471
        %v1476 = vrsqrt.pop %v1441
        %v1477 = vmul.f32 %v1476, %v1441
        %v1478 = vmul.f32 %v1477, %v1476
        %v1479 = vmul.f32 0.5, %v1478
        %v1480 = vsub.f32 1.5, %v1479
        %v1481 = vmul.f32 %v1476, %v1480
        %vm1482 = vweird.f32 %v1441
        %vm1483 = vweird.f32 %v1476
        %vm1484 = vmor %vm1482, %vm1483
        %v1485 = vsel %vm1484, %v1476, %v1481
        %v1486 = vrsqrt.pop %v1442
        %v1487 = vmul.f32 %v1486, %v1442
        %v1488 = vmul.f32 %v1487, %v1486
        %v1489 = vmul.f32 0.5, %v1488
        %v1490 = vsub.f32 1.5, %v1489
        %v1491 = vmul.f32 %v1486, %v1490
        %vm1492 = vweird.f32 %v1442
        %vm1493 = vweird.f32 %v1486
        %vm1494 = vmor %vm1492, %vm1493
        %v1495 = vsel %vm1494, %v1486, %v1491
        %v1496 = vrsqrt.pop %v1443
        %v1497 = vmul.f32 %v1496, %v1443
        %v1498 = vmul.f32 %v1497, %v1496
        %v1499 = vmul.f32 0.5, %v1498
        %v1500 = vsub.f32 1.5, %v1499
        %v1501 = vmul.f32 %v1496, %v1500
        %vm1502 = vweird.f32 %v1443
        %vm1503 = vweird.f32 %v1496
        %vm1504 = vmor %vm1502, %vm1503
        %v1505 = vsel %vm1504, %v1496, %v1501
        %v1506 = vrsqrt.pop %v1444
        %v1507 = vmul.f32 %v1506, %v1444
        %v1508 = vmul.f32 %v1507, %v1506
        %v1509 = vmul.f32 0.5, %v1508
        %v1510 = vsub.f32 1.5, %v1509
        %v1511 = vmul.f32 %v1506, %v1510
        %vm1512 = vweird.f32 %v1444
        %vm1513 = vweird.f32 %v1506
        %vm1514 = vmor %vm1512, %vm1513
        %v1515 = vsel %vm1514, %v1506, %v1511
        %v1516 = vrsqrt.pop %v1445
        %v1517 = vmul.f32 %v1516, %v1445
        %v1518 = vmul.f32 %v1517, %v1516
        %v1519 = vmul.f32 0.5, %v1518
        %v1520 = vsub.f32 1.5, %v1519
        %v1521 = vmul.f32 %v1516, %v1520
        %vm1522 = vweird.f32 %v1445
        %vm1523 = vweird.f32 %v1516
        %vm1524 = vmor %vm1522, %vm1523
        %v1525 = vsel %vm1524, %v1516, %v1521
        %v1526 = vmul.f32 %v1398, %v1455
        %v1527 = vmul.f32 %v1399, %v1465
        %v1528 = vmul.f32 %v1400, %v1475
        %v1529 = vmul.f32 %v1401, %v1485
        %v1530 = vmul.f32 %v1402, %v1495
        %v1531 = vmul.f32 %v1403, %v1505
        %v1532 = vmul.f32 %v1404, %v1515
        %v1533 = vmul.f32 %v1405, %v1525
        %v1535 = vperm.slane %v1365, 0
        %v1537 = vmul.f32 %v1526, %v1535
        %v1538 = vmul.f32 %v1527, %v1535
        %v1539 = vmul.f32 %v1528, %v1535
        %v1540 = vmul.f32 %v1529, %v1535
        %v1541 = vmul.f32 %v1530, %v1535
        %v1542 = vmul.f32 %v1531, %v1535
        %v1543 = vmul.f32 %v1532, %v1535
        %v1544 = vmul.f32 %v1533, %v1535
        %v1546 = vperm.slane %v1366, 0
        %v1548 = vadd.f32 %v1537, %v1546
        %v1549 = vadd.f32 %v1538, %v1546
        %v1550 = vadd.f32 %v1539, %v1546
        %v1551 = vadd.f32 %v1540, %v1546
        %v1552 = vadd.f32 %v1541, %v1546
        %v1553 = vadd.f32 %v1542, %v1546
        %v1554 = vadd.f32 %v1543, %v1546
        %v1555 = vadd.f32 %v1544, %v1546
        %v1556 = vpack.c.bf16 %v1549, %v1548
        %v1557 = vpack.c.bf16 %v1551, %v1550
        %v1558 = vpack.c.bf16 %v1553, %v1552
        %v1559 = vpack.c.bf16 %v1555, %v1554
        %v1560 = vld [vmem:[%s965] sm:$0xff]
        %v1561 = vld [vmem:[%s965 + $0x8] sm:$0xf]
        %v1562 = vld [vmem:[%s965 + $0xc] sm:$0xff]
        %v1563 = vld [vmem:[%s965 + $0x14] sm:$0xf]
        %v1564 = vld [vmem:[%s965 + $0x18] sm:$0xff]
        %v1565 = vld [vmem:[%s965 + $0x20] sm:$0xf]
        %v1566 = vld [vmem:[%s965 + $0x24] sm:$0xff]
        %v1567 = vld [vmem:[%s965 + $0x2c] sm:$0xf]
        %v1568 = vld [vmem:[%s965 + $0x30] sm:$0xff]
        %v1569 = vld [vmem:[%s965 + $0x38] sm:$0xf]
        %v1570 = vld [vmem:[%s965 + $0x3c] sm:$0xff]
        %v1571 = vld [vmem:[%s965 + $0x44] sm:$0xf]
        %v1572 = vld [vmem:[%s965 + $0x48] sm:$0xff]
        %v1573 = vld [vmem:[%s965 + $0x50] sm:$0xf]
        %v1574 = vld [vmem:[%s965 + $0x54] sm:$0xff]
        %v1575 = vld [vmem:[%s965 + $0x5c] sm:$0xf]
        %v1576 = vld [vmem:[%s965 + $0x60] sm:$0xff]
        %v1577 = vld [vmem:[%s965 + $0x68] sm:$0xf]
        %v1578 = vld [vmem:[%s965 + $0x6c] sm:$0xff]
        %v1579 = vld [vmem:[%s965 + $0x74] sm:$0xf]
        %v1580 = vld [vmem:[%s965 + $0x78] sm:$0xff]
        %v1581 = vld [vmem:[%s965 + $0x80] sm:$0xf]
        %v1582 = vld [vmem:[%s965 + $0x84] sm:$0xff]
        %v1583 = vld [vmem:[%s965 + $0x8c] sm:$0xf]
        %v1584 = vld [vmem:[%s965 + $0x90] sm:$0xff]
        %v1585 = vld [vmem:[%s965 + $0x98] sm:$0xf]
        %v1586 = vld [vmem:[%s965 + $0x9c] sm:$0xff]
        %v1587 = vld [vmem:[%s965 + $0xa4] sm:$0xf]
        %v1588 = vld [vmem:[%s965 + $0xa8] sm:$0xff]
        %v1589 = vld [vmem:[%s965 + $0xb0] sm:$0xf]
        %v1590 = vld [vmem:[%s965 + $0xb4] sm:$0xff]
        %v1591 = vld [vmem:[%s965 + $0xbc] sm:$0xf]
        %v1592 = vld [vmem:[%s1124] sm:$0x7]
        %v1594 = vperm.slane %v1592, 0
        %v1595 = vperm.slane %v1592, 1
        %v1596 = vperm.slane %v1592, 2
        %v1632 = vunpack.c.l.b16 %v1560
        %v1633 = vunpack.c.h.b16 %v1560
        %v1634 = vunpack.c.l.b16 %v1561
        %v1635 = vunpack.c.l.b16 %v1562
        %v1636 = vunpack.c.h.b16 %v1562
        %v1637 = vunpack.c.l.b16 %v1563
        %v1638 = vunpack.c.l.b16 %v1564
        %v1639 = vunpack.c.h.b16 %v1564
        %v1640 = vunpack.c.l.b16 %v1565
        %v1641 = vunpack.c.l.b16 %v1566
        %v1642 = vunpack.c.h.b16 %v1566
        %v1643 = vunpack.c.l.b16 %v1567
        %v1644 = vunpack.c.l.b16 %v1568
        %v1645 = vunpack.c.h.b16 %v1568
        %v1646 = vunpack.c.l.b16 %v1569
        %v1647 = vunpack.c.l.b16 %v1570
        %v1648 = vunpack.c.h.b16 %v1570
        %v1649 = vunpack.c.l.b16 %v1571
        %v1650 = vunpack.c.l.b16 %v1572
        %v1651 = vunpack.c.h.b16 %v1572
        %v1652 = vunpack.c.l.b16 %v1573
        %v1653 = vunpack.c.l.b16 %v1574
        %v1654 = vunpack.c.h.b16 %v1574
        %v1655 = vunpack.c.l.b16 %v1575
        %v1656 = vunpack.c.l.b16 %v1576
        %v1657 = vunpack.c.h.b16 %v1576
        %v1658 = vunpack.c.l.b16 %v1577
        %v1659 = vunpack.c.l.b16 %v1578
        %v1660 = vunpack.c.h.b16 %v1578
        %v1661 = vunpack.c.l.b16 %v1579
        %v1662 = vunpack.c.l.b16 %v1580
        %v1663 = vunpack.c.h.b16 %v1580
        %v1664 = vunpack.c.l.b16 %v1581
        %v1665 = vunpack.c.l.b16 %v1582
        %v1666 = vunpack.c.h.b16 %v1582
        %v1667 = vunpack.c.l.b16 %v1583
        %v1668 = vunpack.c.l.b16 %v1584
        %v1669 = vunpack.c.h.b16 %v1584
        %v1670 = vunpack.c.l.b16 %v1585
        %v1671 = vunpack.c.l.b16 %v1586
        %v1672 = vunpack.c.h.b16 %v1586
        %v1673 = vunpack.c.l.b16 %v1587
        %v1674 = vunpack.c.l.b16 %v1588
        %v1675 = vunpack.c.h.b16 %v1588
        %v1676 = vunpack.c.l.b16 %v1589
        %v1677 = vunpack.c.l.b16 %v1590
        %v1678 = vunpack.c.h.b16 %v1590
        %v1679 = vunpack.c.l.b16 %v1591
        %v1680 = vpack.c.b16 %v1635, %v1632
        %v1681 = vpack.c.b16 %v1636, %v1633
        %v1682 = vpack.c.b16 %v1637, %v1634
        %v1683 = vpack.c.b16 %v1641, %v1638
        %v1684 = vpack.c.b16 %v1642, %v1639
        %v1685 = vpack.c.b16 %v1643, %v1640
        %v1686 = vpack.c.b16 %v1647, %v1644
        %v1687 = vpack.c.b16 %v1648, %v1645
        %v1688 = vpack.c.b16 %v1649, %v1646
        %v1689 = vpack.c.b16 %v1653, %v1650
        %v1690 = vpack.c.b16 %v1654, %v1651
        %v1691 = vpack.c.b16 %v1655, %v1652
        %v1692 = vpack.c.b16 %v1659, %v1656
        %v1693 = vpack.c.b16 %v1660, %v1657
        %v1694 = vpack.c.b16 %v1661, %v1658
        %v1695 = vpack.c.b16 %v1665, %v1662
        %v1696 = vpack.c.b16 %v1666, %v1663
        %v1697 = vpack.c.b16 %v1667, %v1664
        %v1698 = vpack.c.b16 %v1671, %v1668
        %v1699 = vpack.c.b16 %v1672, %v1669
        %v1700 = vpack.c.b16 %v1673, %v1670
        %v1701 = vpack.c.b16 %v1677, %v1674
        %v1702 = vpack.c.b16 %v1678, %v1675
        %v1703 = vpack.c.b16 %v1679, %v1676
        %1728 = vmatpush.bf16.msra.mxu0 %v1701
        %1729 = vmatpush.bf16.msra.mxu0 %v1698
        %1730 = vmatpush.bf16.msra.mxu0 %v1695
        %1731 = vmatpush.bf16.msra.mxu0 %v1692
        %1732 = vmatpush.bf16.msra.mxu0 %v1689
        %1733 = vmatpush.bf16.msra.mxu0 %v1686
        %1734 = vmatpush.bf16.msra.mxu0 %v1683
        %1735 = vmatpush.bf16.msra.mxu0 %v1680
        %1736 = vmatmul.bf16.gmra.mxu0 %v1556
        %v1737 = vpop.f32.mrf.mxu0
        %v1738 = vadd.f32 %v1594, %v1737
        %v1739 = vpop.f32.mrf.mxu0
        %v1740 = vadd.f32 %v1594, %v1739
        %1741 = vmatmul.bf16.gmra.mxu0 %v1557
        %v1742 = vpop.f32.mrf.mxu0
        %v1743 = vadd.f32 %v1594, %v1742
        %v1744 = vpop.f32.mrf.mxu0
        %v1745 = vadd.f32 %v1594, %v1744
        %1746 = vmatmul.bf16.gmra.mxu0 %v1558
        %v1747 = vpop.f32.mrf.mxu0
        %v1748 = vadd.f32 %v1594, %v1747
        %v1749 = vpop.f32.mrf.mxu0
        %v1750 = vadd.f32 %v1594, %v1749
        %1751 = vmatmul.bf16.gmra.mxu0 %v1559
        %v1752 = vpop.f32.mrf.mxu0
        %v1753 = vadd.f32 %v1594, %v1752
        %v1754 = vpop.f32.mrf.mxu0
        %v1755 = vadd.f32 %v1594, %v1754
        %1756 = vdwg.mxu0
        %1757 = vmatpush.bf16.msra.mxu0 %v1702
        %1758 = vmatpush.bf16.msra.mxu0 %v1699
        %1759 = vmatpush.bf16.msra.mxu0 %v1696
        %1760 = vmatpush.bf16.msra.mxu0 %v1693
        %1761 = vmatpush.bf16.msra.mxu0 %v1690
        %1762 = vmatpush.bf16.msra.mxu0 %v1687
        %1763 = vmatpush.bf16.msra.mxu0 %v1684
        %1764 = vmatpush.bf16.msra.mxu0 %v1681
        %1765 = vmatmul.bf16.gmra.mxu0 %v1556
        %v1766 = vpop.f32.mrf.mxu0
        %v1767 = vadd.f32 %v1595, %v1766
        %v1768 = vpop.f32.mrf.mxu0
        %v1769 = vadd.f32 %v1595, %v1768
        %1770 = vmatmul.bf16.gmra.mxu0 %v1557
        %v1771 = vpop.f32.mrf.mxu0
        %v1772 = vadd.f32 %v1595, %v1771
        %v1773 = vpop.f32.mrf.mxu0
        %v1774 = vadd.f32 %v1595, %v1773
        %1775 = vmatmul.bf16.gmra.mxu0 %v1558
        %v1776 = vpop.f32.mrf.mxu0
        %v1777 = vadd.f32 %v1595, %v1776
        %v1778 = vpop.f32.mrf.mxu0
        %v1779 = vadd.f32 %v1595, %v1778
        %1780 = vmatmul.bf16.gmra.mxu0 %v1559
        %v1781 = vpop.f32.mrf.mxu0
        %v1782 = vadd.f32 %v1595, %v1781
        %v1783 = vpop.f32.mrf.mxu0
        %v1784 = vadd.f32 %v1595, %v1783
        %1785 = vdwg.mxu0
        %1786 = vmatpush.bf16.msra.mxu0 %v1703
        %1787 = vmatpush.bf16.msra.mxu0 %v1700
        %1788 = vmatpush.bf16.msra.mxu0 %v1697
        %1789 = vmatpush.bf16.msra.mxu0 %v1694
        %1790 = vmatpush.bf16.msra.mxu0 %v1691
        %1791 = vmatpush.bf16.msra.mxu0 %v1688
        %1792 = vmatpush.bf16.msra.mxu0 %v1685
        %1793 = vmatpush.bf16.msra.mxu0 %v1682
        %1794 = vmatmul.bf16.gmra.mxu0 %v1556
        %v1795 = vpop.f32.mrf.mxu0
        %v1796 = vadd.f32 %v1596, %v1795
        %v1797 = vpop.f32.mrf.mxu0
        %v1798 = vadd.f32 %v1596, %v1797
        %1799 = vmatmul.bf16.gmra.mxu0 %v1557
        %v1800 = vpop.f32.mrf.mxu0
        %v1801 = vadd.f32 %v1596, %v1800
        %v1802 = vpop.f32.mrf.mxu0
        %v1803 = vadd.f32 %v1596, %v1802
        %1804 = vmatmul.bf16.gmra.mxu0 %v1558
        %v1805 = vpop.f32.mrf.mxu0
        %v1806 = vadd.f32 %v1596, %v1805
        %v1807 = vpop.f32.mrf.mxu0
        %v1808 = vadd.f32 %v1596, %v1807
        %1809 = vmatmul.bf16.gmra.mxu0 %v1559
        %v1810 = vpop.f32.mrf.mxu0
        %v1811 = vadd.f32 %v1596, %v1810
        %v1812 = vpop.f32.mrf.mxu0
        %v1813 = vadd.f32 %v1596, %v1812
        %1814 = vdwg.mxu0
        %v1815 = vld [vmem:[#allocation8] sm:$0x1]
        %v1816 = vld [vmem:[#allocation8 + $0x1] sm:$0x1]
        %v1817 = vld [vmem:[#allocation8 + $0x2] sm:$0x1]
        %v1818 = vld [vmem:[#allocation8 + $0x3] sm:$0x1]
        %v1819 = vld [vmem:[#allocation8 + $0x4] sm:$0x1]
        %v1820 = vld [vmem:[#allocation8 + $0x5] sm:$0x1]
        %v1821 = vld [vmem:[#allocation8 + $0x6] sm:$0x1]
        %v1822 = vld [vmem:[#allocation8 + $0x7] sm:$0x1]
        %v1831 = vperm.slane %v1815, 0
        %v1832 = vperm.slane %v1816, 0
        %v1833 = vperm.slane %v1817, 0
        %v1834 = vperm.slane %v1818, 0
        %v1835 = vperm.slane %v1819, 0
        %v1836 = vperm.slane %v1820, 0
        %v1837 = vperm.slane %v1821, 0
        %v1838 = vperm.slane %v1822, 0
        %v1847 = vmul.f32 %v1767, %v1831
        %v1848 = vmul.f32 %v1769, %v1831
        %v1849 = vmul.f32 %v1767, %v1832
        %v1850 = vmul.f32 %v1769, %v1832
        %v1851 = vmul.f32 %v1767, %v1833
        %v1852 = vmul.f32 %v1769, %v1833
        %v1853 = vmul.f32 %v1767, %v1834
        %v1854 = vmul.f32 %v1769, %v1834
        %v1855 = vmul.f32 %v1767, %v1835
        %v1856 = vmul.f32 %v1769, %v1835
        %v1857 = vmul.f32 %v1767, %v1836
        %v1858 = vmul.f32 %v1769, %v1836
        %v1859 = vmul.f32 %v1767, %v1837
        %v1860 = vmul.f32 %v1769, %v1837
        %v1861 = vmul.f32 %v1767, %v1838
        %v1862 = vmul.f32 %v1769, %v1838
        %v1863 = vmul.f32 %v1772, %v1831
        %v1864 = vmul.f32 %v1774, %v1831
        %v1865 = vmul.f32 %v1772, %v1832
        %v1866 = vmul.f32 %v1774, %v1832
        %v1867 = vmul.f32 %v1772, %v1833
        %v1868 = vmul.f32 %v1774, %v1833
        %v1869 = vmul.f32 %v1772, %v1834
        %v1870 = vmul.f32 %v1774, %v1834
        %v1871 = vmul.f32 %v1772, %v1835
        %v1872 = vmul.f32 %v1774, %v1835
        %v1873 = vmul.f32 %v1772, %v1836
        %v1874 = vmul.f32 %v1774, %v1836
        %v1875 = vmul.f32 %v1772, %v1837
        %v1876 = vmul.f32 %v1774, %v1837
        %v1877 = vmul.f32 %v1772, %v1838
        %v1878 = vmul.f32 %v1774, %v1838
        %v1879 = vmul.f32 %v1777, %v1831
        %v1880 = vmul.f32 %v1779, %v1831
        %v1881 = vmul.f32 %v1777, %v1832
        %v1882 = vmul.f32 %v1779, %v1832
        %v1883 = vmul.f32 %v1777, %v1833
        %v1884 = vmul.f32 %v1779, %v1833
        %v1885 = vmul.f32 %v1777, %v1834
        %v1886 = vmul.f32 %v1779, %v1834
        %v1887 = vmul.f32 %v1777, %v1835
        %v1888 = vmul.f32 %v1779, %v1835
        %v1889 = vmul.f32 %v1777, %v1836
        %v1890 = vmul.f32 %v1779, %v1836
        %v1891 = vmul.f32 %v1777, %v1837
        %v1892 = vmul.f32 %v1779, %v1837
        %v1893 = vmul.f32 %v1777, %v1838
        %v1894 = vmul.f32 %v1779, %v1838
        %v1895 = vmul.f32 %v1782, %v1831
        %v1896 = vmul.f32 %v1784, %v1831
        %v1897 = vmul.f32 %v1782, %v1832
        %v1898 = vmul.f32 %v1784, %v1832
        %v1899 = vmul.f32 %v1782, %v1833
        %v1900 = vmul.f32 %v1784, %v1833
        %v1901 = vmul.f32 %v1782, %v1834
        %v1902 = vmul.f32 %v1784, %v1834
        %v1903 = vmul.f32 %v1782, %v1835
        %v1904 = vmul.f32 %v1784, %v1835
        %v1905 = vmul.f32 %v1782, %v1836
        %v1906 = vmul.f32 %v1784, %v1836
        %v1907 = vmul.f32 %v1782, %v1837
        %v1908 = vmul.f32 %v1784, %v1837
        %v1909 = vmul.f32 %v1782, %v1838
        %v1910 = vmul.f32 %v1784, %v1838
        %v1911 = vpack.c.bf16 %v1847, %v1847
        %v1912 = vpack.c.bf16 %v1848, %v1848
        %v1913 = vpack.c.bf16 %v1849, %v1849
        %v1914 = vpack.c.bf16 %v1850, %v1850
        %v1915 = vpack.c.bf16 %v1851, %v1851
        %v1916 = vpack.c.bf16 %v1852, %v1852
        %v1917 = vpack.c.bf16 %v1853, %v1853
        %v1918 = vpack.c.bf16 %v1854, %v1854
        %v1919 = vpack.c.bf16 %v1855, %v1855
        %v1920 = vpack.c.bf16 %v1856, %v1856
        %v1921 = vpack.c.bf16 %v1857, %v1857
        %v1922 = vpack.c.bf16 %v1858, %v1858
        %v1923 = vpack.c.bf16 %v1859, %v1859
        %v1924 = vpack.c.bf16 %v1860, %v1860
        %v1925 = vpack.c.bf16 %v1861, %v1861
        %v1926 = vpack.c.bf16 %v1862, %v1862
        %v1927 = vpack.c.bf16 %v1863, %v1863
        %v1928 = vpack.c.bf16 %v1864, %v1864
        %v1929 = vpack.c.bf16 %v1865, %v1865
        %v1930 = vpack.c.bf16 %v1866, %v1866
        %v1931 = vpack.c.bf16 %v1867, %v1867
        %v1932 = vpack.c.bf16 %v1868, %v1868
        %v1933 = vpack.c.bf16 %v1869, %v1869
        %v1934 = vpack.c.bf16 %v1870, %v1870
        %v1935 = vpack.c.bf16 %v1871, %v1871
        %v1936 = vpack.c.bf16 %v1872, %v1872
        %v1937 = vpack.c.bf16 %v1873, %v1873
        %v1938 = vpack.c.bf16 %v1874, %v1874
        %v1939 = vpack.c.bf16 %v1875, %v1875
        %v1940 = vpack.c.bf16 %v1876, %v1876
        %v1941 = vpack.c.bf16 %v1877, %v1877
        %v1942 = vpack.c.bf16 %v1878, %v1878
        %v1943 = vpack.c.bf16 %v1879, %v1879
        %v1944 = vpack.c.bf16 %v1880, %v1880
        %v1945 = vpack.c.bf16 %v1881, %v1881
        %v1946 = vpack.c.bf16 %v1882, %v1882
        %v1947 = vpack.c.bf16 %v1883, %v1883
        %v1948 = vpack.c.bf16 %v1884, %v1884
        %v1949 = vpack.c.bf16 %v1885, %v1885
        %v1950 = vpack.c.bf16 %v1886, %v1886
        %v1951 = vpack.c.bf16 %v1887, %v1887
        %v1952 = vpack.c.bf16 %v1888, %v1888
        %v1953 = vpack.c.bf16 %v1889, %v1889
        %v1954 = vpack.c.bf16 %v1890, %v1890
        %v1955 = vpack.c.bf16 %v1891, %v1891
        %v1956 = vpack.c.bf16 %v1892, %v1892
        %v1957 = vpack.c.bf16 %v1893, %v1893
        %v1958 = vpack.c.bf16 %v1894, %v1894
        %v1959 = vpack.c.bf16 %v1895, %v1895
        %v1960 = vpack.c.bf16 %v1896, %v1896
        %v1961 = vpack.c.bf16 %v1897, %v1897
        %v1962 = vpack.c.bf16 %v1898, %v1898
        %v1963 = vpack.c.bf16 %v1899, %v1899
        %v1964 = vpack.c.bf16 %v1900, %v1900
        %v1965 = vpack.c.bf16 %v1901, %v1901
        %v1966 = vpack.c.bf16 %v1902, %v1902
        %v1967 = vpack.c.bf16 %v1903, %v1903
        %v1968 = vpack.c.bf16 %v1904, %v1904
        %v1969 = vpack.c.bf16 %v1905, %v1905
        %v1970 = vpack.c.bf16 %v1906, %v1906
        %v1971 = vpack.c.bf16 %v1907, %v1907
        %v1972 = vpack.c.bf16 %v1908, %v1908
        %v1973 = vpack.c.bf16 %v1909, %v1909
        %v1974 = vpack.c.bf16 %v1910, %v1910
        %v1975 = vmul.f32 %v1796, %v1831
        %v1976 = vmul.f32 %v1798, %v1831
        %v1977 = vmul.f32 %v1796, %v1832
        %v1978 = vmul.f32 %v1798, %v1832
        %v1979 = vmul.f32 %v1796, %v1833
        %v1980 = vmul.f32 %v1798, %v1833
        %v1981 = vmul.f32 %v1796, %v1834
        %v1982 = vmul.f32 %v1798, %v1834
        %v1983 = vmul.f32 %v1796, %v1835
        %v1984 = vmul.f32 %v1798, %v1835
        %v1985 = vmul.f32 %v1796, %v1836
        %v1986 = vmul.f32 %v1798, %v1836
        %v1987 = vmul.f32 %v1796, %v1837
        %v1988 = vmul.f32 %v1798, %v1837
        %v1989 = vmul.f32 %v1796, %v1838
        %v1990 = vmul.f32 %v1798, %v1838
        %v1991 = vmul.f32 %v1801, %v1831
        %v1992 = vmul.f32 %v1803, %v1831
        %v1993 = vmul.f32 %v1801, %v1832
        %v1994 = vmul.f32 %v1803, %v1832
        %v1995 = vmul.f32 %v1801, %v1833
        %v1996 = vmul.f32 %v1803, %v1833
        %v1997 = vmul.f32 %v1801, %v1834
        %v1998 = vmul.f32 %v1803, %v1834
        %v1999 = vmul.f32 %v1801, %v1835
        %v2000 = vmul.f32 %v1803, %v1835
        %v2001 = vmul.f32 %v1801, %v1836
        %v2002 = vmul.f32 %v1803, %v1836
        %v2003 = vmul.f32 %v1801, %v1837
        %v2004 = vmul.f32 %v1803, %v1837
        %v2005 = vmul.f32 %v1801, %v1838
        %v2006 = vmul.f32 %v1803, %v1838
        %v2007 = vmul.f32 %v1806, %v1831
        %v2008 = vmul.f32 %v1808, %v1831
        %v2009 = vmul.f32 %v1806, %v1832
        %v2010 = vmul.f32 %v1808, %v1832
        %v2011 = vmul.f32 %v1806, %v1833
        %v2012 = vmul.f32 %v1808, %v1833
        %v2013 = vmul.f32 %v1806, %v1834
        %v2014 = vmul.f32 %v1808, %v1834
        %v2015 = vmul.f32 %v1806, %v1835
        %v2016 = vmul.f32 %v1808, %v1835
        %v2017 = vmul.f32 %v1806, %v1836
        %v2018 = vmul.f32 %v1808, %v1836
        %v2019 = vmul.f32 %v1806, %v1837
        %v2020 = vmul.f32 %v1808, %v1837
        %v2021 = vmul.f32 %v1806, %v1838
        %v2022 = vmul.f32 %v1808, %v1838
        %v2023 = vmul.f32 %v1811, %v1831
        %v2024 = vmul.f32 %v1813, %v1831
        %v2025 = vmul.f32 %v1811, %v1832
        %v2026 = vmul.f32 %v1813, %v1832
        %v2027 = vmul.f32 %v1811, %v1833
        %v2028 = vmul.f32 %v1813, %v1833
        %v2029 = vmul.f32 %v1811, %v1834
        %v2030 = vmul.f32 %v1813, %v1834
        %v2031 = vmul.f32 %v1811, %v1835
        %v2032 = vmul.f32 %v1813, %v1835
        %v2033 = vmul.f32 %v1811, %v1836
        %v2034 = vmul.f32 %v1813, %v1836
        %v2035 = vmul.f32 %v1811, %v1837
        %v2036 = vmul.f32 %v1813, %v1837
        %v2037 = vmul.f32 %v1811, %v1838
        %v2038 = vmul.f32 %v1813, %v1838
        %v2039 = vpack.c.bf16 %v1975, %v1975
        %v2040 = vpack.c.bf16 %v1976, %v1976
        %v2041 = vpack.c.bf16 %v1977, %v1977
        %v2042 = vpack.c.bf16 %v1978, %v1978
        %v2043 = vpack.c.bf16 %v1979, %v1979
        %v2044 = vpack.c.bf16 %v1980, %v1980
        %v2045 = vpack.c.bf16 %v1981, %v1981
        %v2046 = vpack.c.bf16 %v1982, %v1982
        %v2047 = vpack.c.bf16 %v1983, %v1983
        %v2048 = vpack.c.bf16 %v1984, %v1984
        %v2049 = vpack.c.bf16 %v1985, %v1985
        %v2050 = vpack.c.bf16 %v1986, %v1986
        %v2051 = vpack.c.bf16 %v1987, %v1987
        %v2052 = vpack.c.bf16 %v1988, %v1988
        %v2053 = vpack.c.bf16 %v1989, %v1989
        %v2054 = vpack.c.bf16 %v1990, %v1990
        %v2055 = vpack.c.bf16 %v1991, %v1991
        %v2056 = vpack.c.bf16 %v1992, %v1992
        %v2057 = vpack.c.bf16 %v1993, %v1993
        %v2058 = vpack.c.bf16 %v1994, %v1994
        %v2059 = vpack.c.bf16 %v1995, %v1995
        %v2060 = vpack.c.bf16 %v1996, %v1996
        %v2061 = vpack.c.bf16 %v1997, %v1997
        %v2062 = vpack.c.bf16 %v1998, %v1998
        %v2063 = vpack.c.bf16 %v1999, %v1999
        %v2064 = vpack.c.bf16 %v2000, %v2000
        %v2065 = vpack.c.bf16 %v2001, %v2001
        %v2066 = vpack.c.bf16 %v2002, %v2002
        %v2067 = vpack.c.bf16 %v2003, %v2003
        %v2068 = vpack.c.bf16 %v2004, %v2004
        %v2069 = vpack.c.bf16 %v2005, %v2005
        %v2070 = vpack.c.bf16 %v2006, %v2006
        %v2071 = vpack.c.bf16 %v2007, %v2007
        %v2072 = vpack.c.bf16 %v2008, %v2008
        %v2073 = vpack.c.bf16 %v2009, %v2009
        %v2074 = vpack.c.bf16 %v2010, %v2010
        %v2075 = vpack.c.bf16 %v2011, %v2011
        %v2076 = vpack.c.bf16 %v2012, %v2012
        %v2077 = vpack.c.bf16 %v2013, %v2013
        %v2078 = vpack.c.bf16 %v2014, %v2014
        %v2079 = vpack.c.bf16 %v2015, %v2015
        %v2080 = vpack.c.bf16 %v2016, %v2016
        %v2081 = vpack.c.bf16 %v2017, %v2017
        %v2082 = vpack.c.bf16 %v2018, %v2018
        %v2083 = vpack.c.bf16 %v2019, %v2019
        %v2084 = vpack.c.bf16 %v2020, %v2020
        %v2085 = vpack.c.bf16 %v2021, %v2021
        %v2086 = vpack.c.bf16 %v2022, %v2022
        %v2087 = vpack.c.bf16 %v2023, %v2023
        %v2088 = vpack.c.bf16 %v2024, %v2024
        %v2089 = vpack.c.bf16 %v2025, %v2025
        %v2090 = vpack.c.bf16 %v2026, %v2026
        %v2091 = vpack.c.bf16 %v2027, %v2027
        %v2092 = vpack.c.bf16 %v2028, %v2028
        %v2093 = vpack.c.bf16 %v2029, %v2029
        %v2094 = vpack.c.bf16 %v2030, %v2030
        %v2095 = vpack.c.bf16 %v2031, %v2031
        %v2096 = vpack.c.bf16 %v2032, %v2032
        %v2097 = vpack.c.bf16 %v2033, %v2033
        %v2098 = vpack.c.bf16 %v2034, %v2034
        %v2099 = vpack.c.bf16 %v2035, %v2035
        %v2100 = vpack.c.bf16 %v2036, %v2036
        %v2101 = vpack.c.bf16 %v2037, %v2037
        %v2102 = vpack.c.bf16 %v2038, %v2038
        %v2103 = vpack.c.bf16 %v1738, %v1738
        %v2104 = vpack.c.bf16 %v1740, %v1740
        %v2105 = vpack.c.bf16 %v1743, %v1743
        %v2106 = vpack.c.bf16 %v1745, %v1745
        %v2107 = vpack.c.bf16 %v1748, %v1748
        %v2108 = vpack.c.bf16 %v1750, %v1750
        %v2109 = vpack.c.bf16 %v1753, %v1753
        %v2110 = vpack.c.bf16 %v1755, %v1755
        %v2113 = vunpack.c.l.b16 %v2103
        %v2114 = vunpack.c.l.b16 %v2104
        %v2115 = vpack.c.b16 %v2114, %v2113
        %v2133 = vunpack.c.l.b16 %v1911
        %v2134 = vunpack.c.l.b16 %v1912
        %v2135 = vunpack.c.l.b16 %v1913
        %v2136 = vunpack.c.l.b16 %v1914
        %v2137 = vunpack.c.l.b16 %v1915
        %v2138 = vunpack.c.l.b16 %v1916
        %v2139 = vunpack.c.l.b16 %v1917
        %v2140 = vunpack.c.l.b16 %v1918
        %v2141 = vunpack.c.l.b16 %v1919
        %v2142 = vunpack.c.l.b16 %v1920
        %v2143 = vunpack.c.l.b16 %v1921
        %v2144 = vunpack.c.l.b16 %v1922
        %v2145 = vunpack.c.l.b16 %v1923
        %v2146 = vunpack.c.l.b16 %v1924
        %v2147 = vunpack.c.l.b16 %v1925
        %v2148 = vunpack.c.l.b16 %v1926
        %v2149 = vpack.c.b16 %v2134, %v2133
        %v2150 = vpack.c.b16 %v2136, %v2135
        %v2151 = vpack.c.b16 %v2138, %v2137
        %v2152 = vpack.c.b16 %v2140, %v2139
        %v2153 = vpack.c.b16 %v2142, %v2141
        %v2154 = vpack.c.b16 %v2144, %v2143
        %v2155 = vpack.c.b16 %v2146, %v2145
        %v2156 = vpack.c.b16 %v2148, %v2147
        %2165 = vmatpush.bf16.xpose.msra.mxu0 %v2156
        %2166 = vmatpush.bf16.xpose.msra.mxu0 %v2155
        %2167 = vmatpush.bf16.xpose.msra.mxu0 %v2154
        %2168 = vmatpush.bf16.xpose.msra.mxu0 %v2153
        %2169 = vmatpush.bf16.xpose.msra.mxu0 %v2152
        %2170 = vmatpush.bf16.xpose.msra.mxu0 %v2151
        %2171 = vmatpush.bf16.xpose.msra.mxu0 %v2150
        %2172 = vmatpush.bf16.xpose.msra.mxu0 %v2149
        %2173 = vmatmul.bf16.gmra.mxu0 %v2115
        %v2174 = vpop.f32.mrf.mxu0
        %v2175 = vadd.f32 0.0, %v2174
        %v2176 = vpop.f32.mrf.mxu0
        %v2177 = vadd.f32 0.0, %v2176
        %2178 = vdwg.mxu0
        %v2181 = vunpack.c.l.b16 %v2105
        %v2182 = vunpack.c.l.b16 %v2106
        %v2183 = vpack.c.b16 %v2182, %v2181
        %v2201 = vunpack.c.l.b16 %v1927
        %v2202 = vunpack.c.l.b16 %v1928
        %v2203 = vunpack.c.l.b16 %v1929
        %v2204 = vunpack.c.l.b16 %v1930
        %v2205 = vunpack.c.l.b16 %v1931
        %v2206 = vunpack.c.l.b16 %v1932
        %v2207 = vunpack.c.l.b16 %v1933
        %v2208 = vunpack.c.l.b16 %v1934
        %v2209 = vunpack.c.l.b16 %v1935
        %v2210 = vunpack.c.l.b16 %v1936
        %v2211 = vunpack.c.l.b16 %v1937
        %v2212 = vunpack.c.l.b16 %v1938
        %v2213 = vunpack.c.l.b16 %v1939
        %v2214 = vunpack.c.l.b16 %v1940
        %v2215 = vunpack.c.l.b16 %v1941
        %v2216 = vunpack.c.l.b16 %v1942
        %v2217 = vpack.c.b16 %v2202, %v2201
        %v2218 = vpack.c.b16 %v2204, %v2203
        %v2219 = vpack.c.b16 %v2206, %v2205
        %v2220 = vpack.c.b16 %v2208, %v2207
        %v2221 = vpack.c.b16 %v2210, %v2209
        %v2222 = vpack.c.b16 %v2212, %v2211
        %v2223 = vpack.c.b16 %v2214, %v2213
        %v2224 = vpack.c.b16 %v2216, %v2215
        %2233 = vmatpush.bf16.xpose.msra.mxu0 %v2224
        %2234 = vmatpush.bf16.xpose.msra.mxu0 %v2223
        %2235 = vmatpush.bf16.xpose.msra.mxu0 %v2222
        %2236 = vmatpush.bf16.xpose.msra.mxu0 %v2221
        %2237 = vmatpush.bf16.xpose.msra.mxu0 %v2220
        %2238 = vmatpush.bf16.xpose.msra.mxu0 %v2219
        %2239 = vmatpush.bf16.xpose.msra.mxu0 %v2218
        %2240 = vmatpush.bf16.xpose.msra.mxu0 %v2217
        %2241 = vmatmul.bf16.gmra.mxu0 %v2183
        %v2242 = vpop.f32.mrf.mxu0
        %v2243 = vadd.f32 0.0, %v2242
        %v2244 = vpop.f32.mrf.mxu0
        %v2245 = vadd.f32 0.0, %v2244
        %2246 = vdwg.mxu0
        %v2249 = vunpack.c.l.b16 %v2107
        %v2250 = vunpack.c.l.b16 %v2108
        %v2251 = vpack.c.b16 %v2250, %v2249
        %v2269 = vunpack.c.l.b16 %v1943
        %v2270 = vunpack.c.l.b16 %v1944
        %v2271 = vunpack.c.l.b16 %v1945
        %v2272 = vunpack.c.l.b16 %v1946
        %v2273 = vunpack.c.l.b16 %v1947
        %v2274 = vunpack.c.l.b16 %v1948
        %v2275 = vunpack.c.l.b16 %v1949
        %v2276 = vunpack.c.l.b16 %v1950
        %v2277 = vunpack.c.l.b16 %v1951
        %v2278 = vunpack.c.l.b16 %v1952
        %v2279 = vunpack.c.l.b16 %v1953
        %v2280 = vunpack.c.l.b16 %v1954
        %v2281 = vunpack.c.l.b16 %v1955
        %v2282 = vunpack.c.l.b16 %v1956
        %v2283 = vunpack.c.l.b16 %v1957
        %v2284 = vunpack.c.l.b16 %v1958
        %v2285 = vpack.c.b16 %v2270, %v2269
        %v2286 = vpack.c.b16 %v2272, %v2271
        %v2287 = vpack.c.b16 %v2274, %v2273
        %v2288 = vpack.c.b16 %v2276, %v2275
        %v2289 = vpack.c.b16 %v2278, %v2277
        %v2290 = vpack.c.b16 %v2280, %v2279
        %v2291 = vpack.c.b16 %v2282, %v2281
        %v2292 = vpack.c.b16 %v2284, %v2283
        %2301 = vmatpush.bf16.xpose.msra.mxu0 %v2292
        %2302 = vmatpush.bf16.xpose.msra.mxu0 %v2291
        %2303 = vmatpush.bf16.xpose.msra.mxu0 %v2290
        %2304 = vmatpush.bf16.xpose.msra.mxu0 %v2289
        %2305 = vmatpush.bf16.xpose.msra.mxu0 %v2288
        %2306 = vmatpush.bf16.xpose.msra.mxu0 %v2287
        %2307 = vmatpush.bf16.xpose.msra.mxu0 %v2286
        %2308 = vmatpush.bf16.xpose.msra.mxu0 %v2285
        %2309 = vmatmul.bf16.gmra.mxu0 %v2251
        %v2310 = vpop.f32.mrf.mxu0
        %v2311 = vadd.f32 0.0, %v2310
        %v2312 = vpop.f32.mrf.mxu0
        %v2313 = vadd.f32 0.0, %v2312
        %2314 = vdwg.mxu0
        %v2317 = vunpack.c.l.b16 %v2109
        %v2318 = vunpack.c.l.b16 %v2110
        %v2319 = vpack.c.b16 %v2318, %v2317
        %v2337 = vunpack.c.l.b16 %v1959
        %v2338 = vunpack.c.l.b16 %v1960
        %v2339 = vunpack.c.l.b16 %v1961
        %v2340 = vunpack.c.l.b16 %v1962
        %v2341 = vunpack.c.l.b16 %v1963
        %v2342 = vunpack.c.l.b16 %v1964
        %v2343 = vunpack.c.l.b16 %v1965
        %v2344 = vunpack.c.l.b16 %v1966
        %v2345 = vunpack.c.l.b16 %v1967
        %v2346 = vunpack.c.l.b16 %v1968
        %v2347 = vunpack.c.l.b16 %v1969
        %v2348 = vunpack.c.l.b16 %v1970
        %v2349 = vunpack.c.l.b16 %v1971
        %v2350 = vunpack.c.l.b16 %v1972
        %v2351 = vunpack.c.l.b16 %v1973
        %v2352 = vunpack.c.l.b16 %v1974
        %v2353 = vpack.c.b16 %v2338, %v2337
        %v2354 = vpack.c.b16 %v2340, %v2339
        %v2355 = vpack.c.b16 %v2342, %v2341
        %v2356 = vpack.c.b16 %v2344, %v2343
        %v2357 = vpack.c.b16 %v2346, %v2345
        %v2358 = vpack.c.b16 %v2348, %v2347
        %v2359 = vpack.c.b16 %v2350, %v2349
        %v2360 = vpack.c.b16 %v2352, %v2351
        %2369 = vmatpush.bf16.xpose.msra.mxu0 %v2360
        %2370 = vmatpush.bf16.xpose.msra.mxu0 %v2359
        %2371 = vmatpush.bf16.xpose.msra.mxu0 %v2358
        %2372 = vmatpush.bf16.xpose.msra.mxu0 %v2357
        %2373 = vmatpush.bf16.xpose.msra.mxu0 %v2356
        %2374 = vmatpush.bf16.xpose.msra.mxu0 %v2355
        %2375 = vmatpush.bf16.xpose.msra.mxu0 %v2354
        %2376 = vmatpush.bf16.xpose.msra.mxu0 %v2353
        %2377 = vmatmul.bf16.gmra.mxu0 %v2319
        %v2378 = vpop.f32.mrf.mxu0
        %v2379 = vadd.f32 0.0, %v2378
        %v2380 = vpop.f32.mrf.mxu0
        %v2381 = vadd.f32 0.0, %v2380
        %2382 = vdwg.mxu0
        %2383 = vmax.xlane.f32.xlu0 %v2175
        %v2384 = vpop.xlane.xlu0 %2383
        %2385 = vmax.xlane.f32.xlu0 %v2177
        %v2386 = vpop.xlane.xlu0 %2385
        %2387 = vmax.xlane.f32.xlu0 %v2243
        %v2388 = vpop.xlane.xlu0 %2387
        %2389 = vmax.xlane.f32.xlu0 %v2245
        %v2390 = vpop.xlane.xlu0 %2389
        %2391 = vmax.xlane.f32.xlu0 %v2311
        %v2392 = vpop.xlane.xlu0 %2391
        %2393 = vmax.xlane.f32.xlu0 %v2313
        %v2394 = vpop.xlane.xlu0 %2393
        %2395 = vmax.xlane.f32.xlu0 %v2379
        %v2396 = vpop.xlane.xlu0 %2395
        %2397 = vmax.xlane.f32.xlu0 %v2381
        %v2398 = vpop.xlane.xlu0 %2397
        %v2399 = vsub.f32 %v2175, %v2384
        %v2400 = vsub.f32 %v2177, %v2386
        %v2401 = vsub.f32 %v2243, %v2388
        %v2402 = vsub.f32 %v2245, %v2390
        %v2403 = vsub.f32 %v2311, %v2392
        %v2404 = vsub.f32 %v2313, %v2394
        %v2405 = vsub.f32 %v2379, %v2396
        %v2406 = vsub.f32 %v2381, %v2398
        %v2407 = vmul.f32 %v2399, 1.442695
        %v2408 = vpow.pop %v2407
        %v2409 = vmul.f32 %v2400, 1.442695
        %v2410 = vpow.pop %v2409
        %v2411 = vmul.f32 %v2401, 1.442695
        %v2412 = vpow.pop %v2411
        %v2413 = vmul.f32 %v2402, 1.442695
        %v2414 = vpow.pop %v2413
        %v2415 = vmul.f32 %v2403, 1.442695
        %v2416 = vpow.pop %v2415
        %v2417 = vmul.f32 %v2404, 1.442695
        %v2418 = vpow.pop %v2417
        %v2419 = vmul.f32 %v2405, 1.442695
        %v2420 = vpow.pop %v2419
        %v2421 = vmul.f32 %v2406, 1.442695
        %v2422 = vpow.pop %v2421
        %v2423 = vld [vmem:[#allocation9] sm:$0xff]
        %v2424 = vld [vmem:[#allocation9 + $0x8] sm:$0xff]
        %v2425 = vld [vmem:[#allocation9 + $0x10] sm:$0xff]
        %v2426 = vld [vmem:[#allocation9 + $0x18] sm:$0xff]
        %v2427 = vld [vmem:[#allocation9 + $0x20] sm:$0xff]
        %v2428 = vld [vmem:[#allocation9 + $0x28] sm:$0xff]
        %v2429 = vld [vmem:[#allocation9 + $0x30] sm:$0xff]
        %v2430 = vld [vmem:[#allocation9 + $0x38] sm:$0xff]
        %v2431 = vld [vmem:[#allocation9 + $0x40] sm:$0xff]
        %v2432 = vld [vmem:[#allocation9 + $0x48] sm:$0xff]
        %v2433 = vld [vmem:[#allocation9 + $0x50] sm:$0xff]
        %v2434 = vld [vmem:[#allocation9 + $0x58] sm:$0xff]
        %v2435 = vld [vmem:[#allocation9 + $0x60] sm:$0xff]
        %v2436 = vld [vmem:[#allocation9 + $0x68] sm:$0xff]
        %v2437 = vld [vmem:[#allocation9 + $0x70] sm:$0xff]
        %v2438 = vld [vmem:[#allocation9 + $0x78] sm:$0xff]
        %2439 = vmatpush.msra.mxu0 %v2438
        %2440 = vmatpush.msra.mxu0 %v2437
        %2441 = vmatpush.msra.mxu0 %v2436
        %2442 = vmatpush.msra.mxu0 %v2435
        %2443 = vmatpush.msra.mxu0 %v2434
        %2444 = vmatpush.msra.mxu0 %v2433
        %2445 = vmatpush.msra.mxu0 %v2432
        %2446 = vmatpush.msra.mxu0 %v2431
        %2447 = vmatpush.msra.mxu0 %v2430
        %2448 = vmatpush.msra.mxu0 %v2429
        %2449 = vmatpush.msra.mxu0 %v2428
        %2450 = vmatpush.msra.mxu0 %v2427
        %2451 = vmatpush.msra.mxu0 %v2426
        %2452 = vmatpush.msra.mxu0 %v2425
        %2453 = vmatpush.msra.mxu0 %v2424
        %2454 = vmatpush.msra.mxu0 %v2423
        %2455 = vmatmul.f32.gmra.mxu0 %v2408
        %v2456 = vpop.f32.mrf.mxu0
        %v2457 = vadd.f32 0.0, %v2456
        %2458 = vmatmul.f32.gmra.mxu0 %v2410
        %v2459 = vpop.f32.mrf.mxu0
        %v2460 = vadd.f32 0.0, %v2459
        %2461 = vmatmul.f32.gmra.mxu0 %v2412
        %v2462 = vpop.f32.mrf.mxu0
        %v2463 = vadd.f32 0.0, %v2462
        %2464 = vmatmul.f32.gmra.mxu0 %v2414
        %v2465 = vpop.f32.mrf.mxu0
        %v2466 = vadd.f32 0.0, %v2465
        %2467 = vmatmul.f32.gmra.mxu0 %v2416
        %v2468 = vpop.f32.mrf.mxu0
        %v2469 = vadd.f32 0.0, %v2468
        %2470 = vmatmul.f32.gmra.mxu0 %v2418
        %v2471 = vpop.f32.mrf.mxu0
        %v2472 = vadd.f32 0.0, %v2471
        %2473 = vmatmul.f32.gmra.mxu0 %v2420
        %v2474 = vpop.f32.mrf.mxu0
        %v2475 = vadd.f32 0.0, %v2474
        %2476 = vmatmul.f32.gmra.mxu0 %v2422
        %v2477 = vpop.f32.mrf.mxu0
        %v2478 = vadd.f32 0.0, %v2477
        %2479 = vdwg.mxu0
        %v2480 = vrcp.pop %v2457
        %v2481 = vrcp.pop %v2460
        %v2482 = vrcp.pop %v2463
        %v2483 = vrcp.pop %v2466
        %v2484 = vrcp.pop %v2469
        %v2485 = vrcp.pop %v2472
        %v2486 = vrcp.pop %v2475
        %v2487 = vrcp.pop %v2478
        %v2488 = vmul.f32 %v2408, %v2480
        %v2489 = vmul.f32 %v2410, %v2481
        %v2490 = vmul.f32 %v2412, %v2482
        %v2491 = vmul.f32 %v2414, %v2483
        %v2492 = vmul.f32 %v2416, %v2484
        %v2493 = vmul.f32 %v2418, %v2485
        %v2494 = vmul.f32 %v2420, %v2486
        %v2495 = vmul.f32 %v2422, %v2487
        %v2496 = vpack.c.bf16 %v2488, %v2488
        %v2497 = vpack.c.bf16 %v2489, %v2489
        %v2498 = vpack.c.bf16 %v2490, %v2490
        %v2499 = vpack.c.bf16 %v2491, %v2491
        %v2500 = vpack.c.bf16 %v2492, %v2492
        %v2501 = vpack.c.bf16 %v2493, %v2493
        %v2502 = vpack.c.bf16 %v2494, %v2494
        %v2503 = vpack.c.bf16 %v2495, %v2495
        %v2506 = vunpack.c.l.b16 %v2496
        %v2507 = vunpack.c.l.b16 %v2497
        %v2508 = vpack.c.b16 %v2507, %v2506
        %v2526 = vunpack.c.l.b16 %v2039
        %v2527 = vunpack.c.l.b16 %v2040
        %v2528 = vunpack.c.l.b16 %v2041
        %v2529 = vunpack.c.l.b16 %v2042
        %v2530 = vunpack.c.l.b16 %v2043
        %v2531 = vunpack.c.l.b16 %v2044
        %v2532 = vunpack.c.l.b16 %v2045
        %v2533 = vunpack.c.l.b16 %v2046
        %v2534 = vunpack.c.l.b16 %v2047
        %v2535 = vunpack.c.l.b16 %v2048
        %v2536 = vunpack.c.l.b16 %v2049
        %v2537 = vunpack.c.l.b16 %v2050
        %v2538 = vunpack.c.l.b16 %v2051
        %v2539 = vunpack.c.l.b16 %v2052
        %v2540 = vunpack.c.l.b16 %v2053
        %v2541 = vunpack.c.l.b16 %v2054
        %v2542 = vpack.c.b16 %v2527, %v2526
        %v2543 = vpack.c.b16 %v2529, %v2528
        %v2544 = vpack.c.b16 %v2531, %v2530
        %v2545 = vpack.c.b16 %v2533, %v2532
        %v2546 = vpack.c.b16 %v2535, %v2534
        %v2547 = vpack.c.b16 %v2537, %v2536
        %v2548 = vpack.c.b16 %v2539, %v2538
        %v2549 = vpack.c.b16 %v2541, %v2540
        %2558 = vmatpush.bf16.msra.mxu0 %v2549
        %2559 = vmatpush.bf16.msra.mxu0 %v2548
        %2560 = vmatpush.bf16.msra.mxu0 %v2547
        %2561 = vmatpush.bf16.msra.mxu0 %v2546
        %2562 = vmatpush.bf16.msra.mxu0 %v2545
        %2563 = vmatpush.bf16.msra.mxu0 %v2544
        %2564 = vmatpush.bf16.msra.mxu0 %v2543
        %2565 = vmatpush.bf16.msra.mxu0 %v2542
        %2566 = vmatmul.bf16.gmra.mxu0 %v2508
        %v2567 = vpop.f32.mrf.mxu0
        %v2568 = vadd.f32 0.0, %v2567
        %v2569 = vpop.f32.mrf.mxu0
        %v2570 = vadd.f32 0.0, %v2569
        %2571 = vdwg.mxu0
        %v2574 = vunpack.c.l.b16 %v2498
        %v2575 = vunpack.c.l.b16 %v2499
        %v2576 = vpack.c.b16 %v2575, %v2574
        %v2594 = vunpack.c.l.b16 %v2055
        %v2595 = vunpack.c.l.b16 %v2056
        %v2596 = vunpack.c.l.b16 %v2057
        %v2597 = vunpack.c.l.b16 %v2058
        %v2598 = vunpack.c.l.b16 %v2059
        %v2599 = vunpack.c.l.b16 %v2060
        %v2600 = vunpack.c.l.b16 %v2061
        %v2601 = vunpack.c.l.b16 %v2062
        %v2602 = vunpack.c.l.b16 %v2063
        %v2603 = vunpack.c.l.b16 %v2064
        %v2604 = vunpack.c.l.b16 %v2065
        %v2605 = vunpack.c.l.b16 %v2066
        %v2606 = vunpack.c.l.b16 %v2067
        %v2607 = vunpack.c.l.b16 %v2068
        %v2608 = vunpack.c.l.b16 %v2069
        %v2609 = vunpack.c.l.b16 %v2070
        %v2610 = vpack.c.b16 %v2595, %v2594
        %v2611 = vpack.c.b16 %v2597, %v2596
        %v2612 = vpack.c.b16 %v2599, %v2598
        %v2613 = vpack.c.b16 %v2601, %v2600
        %v2614 = vpack.c.b16 %v2603, %v2602
        %v2615 = vpack.c.b16 %v2605, %v2604
        %v2616 = vpack.c.b16 %v2607, %v2606
        %v2617 = vpack.c.b16 %v2609, %v2608
        %2626 = vmatpush.bf16.msra.mxu0 %v2617
        %2627 = vmatpush.bf16.msra.mxu0 %v2616
        %2628 = vmatpush.bf16.msra.mxu0 %v2615
        %2629 = vmatpush.bf16.msra.mxu0 %v2614
        %2630 = vmatpush.bf16.msra.mxu0 %v2613
        %2631 = vmatpush.bf16.msra.mxu0 %v2612
        %2632 = vmatpush.bf16.msra.mxu0 %v2611
        %2633 = vmatpush.bf16.msra.mxu0 %v2610
        %2634 = vmatmul.bf16.gmra.mxu0 %v2576
        %v2635 = vpop.f32.mrf.mxu0
        %v2636 = vadd.f32 0.0, %v2635
        %v2637 = vpop.f32.mrf.mxu0
        %v2638 = vadd.f32 0.0, %v2637
        %2639 = vdwg.mxu0
        %v2642 = vunpack.c.l.b16 %v2500
        %v2643 = vunpack.c.l.b16 %v2501
        %v2644 = vpack.c.b16 %v2643, %v2642
        %v2662 = vunpack.c.l.b16 %v2071
        %v2663 = vunpack.c.l.b16 %v2072
        %v2664 = vunpack.c.l.b16 %v2073
        %v2665 = vunpack.c.l.b16 %v2074
        %v2666 = vunpack.c.l.b16 %v2075
        %v2667 = vunpack.c.l.b16 %v2076
        %v2668 = vunpack.c.l.b16 %v2077
        %v2669 = vunpack.c.l.b16 %v2078
        %v2670 = vunpack.c.l.b16 %v2079
        %v2671 = vunpack.c.l.b16 %v2080
        %v2672 = vunpack.c.l.b16 %v2081
        %v2673 = vunpack.c.l.b16 %v2082
        %v2674 = vunpack.c.l.b16 %v2083
        %v2675 = vunpack.c.l.b16 %v2084
        %v2676 = vunpack.c.l.b16 %v2085
        %v2677 = vunpack.c.l.b16 %v2086
        %v2678 = vpack.c.b16 %v2663, %v2662
        %v2679 = vpack.c.b16 %v2665, %v2664
        %v2680 = vpack.c.b16 %v2667, %v2666
        %v2681 = vpack.c.b16 %v2669, %v2668
        %v2682 = vpack.c.b16 %v2671, %v2670
        %v2683 = vpack.c.b16 %v2673, %v2672
        %v2684 = vpack.c.b16 %v2675, %v2674
        %v2685 = vpack.c.b16 %v2677, %v2676
        %2694 = vmatpush.bf16.msra.mxu0 %v2685
        %2695 = vmatpush.bf16.msra.mxu0 %v2684
        %2696 = vmatpush.bf16.msra.mxu0 %v2683
        %2697 = vmatpush.bf16.msra.mxu0 %v2682
        %2698 = vmatpush.bf16.msra.mxu0 %v2681
        %2699 = vmatpush.bf16.msra.mxu0 %v2680
        %2700 = vmatpush.bf16.msra.mxu0 %v2679
        %2701 = vmatpush.bf16.msra.mxu0 %v2678
        %2702 = vmatmul.bf16.gmra.mxu0 %v2644
        %v2703 = vpop.f32.mrf.mxu0
        %v2704 = vadd.f32 0.0, %v2703
        %v2705 = vpop.f32.mrf.mxu0
        %v2706 = vadd.f32 0.0, %v2705
        %2707 = vdwg.mxu0
        %v2710 = vunpack.c.l.b16 %v2502
        %v2711 = vunpack.c.l.b16 %v2503
        %v2712 = vpack.c.b16 %v2711, %v2710
        %v2730 = vunpack.c.l.b16 %v2087
        %v2731 = vunpack.c.l.b16 %v2088
        %v2732 = vunpack.c.l.b16 %v2089
        %v2733 = vunpack.c.l.b16 %v2090
        %v2734 = vunpack.c.l.b16 %v2091
        %v2735 = vunpack.c.l.b16 %v2092
        %v2736 = vunpack.c.l.b16 %v2093
        %v2737 = vunpack.c.l.b16 %v2094
        %v2738 = vunpack.c.l.b16 %v2095
        %v2739 = vunpack.c.l.b16 %v2096
        %v2740 = vunpack.c.l.b16 %v2097
        %v2741 = vunpack.c.l.b16 %v2098
        %v2742 = vunpack.c.l.b16 %v2099
        %v2743 = vunpack.c.l.b16 %v2100
        %v2744 = vunpack.c.l.b16 %v2101
        %v2745 = vunpack.c.l.b16 %v2102
        %v2746 = vpack.c.b16 %v2731, %v2730
        %v2747 = vpack.c.b16 %v2733, %v2732
        %v2748 = vpack.c.b16 %v2735, %v2734
        %v2749 = vpack.c.b16 %v2737, %v2736
        %v2750 = vpack.c.b16 %v2739, %v2738
        %v2751 = vpack.c.b16 %v2741, %v2740
        %v2752 = vpack.c.b16 %v2743, %v2742
        %v2753 = vpack.c.b16 %v2745, %v2744
        %2762 = vmatpush.bf16.msra.mxu0 %v2753
        %2763 = vmatpush.bf16.msra.mxu0 %v2752
        %2764 = vmatpush.bf16.msra.mxu0 %v2751
        %2765 = vmatpush.bf16.msra.mxu0 %v2750
        %2766 = vmatpush.bf16.msra.mxu0 %v2749
        %2767 = vmatpush.bf16.msra.mxu0 %v2748
        %2768 = vmatpush.bf16.msra.mxu0 %v2747
        %2769 = vmatpush.bf16.msra.mxu0 %v2746
        %2770 = vmatmul.bf16.gmra.mxu0 %v2712
        %v2771 = vpop.f32.mrf.mxu0
        %v2772 = vadd.f32 0.0, %v2771
        %v2773 = vpop.f32.mrf.mxu0
        %v2774 = vadd.f32 0.0, %v2773
        %2775 = vdwg.mxu0
        %v2776 = vpack.c.bf16 %v2570, %v2568
        %v2777 = vpack.c.bf16 %v2638, %v2636
        %v2778 = vpack.c.bf16 %v2706, %v2704
        %v2779 = vpack.c.bf16 %v2774, %v2772
        %v2780 = vld [vmem:[%s975] sm:$0xf]
        %v2781 = vld [vmem:[%s975 + $0x4] sm:$0xf]
        %v2782 = vld [vmem:[%s975 + $0x8] sm:$0xf]
        %v2783 = vld [vmem:[%s975 + $0xc] sm:$0xf]
        %v2784 = vld [vmem:[%s975 + $0x10] sm:$0xf]
        %v2785 = vld [vmem:[%s975 + $0x14] sm:$0xf]
        %v2786 = vld [vmem:[%s975 + $0x18] sm:$0xf]
        %v2787 = vld [vmem:[%s975 + $0x1c] sm:$0xf]
        %v2788 = vld [vmem:[%s975 + $0x20] sm:$0xf]
        %v2789 = vld [vmem:[%s975 + $0x24] sm:$0xf]
        %v2790 = vld [vmem:[%s975 + $0x28] sm:$0xf]
        %v2791 = vld [vmem:[%s975 + $0x2c] sm:$0xf]
        %v2792 = vld [vmem:[%s975 + $0x30] sm:$0xf]
        %v2793 = vld [vmem:[%s975 + $0x34] sm:$0xf]
        %v2794 = vld [vmem:[%s975 + $0x38] sm:$0xf]
        %v2795 = vld [vmem:[%s975 + $0x3c] sm:$0xf]
        %v2796 = vld [vmem:[%s984] sm:$0x1]
        %v2798 = vperm.slane %v2796, 0
        %v2816 = vunpack.c.l.b16 %v2780
        %v2817 = vunpack.c.l.b16 %v2781
        %v2818 = vunpack.c.l.b16 %v2782
        %v2819 = vunpack.c.l.b16 %v2783
        %v2820 = vunpack.c.l.b16 %v2784
        %v2821 = vunpack.c.l.b16 %v2785
        %v2822 = vunpack.c.l.b16 %v2786
        %v2823 = vunpack.c.l.b16 %v2787
        %v2824 = vunpack.c.l.b16 %v2788
        %v2825 = vunpack.c.l.b16 %v2789
        %v2826 = vunpack.c.l.b16 %v2790
        %v2827 = vunpack.c.l.b16 %v2791
        %v2828 = vunpack.c.l.b16 %v2792
        %v2829 = vunpack.c.l.b16 %v2793
        %v2830 = vunpack.c.l.b16 %v2794
        %v2831 = vunpack.c.l.b16 %v2795
        %v2832 = vpack.c.b16 %v2817, %v2816
        %v2833 = vpack.c.b16 %v2819, %v2818
        %v2834 = vpack.c.b16 %v2821, %v2820
        %v2835 = vpack.c.b16 %v2823, %v2822
        %v2836 = vpack.c.b16 %v2825, %v2824
        %v2837 = vpack.c.b16 %v2827, %v2826
        %v2838 = vpack.c.b16 %v2829, %v2828
        %v2839 = vpack.c.b16 %v2831, %v2830
        %2848 = vmatpush.bf16.msra.mxu0 %v2839
        %2849 = vmatpush.bf16.msra.mxu0 %v2838
        %2850 = vmatpush.bf16.msra.mxu0 %v2837
        %2851 = vmatpush.bf16.msra.mxu0 %v2836
        %2852 = vmatpush.bf16.msra.mxu0 %v2835
        %2853 = vmatpush.bf16.msra.mxu0 %v2834
        %2854 = vmatpush.bf16.msra.mxu0 %v2833
        %2855 = vmatpush.bf16.msra.mxu0 %v2832
        %2856 = vmatmul.bf16.gmra.mxu0 %v2776
        %v2857 = vpop.f32.mrf.mxu0
        %v2858 = vadd.f32 %v2798, %v2857
        %v2859 = vpop.f32.mrf.mxu0
        %v2860 = vadd.f32 %v2798, %v2859
        %2861 = vmatmul.bf16.gmra.mxu0 %v2777
        %v2862 = vpop.f32.mrf.mxu0
        %v2863 = vadd.f32 %v2798, %v2862
        %v2864 = vpop.f32.mrf.mxu0
        %v2865 = vadd.f32 %v2798, %v2864
        %2866 = vmatmul.bf16.gmra.mxu0 %v2778
        %v2867 = vpop.f32.mrf.mxu0
        %v2868 = vadd.f32 %v2798, %v2867
        %v2869 = vpop.f32.mrf.mxu0
        %v2870 = vadd.f32 %v2798, %v2869
        %2871 = vmatmul.bf16.gmra.mxu0 %v2779
        %v2872 = vpop.f32.mrf.mxu0
        %v2873 = vadd.f32 %v2798, %v2872
        %v2874 = vpop.f32.mrf.mxu0
        %v2875 = vadd.f32 %v2798, %v2874
        %2876 = vdwg.mxu0
        %v2877 = vadd.f32 %v1357, %v2858
        %v2878 = vadd.f32 %v1358, %v2860
        %v2879 = vadd.f32 %v1359, %v2863
        %v2880 = vadd.f32 %v1360, %v2865
        %v2881 = vadd.f32 %v1361, %v2868
        %v2882 = vadd.f32 %v1362, %v2870
        %v2883 = vadd.f32 %v1363, %v2873
        %v2884 = vadd.f32 %v1364, %v2875
        %v2885 = vld [vmem:[%s993] sm:$0x1]
        %v2886 = vld [vmem:[%s1127] sm:$0x1]
        %2887 = vadd.xlane.f32.xlu0 %v2877
        %v2888 = vpop.xlane.xlu0 %2887
        %2889 = vadd.xlane.f32.xlu0 %v2878
        %v2890 = vpop.xlane.xlu0 %2889
        %2891 = vadd.xlane.f32.xlu0 %v2879
        %v2892 = vpop.xlane.xlu0 %2891
        %2893 = vadd.xlane.f32.xlu0 %v2880
        %v2894 = vpop.xlane.xlu0 %2893
        %2895 = vadd.xlane.f32.xlu0 %v2881
        %v2896 = vpop.xlane.xlu0 %2895
        %2897 = vadd.xlane.f32.xlu0 %v2882
        %v2898 = vpop.xlane.xlu0 %2897
        %2899 = vadd.xlane.f32.xlu0 %v2883
        %v2900 = vpop.xlane.xlu0 %2899
        %2901 = vadd.xlane.f32.xlu0 %v2884
        %v2902 = vpop.xlane.xlu0 %2901
        %v2903 = vmul.f32 %v2888, %v1389
        %v2904 = vmul.f32 %v2890, %v1389
        %v2905 = vmul.f32 %v2892, %v1389
        %v2906 = vmul.f32 %v2894, %v1389
        %v2907 = vmul.f32 %v2896, %v1389
        %v2908 = vmul.f32 %v2898, %v1389
        %v2909 = vmul.f32 %v2900, %v1389
        %v2910 = vmul.f32 %v2902, %v1389
        %v2911 = vsub.f32 %v2877, %v2903
        %v2912 = vsub.f32 %v2878, %v2904
        %v2913 = vsub.f32 %v2879, %v2905
        %v2914 = vsub.f32 %v2880, %v2906
        %v2915 = vsub.f32 %v2881, %v2907
        %v2916 = vsub.f32 %v2882, %v2908
        %v2917 = vsub.f32 %v2883, %v2909
        %v2918 = vsub.f32 %v2884, %v2910
        %v2919 = vmul.f32 %v2911, %v2911
        %v2920 = vmul.f32 %v2912, %v2912
        %v2921 = vmul.f32 %v2913, %v2913
        %v2922 = vmul.f32 %v2914, %v2914
        %v2923 = vmul.f32 %v2915, %v2915
        %v2924 = vmul.f32 %v2916, %v2916
        %v2925 = vmul.f32 %v2917, %v2917
        %v2926 = vmul.f32 %v2918, %v2918
        %2927 = vadd.xlane.f32.xlu0 %v2919
        %v2928 = vpop.xlane.xlu0 %2927
        %2929 = vadd.xlane.f32.xlu0 %v2920
        %v2930 = vpop.xlane.xlu0 %2929
        %2931 = vadd.xlane.f32.xlu0 %v2921
        %v2932 = vpop.xlane.xlu0 %2931
        %2933 = vadd.xlane.f32.xlu0 %v2922
        %v2934 = vpop.xlane.xlu0 %2933
        %2935 = vadd.xlane.f32.xlu0 %v2923
        %v2936 = vpop.xlane.xlu0 %2935
        %2937 = vadd.xlane.f32.xlu0 %v2924
        %v2938 = vpop.xlane.xlu0 %2937
        %2939 = vadd.xlane.f32.xlu0 %v2925
        %v2940 = vpop.xlane.xlu0 %2939
        %2941 = vadd.xlane.f32.xlu0 %v2926
        %v2942 = vpop.xlane.xlu0 %2941
        %v2943 = vmul.f32 %v2928, %v1389
        %v2944 = vmul.f32 %v2930, %v1389
        %v2945 = vmul.f32 %v2932, %v1389
        %v2946 = vmul.f32 %v2934, %v1389
        %v2947 = vmul.f32 %v2936, %v1389
        %v2948 = vmul.f32 %v2938, %v1389
        %v2949 = vmul.f32 %v2940, %v1389
        %v2950 = vmul.f32 %v2942, %v1389
        %v2951 = vadd.f32 %v2943, 1e-05
        %v2952 = vadd.f32 %v2944, 1e-05
        %v2953 = vadd.f32 %v2945, 1e-05
        %v2954 = vadd.f32 %v2946, 1e-05
        %v2955 = vadd.f32 %v2947, 1e-05
        %v2956 = vadd.f32 %v2948, 1e-05
        %v2957 = vadd.f32 %v2949, 1e-05
        %v2958 = vadd.f32 %v2950, 1e-05
        %v2959 = vrsqrt.pop %v2951
        %v2960 = vmul.f32 %v2959, %v2951
        %v2961 = vmul.f32 %v2960, %v2959
        %v2962 = vmul.f32 0.5, %v2961
        %v2963 = vsub.f32 1.5, %v2962
        %v2964 = vmul.f32 %v2959, %v2963
        %vm2965 = vweird.f32 %v2951
        %vm2966 = vweird.f32 %v2959
        %vm2967 = vmor %vm2965, %vm2966
        %v2968 = vsel %vm2967, %v2959, %v2964
        %v2969 = vrsqrt.pop %v2952
        %v2970 = vmul.f32 %v2969, %v2952
        %v2971 = vmul.f32 %v2970, %v2969
        %v2972 = vmul.f32 0.5, %v2971
        %v2973 = vsub.f32 1.5, %v2972
        %v2974 = vmul.f32 %v2969, %v2973
        %vm2975 = vweird.f32 %v2952
        %vm2976 = vweird.f32 %v2969
        %vm2977 = vmor %vm2975, %vm2976
        %v2978 = vsel %vm2977, %v2969, %v2974
        %v2979 = vrsqrt.pop %v2953
        %v2980 = vmul.f32 %v2979, %v2953
        %v2981 = vmul.f32 %v2980, %v2979
        %v2982 = vmul.f32 0.5, %v2981
        %v2983 = vsub.f32 1.5, %v2982
        %v2984 = vmul.f32 %v2979, %v2983
        %vm2985 = vweird.f32 %v2953
        %vm2986 = vweird.f32 %v2979
        %vm2987 = vmor %vm2985, %vm2986
        %v2988 = vsel %vm2987, %v2979, %v2984
        %v2989 = vrsqrt.pop %v2954
        %v2990 = vmul.f32 %v2989, %v2954
        %v2991 = vmul.f32 %v2990, %v2989
        %v2992 = vmul.f32 0.5, %v2991
        %v2993 = vsub.f32 1.5, %v2992
        %v2994 = vmul.f32 %v2989, %v2993
        %vm2995 = vweird.f32 %v2954
        %vm2996 = vweird.f32 %v2989
        %vm2997 = vmor %vm2995, %vm2996
        %v2998 = vsel %vm2997, %v2989, %v2994
        %v2999 = vrsqrt.pop %v2955
        %v3000 = vmul.f32 %v2999, %v2955
        %v3001 = vmul.f32 %v3000, %v2999
        %v3002 = vmul.f32 0.5, %v3001
        %v3003 = vsub.f32 1.5, %v3002
        %v3004 = vmul.f32 %v2999, %v3003
        %vm3005 = vweird.f32 %v2955
        %vm3006 = vweird.f32 %v2999
        %vm3007 = vmor %vm3005, %vm3006
        %v3008 = vsel %vm3007, %v2999, %v3004
        %v3009 = vrsqrt.pop %v2956
        %v3010 = vmul.f32 %v3009, %v2956
        %v3011 = vmul.f32 %v3010, %v3009
        %v3012 = vmul.f32 0.5, %v3011
        %v3013 = vsub.f32 1.5, %v3012
        %v3014 = vmul.f32 %v3009, %v3013
        %vm3015 = vweird.f32 %v2956
        %vm3016 = vweird.f32 %v3009
        %vm3017 = vmor %vm3015, %vm3016
        %v3018 = vsel %vm3017, %v3009, %v3014
        %v3019 = vrsqrt.pop %v2957
        %v3020 = vmul.f32 %v3019, %v2957
        %v3021 = vmul.f32 %v3020, %v3019
        %v3022 = vmul.f32 0.5, %v3021
        %v3023 = vsub.f32 1.5, %v3022
        %v3024 = vmul.f32 %v3019, %v3023
        %vm3025 = vweird.f32 %v2957
        %vm3026 = vweird.f32 %v3019
        %vm3027 = vmor %vm3025, %vm3026
        %v3028 = vsel %vm3027, %v3019, %v3024
        %v3029 = vrsqrt.pop %v2958
        %v3030 = vmul.f32 %v3029, %v2958
        %v3031 = vmul.f32 %v3030, %v3029
        %v3032 = vmul.f32 0.5, %v3031
        %v3033 = vsub.f32 1.5, %v3032
        %v3034 = vmul.f32 %v3029, %v3033
        %vm3035 = vweird.f32 %v2958
        %vm3036 = vweird.f32 %v3029
        %vm3037 = vmor %vm3035, %vm3036
        %v3038 = vsel %vm3037, %v3029, %v3034
        %v3039 = vmul.f32 %v2911, %v2968
        %v3040 = vmul.f32 %v2912, %v2978
        %v3041 = vmul.f32 %v2913, %v2988
        %v3042 = vmul.f32 %v2914, %v2998
        %v3043 = vmul.f32 %v2915, %v3008
        %v3044 = vmul.f32 %v2916, %v3018
        %v3045 = vmul.f32 %v2917, %v3028
        %v3046 = vmul.f32 %v2918, %v3038
        %v3048 = vperm.slane %v2885, 0
        %v3050 = vmul.f32 %v3039, %v3048
        %v3051 = vmul.f32 %v3040, %v3048
        %v3052 = vmul.f32 %v3041, %v3048
        %v3053 = vmul.f32 %v3042, %v3048
        %v3054 = vmul.f32 %v3043, %v3048
        %v3055 = vmul.f32 %v3044, %v3048
        %v3056 = vmul.f32 %v3045, %v3048
        %v3057 = vmul.f32 %v3046, %v3048
        %v3059 = vperm.slane %v2886, 0
        %v3061 = vadd.f32 %v3050, %v3059
        %v3062 = vadd.f32 %v3051, %v3059
        %v3063 = vadd.f32 %v3052, %v3059
        %v3064 = vadd.f32 %v3053, %v3059
        %v3065 = vadd.f32 %v3054, %v3059
        %v3066 = vadd.f32 %v3055, %v3059
        %v3067 = vadd.f32 %v3056, %v3059
        %v3068 = vadd.f32 %v3057, %v3059
        %v3069 = vpack.c.bf16 %v3062, %v3061
        %v3070 = vpack.c.bf16 %v3064, %v3063
        %v3071 = vpack.c.bf16 %v3066, %v3065
        %v3072 = vpack.c.bf16 %v3068, %v3067
        %v3073 = vld [vmem:[%s1003] sm:$0xff]
        %v3074 = vld [vmem:[%s1003 + $0x8] sm:$0xff]
        %v3075 = vld [vmem:[%s1003 + $0x10] sm:$0xff]
        %v3076 = vld [vmem:[%s1003 + $0x18] sm:$0xff]
        %v3077 = vld [vmem:[%s1003 + $0x20] sm:$0xff]
        %v3078 = vld [vmem:[%s1003 + $0x28] sm:$0xff]
        %v3079 = vld [vmem:[%s1003 + $0x30] sm:$0xff]
        %v3080 = vld [vmem:[%s1003 + $0x38] sm:$0xff]
        %v3081 = vld [vmem:[%s1003 + $0x40] sm:$0xff]
        %v3082 = vld [vmem:[%s1003 + $0x48] sm:$0xff]
        %v3083 = vld [vmem:[%s1003 + $0x50] sm:$0xff]
        %v3084 = vld [vmem:[%s1003 + $0x58] sm:$0xff]
        %v3085 = vld [vmem:[%s1003 + $0x60] sm:$0xff]
        %v3086 = vld [vmem:[%s1003 + $0x68] sm:$0xff]
        %v3087 = vld [vmem:[%s1003 + $0x70] sm:$0xff]
        %v3088 = vld [vmem:[%s1003 + $0x78] sm:$0xff]
        %v3089 = vld [vmem:[%s1131] sm:$0x3]
        %v3091 = vperm.slane %v3089, 0
        %v3092 = vperm.slane %v3089, 1
        %v3111 = vunpack.c.l.b16 %v3073
        %v3112 = vunpack.c.h.b16 %v3073
        %v3113 = vunpack.c.l.b16 %v3074
        %v3114 = vunpack.c.h.b16 %v3074
        %v3115 = vunpack.c.l.b16 %v3075
        %v3116 = vunpack.c.h.b16 %v3075
        %v3117 = vunpack.c.l.b16 %v3076
        %v3118 = vunpack.c.h.b16 %v3076
        %v3119 = vunpack.c.l.b16 %v3077
        %v3120 = vunpack.c.h.b16 %v3077
        %v3121 = vunpack.c.l.b16 %v3078
        %v3122 = vunpack.c.h.b16 %v3078
        %v3123 = vunpack.c.l.b16 %v3079
        %v3124 = vunpack.c.h.b16 %v3079
        %v3125 = vunpack.c.l.b16 %v3080
        %v3126 = vunpack.c.h.b16 %v3080
        %v3127 = vunpack.c.l.b16 %v3081
        %v3128 = vunpack.c.h.b16 %v3081
        %v3129 = vunpack.c.l.b16 %v3082
        %v3130 = vunpack.c.h.b16 %v3082
        %v3131 = vunpack.c.l.b16 %v3083
        %v3132 = vunpack.c.h.b16 %v3083
        %v3133 = vunpack.c.l.b16 %v3084
        %v3134 = vunpack.c.h.b16 %v3084
        %v3135 = vunpack.c.l.b16 %v3085
        %v3136 = vunpack.c.h.b16 %v3085
        %v3137 = vunpack.c.l.b16 %v3086
        %v3138 = vunpack.c.h.b16 %v3086
        %v3139 = vunpack.c.l.b16 %v3087
        %v3140 = vunpack.c.h.b16 %v3087
        %v3141 = vunpack.c.l.b16 %v3088
        %v3142 = vunpack.c.h.b16 %v3088
        %v3143 = vpack.c.b16 %v3113, %v3111
        %v3144 = vpack.c.b16 %v3114, %v3112
        %v3145 = vpack.c.b16 %v3117, %v3115
        %v3146 = vpack.c.b16 %v3118, %v3116
        %v3147 = vpack.c.b16 %v3121, %v3119
        %v3148 = vpack.c.b16 %v3122, %v3120
        %v3149 = vpack.c.b16 %v3125, %v3123
        %v3150 = vpack.c.b16 %v3126, %v3124
        %v3151 = vpack.c.b16 %v3129, %v3127
        %v3152 = vpack.c.b16 %v3130, %v3128
        %v3153 = vpack.c.b16 %v3133, %v3131
        %v3154 = vpack.c.b16 %v3134, %v3132
        %v3155 = vpack.c.b16 %v3137, %v3135
        %v3156 = vpack.c.b16 %v3138, %v3136
        %v3157 = vpack.c.b16 %v3141, %v3139
        %v3158 = vpack.c.b16 %v3142, %v3140
        %3175 = vmatpush.bf16.msra.mxu0 %v3157
        %3176 = vmatpush.bf16.msra.mxu0 %v3155
        %3177 = vmatpush.bf16.msra.mxu0 %v3153
        %3178 = vmatpush.bf16.msra.mxu0 %v3151
        %3179 = vmatpush.bf16.msra.mxu0 %v3149
        %3180 = vmatpush.bf16.msra.mxu0 %v3147
        %3181 = vmatpush.bf16.msra.mxu0 %v3145
        %3182 = vmatpush.bf16.msra.mxu0 %v3143
        %3183 = vmatmul.bf16.gmra.mxu0 %v3069
        %v3184 = vpop.f32.mrf.mxu0
        %v3185 = vadd.f32 %v3091, %v3184
        %v3186 = vpop.f32.mrf.mxu0
        %v3187 = vadd.f32 %v3091, %v3186
        %3188 = vmatmul.bf16.gmra.mxu0 %v3070
        %v3189 = vpop.f32.mrf.mxu0
        %v3190 = vadd.f32 %v3091, %v3189
        %v3191 = vpop.f32.mrf.mxu0
        %v3192 = vadd.f32 %v3091, %v3191
        %3193 = vmatmul.bf16.gmra.mxu0 %v3071
        %v3194 = vpop.f32.mrf.mxu0
        %v3195 = vadd.f32 %v3091, %v3194
        %v3196 = vpop.f32.mrf.mxu0
        %v3197 = vadd.f32 %v3091, %v3196
        %3198 = vmatmul.bf16.gmra.mxu0 %v3072
        %v3199 = vpop.f32.mrf.mxu0
        %v3200 = vadd.f32 %v3091, %v3199
        %v3201 = vpop.f32.mrf.mxu0
        %v3202 = vadd.f32 %v3091, %v3201
        %3203 = vdwg.mxu0
        %3204 = vmatpush.bf16.msra.mxu0 %v3158
        %3205 = vmatpush.bf16.msra.mxu0 %v3156
        %3206 = vmatpush.bf16.msra.mxu0 %v3154
        %3207 = vmatpush.bf16.msra.mxu0 %v3152
        %3208 = vmatpush.bf16.msra.mxu0 %v3150
        %3209 = vmatpush.bf16.msra.mxu0 %v3148
        %3210 = vmatpush.bf16.msra.mxu0 %v3146
        %3211 = vmatpush.bf16.msra.mxu0 %v3144
        %3212 = vmatmul.bf16.gmra.mxu0 %v3069
        %v3213 = vpop.f32.mrf.mxu0
        %v3214 = vadd.f32 %v3092, %v3213
        %v3215 = vpop.f32.mrf.mxu0
        %v3216 = vadd.f32 %v3092, %v3215
        %3217 = vmatmul.bf16.gmra.mxu0 %v3070
        %v3218 = vpop.f32.mrf.mxu0
        %v3219 = vadd.f32 %v3092, %v3218
        %v3220 = vpop.f32.mrf.mxu0
        %v3221 = vadd.f32 %v3092, %v3220
        %3222 = vmatmul.bf16.gmra.mxu0 %v3071
        %v3223 = vpop.f32.mrf.mxu0
        %v3224 = vadd.f32 %v3092, %v3223
        %v3225 = vpop.f32.mrf.mxu0
        %v3226 = vadd.f32 %v3092, %v3225
        %3227 = vmatmul.bf16.gmra.mxu0 %v3072
        %v3228 = vpop.f32.mrf.mxu0
        %v3229 = vadd.f32 %v3092, %v3228
        %v3230 = vpop.f32.mrf.mxu0
        %v3231 = vadd.f32 %v3092, %v3230
        %3232 = vdwg.mxu0
        %v3233 = vmul.f32 %v3185, 0.5
        %v3234 = vmul.f32 %v3214, 0.5
        %v3235 = vmul.f32 %v3187, 0.5
        %v3236 = vmul.f32 %v3216, 0.5
        %v3237 = vmul.f32 %v3190, 0.5
        %v3238 = vmul.f32 %v3219, 0.5
        %v3239 = vmul.f32 %v3192, 0.5
        %v3240 = vmul.f32 %v3221, 0.5
        %v3241 = vmul.f32 %v3195, 0.5
        %v3242 = vmul.f32 %v3224, 0.5
        %v3243 = vmul.f32 %v3197, 0.5
        %v3244 = vmul.f32 %v3226, 0.5
        %v3245 = vmul.f32 %v3200, 0.5
        %v3246 = vmul.f32 %v3229, 0.5
        %v3247 = vmul.f32 %v3202, 0.5
        %v3248 = vmul.f32 %v3231, 0.5
        %v3249 = vmul.f32 %v3185, 0.044715
        %v3250 = vmul.f32 %v3214, 0.044715
        %v3251 = vmul.f32 %v3187, 0.044715
        %v3252 = vmul.f32 %v3216, 0.044715
        %v3253 = vmul.f32 %v3190, 0.044715
        %v3254 = vmul.f32 %v3219, 0.044715
        %v3255 = vmul.f32 %v3192, 0.044715
        %v3256 = vmul.f32 %v3221, 0.044715
        %v3257 = vmul.f32 %v3195, 0.044715
        %v3258 = vmul.f32 %v3224, 0.044715
        %v3259 = vmul.f32 %v3197, 0.044715
        %v3260 = vmul.f32 %v3226, 0.044715
        %v3261 = vmul.f32 %v3200, 0.044715
        %v3262 = vmul.f32 %v3229, 0.044715
        %v3263 = vmul.f32 %v3202, 0.044715
        %v3264 = vmul.f32 %v3231, 0.044715
        %v3265 = vmul.f32 %v3249, %v3185
        %v3266 = vmul.f32 %v3250, %v3214
        %v3267 = vmul.f32 %v3251, %v3187
        %v3268 = vmul.f32 %v3252, %v3216
        %v3269 = vmul.f32 %v3253, %v3190
        %v3270 = vmul.f32 %v3254, %v3219
        %v3271 = vmul.f32 %v3255, %v3192
        %v3272 = vmul.f32 %v3256, %v3221
        %v3273 = vmul.f32 %v3257, %v3195
        %v3274 = vmul.f32 %v3258, %v3224
        %v3275 = vmul.f32 %v3259, %v3197
        %v3276 = vmul.f32 %v3260, %v3226
        %v3277 = vmul.f32 %v3261, %v3200
        %v3278 = vmul.f32 %v3262, %v3229
        %v3279 = vmul.f32 %v3263, %v3202
        %v3280 = vmul.f32 %v3264, %v3231
        %v3281 = vmul.f32 %v3265, %v3185
        %v3282 = vmul.f32 %v3266, %v3214
        %v3283 = vmul.f32 %v3267, %v3187
        %v3284 = vmul.f32 %v3268, %v3216
        %v3285 = vmul.f32 %v3269, %v3190
        %v3286 = vmul.f32 %v3270, %v3219
        %v3287 = vmul.f32 %v3271, %v3192
        %v3288 = vmul.f32 %v3272, %v3221
        %v3289 = vmul.f32 %v3273, %v3195
        %v3290 = vmul.f32 %v3274, %v3224
        %v3291 = vmul.f32 %v3275, %v3197
        %v3292 = vmul.f32 %v3276, %v3226
        %v3293 = vmul.f32 %v3277, %v3200
        %v3294 = vmul.f32 %v3278, %v3229
        %v3295 = vmul.f32 %v3279, %v3202
        %v3296 = vmul.f32 %v3280, %v3231
        %v3297 = vadd.f32 %v3185, %v3281
        %v3298 = vadd.f32 %v3214, %v3282
        %v3299 = vadd.f32 %v3187, %v3283
        %v3300 = vadd.f32 %v3216, %v3284
        %v3301 = vadd.f32 %v3190, %v3285
        %v3302 = vadd.f32 %v3219, %v3286
        %v3303 = vadd.f32 %v3192, %v3287
        %v3304 = vadd.f32 %v3221, %v3288
        %v3305 = vadd.f32 %v3195, %v3289
        %v3306 = vadd.f32 %v3224, %v3290
        %v3307 = vadd.f32 %v3197, %v3291
        %v3308 = vadd.f32 %v3226, %v3292
        %v3309 = vadd.f32 %v3200, %v3293
        %v3310 = vadd.f32 %v3229, %v3294
        %v3311 = vadd.f32 %v3202, %v3295
        %v3312 = vadd.f32 %v3231, %v3296
        %v3313 = vmul.f32 %v3297, 0.7978846
        %v3314 = vmul.f32 %v3298, 0.7978846
        %v3315 = vmul.f32 %v3299, 0.7978846
        %v3316 = vmul.f32 %v3300, 0.7978846
        %v3317 = vmul.f32 %v3301, 0.7978846
        %v3318 = vmul.f32 %v3302, 0.7978846
        %v3319 = vmul.f32 %v3303, 0.7978846
        %v3320 = vmul.f32 %v3304, 0.7978846
        %v3321 = vmul.f32 %v3305, 0.7978846
        %v3322 = vmul.f32 %v3306, 0.7978846
        %v3323 = vmul.f32 %v3307, 0.7978846
        %v3324 = vmul.f32 %v3308, 0.7978846
        %v3325 = vmul.f32 %v3309, 0.7978846
        %v3326 = vmul.f32 %v3310, 0.7978846
        %v3327 = vmul.f32 %v3311, 0.7978846
        %v3328 = vmul.f32 %v3312, 0.7978846
        %v3329 = vtanh.pop %v3313
        %v3330 = vtanh.pop %v3314
        %v3331 = vtanh.pop %v3315
        %v3332 = vtanh.pop %v3316
        %v3333 = vtanh.pop %v3317
        %v3334 = vtanh.pop %v3318
        %v3335 = vtanh.pop %v3319
        %v3336 = vtanh.pop %v3320
        %v3337 = vtanh.pop %v3321
        %v3338 = vtanh.pop %v3322
        %v3339 = vtanh.pop %v3323
        %v3340 = vtanh.pop %v3324
        %v3341 = vtanh.pop %v3325
        %v3342 = vtanh.pop %v3326
        %v3343 = vtanh.pop %v3327
        %v3344 = vtanh.pop %v3328
        %v3345 = vadd.f32 %v3329, 1.0
        %v3346 = vadd.f32 %v3330, 1.0
        %v3347 = vadd.f32 %v3331, 1.0
        %v3348 = vadd.f32 %v3332, 1.0
        %v3349 = vadd.f32 %v3333, 1.0
        %v3350 = vadd.f32 %v3334, 1.0
        %v3351 = vadd.f32 %v3335, 1.0
        %v3352 = vadd.f32 %v3336, 1.0
        %v3353 = vadd.f32 %v3337, 1.0
        %v3354 = vadd.f32 %v3338, 1.0
        %v3355 = vadd.f32 %v3339, 1.0
        %v3356 = vadd.f32 %v3340, 1.0
        %v3357 = vadd.f32 %v3341, 1.0
        %v3358 = vadd.f32 %v3342, 1.0
        %v3359 = vadd.f32 %v3343, 1.0
        %v3360 = vadd.f32 %v3344, 1.0
        %v3361 = vmul.f32 %v3233, %v3345
        %v3362 = vmul.f32 %v3234, %v3346
        %v3363 = vmul.f32 %v3235, %v3347
        %v3364 = vmul.f32 %v3236, %v3348
        %v3365 = vmul.f32 %v3237, %v3349
        %v3366 = vmul.f32 %v3238, %v3350
        %v3367 = vmul.f32 %v3239, %v3351
        %v3368 = vmul.f32 %v3240, %v3352
        %v3369 = vmul.f32 %v3241, %v3353
        %v3370 = vmul.f32 %v3242, %v3354
        %v3371 = vmul.f32 %v3243, %v3355
        %v3372 = vmul.f32 %v3244, %v3356
        %v3373 = vmul.f32 %v3245, %v3357
        %v3374 = vmul.f32 %v3246, %v3358
        %v3375 = vmul.f32 %v3247, %v3359
        %v3376 = vmul.f32 %v3248, %v3360
        %v3377 = vpack.c.bf16 %v3363, %v3361
        %v3378 = vpack.c.bf16 %v3364, %v3362
        %v3379 = vpack.c.bf16 %v3367, %v3365
        %v3380 = vpack.c.bf16 %v3368, %v3366
        %v3381 = vpack.c.bf16 %v3371, %v3369
        %v3382 = vpack.c.bf16 %v3372, %v3370
        %v3383 = vpack.c.bf16 %v3375, %v3373
        %v3384 = vpack.c.bf16 %v3376, %v3374
        %v3385 = vld [vmem:[%s1013] sm:$0xf]
        %v3386 = vld [vmem:[%s1013 + $0x4] sm:$0xf]
        %v3387 = vld [vmem:[%s1013 + $0x8] sm:$0xf]
        %v3388 = vld [vmem:[%s1013 + $0xc] sm:$0xf]
        %v3389 = vld [vmem:[%s1013 + $0x10] sm:$0xf]
        %v3390 = vld [vmem:[%s1013 + $0x14] sm:$0xf]
        %v3391 = vld [vmem:[%s1013 + $0x18] sm:$0xf]
        %v3392 = vld [vmem:[%s1013 + $0x1c] sm:$0xf]
        %v3393 = vld [vmem:[%s1013 + $0x20] sm:$0xf]
        %v3394 = vld [vmem:[%s1013 + $0x24] sm:$0xf]
        %v3395 = vld [vmem:[%s1013 + $0x28] sm:$0xf]
        %v3396 = vld [vmem:[%s1013 + $0x2c] sm:$0xf]
        %v3397 = vld [vmem:[%s1013 + $0x30] sm:$0xf]
        %v3398 = vld [vmem:[%s1013 + $0x34] sm:$0xf]
        %v3399 = vld [vmem:[%s1013 + $0x38] sm:$0xf]
        %v3400 = vld [vmem:[%s1013 + $0x3c] sm:$0xf]
        %v3401 = vld [vmem:[%s1013 + $0x40] sm:$0xf]
        %v3402 = vld [vmem:[%s1013 + $0x44] sm:$0xf]
        %v3403 = vld [vmem:[%s1013 + $0x48] sm:$0xf]
        %v3404 = vld [vmem:[%s1013 + $0x4c] sm:$0xf]
        %v3405 = vld [vmem:[%s1013 + $0x50] sm:$0xf]
        %v3406 = vld [vmem:[%s1013 + $0x54] sm:$0xf]
        %v3407 = vld [vmem:[%s1013 + $0x58] sm:$0xf]
        %v3408 = vld [vmem:[%s1013 + $0x5c] sm:$0xf]
        %v3409 = vld [vmem:[%s1013 + $0x60] sm:$0xf]
        %v3410 = vld [vmem:[%s1013 + $0x64] sm:$0xf]
        %v3411 = vld [vmem:[%s1013 + $0x68] sm:$0xf]
        %v3412 = vld [vmem:[%s1013 + $0x6c] sm:$0xf]
        %v3413 = vld [vmem:[%s1013 + $0x70] sm:$0xf]
        %v3414 = vld [vmem:[%s1013 + $0x74] sm:$0xf]
        %v3415 = vld [vmem:[%s1013 + $0x78] sm:$0xf]
        %v3416 = vld [vmem:[%s1013 + $0x7c] sm:$0xf]
        %v3417 = vld [vmem:[%s1134] sm:$0x1]
        %v3419 = vperm.slane %v3417, 0
        %v3453 = vunpack.c.l.b16 %v3385
        %v3454 = vunpack.c.l.b16 %v3386
        %v3455 = vunpack.c.l.b16 %v3387
        %v3456 = vunpack.c.l.b16 %v3388
        %v3457 = vunpack.c.l.b16 %v3389
        %v3458 = vunpack.c.l.b16 %v3390
        %v3459 = vunpack.c.l.b16 %v3391
        %v3460 = vunpack.c.l.b16 %v3392
        %v3461 = vunpack.c.l.b16 %v3393
        %v3462 = vunpack.c.l.b16 %v3394
        %v3463 = vunpack.c.l.b16 %v3395
        %v3464 = vunpack.c.l.b16 %v3396
        %v3465 = vunpack.c.l.b16 %v3397
        %v3466 = vunpack.c.l.b16 %v3398
        %v3467 = vunpack.c.l.b16 %v3399
        %v3468 = vunpack.c.l.b16 %v3400
        %v3469 = vunpack.c.l.b16 %v3401
        %v3470 = vunpack.c.l.b16 %v3402
        %v3471 = vunpack.c.l.b16 %v3403
        %v3472 = vunpack.c.l.b16 %v3404
        %v3473 = vunpack.c.l.b16 %v3405
        %v3474 = vunpack.c.l.b16 %v3406
        %v3475 = vunpack.c.l.b16 %v3407
        %v3476 = vunpack.c.l.b16 %v3408
        %v3477 = vunpack.c.l.b16 %v3409
        %v3478 = vunpack.c.l.b16 %v3410
        %v3479 = vunpack.c.l.b16 %v3411
        %v3480 = vunpack.c.l.b16 %v3412
        %v3481 = vunpack.c.l.b16 %v3413
        %v3482 = vunpack.c.l.b16 %v3414
        %v3483 = vunpack.c.l.b16 %v3415
        %v3484 = vunpack.c.l.b16 %v3416
        %v3485 = vpack.c.b16 %v3454, %v3453
        %v3486 = vpack.c.b16 %v3456, %v3455
        %v3487 = vpack.c.b16 %v3458, %v3457
        %v3488 = vpack.c.b16 %v3460, %v3459
        %v3489 = vpack.c.b16 %v3462, %v3461
        %v3490 = vpack.c.b16 %v3464, %v3463
        %v3491 = vpack.c.b16 %v3466, %v3465
        %v3492 = vpack.c.b16 %v3468, %v3467
        %v3493 = vpack.c.b16 %v3470, %v3469
        %v3494 = vpack.c.b16 %v3472, %v3471
        %v3495 = vpack.c.b16 %v3474, %v3473
        %v3496 = vpack.c.b16 %v3476, %v3475
        %v3497 = vpack.c.b16 %v3478, %v3477
        %v3498 = vpack.c.b16 %v3480, %v3479
        %v3499 = vpack.c.b16 %v3482, %v3481
        %v3500 = vpack.c.b16 %v3484, %v3483
        %3517 = vmatpush.bf16.msra.mxu0 %v3492
        %3518 = vmatpush.bf16.msra.mxu0 %v3491
        %3519 = vmatpush.bf16.msra.mxu0 %v3490
        %3520 = vmatpush.bf16.msra.mxu0 %v3489
        %3521 = vmatpush.bf16.msra.mxu0 %v3488
        %3522 = vmatpush.bf16.msra.mxu0 %v3487
        %3523 = vmatpush.bf16.msra.mxu0 %v3486
        %3524 = vmatpush.bf16.msra.mxu0 %v3485
        %3525 = vmatmul.bf16.gmra.mxu0 %v3377
        %v3526 = vpop.f32.mrf.mxu0
        %v3527 = vadd.f32 %v3419, %v3526
        %v3528 = vpop.f32.mrf.mxu0
        %v3529 = vadd.f32 %v3419, %v3528
        %3530 = vmatmul.bf16.gmra.mxu0 %v3379
        %v3531 = vpop.f32.mrf.mxu0
        %v3532 = vadd.f32 %v3419, %v3531
        %v3533 = vpop.f32.mrf.mxu0
        %v3534 = vadd.f32 %v3419, %v3533
        %3535 = vmatmul.bf16.gmra.mxu0 %v3381
        %v3536 = vpop.f32.mrf.mxu0
        %v3537 = vadd.f32 %v3419, %v3536
        %v3538 = vpop.f32.mrf.mxu0
        %v3539 = vadd.f32 %v3419, %v3538
        %3540 = vmatmul.bf16.gmra.mxu0 %v3383
        %v3541 = vpop.f32.mrf.mxu0
        %v3542 = vadd.f32 %v3419, %v3541
        %v3543 = vpop.f32.mrf.mxu0
        %v3544 = vadd.f32 %v3419, %v3543
        %3545 = vdwg.mxu0
        %3546 = vmatpush.bf16.msra.mxu0 %v3500
        %3547 = vmatpush.bf16.msra.mxu0 %v3499
        %3548 = vmatpush.bf16.msra.mxu0 %v3498
        %3549 = vmatpush.bf16.msra.mxu0 %v3497
        %3550 = vmatpush.bf16.msra.mxu0 %v3496
        %3551 = vmatpush.bf16.msra.mxu0 %v3495
        %3552 = vmatpush.bf16.msra.mxu0 %v3494
        %3553 = vmatpush.bf16.msra.mxu0 %v3493
        %3554 = vmatmul.bf16.gmra.mxu0 %v3378
        %v3555 = vpop.f32.mrf.mxu0
        %v3556 = vadd.f32 %v3527, %v3555
        %v3557 = vpop.f32.mrf.mxu0
        %v3558 = vadd.f32 %v3529, %v3557
        %3559 = vmatmul.bf16.gmra.mxu0 %v3380
        %v3560 = vpop.f32.mrf.mxu0
        %v3561 = vadd.f32 %v3532, %v3560
        %v3562 = vpop.f32.mrf.mxu0
        %v3563 = vadd.f32 %v3534, %v3562
        %3564 = vmatmul.bf16.gmra.mxu0 %v3382
        %v3565 = vpop.f32.mrf.mxu0
        %v3566 = vadd.f32 %v3537, %v3565
        %v3567 = vpop.f32.mrf.mxu0
        %v3568 = vadd.f32 %v3539, %v3567
        %3569 = vmatmul.bf16.gmra.mxu0 %v3384
        %v3570 = vpop.f32.mrf.mxu0
        %v3571 = vadd.f32 %v3542, %v3570
        %v3572 = vpop.f32.mrf.mxu0
        %v3573 = vadd.f32 %v3544, %v3572
        %3574 = vdwg.mxu0
        %v3575 = vadd.f32 %v2877, %v3556
        %v3576 = vadd.f32 %v2878, %v3558
        %v3577 = vadd.f32 %v2879, %v3561
        %v3578 = vadd.f32 %v2880, %v3563
        %v3579 = vadd.f32 %v2881, %v3566
        %v3580 = vadd.f32 %v2882, %v3568
        %v3581 = vadd.f32 %v2883, %v3571
        %v3582 = vadd.f32 %v2884, %v3573
        %3583 = vst [vmem:[#allocation2] sm:$0xff] %v3575
        %3584 = vst [vmem:[#allocation2 + $0x8] sm:$0xff] %v3576
        %3585 = vst [vmem:[#allocation2 + $0x10] sm:$0xff] %v3577
        %3586 = vst [vmem:[#allocation2 + $0x18] sm:$0xff] %v3578
        %3587 = vst [vmem:[#allocation2 + $0x20] sm:$0xff] %v3579
        %3588 = vst [vmem:[#allocation2 + $0x28] sm:$0xff] %v3580
        %3589 = vst [vmem:[#allocation2 + $0x30] sm:$0xff] %v3581
        %3590 = vst [vmem:[#allocation2 + $0x38] sm:$0xff] %v3582
        %p3591 = scmp.eq.s32.totalorder %s43, 1
        // Predicated region
        $region173: #{tpu_custom_call.1} parent=107 // pred_check
          %p3592 = pneg %p3591
        $region174: #{tpu_custom_call.1} parent=107 // pred_check_branch
          %3594 = sbr.rel (%p3592) target = $region176
        $region175: #{tpu_custom_call.1} parent=107 // pred_region
          %v3595 = vld [vmem:[%s18] sm:$0x1]
          %v3596 = vld [vmem:[%s19] sm:$0x1]
          %3597 = vadd.xlane.f32.xlu0 %v3575
          %v3598 = vpop.xlane.xlu0 %3597
          %3599 = vadd.xlane.f32.xlu0 %v3576
          %v3600 = vpop.xlane.xlu0 %3599
          %3601 = vadd.xlane.f32.xlu0 %v3577
          %v3602 = vpop.xlane.xlu0 %3601
          %3603 = vadd.xlane.f32.xlu0 %v3578
          %v3604 = vpop.xlane.xlu0 %3603
          %3605 = vadd.xlane.f32.xlu0 %v3579
          %v3606 = vpop.xlane.xlu0 %3605
          %3607 = vadd.xlane.f32.xlu0 %v3580
          %v3608 = vpop.xlane.xlu0 %3607
          %3609 = vadd.xlane.f32.xlu0 %v3581
          %v3610 = vpop.xlane.xlu0 %3609
          %3611 = vadd.xlane.f32.xlu0 %v3582
          %v3612 = vpop.xlane.xlu0 %3611
          %v3613 = vmul.f32 %v3598, %v1389
          %v3614 = vmul.f32 %v3600, %v1389
          %v3615 = vmul.f32 %v3602, %v1389
          %v3616 = vmul.f32 %v3604, %v1389
          %v3617 = vmul.f32 %v3606, %v1389
          %v3618 = vmul.f32 %v3608, %v1389
          %v3619 = vmul.f32 %v3610, %v1389
          %v3620 = vmul.f32 %v3612, %v1389
          %v3621 = vsub.f32 %v3575, %v3613
          %v3622 = vsub.f32 %v3576, %v3614
          %v3623 = vsub.f32 %v3577, %v3615
          %v3624 = vsub.f32 %v3578, %v3616
          %v3625 = vsub.f32 %v3579, %v3617
          %v3626 = vsub.f32 %v3580, %v3618
          %v3627 = vsub.f32 %v3581, %v3619
          %v3628 = vsub.f32 %v3582, %v3620
          %v3629 = vmul.f32 %v3621, %v3621
          %v3630 = vmul.f32 %v3622, %v3622
          %v3631 = vmul.f32 %v3623, %v3623
          %v3632 = vmul.f32 %v3624, %v3624
          %v3633 = vmul.f32 %v3625, %v3625
          %v3634 = vmul.f32 %v3626, %v3626
          %v3635 = vmul.f32 %v3627, %v3627
          %v3636 = vmul.f32 %v3628, %v3628
          %3637 = vadd.xlane.f32.xlu0 %v3629
          %v3638 = vpop.xlane.xlu0 %3637
          %3639 = vadd.xlane.f32.xlu0 %v3630
          %v3640 = vpop.xlane.xlu0 %3639
          %3641 = vadd.xlane.f32.xlu0 %v3631
          %v3642 = vpop.xlane.xlu0 %3641
          %3643 = vadd.xlane.f32.xlu0 %v3632
          %v3644 = vpop.xlane.xlu0 %3643
          %3645 = vadd.xlane.f32.xlu0 %v3633
          %v3646 = vpop.xlane.xlu0 %3645
          %3647 = vadd.xlane.f32.xlu0 %v3634
          %v3648 = vpop.xlane.xlu0 %3647
          %3649 = vadd.xlane.f32.xlu0 %v3635
          %v3650 = vpop.xlane.xlu0 %3649
          %3651 = vadd.xlane.f32.xlu0 %v3636
          %v3652 = vpop.xlane.xlu0 %3651
          %v3653 = vmul.f32 %v3638, %v1389
          %v3654 = vmul.f32 %v3640, %v1389
          %v3655 = vmul.f32 %v3642, %v1389
          %v3656 = vmul.f32 %v3644, %v1389
          %v3657 = vmul.f32 %v3646, %v1389
          %v3658 = vmul.f32 %v3648, %v1389
          %v3659 = vmul.f32 %v3650, %v1389
          %v3660 = vmul.f32 %v3652, %v1389
          %v3661 = vadd.f32 %v3653, 1e-05
          %v3662 = vadd.f32 %v3654, 1e-05
          %v3663 = vadd.f32 %v3655, 1e-05
          %v3664 = vadd.f32 %v3656, 1e-05
          %v3665 = vadd.f32 %v3657, 1e-05
          %v3666 = vadd.f32 %v3658, 1e-05
          %v3667 = vadd.f32 %v3659, 1e-05
          %v3668 = vadd.f32 %v3660, 1e-05
          %v3669 = vrsqrt.pop %v3661
          %v3670 = vmul.f32 %v3669, %v3661
          %v3671 = vmul.f32 %v3670, %v3669
          %v3672 = vmul.f32 0.5, %v3671
          %v3673 = vsub.f32 1.5, %v3672
          %v3674 = vmul.f32 %v3669, %v3673
          %vm3675 = vweird.f32 %v3661
          %vm3676 = vweird.f32 %v3669
          %vm3677 = vmor %vm3675, %vm3676
          %v3678 = vsel %vm3677, %v3669, %v3674
          %v3679 = vrsqrt.pop %v3662
          %v3680 = vmul.f32 %v3679, %v3662
          %v3681 = vmul.f32 %v3680, %v3679
          %v3682 = vmul.f32 0.5, %v3681
          %v3683 = vsub.f32 1.5, %v3682
          %v3684 = vmul.f32 %v3679, %v3683
          %vm3685 = vweird.f32 %v3662
          %vm3686 = vweird.f32 %v3679
          %vm3687 = vmor %vm3685, %vm3686
          %v3688 = vsel %vm3687, %v3679, %v3684
          %v3689 = vrsqrt.pop %v3663
          %v3690 = vmul.f32 %v3689, %v3663
          %v3691 = vmul.f32 %v3690, %v3689
          %v3692 = vmul.f32 0.5, %v3691
          %v3693 = vsub.f32 1.5, %v3692
          %v3694 = vmul.f32 %v3689, %v3693
          %vm3695 = vweird.f32 %v3663
          %vm3696 = vweird.f32 %v3689
          %vm3697 = vmor %vm3695, %vm3696
          %v3698 = vsel %vm3697, %v3689, %v3694
          %v3699 = vrsqrt.pop %v3664
          %v3700 = vmul.f32 %v3699, %v3664
          %v3701 = vmul.f32 %v3700, %v3699
          %v3702 = vmul.f32 0.5, %v3701
          %v3703 = vsub.f32 1.5, %v3702
          %v3704 = vmul.f32 %v3699, %v3703
          %vm3705 = vweird.f32 %v3664
          %vm3706 = vweird.f32 %v3699
          %vm3707 = vmor %vm3705, %vm3706
          %v3708 = vsel %vm3707, %v3699, %v3704
          %v3709 = vrsqrt.pop %v3665
          %v3710 = vmul.f32 %v3709, %v3665
          %v3711 = vmul.f32 %v3710, %v3709
          %v3712 = vmul.f32 0.5, %v3711
          %v3713 = vsub.f32 1.5, %v3712
          %v3714 = vmul.f32 %v3709, %v3713
          %vm3715 = vweird.f32 %v3665
          %vm3716 = vweird.f32 %v3709
          %vm3717 = vmor %vm3715, %vm3716
          %v3718 = vsel %vm3717, %v3709, %v3714
          %v3719 = vrsqrt.pop %v3666
          %v3720 = vmul.f32 %v3719, %v3666
          %v3721 = vmul.f32 %v3720, %v3719
          %v3722 = vmul.f32 0.5, %v3721
          %v3723 = vsub.f32 1.5, %v3722
          %v3724 = vmul.f32 %v3719, %v3723
          %vm3725 = vweird.f32 %v3666
          %vm3726 = vweird.f32 %v3719
          %vm3727 = vmor %vm3725, %vm3726
          %v3728 = vsel %vm3727, %v3719, %v3724
          %v3729 = vrsqrt.pop %v3667
          %v3730 = vmul.f32 %v3729, %v3667
          %v3731 = vmul.f32 %v3730, %v3729
          %v3732 = vmul.f32 0.5, %v3731
          %v3733 = vsub.f32 1.5, %v3732
          %v3734 = vmul.f32 %v3729, %v3733
          %vm3735 = vweird.f32 %v3667
          %vm3736 = vweird.f32 %v3729
          %vm3737 = vmor %vm3735, %vm3736
          %v3738 = vsel %vm3737, %v3729, %v3734
          %v3739 = vrsqrt.pop %v3668
          %v3740 = vmul.f32 %v3739, %v3668
          %v3741 = vmul.f32 %v3740, %v3739
          %v3742 = vmul.f32 0.5, %v3741
          %v3743 = vsub.f32 1.5, %v3742
          %v3744 = vmul.f32 %v3739, %v3743
          %vm3745 = vweird.f32 %v3668
          %vm3746 = vweird.f32 %v3739
          %vm3747 = vmor %vm3745, %vm3746
          %v3748 = vsel %vm3747, %v3739, %v3744
          %v3749 = vmul.f32 %v3621, %v3678
          %v3750 = vmul.f32 %v3622, %v3688
          %v3751 = vmul.f32 %v3623, %v3698
          %v3752 = vmul.f32 %v3624, %v3708
          %v3753 = vmul.f32 %v3625, %v3718
          %v3754 = vmul.f32 %v3626, %v3728
          %v3755 = vmul.f32 %v3627, %v3738
          %v3756 = vmul.f32 %v3628, %v3748
          %v3758 = vperm.slane %v3595, 0
          %v3760 = vmul.f32 %v3749, %v3758
          %v3761 = vmul.f32 %v3750, %v3758
          %v3762 = vmul.f32 %v3751, %v3758
          %v3763 = vmul.f32 %v3752, %v3758
          %v3764 = vmul.f32 %v3753, %v3758
          %v3765 = vmul.f32 %v3754, %v3758
          %v3766 = vmul.f32 %v3755, %v3758
          %v3767 = vmul.f32 %v3756, %v3758
          %v3769 = vperm.slane %v3596, 0
          %v3771 = vadd.f32 %v3760, %v3769
          %v3772 = vadd.f32 %v3761, %v3769
          %v3773 = vadd.f32 %v3762, %v3769
          %v3774 = vadd.f32 %v3763, %v3769
          %v3775 = vadd.f32 %v3764, %v3769
          %v3776 = vadd.f32 %v3765, %v3769
          %v3777 = vadd.f32 %v3766, %v3769
          %v3778 = vadd.f32 %v3767, %v3769
          %v3779 = vpack.c.bf16 %v3772, %v3771
          %v3780 = vpack.c.bf16 %v3774, %v3773
          %v3781 = vpack.c.bf16 %v3776, %v3775
          %v3782 = vpack.c.bf16 %v3778, %v3777
          %v3783 = vld [vmem:[#allocation22] sm:$0xf]
          %v3784 = vld [vmem:[#allocation22 + $0x4] sm:$0xf]
          %v3785 = vld [vmem:[#allocation22 + $0x8] sm:$0xf]
          %v3786 = vld [vmem:[#allocation22 + $0xc] sm:$0xf]
          %v3787 = vld [vmem:[#allocation22 + $0x10] sm:$0xf]
          %v3788 = vld [vmem:[#allocation22 + $0x14] sm:$0xf]
          %v3789 = vld [vmem:[#allocation22 + $0x18] sm:$0xf]
          %v3790 = vld [vmem:[#allocation22 + $0x1c] sm:$0xf]
          %v3791 = vld [vmem:[#allocation22 + $0x20] sm:$0xf]
          %v3792 = vld [vmem:[#allocation22 + $0x24] sm:$0xf]
          %v3793 = vld [vmem:[#allocation22 + $0x28] sm:$0xf]
          %v3794 = vld [vmem:[#allocation22 + $0x2c] sm:$0xf]
          %v3795 = vld [vmem:[#allocation22 + $0x30] sm:$0xf]
          %v3796 = vld [vmem:[#allocation22 + $0x34] sm:$0xf]
          %v3797 = vld [vmem:[#allocation22 + $0x38] sm:$0xf]
          %v3798 = vld [vmem:[#allocation22 + $0x3c] sm:$0xf]
          %v3799 = vld [vmem:[%s21] sm:$0x1]
          %v3801 = vperm.slane %v3799, 0
          %v3819 = vunpack.c.l.b16 %v3783
          %v3820 = vunpack.c.l.b16 %v3784
          %v3821 = vunpack.c.l.b16 %v3785
          %v3822 = vunpack.c.l.b16 %v3786
          %v3823 = vunpack.c.l.b16 %v3787
          %v3824 = vunpack.c.l.b16 %v3788
          %v3825 = vunpack.c.l.b16 %v3789
          %v3826 = vunpack.c.l.b16 %v3790
          %v3827 = vunpack.c.l.b16 %v3791
          %v3828 = vunpack.c.l.b16 %v3792
          %v3829 = vunpack.c.l.b16 %v3793
          %v3830 = vunpack.c.l.b16 %v3794
          %v3831 = vunpack.c.l.b16 %v3795
          %v3832 = vunpack.c.l.b16 %v3796
          %v3833 = vunpack.c.l.b16 %v3797
          %v3834 = vunpack.c.l.b16 %v3798
          %v3835 = vpack.c.b16 %v3820, %v3819
          %v3836 = vpack.c.b16 %v3822, %v3821
          %v3837 = vpack.c.b16 %v3824, %v3823
          %v3838 = vpack.c.b16 %v3826, %v3825
          %v3839 = vpack.c.b16 %v3828, %v3827
          %v3840 = vpack.c.b16 %v3830, %v3829
          %v3841 = vpack.c.b16 %v3832, %v3831
          %v3842 = vpack.c.b16 %v3834, %v3833
          %3851 = vmatpush.bf16.msra.mxu0 %v3842
          %3852 = vmatpush.bf16.msra.mxu0 %v3841
          %3853 = vmatpush.bf16.msra.mxu0 %v3840
          %3854 = vmatpush.bf16.msra.mxu0 %v3839
          %3855 = vmatpush.bf16.msra.mxu0 %v3838
          %3856 = vmatpush.bf16.msra.mxu0 %v3837
          %3857 = vmatpush.bf16.msra.mxu0 %v3836
          %3858 = vmatpush.bf16.msra.mxu0 %v3835
          %3859 = vmatmul.bf16.gmra.mxu0 %v3779
          %v3860 = vpop.f32.mrf.mxu0
          %v3861 = vadd.f32 %v3801, %v3860
          %v3862 = vpop.f32.mrf.mxu0
          %v3863 = vadd.f32 %v3801, %v3862
          %3864 = vmatmul.bf16.gmra.mxu0 %v3780
          %v3865 = vpop.f32.mrf.mxu0
          %v3866 = vadd.f32 %v3801, %v3865
          %v3867 = vpop.f32.mrf.mxu0
          %v3868 = vadd.f32 %v3801, %v3867
          %3869 = vmatmul.bf16.gmra.mxu0 %v3781
          %v3870 = vpop.f32.mrf.mxu0
          %v3871 = vadd.f32 %v3801, %v3870
          %v3872 = vpop.f32.mrf.mxu0
          %v3873 = vadd.f32 %v3801, %v3872
          %3874 = vmatmul.bf16.gmra.mxu0 %v3782
          %v3875 = vpop.f32.mrf.mxu0
          %v3876 = vadd.f32 %v3801, %v3875
          %v3877 = vpop.f32.mrf.mxu0
          %v3878 = vadd.f32 %v3801, %v3877
          %3879 = vdwg.mxu0
          %3880 = vst [vmem:[#allocation23] sm:$0xff] %v3861
          %3881 = vst [vmem:[#allocation23 + $0x8] sm:$0xff] %v3863
          %3882 = vst [vmem:[#allocation23 + $0x10] sm:$0xff] %v3866
          %3883 = vst [vmem:[#allocation23 + $0x18] sm:$0xff] %v3868
          %3884 = vst [vmem:[#allocation23 + $0x20] sm:$0xff] %v3871
          %3885 = vst [vmem:[#allocation23 + $0x28] sm:$0xff] %v3873
          %3886 = vst [vmem:[#allocation23 + $0x30] sm:$0xff] %v3876
          %3887 = vst [vmem:[#allocation23 + $0x38] sm:$0xff] %v3878
        $region176: #{tpu_custom_call.1} parent=107 // pred_fallthru
          _
        // Predicated region
        $region177: #{tpu_custom_call.1} parent=107 // pred_check
          %p3888 = pneg %p595
        $region178: #{tpu_custom_call.1} parent=107 // pred_check_branch
          %3890 = sbr.rel (%p3888) target = $region180
        $region179: #{tpu_custom_call.1} parent=107 // pred_region
          %s3891 = smul.u32 4, %s42
          %3893 = vsyncadd [#allocation5], 0
          %s3894 = smul.addr %s3891, 2
          %s3895 = smul.addr %s3894, 8
          %s3896 = scalar_lea.hbm %s22, %s3895
          %s3897 = sshll.u32 [#allocation23], 4
          %s3898 = int_to_ptr.vmem [resolvable:$true] %s3897
          %s3899 = sshll.u32 %s3896, 4
          %s3900 = int_to_ptr.hbm [resolvable:$true] %s3899
          %3905 = dma.vmem_to_hbm [thread:$0]  %s3898, 1024, %s3900, [#allocation5], 128, 128, 8
        $region180: #{tpu_custom_call.1} parent=107 // pred_fallthru
          _
        // Predicated region
        $region181: #{tpu_custom_call.1} parent=107 // pred_check
          %p3906 = pneg %p595
        $region182: #{tpu_custom_call.1} parent=107 // pred_check_branch
          %3908 = sbr.rel (%p3906) target = $region184
        $region183: #{tpu_custom_call.1} parent=107 // pred_region
          %3910 = dma.done [#allocation5], 1024
        $region184: #{tpu_custom_call.1} parent=107 // pred_fallthru
          _
      $region108: #{tpu_custom_call.1} parent=5 // pred_fallthru
        _
      %p3911 = scmp.le.s32.totalorder 2, %s33
      // Predicated region
      $region185: #{tpu_custom_call.1} parent=5 // pred_check
        %p3912 = pneg %p3911
      $region186: #{tpu_custom_call.1} parent=5 // pred_check_branch
        %3914 = sbr.rel (%p3912) target = $region188
      $region187: #{tpu_custom_call.1} parent=5 // pred_region
        %s3915 = ssub.s32 %s33, 2
      $region188: #{tpu_custom_call.1} parent=5 // pred_fallthru
        _
    $region6: #{tpu_custom_call.1} parent=1 // loop_footer
      %s37 = sadd.s32 1, %s33
    $region7: #{tpu_custom_call.1} parent=1 // loop_footer_branch
      %32 = sbr.rel target = $region3
    $region8: #{tpu_custom_call.1} parent=1 // loop_exit
      _
    %3916 = vsyncpa [#allocation4], 1
    %s3917 = scalar_lea.sflag [#allocation4], 1
    %3918 = vsyncpa %s3917, 1
    %3919 = vsyncpa [#allocation7], 1
    %3920 = vsyncpa [#allocation10], 1
    %3921 = vsyncpa [#allocation13], 1
    %3922 = vsyncpa [#allocation5], 1
    %s3923 = scalar_lea.sflag [#allocation5], 1
    %3924 = vsyncpa %s3923, 1

// kernel: tpu_custom_call.1
$region0: #{tpu_custom_call.1}
  #allocation0 [shape = 'u32[]', space=smem, size = 0x4, offset = 0x4, fixed_abs, tag = 'smem constant byte address 0x4 - core index']
  #allocation1 [shape = 'u32[72,128]{1,0:T(1,128)}', space=vmem, size = 0x9000, scoped, tag = 'internal scratch']
  #allocation2 [shape = 'f32[64,128]{1,0:T(8,128)}', space=vmem, size = 0x8000, scoped, tag = 'scratch operand']
  %s0 = inlined_call_operand.hbm [shape: f32[4,16,128], index: 0, kind: input, shape index: {}]
  %s1 = inlined_call_operand.hbm [shape: f32[16,128], index: 1, kind: input, shape index: {}]
  %s2 = inlined_call_operand.hbm [shape: f32[8,1,128], index: 2, kind: input, shape index: {}]
  %s3 = inlined_call_operand.hbm [shape: f32[128,128], index: 3, kind: input, shape index: {}]
  %s4 = inlined_call_operand.hbm [shape: f32[1,128], index: 4, kind: input, shape index: {}]
  %s5 = inlined_call_operand.hbm [shape: f32[1,128], index: 5, kind: input, shape index: {}]
  %s6 = inlined_call_operand.hbm [shape: f32[2,1,128], index: 6, kind: input, shape index: {}]
  %s7 = inlined_call_operand.hbm [shape: f32[2,1,128], index: 7, kind: input, shape index: {}]
  %s8 = inlined_call_operand.hbm [shape: bf16[2,128,384], index: 8, kind: input, shape index: {}]
  %s9 = inlined_call_operand.vmem [shape: f32[2,1,384], index: 9, kind: input, shape index: {}]
  %s10 = inlined_call_operand.hbm [shape: bf16[2,128,128], index: 10, kind: input, shape index: {}]
  %s11 = inlined_call_operand.hbm [shape: f32[2,1,128], index: 11, kind: input, shape index: {}]
  %s12 = inlined_call_operand.hbm [shape: f32[2,1,128], index: 12, kind: input, shape index: {}]
  %s13 = inlined_call_operand.vmem [shape: f32[2,1,128], index: 13, kind: input, shape index: {}]
  %s14 = inlined_call_operand.hbm [shape: bf16[2,128,256], index: 14, kind: input, shape index: {}]
  %s15 = inlined_call_operand.vmem [shape: f32[2,1,256], index: 15, kind: input, shape index: {}]
  %s16 = inlined_call_operand.hbm [shape: bf16[2,256,128], index: 16, kind: input, shape index: {}]
  %s17 = inlined_call_operand.vmem [shape: f32[2,1,128], index: 17, kind: input, shape index: {}]
  %s18 = inlined_call_operand.vmem [shape: f32[1,128], index: 18, kind: input, shape index: {}]
  %s19 = inlined_call_operand.vmem [shape: f32[1,128], index: 19, kind: input, shape index: {}]
  %s20 = inlined_call_operand.hbm [shape: bf16[128,128], index: 20, kind: input, shape index: {}]
  %s21 = inlined_call_operand.vmem [shape: f32[1,128], index: 21, kind: input, shape index: {}]
  %s22 = inlined_call_operand.hbm [shape: f32[4,16,128], index: 22, kind: output, shape index: {}]
  %s23 = sld [smem:[#allocation0]]
  $region189: #{tpu_custom_call.1} parent=0
    _
  %s25 = ssub.s32 1, %s23
  %s26 = scalar_select 0, %s25, %s23
  $region1: #{tpu_custom_call.1} parent=0
    #allocation3 [shape = 'u8[32768]{0}', space=vmem, size = 0x8000, scoped, tag = 'input window, operand 0, single buffered']
    #allocation4 [shape = 's32[2]{0}', space=sflag, size = 0x8, scoped, tag = 'scoped memory for tpu_custom_call.1']
    #allocation5 [shape = 's32[2]{0}', space=sflag, size = 0x8, scoped, tag = 'scoped memory for tpu_custom_call.1']
    #allocation6 [shape = 'u8[8192]{0}', space=vmem, size = 0x2000, scoped, tag = 'input window, operand 1, single buffered']
    #allocation7 [shape = 's32[1]{0}', space=sflag, size = 0x4, scoped, tag = 'scoped memory for tpu_custom_call.1']
    #allocation8 [shape = 'u8[4096]{0}', space=vmem, size = 0x1000, scoped, tag = 'input window, operand 2, single buffered']
    #allocation9 [shape = 'u8[65536]{0}', space=vmem, size = 0x10000, scoped, tag = 'input window, operand 3, single buffered']
    #allocation10 [shape = 's32[1]{0}', space=sflag, size = 0x4, scoped, tag = 'scoped memory for tpu_custom_call.1']
    #allocation11 [shape = 'u8[512]{0}', space=vmem, size = 0x400, scoped, tag = 'input window, operand 4, single buffered']
    #allocation12 [shape = 'u8[512]{0}', space=vmem, size = 0x400, scoped, tag = 'input window, operand 5, single buffered']
    #allocation13 [shape = 's32[1]{0}', space=sflag, size = 0x4, scoped, tag = 'scoped memory for tpu_custom_call.1']
    #allocation14 [shape = 'u8[1024]{0}', space=vmem, size = 0x400, scoped, tag = 'input window, operand 6']
    #allocation15 [shape = 'u8[1024]{0}', space=vmem, size = 0x400, scoped, tag = 'input window, operand 7']
    #allocation16 [shape = 'u8[196608]{0}', space=vmem, size = 0x30000, scoped, tag = 'input window, operand 8']
    #allocation17 [shape = 'u8[65536]{0}', space=vmem, size = 0x10000, scoped, tag = 'input window, operand 10']
    #allocation18 [shape = 'u8[1024]{0}', space=vmem, size = 0x400, scoped, tag = 'input window, operand 11']
    #allocation19 [shape = 'u8[1024]{0}', space=vmem, size = 0x400, scoped, tag = 'input window, operand 12']
    #allocation20 [shape = 'u8[131072]{0}', space=vmem, size = 0x20000, scoped, tag = 'input window, operand 14']
    #allocation21 [shape = 'u8[131072]{0}', space=vmem, size = 0x20000, scoped, tag = 'input window, operand 16']
    #allocation22 [shape = 'u8[32768]{0}', space=vmem, size = 0x8000, scoped, tag = 'input window, operand 20, single buffered']
    #allocation23 [shape = 'u8[32768]{0}', space=vmem, size = 0x8000, scoped, tag = 'output window, operand 0, single buffered']
    %27 = vsyncpa [#allocation4], 0
    %28 = vsyncpa [#allocation7], 0
    %29 = vsyncpa [#allocation10], 0
    %30 = vsyncpa [#allocation13], 0
    %31 = vsyncpa [#allocation5], 0
    loop: start=0, step=1, limit=4
    $region2: #{tpu_custom_call.1} parent=1 // loop_pre_header
      _
    $region3: #{tpu_custom_call.1} parent=1 // loop_header
      %s33 = sphi 0, %s37
      %p34 = scmp.ge.s32.totalorder %s33, 4
      %s40 = sphi 0, %s52
      %s41 = sphi 0, %s48
      %s42 = sphi 0, %s40
      %s43 = sphi 0, %s41
      %s44 = sphi 0, %s42
      %s45 = sphi 0, %s43
      %s55 = sphi 0, %s57
      %s58 = sphi 0, %s55
      %s59 = sphi 0, %s58
      %s75 = sphi 0, %s59
      %s79 = sphi 0, %s79
      %s81 = sphi 0, %s79
      %s82 = sphi 0, %s81
      %s96 = sphi 0, %s82
      %s100 = sphi 0, %s100
      %s102 = sphi 0, %s100
      %s103 = sphi 0, %s102
      %s117 = sphi 0, %s103
      %s121 = sphi 0, %s121
      %s123 = sphi 0, %s121
      %s124 = sphi 0, %s123
      %s138 = sphi 0, %s124
      %s142 = sphi 0, %s142
      %s144 = sphi 0, %s142
      %s145 = sphi 0, %s144
      %s159 = sphi 0, %s145
      %s163 = sphi 0, %s163
      %s165 = sphi 0, %s163
      %s166 = sphi 0, %s165
      %s180 = sphi 0, %s166
      %s186 = sphi 0, %s188
      %s189 = sphi 0, %s186
      %s190 = sphi 0, %s189
      %s206 = sphi 0, %s190
      %s212 = sphi 0, %s214
      %s215 = sphi 0, %s212
      %s216 = sphi 0, %s215
      %s232 = sphi 0, %s216
      %s238 = sphi 0, %s240
      %s241 = sphi 0, %s238
      %s242 = sphi 0, %s241
      %s258 = sphi 0, %s242
      %s264 = sphi 0, %s266
      %s267 = sphi 0, %s264
      %s268 = sphi 0, %s267
      %s284 = sphi 0, %s268
      %s290 = sphi 0, %s292
      %s293 = sphi 0, %s290
      %s294 = sphi 0, %s293
      %s310 = sphi 0, %s294
      %s316 = sphi 0, %s318
      %s319 = sphi 0, %s316
      %s320 = sphi 0, %s319
      %s336 = sphi 0, %s320
      %s342 = sphi 0, %s344
      %s345 = sphi 0, %s342
      %s346 = sphi 0, %s345
      %s362 = sphi 0, %s346
      %s368 = sphi 0, %s370
      %s371 = sphi 0, %s368
      %s372 = sphi 0, %s371
      %s388 = sphi 0, %s372
      %s394 = sphi 0, %s396
      %s397 = sphi 0, %s394
      %s398 = sphi 0, %s397
      %s414 = sphi 0, %s398
      %s420 = sphi 0, %s422
      %s423 = sphi 0, %s420
      %s424 = sphi 0, %s423
      %s440 = sphi 0, %s424
      %s446 = sphi 0, %s448
      %s449 = sphi 0, %s446
      %s450 = sphi 0, %s449
      %s466 = sphi 0, %s450
      %s472 = sphi 0, %s474
      %s475 = sphi 0, %s472
      %s476 = sphi 0, %s475
      %s492 = sphi 0, %s476
      %s496 = sphi 0, %s496
      %s498 = sphi 0, %s496
      %s499 = sphi 0, %s498
      %s513 = sphi 0, %s499
      %s517 = sphi 0, %s517
      %s519 = sphi 0, %s517
      %s520 = sphi 0, %s519
      %s534 = sphi 0, %s520
      %s538 = sphi 0, %s538
      %s540 = sphi 0, %s538
      %s541 = sphi 0, %s540
      %s555 = sphi 0, %s541
      %s559 = sphi 0, %s559
      %s561 = sphi 0, %s559
      %s562 = sphi 0, %s561
      %s576 = sphi 0, %s562
      %s582 = sphi 0, %s584
      %s585 = sphi 0, %s582
      %s586 = sphi 0, %s585
      %s602 = sphi 0, %s586
    $region4: #{tpu_custom_call.1} parent=1 // loop_header_branch
      %36 = sbr.rel (%p34) target = $region8
    $region5: #{tpu_custom_call.1} parent=1 // loop_body
      %s38 = ssub.s32 %s33, 1
      %s39 = ssub.s32 %s33, 2
      %s46 = sadd.s32 1, %s41
      %p47 = scmp.ge.s32.totalorder %s46, 2
      %s48 = scalar_select %p47, 0, %s46
      %s49 = sadd.s32 1, %s40
      %s50 = scalar_select %p47, %s49, %s40
      %p51 = scmp.ge.s32.totalorder %s50, 1
      %s52 = scalar_select %p51, 0, %s50
      %s53 = ssub.s32 %s40, %s52
      %p54 = scmp.eq.s32.totalorder %s53, 0
      %s56 = sadd.s32 %s55, 1
      %s57 = scalar_select %p54, %s55, %s56
      %p60 = pneg %p54
      %p61 = scmp.eq.s32.totalorder %s33, 1
      %p62 = por %p60, %p61
      %p63 = scmp.ne.s32.totalorder %s55, %s58
      %p64 = scmp.eq.s32.totalorder %s33, 0
      %p65 = por %p63, %p64
      %p66 = scmp.ne.s32.totalorder %s55, %s58
      %p67 = scmp.eq.s32.totalorder %s38, 1
      %p68 = por %p66, %p67
      %p69 = scmp.ne.s32.totalorder %s58, %s59
      %p70 = scmp.eq.s32.totalorder %s38, 0
      %p71 = por %p69, %p70
      %p72 = scmp.ne.s32.totalorder %s58, %s59
      %p73 = scmp.eq.s32.totalorder %s39, 1
      %p74 = por %p72, %p73
      %p76 = scmp.ne.s32.totalorder %s59, %s75
      %p77 = scmp.eq.s32.totalorder %s39, 0
      %p78 = por %p76, %p77
      %s80 = sadd.s32 %s79, 1
      %p83 = scmp.eq.s32.totalorder %s33, 1
      %p84 = scmp.ne.s32.totalorder %s79, %s81
      %p85 = scmp.eq.s32.totalorder %s33, 0
      %p86 = por %p84, %p85
      %p87 = scmp.ne.s32.totalorder %s79, %s81
      %p88 = scmp.eq.s32.totalorder %s38, 1
      %p89 = por %p87, %p88
      %p90 = scmp.ne.s32.totalorder %s81, %s82
      %p91 = scmp.eq.s32.totalorder %s38, 0
      %p92 = por %p90, %p91
      %p93 = scmp.ne.s32.totalorder %s81, %s82
      %p94 = scmp.eq.s32.totalorder %s39, 1
      %p95 = por %p93, %p94
      %p97 = scmp.ne.s32.totalorder %s82, %s96
      %p98 = scmp.eq.s32.totalorder %s39, 0
      %p99 = por %p97, %p98
      %s101 = sadd.s32 %s100, 1
      %p104 = scmp.eq.s32.totalorder %s33, 1
      %p105 = scmp.ne.s32.totalorder %s100, %s102
      %p106 = scmp.eq.s32.totalorder %s33, 0
      %p107 = por %p105, %p106
      %p108 = scmp.ne.s32.totalorder %s100, %s102
      %p109 = scmp.eq.s32.totalorder %s38, 1
      %p110 = por %p108, %p109
      %p111 = scmp.ne.s32.totalorder %s102, %s103
      %p112 = scmp.eq.s32.totalorder %s38, 0
      %p113 = por %p111, %p112
      %p114 = scmp.ne.s32.totalorder %s102, %s103
      %p115 = scmp.eq.s32.totalorder %s39, 1
      %p116 = por %p114, %p115
      %p118 = scmp.ne.s32.totalorder %s103, %s117
      %p119 = scmp.eq.s32.totalorder %s39, 0
      %p120 = por %p118, %p119
      %s122 = sadd.s32 %s121, 1
      %p125 = scmp.eq.s32.totalorder %s33, 1
      %p126 = scmp.ne.s32.totalorder %s121, %s123
      %p127 = scmp.eq.s32.totalorder %s33, 0
      %p128 = por %p126, %p127
      %p129 = scmp.ne.s32.totalorder %s121, %s123
      %p130 = scmp.eq.s32.totalorder %s38, 1
      %p131 = por %p129, %p130
      %p132 = scmp.ne.s32.totalorder %s123, %s124
      %p133 = scmp.eq.s32.totalorder %s38, 0
      %p134 = por %p132, %p133
      %p135 = scmp.ne.s32.totalorder %s123, %s124
      %p136 = scmp.eq.s32.totalorder %s39, 1
      %p137 = por %p135, %p136
      %p139 = scmp.ne.s32.totalorder %s124, %s138
      %p140 = scmp.eq.s32.totalorder %s39, 0
      %p141 = por %p139, %p140
      %s143 = sadd.s32 %s142, 1
      %p146 = scmp.eq.s32.totalorder %s33, 1
      %p147 = scmp.ne.s32.totalorder %s142, %s144
      %p148 = scmp.eq.s32.totalorder %s33, 0
      %p149 = por %p147, %p148
      %p150 = scmp.ne.s32.totalorder %s142, %s144
      %p151 = scmp.eq.s32.totalorder %s38, 1
      %p152 = por %p150, %p151
      %p153 = scmp.ne.s32.totalorder %s144, %s145
      %p154 = scmp.eq.s32.totalorder %s38, 0
      %p155 = por %p153, %p154
      %p156 = scmp.ne.s32.totalorder %s144, %s145
      %p157 = scmp.eq.s32.totalorder %s39, 1
      %p158 = por %p156, %p157
      %p160 = scmp.ne.s32.totalorder %s145, %s159
      %p161 = scmp.eq.s32.totalorder %s39, 0
      %p162 = por %p160, %p161
      %s164 = sadd.s32 %s163, 1
      %p167 = scmp.eq.s32.totalorder %s33, 1
      %p168 = scmp.ne.s32.totalorder %s163, %s165
      %p169 = scmp.eq.s32.totalorder %s33, 0
      %p170 = por %p168, %p169
      %p171 = scmp.ne.s32.totalorder %s163, %s165
      %p172 = scmp.eq.s32.totalorder %s38, 1
      %p173 = por %p171, %p172
      %p174 = scmp.ne.s32.totalorder %s165, %s166
      %p175 = scmp.eq.s32.totalorder %s38, 0
      %p176 = por %p174, %p175
      %p177 = scmp.ne.s32.totalorder %s165, %s166
      %p178 = scmp.eq.s32.totalorder %s39, 1
      %p179 = por %p177, %p178
      %p181 = scmp.ne.s32.totalorder %s166, %s180
      %p182 = scmp.eq.s32.totalorder %s39, 0
      %p183 = por %p181, %p182
      %s184 = ssub.s32 %s41, %s48
      %p185 = scmp.eq.s32.totalorder %s184, 0
      %s187 = sadd.s32 %s186, 1
      %s188 = scalar_select %p185, %s186, %s187
      %p191 = pneg %p185
      %p192 = scmp.eq.s32.totalorder %s33, 1
      %p193 = por %p191, %p192
      %p194 = scmp.ne.s32.totalorder %s186, %s189
      %p195 = scmp.eq.s32.totalorder %s33, 0
      %p196 = por %p194, %p195
      %p197 = scmp.ne.s32.totalorder %s186, %s189
      %p198 = scmp.eq.s32.totalorder %s38, 1
      %p199 = por %p197, %p198
      %p200 = scmp.ne.s32.totalorder %s189, %s190
      %p201 = scmp.eq.s32.totalorder %s38, 0
      %p202 = por %p200, %p201
      %p203 = scmp.ne.s32.totalorder %s189, %s190
      %p204 = scmp.eq.s32.totalorder %s39, 1
      %p205 = por %p203, %p204
      %p207 = scmp.ne.s32.totalorder %s190, %s206
      %p208 = scmp.eq.s32.totalorder %s39, 0
      %p209 = por %p207, %p208
      %s210 = ssub.s32 %s41, %s48
      %p211 = scmp.eq.s32.totalorder %s210, 0
      %s213 = sadd.s32 %s212, 1
      %s214 = scalar_select %p211, %s212, %s213
      %p217 = pneg %p211
      %p218 = scmp.eq.s32.totalorder %s33, 1
      %p219 = por %p217, %p218
      %p220 = scmp.ne.s32.totalorder %s212, %s215
      %p221 = scmp.eq.s32.totalorder %s33, 0
      %p222 = por %p220, %p221
      %p223 = scmp.ne.s32.totalorder %s212, %s215
      %p224 = scmp.eq.s32.totalorder %s38, 1
      %p225 = por %p223, %p224
      %p226 = scmp.ne.s32.totalorder %s215, %s216
      %p227 = scmp.eq.s32.totalorder %s38, 0
      %p228 = por %p226, %p227
      %p229 = scmp.ne.s32.totalorder %s215, %s216
      %p230 = scmp.eq.s32.totalorder %s39, 1
      %p231 = por %p229, %p230
      %p233 = scmp.ne.s32.totalorder %s216, %s232
      %p234 = scmp.eq.s32.totalorder %s39, 0
      %p235 = por %p233, %p234
      %s236 = ssub.s32 %s41, %s48
      %p237 = scmp.eq.s32.totalorder %s236, 0
      %s239 = sadd.s32 %s238, 1
      %s240 = scalar_select %p237, %s238, %s239
      %p243 = pneg %p237
      %p244 = scmp.eq.s32.totalorder %s33, 1
      %p245 = por %p243, %p244
      %p246 = scmp.ne.s32.totalorder %s238, %s241
      %p247 = scmp.eq.s32.totalorder %s33, 0
      %p248 = por %p246, %p247
      %p249 = scmp.ne.s32.totalorder %s238, %s241
      %p250 = scmp.eq.s32.totalorder %s38, 1
      %p251 = por %p249, %p250
      %p252 = scmp.ne.s32.totalorder %s241, %s242
      %p253 = scmp.eq.s32.totalorder %s38, 0
      %p254 = por %p252, %p253
      %p255 = scmp.ne.s32.totalorder %s241, %s242
      %p256 = scmp.eq.s32.totalorder %s39, 1
      %p257 = por %p255, %p256
      %p259 = scmp.ne.s32.totalorder %s242, %s258
      %p260 = scmp.eq.s32.totalorder %s39, 0
      %p261 = por %p259, %p260
      %s262 = ssub.s32 %s41, %s48
      %p263 = scmp.eq.s32.totalorder %s262, 0
      %s265 = sadd.s32 %s264, 1
      %s266 = scalar_select %p263, %s264, %s265
      %p269 = pneg %p263
      %p270 = scmp.eq.s32.totalorder %s33, 1
      %p271 = por %p269, %p270
      %p272 = scmp.ne.s32.totalorder %s264, %s267
      %p273 = scmp.eq.s32.totalorder %s33, 0
      %p274 = por %p272, %p273
      %p275 = scmp.ne.s32.totalorder %s264, %s267
      %p276 = scmp.eq.s32.totalorder %s38, 1
      %p277 = por %p275, %p276
      %p278 = scmp.ne.s32.totalorder %s267, %s268
      %p279 = scmp.eq.s32.totalorder %s38, 0
      %p280 = por %p278, %p279
      %p281 = scmp.ne.s32.totalorder %s267, %s268
      %p282 = scmp.eq.s32.totalorder %s39, 1
      %p283 = por %p281, %p282
      %p285 = scmp.ne.s32.totalorder %s268, %s284
      %p286 = scmp.eq.s32.totalorder %s39, 0
      %p287 = por %p285, %p286
      %s288 = ssub.s32 %s41, %s48
      %p289 = scmp.eq.s32.totalorder %s288, 0
      %s291 = sadd.s32 %s290, 1
      %s292 = scalar_select %p289, %s290, %s291
      %p295 = pneg %p289
      %p296 = scmp.eq.s32.totalorder %s33, 1
      %p297 = por %p295, %p296
      %p298 = scmp.ne.s32.totalorder %s290, %s293
      %p299 = scmp.eq.s32.totalorder %s33, 0
      %p300 = por %p298, %p299
      %p301 = scmp.ne.s32.totalorder %s290, %s293
      %p302 = scmp.eq.s32.totalorder %s38, 1
      %p303 = por %p301, %p302
      %p304 = scmp.ne.s32.totalorder %s293, %s294
      %p305 = scmp.eq.s32.totalorder %s38, 0
      %p306 = por %p304, %p305
      %p307 = scmp.ne.s32.totalorder %s293, %s294
      %p308 = scmp.eq.s32.totalorder %s39, 1
      %p309 = por %p307, %p308
      %p311 = scmp.ne.s32.totalorder %s294, %s310
      %p312 = scmp.eq.s32.totalorder %s39, 0
      %p313 = por %p311, %p312
      %s314 = ssub.s32 %s41, %s48
      %p315 = scmp.eq.s32.totalorder %s314, 0
      %s317 = sadd.s32 %s316, 1
      %s318 = scalar_select %p315, %s316, %s317
      %p321 = pneg %p315
      %p322 = scmp.eq.s32.totalorder %s33, 1
      %p323 = por %p321, %p322
      %p324 = scmp.ne.s32.totalorder %s316, %s319
      %p325 = scmp.eq.s32.totalorder %s33, 0
      %p326 = por %p324, %p325
      %p327 = scmp.ne.s32.totalorder %s316, %s319
      %p328 = scmp.eq.s32.totalorder %s38, 1
      %p329 = por %p327, %p328
      %p330 = scmp.ne.s32.totalorder %s319, %s320
      %p331 = scmp.eq.s32.totalorder %s38, 0
      %p332 = por %p330, %p331
      %p333 = scmp.ne.s32.totalorder %s319, %s320
      %p334 = scmp.eq.s32.totalorder %s39, 1
      %p335 = por %p333, %p334
      %p337 = scmp.ne.s32.totalorder %s320, %s336
      %p338 = scmp.eq.s32.totalorder %s39, 0
      %p339 = por %p337, %p338
      %s340 = ssub.s32 %s41, %s48
      %p341 = scmp.eq.s32.totalorder %s340, 0
      %s343 = sadd.s32 %s342, 1
      %s344 = scalar_select %p341, %s342, %s343
      %p347 = pneg %p341
      %p348 = scmp.eq.s32.totalorder %s33, 1
      %p349 = por %p347, %p348
      %p350 = scmp.ne.s32.totalorder %s342, %s345
      %p351 = scmp.eq.s32.totalorder %s33, 0
      %p352 = por %p350, %p351
      %p353 = scmp.ne.s32.totalorder %s342, %s345
      %p354 = scmp.eq.s32.totalorder %s38, 1
      %p355 = por %p353, %p354
      %p356 = scmp.ne.s32.totalorder %s345, %s346
      %p357 = scmp.eq.s32.totalorder %s38, 0
      %p358 = por %p356, %p357
      %p359 = scmp.ne.s32.totalorder %s345, %s346
      %p360 = scmp.eq.s32.totalorder %s39, 1
      %p361 = por %p359, %p360
      %p363 = scmp.ne.s32.totalorder %s346, %s362
      %p364 = scmp.eq.s32.totalorder %s39, 0
      %p365 = por %p363, %p364
      %s366 = ssub.s32 %s41, %s48
      %p367 = scmp.eq.s32.totalorder %s366, 0
      %s369 = sadd.s32 %s368, 1
      %s370 = scalar_select %p367, %s368, %s369
      %p373 = pneg %p367
      %p374 = scmp.eq.s32.totalorder %s33, 1
      %p375 = por %p373, %p374
      %p376 = scmp.ne.s32.totalorder %s368, %s371
      %p377 = scmp.eq.s32.totalorder %s33, 0
      %p378 = por %p376, %p377
      %p379 = scmp.ne.s32.totalorder %s368, %s371
      %p380 = scmp.eq.s32.totalorder %s38, 1
      %p381 = por %p379, %p380
      %p382 = scmp.ne.s32.totalorder %s371, %s372
      %p383 = scmp.eq.s32.totalorder %s38, 0
      %p384 = por %p382, %p383
      %p385 = scmp.ne.s32.totalorder %s371, %s372
      %p386 = scmp.eq.s32.totalorder %s39, 1
      %p387 = por %p385, %p386
      %p389 = scmp.ne.s32.totalorder %s372, %s388
      %p390 = scmp.eq.s32.totalorder %s39, 0
      %p391 = por %p389, %p390
      %s392 = ssub.s32 %s41, %s48
      %p393 = scmp.eq.s32.totalorder %s392, 0
      %s395 = sadd.s32 %s394, 1
      %s396 = scalar_select %p393, %s394, %s395
      %p399 = pneg %p393
      %p400 = scmp.eq.s32.totalorder %s33, 1
      %p401 = por %p399, %p400
      %p402 = scmp.ne.s32.totalorder %s394, %s397
      %p403 = scmp.eq.s32.totalorder %s33, 0
      %p404 = por %p402, %p403
      %p405 = scmp.ne.s32.totalorder %s394, %s397
      %p406 = scmp.eq.s32.totalorder %s38, 1
      %p407 = por %p405, %p406
      %p408 = scmp.ne.s32.totalorder %s397, %s398
      %p409 = scmp.eq.s32.totalorder %s38, 0
      %p410 = por %p408, %p409
      %p411 = scmp.ne.s32.totalorder %s397, %s398
      %p412 = scmp.eq.s32.totalorder %s39, 1
      %p413 = por %p411, %p412
      %p415 = scmp.ne.s32.totalorder %s398, %s414
      %p416 = scmp.eq.s32.totalorder %s39, 0
      %p417 = por %p415, %p416
      %s418 = ssub.s32 %s41, %s48
      %p419 = scmp.eq.s32.totalorder %s418, 0
      %s421 = sadd.s32 %s420, 1
      %s422 = scalar_select %p419, %s420, %s421
      %p425 = pneg %p419
      %p426 = scmp.eq.s32.totalorder %s33, 1
      %p427 = por %p425, %p426
      %p428 = scmp.ne.s32.totalorder %s420, %s423
      %p429 = scmp.eq.s32.totalorder %s33, 0
      %p430 = por %p428, %p429
      %p431 = scmp.ne.s32.totalorder %s420, %s423
      %p432 = scmp.eq.s32.totalorder %s38, 1
      %p433 = por %p431, %p432
      %p434 = scmp.ne.s32.totalorder %s423, %s424
      %p435 = scmp.eq.s32.totalorder %s38, 0
      %p436 = por %p434, %p435
      %p437 = scmp.ne.s32.totalorder %s423, %s424
      %p438 = scmp.eq.s32.totalorder %s39, 1
      %p439 = por %p437, %p438
      %p441 = scmp.ne.s32.totalorder %s424, %s440
      %p442 = scmp.eq.s32.totalorder %s39, 0
      %p443 = por %p441, %p442
      %s444 = ssub.s32 %s41, %s48
      %p445 = scmp.eq.s32.totalorder %s444, 0
      %s447 = sadd.s32 %s446, 1
      %s448 = scalar_select %p445, %s446, %s447
      %p451 = pneg %p445
      %p452 = scmp.eq.s32.totalorder %s33, 1
      %p453 = por %p451, %p452
      %p454 = scmp.ne.s32.totalorder %s446, %s449
      %p455 = scmp.eq.s32.totalorder %s33, 0
      %p456 = por %p454, %p455
      %p457 = scmp.ne.s32.totalorder %s446, %s449
      %p458 = scmp.eq.s32.totalorder %s38, 1
      %p459 = por %p457, %p458
      %p460 = scmp.ne.s32.totalorder %s449, %s450
      %p461 = scmp.eq.s32.totalorder %s38, 0
      %p462 = por %p460, %p461
      %p463 = scmp.ne.s32.totalorder %s449, %s450
      %p464 = scmp.eq.s32.totalorder %s39, 1
      %p465 = por %p463, %p464
      %p467 = scmp.ne.s32.totalorder %s450, %s466
      %p468 = scmp.eq.s32.totalorder %s39, 0
      %p469 = por %p467, %p468
      %s470 = ssub.s32 %s41, %s48
      %p471 = scmp.eq.s32.totalorder %s470, 0
      %s473 = sadd.s32 %s472, 1
      %s474 = scalar_select %p471, %s472, %s473
      %p477 = pneg %p471
      %p478 = scmp.eq.s32.totalorder %s33, 1
      %p479 = por %p477, %p478
      %p480 = scmp.ne.s32.totalorder %s472, %s475
      %p481 = scmp.eq.s32.totalorder %s33, 0
      %p482 = por %p480, %p481
      %p483 = scmp.ne.s32.totalorder %s472, %s475
      %p484 = scmp.eq.s32.totalorder %s38, 1
      %p485 = por %p483, %p484
      %p486 = scmp.ne.s32.totalorder %s475, %s476
      %p487 = scmp.eq.s32.totalorder %s38, 0
      %p488 = por %p486, %p487
      %p489 = scmp.ne.s32.totalorder %s475, %s476
      %p490 = scmp.eq.s32.totalorder %s39, 1
      %p491 = por %p489, %p490
      %p493 = scmp.ne.s32.totalorder %s476, %s492
      %p494 = scmp.eq.s32.totalorder %s39, 0
      %p495 = por %p493, %p494
      %s497 = sadd.s32 %s496, 1
      %p500 = scmp.eq.s32.totalorder %s33, 1
      %p501 = scmp.ne.s32.totalorder %s496, %s498
      %p502 = scmp.eq.s32.totalorder %s33, 0
      %p503 = por %p501, %p502
      %p504 = scmp.ne.s32.totalorder %s496, %s498
      %p505 = scmp.eq.s32.totalorder %s38, 1
      %p506 = por %p504, %p505
      %p507 = scmp.ne.s32.totalorder %s498, %s499
      %p508 = scmp.eq.s32.totalorder %s38, 0
      %p509 = por %p507, %p508
      %p510 = scmp.ne.s32.totalorder %s498, %s499
      %p511 = scmp.eq.s32.totalorder %s39, 1
      %p512 = por %p510, %p511
      %p514 = scmp.ne.s32.totalorder %s499, %s513
      %p515 = scmp.eq.s32.totalorder %s39, 0
      %p516 = por %p514, %p515
      %s518 = sadd.s32 %s517, 1
      %p521 = scmp.eq.s32.totalorder %s33, 1
      %p522 = scmp.ne.s32.totalorder %s517, %s519
      %p523 = scmp.eq.s32.totalorder %s33, 0
      %p524 = por %p522, %p523
      %p525 = scmp.ne.s32.totalorder %s517, %s519
      %p526 = scmp.eq.s32.totalorder %s38, 1
      %p527 = por %p525, %p526
      %p528 = scmp.ne.s32.totalorder %s519, %s520
      %p529 = scmp.eq.s32.totalorder %s38, 0
      %p530 = por %p528, %p529
      %p531 = scmp.ne.s32.totalorder %s519, %s520
      %p532 = scmp.eq.s32.totalorder %s39, 1
      %p533 = por %p531, %p532
      %p535 = scmp.ne.s32.totalorder %s520, %s534
      %p536 = scmp.eq.s32.totalorder %s39, 0
      %p537 = por %p535, %p536
      %s539 = sadd.s32 %s538, 1
      %p542 = scmp.eq.s32.totalorder %s33, 1
      %p543 = scmp.ne.s32.totalorder %s538, %s540
      %p544 = scmp.eq.s32.totalorder %s33, 0
      %p545 = por %p543, %p544
      %p546 = scmp.ne.s32.totalorder %s538, %s540
      %p547 = scmp.eq.s32.totalorder %s38, 1
      %p548 = por %p546, %p547
      %p549 = scmp.ne.s32.totalorder %s540, %s541
      %p550 = scmp.eq.s32.totalorder %s38, 0
      %p551 = por %p549, %p550
      %p552 = scmp.ne.s32.totalorder %s540, %s541
      %p553 = scmp.eq.s32.totalorder %s39, 1
      %p554 = por %p552, %p553
      %p556 = scmp.ne.s32.totalorder %s541, %s555
      %p557 = scmp.eq.s32.totalorder %s39, 0
      %p558 = por %p556, %p557
      %s560 = sadd.s32 %s559, 1
      %p563 = scmp.eq.s32.totalorder %s33, 1
      %p564 = scmp.ne.s32.totalorder %s559, %s561
      %p565 = scmp.eq.s32.totalorder %s33, 0
      %p566 = por %p564, %p565
      %p567 = scmp.ne.s32.totalorder %s559, %s561
      %p568 = scmp.eq.s32.totalorder %s38, 1
      %p569 = por %p567, %p568
      %p570 = scmp.ne.s32.totalorder %s561, %s562
      %p571 = scmp.eq.s32.totalorder %s38, 0
      %p572 = por %p570, %p571
      %p573 = scmp.ne.s32.totalorder %s561, %s562
      %p574 = scmp.eq.s32.totalorder %s39, 1
      %p575 = por %p573, %p574
      %p577 = scmp.ne.s32.totalorder %s562, %s576
      %p578 = scmp.eq.s32.totalorder %s39, 0
      %p579 = por %p577, %p578
      %s580 = ssub.s32 %s40, %s52
      %p581 = scmp.eq.s32.totalorder %s580, 0
      %s583 = sadd.s32 %s582, 1
      %s584 = scalar_select %p581, %s582, %s583
      %p587 = pneg %p581
      %p588 = scmp.eq.s32.totalorder %s33, 1
      %p589 = por %p587, %p588
      %p590 = scmp.ne.s32.totalorder %s582, %s585
      %p591 = scmp.eq.s32.totalorder %s33, 0
      %p592 = por %p590, %p591
      %p593 = scmp.ne.s32.totalorder %s582, %s585
      %p594 = scmp.eq.s32.totalorder %s38, 1
      %p595 = por %p593, %p594
      %p596 = scmp.ne.s32.totalorder %s585, %s586
      %p597 = scmp.eq.s32.totalorder %s38, 0
      %p598 = por %p596, %p597
      %p599 = scmp.ne.s32.totalorder %s585, %s586
      %p600 = scmp.eq.s32.totalorder %s39, 1
      %p601 = por %p599, %p600
      %p603 = scmp.ne.s32.totalorder %s586, %s602
      %p604 = scmp.eq.s32.totalorder %s39, 0
      %p605 = por %p603, %p604
      %p606 = scmp.le.s32.totalorder 1, %s33
      %p607 = scmp.lt.s32.totalorder %s33, 3
      %p608 = pnand %p606, %p607
      %p609 = pneg %p608
      // Predicated region
      $region9: #{tpu_custom_call.1} parent=5 // pred_check
        _
      $region10: #{tpu_custom_call.1} parent=5 // pred_check_branch
        %611 = sbr.rel (%p608) target = $region12
      $region11: #{tpu_custom_call.1} parent=5 // pred_region
        %s612 = ssub.s32 %s33, 1
        // Predicated region
        $region13: #{tpu_custom_call.1} parent=11 // pred_check
          %p613 = pneg %p71
        $region14: #{tpu_custom_call.1} parent=11 // pred_check_branch
          %615 = sbr.rel (%p613) target = $region16
        $region15: #{tpu_custom_call.1} parent=11 // pred_region
          %s616 = smul.u32 4, %s42
          %618 = vsyncadd [#allocation4], 0
          %s619 = smul.addr %s616, 2
          %s620 = smul.addr %s619, 8
          %s621 = scalar_lea.hbm %s0, %s620
          %s622 = sshll.u32 %s621, 4
          %s623 = int_to_ptr.hbm [resolvable:$true] %s622
          %s624 = sshll.u32 [#allocation3], 4
          %s625 = int_to_ptr.vmem [resolvable:$true] %s624
          %630 = dma.hbm_to_vmem [thread:$0]  %s623, 1024, %s625, [#allocation4], 128, 128, 8
        $region16: #{tpu_custom_call.1} parent=11 // pred_fallthru
          _
        // Predicated region
        $region17: #{tpu_custom_call.1} parent=11 // pred_check
          %p631 = pneg %p92
        $region18: #{tpu_custom_call.1} parent=11 // pred_check_branch
          %633 = sbr.rel (%p631) target = $region20
        $region19: #{tpu_custom_call.1} parent=11 // pred_region
          %635 = vsyncadd [#allocation7], 0
          %s636 = sshll.u32 %s1, 4
          %s637 = int_to_ptr.hbm [resolvable:$true] %s636
          %s638 = sshll.u32 [#allocation6], 4
          %s639 = int_to_ptr.vmem [resolvable:$true] %s638
          %644 = dma.hbm_to_vmem [thread:$0]  %s637, 256, %s639, [#allocation7], 128, 128, 8
        $region20: #{tpu_custom_call.1} parent=11 // pred_fallthru
          _
        // Predicated region
        $region21: #{tpu_custom_call.1} parent=11 // pred_check
          %p645 = pneg %p113
        $region22: #{tpu_custom_call.1} parent=11 // pred_check_branch
          %647 = sbr.rel (%p645) target = $region24
        $region23: #{tpu_custom_call.1} parent=11 // pred_region
          %649 = vsyncadd [#allocation7], 0
          %s650 = sshll.u32 %s2, 4
          %s651 = int_to_ptr.hbm [resolvable:$true] %s650
          %s652 = sshll.u32 [#allocation8], 4
          %s653 = int_to_ptr.vmem [resolvable:$true] %s652
          %658 = dma.hbm_to_vmem [thread:$0]  %s651, 128, %s653, [#allocation7], 16, 16, 1
        $region24: #{tpu_custom_call.1} parent=11 // pred_fallthru
          _
        // Predicated region
        $region25: #{tpu_custom_call.1} parent=11 // pred_check
          %p659 = pneg %p134
        $region26: #{tpu_custom_call.1} parent=11 // pred_check_branch
          %661 = sbr.rel (%p659) target = $region28
        $region27: #{tpu_custom_call.1} parent=11 // pred_region
          %663 = vsyncadd [#allocation10], 0
          %s664 = sshll.u32 %s3, 4
          %s665 = int_to_ptr.hbm [resolvable:$true] %s664
          %s666 = sshll.u32 [#allocation9], 4
          %s667 = int_to_ptr.vmem [resolvable:$true] %s666
          %672 = dma.hbm_to_vmem [thread:$0]  %s665, 2048, %s667, [#allocation10], 128, 128, 8
        $region28: #{tpu_custom_call.1} parent=11 // pred_fallthru
          _
        // Predicated region
        $region29: #{tpu_custom_call.1} parent=11 // pred_check
          %p673 = pneg %p155
        $region30: #{tpu_custom_call.1} parent=11 // pred_check_branch
          %675 = sbr.rel (%p673) target = $region32
        $region31: #{tpu_custom_call.1} parent=11 // pred_region
          %677 = vsyncadd [#allocation10], 0
          %s679 = sshll.u32 %s4, 4
          %s680 = int_to_ptr.hbm [resolvable:$true] %s679
          %s681 = sshll.u32 [#allocation11], 4
          %s682 = int_to_ptr.vmem [resolvable:$true] %s681
          %684 = dma.hbm_to_vmem [thread:$0]  %s680, 16, %s682, [#allocation10]
        $region32: #{tpu_custom_call.1} parent=11 // pred_fallthru
          _
        // Predicated region
        $region33: #{tpu_custom_call.1} parent=11 // pred_check
          %p685 = pneg %p176
        $region34: #{tpu_custom_call.1} parent=11 // pred_check_branch
          %687 = sbr.rel (%p685) target = $region36
        $region35: #{tpu_custom_call.1} parent=11 // pred_region
          %689 = vsyncadd [#allocation13], 0
          %s691 = sshll.u32 %s5, 4
          %s692 = int_to_ptr.hbm [resolvable:$true] %s691
          %s693 = sshll.u32 [#allocation12], 4
          %s694 = int_to_ptr.vmem [resolvable:$true] %s693
          %696 = dma.hbm_to_vmem [thread:$0]  %s692, 16, %s694, [#allocation13]
        $region36: #{tpu_custom_call.1} parent=11 // pred_fallthru
          _
        // Predicated region
        $region37: #{tpu_custom_call.1} parent=11 // pred_check
          %p697 = pneg %p509
        $region38: #{tpu_custom_call.1} parent=11 // pred_check_branch
          %699 = sbr.rel (%p697) target = $region40
        $region39: #{tpu_custom_call.1} parent=11 // pred_region
          _
        $region40: #{tpu_custom_call.1} parent=11 // pred_fallthru
          _
        // Predicated region
        $region41: #{tpu_custom_call.1} parent=11 // pred_check
          %p700 = pneg %p530
        $region42: #{tpu_custom_call.1} parent=11 // pred_check_branch
          %702 = sbr.rel (%p700) target = $region44
        $region43: #{tpu_custom_call.1} parent=11 // pred_region
          _
        $region44: #{tpu_custom_call.1} parent=11 // pred_fallthru
          _
        // Predicated region
        $region45: #{tpu_custom_call.1} parent=11 // pred_check
          %p703 = pneg %p551
        $region46: #{tpu_custom_call.1} parent=11 // pred_check_branch
          %705 = sbr.rel (%p703) target = $region48
        $region47: #{tpu_custom_call.1} parent=11 // pred_region
          %707 = vsyncadd [#allocation7], 0
          %s708 = sshll.u32 %s20, 4
          %s709 = int_to_ptr.hbm [resolvable:$true] %s708
          %s710 = sshll.u32 [#allocation22], 4
          %s711 = int_to_ptr.vmem [resolvable:$true] %s710
          %716 = dma.hbm_to_vmem [thread:$0]  %s709, 1024, %s711, [#allocation7], 64, 64, 4
        $region48: #{tpu_custom_call.1} parent=11 // pred_fallthru
          _
        // Predicated region
        $region49: #{tpu_custom_call.1} parent=11 // pred_check
          %p717 = pneg %p572
        $region50: #{tpu_custom_call.1} parent=11 // pred_check_branch
          %719 = sbr.rel (%p717) target = $region52
        $region51: #{tpu_custom_call.1} parent=11 // pred_region
          _
        $region52: #{tpu_custom_call.1} parent=11 // pred_fallthru
          _
      $region12: #{tpu_custom_call.1} parent=5 // pred_fallthru
        _
      %p720 = scmp.lt.s32.totalorder %s33, 2
      // Predicated region
      $region53: #{tpu_custom_call.1} parent=5 // pred_check
        %p721 = pneg %p720
      $region54: #{tpu_custom_call.1} parent=5 // pred_check_branch
        %723 = sbr.rel (%p721) target = $region56
      $region55: #{tpu_custom_call.1} parent=5 // pred_region
        // Predicated region
        $region57: #{tpu_custom_call.1} parent=55 // pred_check
          %p724 = pneg %p196
        $region58: #{tpu_custom_call.1} parent=55 // pred_check_branch
          %726 = sbr.rel (%p724) target = $region60
        $region59: #{tpu_custom_call.1} parent=55 // pred_region
          %s727 = sand.u32 %s33, 1
          %s728 = scalar_lea.sflag [#allocation4], %s727
          %s729 = sand.u32 %s186, 1
          %s730 = scalar_lea.vmem [#allocation14], %s729
          %732 = vsyncadd %s728, 0
          %s733 = scalar_lea.hbm %s6, %s41
          %s735 = sshll.u32 %s733, 4
          %s736 = int_to_ptr.hbm [resolvable:$true] %s735
          %s737 = sshll.u32 %s730, 4
          %s738 = int_to_ptr.vmem [resolvable:$true] %s737
          %740 = dma.hbm_to_vmem [thread:$0]  %s736, 16, %s738, %s728
        $region60: #{tpu_custom_call.1} parent=55 // pred_fallthru
          _
        // Predicated region
        $region61: #{tpu_custom_call.1} parent=55 // pred_check
          %p741 = pneg %p222
        $region62: #{tpu_custom_call.1} parent=55 // pred_check_branch
          %743 = sbr.rel (%p741) target = $region64
        $region63: #{tpu_custom_call.1} parent=55 // pred_region
          %s744 = sand.u32 %s33, 1
          %s745 = scalar_lea.sflag [#allocation4], %s744
          %s746 = sand.u32 %s212, 1
          %s747 = scalar_lea.vmem [#allocation15], %s746
          %749 = vsyncadd %s745, 0
          %s750 = scalar_lea.hbm %s7, %s41
          %s752 = sshll.u32 %s750, 4
          %s753 = int_to_ptr.hbm [resolvable:$true] %s752
          %s754 = sshll.u32 %s747, 4
          %s755 = int_to_ptr.vmem [resolvable:$true] %s754
          %757 = dma.hbm_to_vmem [thread:$0]  %s753, 16, %s755, %s745
        $region64: #{tpu_custom_call.1} parent=55 // pred_fallthru
          _
        // Predicated region
        $region65: #{tpu_custom_call.1} parent=55 // pred_check
          %p758 = pneg %p248
        $region66: #{tpu_custom_call.1} parent=55 // pred_check_branch
          %760 = sbr.rel (%p758) target = $region68
        $region67: #{tpu_custom_call.1} parent=55 // pred_region
          %s761 = sand.u32 %s33, 1
          %s762 = scalar_lea.sflag [#allocation4], %s761
          %s763 = sand.u32 %s238, 1
          %s764 = smul.addr %s763, 192
          %s765 = scalar_lea.vmem [#allocation16], %s764
          %767 = vsyncadd %s762, 0
          %s768 = smul.addr %s41, 48
          %s769 = smul.addr %s768, 4
          %s770 = scalar_lea.hbm %s8, %s769
          %s771 = sshll.u32 %s770, 4
          %s772 = int_to_ptr.hbm [resolvable:$true] %s771
          %s773 = sshll.u32 %s765, 4
          %s774 = int_to_ptr.vmem [resolvable:$true] %s773
          %779 = dma.hbm_to_vmem [thread:$0]  %s772, 3072, %s774, %s762, 192, 192, 12
        $region68: #{tpu_custom_call.1} parent=55 // pred_fallthru
          _
        // Predicated region
        $region69: #{tpu_custom_call.1} parent=55 // pred_check
          %p780 = pneg %p274
        $region70: #{tpu_custom_call.1} parent=55 // pred_check_branch
          %782 = sbr.rel (%p780) target = $region72
        $region71: #{tpu_custom_call.1} parent=55 // pred_region
          %p783 = scmp.lt.s32.totalorder %s41, 1
          %s784 = scalar_select %p783, %s41, 1
          %s785 = smul.addr %s784, 3
          %s786 = scalar_lea.vmem %s9, %s785
        $region72: #{tpu_custom_call.1} parent=55 // pred_fallthru
          _
        // Predicated region
        $region73: #{tpu_custom_call.1} parent=55 // pred_check
          %p787 = pneg %p300
        $region74: #{tpu_custom_call.1} parent=55 // pred_check_branch
          %789 = sbr.rel (%p787) target = $region76
        $region75: #{tpu_custom_call.1} parent=55 // pred_region
          %s790 = sand.u32 %s33, 1
          %s791 = scalar_lea.sflag [#allocation4], %s790
          %s792 = sand.u32 %s290, 1
          %s793 = smul.addr %s792, 64
          %s794 = scalar_lea.vmem [#allocation17], %s793
          %796 = vsyncadd %s791, 0
          %s797 = smul.addr %s41, 16
          %s798 = smul.addr %s797, 4
          %s799 = scalar_lea.hbm %s10, %s798
          %s800 = sshll.u32 %s799, 4
          %s801 = int_to_ptr.hbm [resolvable:$true] %s800
          %s802 = sshll.u32 %s794, 4
          %s803 = int_to_ptr.vmem [resolvable:$true] %s802
          %808 = dma.hbm_to_vmem [thread:$0]  %s801, 1024, %s803, %s791, 64, 64, 4
        $region76: #{tpu_custom_call.1} parent=55 // pred_fallthru
          _
        // Predicated region
        $region77: #{tpu_custom_call.1} parent=55 // pred_check
          %p809 = pneg %p326
        $region78: #{tpu_custom_call.1} parent=55 // pred_check_branch
          %811 = sbr.rel (%p809) target = $region80
        $region79: #{tpu_custom_call.1} parent=55 // pred_region
          %s812 = sand.u32 %s33, 1
          %s813 = scalar_lea.sflag [#allocation4], %s812
          %s814 = sand.u32 %s316, 1
          %s815 = scalar_lea.vmem [#allocation18], %s814
          %817 = vsyncadd %s813, 0
          %s818 = scalar_lea.hbm %s11, %s41
          %s820 = sshll.u32 %s818, 4
          %s821 = int_to_ptr.hbm [resolvable:$true] %s820
          %s822 = sshll.u32 %s815, 4
          %s823 = int_to_ptr.vmem [resolvable:$true] %s822
          %825 = dma.hbm_to_vmem [thread:$0]  %s821, 16, %s823, %s813
        $region80: #{tpu_custom_call.1} parent=55 // pred_fallthru
          _
        // Predicated region
        $region81: #{tpu_custom_call.1} parent=55 // pred_check
          %p826 = pneg %p352
        $region82: #{tpu_custom_call.1} parent=55 // pred_check_branch
          %828 = sbr.rel (%p826) target = $region84
        $region83: #{tpu_custom_call.1} parent=55 // pred_region
          %s829 = sand.u32 %s33, 1
          %s830 = scalar_lea.sflag [#allocation4], %s829
          %s831 = sand.u32 %s342, 1
          %s832 = scalar_lea.vmem [#allocation19], %s831
          %834 = vsyncadd %s830, 0
          %s835 = scalar_lea.hbm %s12, %s41
          %s837 = sshll.u32 %s835, 4
          %s838 = int_to_ptr.hbm [resolvable:$true] %s837
          %s839 = sshll.u32 %s832, 4
          %s840 = int_to_ptr.vmem [resolvable:$true] %s839
          %842 = dma.hbm_to_vmem [thread:$0]  %s838, 16, %s840, %s830
        $region84: #{tpu_custom_call.1} parent=55 // pred_fallthru
          _
        // Predicated region
        $region85: #{tpu_custom_call.1} parent=55 // pred_check
          %p843 = pneg %p378
        $region86: #{tpu_custom_call.1} parent=55 // pred_check_branch
          %845 = sbr.rel (%p843) target = $region88
        $region87: #{tpu_custom_call.1} parent=55 // pred_region
          %p846 = scmp.lt.s32.totalorder %s41, 1
          %s847 = scalar_select %p846, %s41, 1
          %s848 = scalar_lea.vmem %s13, %s847
        $region88: #{tpu_custom_call.1} parent=55 // pred_fallthru
          _
        // Predicated region
        $region89: #{tpu_custom_call.1} parent=55 // pred_check
          %p849 = pneg %p404
        $region90: #{tpu_custom_call.1} parent=55 // pred_check_branch
          %851 = sbr.rel (%p849) target = $region92
        $region91: #{tpu_custom_call.1} parent=55 // pred_region
          %s852 = sand.u32 %s33, 1
          %s853 = scalar_lea.sflag [#allocation4], %s852
          %s854 = sand.u32 %s394, 1
          %s855 = smul.addr %s854, 128
          %s856 = scalar_lea.vmem [#allocation20], %s855
          %858 = vsyncadd %s853, 0
          %s859 = smul.addr %s41, 32
          %s860 = smul.addr %s859, 4
          %s861 = scalar_lea.hbm %s14, %s860
          %s862 = sshll.u32 %s861, 4
          %s863 = int_to_ptr.hbm [resolvable:$true] %s862
          %s864 = sshll.u32 %s856, 4
          %s865 = int_to_ptr.vmem [resolvable:$true] %s864
          %870 = dma.hbm_to_vmem [thread:$0]  %s863, 2048, %s865, %s853, 128, 128, 8
        $region92: #{tpu_custom_call.1} parent=55 // pred_fallthru
          _
        // Predicated region
        $region93: #{tpu_custom_call.1} parent=55 // pred_check
          %p871 = pneg %p430
        $region94: #{tpu_custom_call.1} parent=55 // pred_check_branch
          %873 = sbr.rel (%p871) target = $region96
        $region95: #{tpu_custom_call.1} parent=55 // pred_region
          %p874 = scmp.lt.s32.totalorder %s41, 1
          %s875 = scalar_select %p874, %s41, 1
          %s876 = smul.addr %s875, 2
          %s877 = scalar_lea.vmem %s15, %s876
        $region96: #{tpu_custom_call.1} parent=55 // pred_fallthru
          _
        // Predicated region
        $region97: #{tpu_custom_call.1} parent=55 // pred_check
          %p878 = pneg %p456
        $region98: #{tpu_custom_call.1} parent=55 // pred_check_branch
          %880 = sbr.rel (%p878) target = $region100
        $region99: #{tpu_custom_call.1} parent=55 // pred_region
          %s881 = sand.u32 %s33, 1
          %s882 = scalar_lea.sflag [#allocation4], %s881
          %s883 = sand.u32 %s446, 1
          %s884 = smul.addr %s883, 128
          %s885 = scalar_lea.vmem [#allocation21], %s884
          %887 = vsyncadd %s882, 0
          %s888 = smul.addr %s41, 32
          %s889 = smul.addr %s888, 4
          %s890 = scalar_lea.hbm %s16, %s889
          %s891 = sshll.u32 %s890, 4
          %s892 = int_to_ptr.hbm [resolvable:$true] %s891
          %s893 = sshll.u32 %s885, 4
          %s894 = int_to_ptr.vmem [resolvable:$true] %s893
          %899 = dma.hbm_to_vmem [thread:$0]  %s892, 2048, %s894, %s882, 64, 64, 4
        $region100: #{tpu_custom_call.1} parent=55 // pred_fallthru
          _
        // Predicated region
        $region101: #{tpu_custom_call.1} parent=55 // pred_check
          %p900 = pneg %p482
        $region102: #{tpu_custom_call.1} parent=55 // pred_check_branch
          %902 = sbr.rel (%p900) target = $region104
        $region103: #{tpu_custom_call.1} parent=55 // pred_region
          %p903 = scmp.lt.s32.totalorder %s41, 1
          %s904 = scalar_select %p903, %s41, 1
          %s905 = scalar_lea.vmem %s17, %s904
        $region104: #{tpu_custom_call.1} parent=55 // pred_fallthru
          _
      $region56: #{tpu_custom_call.1} parent=5 // pred_fallthru
        _
      %p906 = scmp.le.s32.totalorder 1, %s33
      %p907 = scmp.lt.s32.totalorder %s33, 3
      %p908 = pnand %p906, %p907
      %p909 = pneg %p908
      // Predicated region
      $region105: #{tpu_custom_call.1} parent=5 // pred_check
        _
      $region106: #{tpu_custom_call.1} parent=5 // pred_check_branch
        %911 = sbr.rel (%p908) target = $region108
      $region107: #{tpu_custom_call.1} parent=5 // pred_region
        %s912 = ssub.s32 %s33, 1
        // Predicated region
        $region109: #{tpu_custom_call.1} parent=107 // pred_check
          %p913 = pneg %p71
        $region110: #{tpu_custom_call.1} parent=107 // pred_check_branch
          %915 = sbr.rel (%p913) target = $region112
        $region111: #{tpu_custom_call.1} parent=107 // pred_region
          %917 = dma.done [#allocation4], 1024
        $region112: #{tpu_custom_call.1} parent=107 // pred_fallthru
          _
        // Predicated region
        $region113: #{tpu_custom_call.1} parent=107 // pred_check
          %p918 = pneg %p92
        $region114: #{tpu_custom_call.1} parent=107 // pred_check_branch
          %920 = sbr.rel (%p918) target = $region116
        $region115: #{tpu_custom_call.1} parent=107 // pred_region
          %922 = dma.done [#allocation7], 256
        $region116: #{tpu_custom_call.1} parent=107 // pred_fallthru
          _
        // Predicated region
        $region117: #{tpu_custom_call.1} parent=107 // pred_check
          %p923 = pneg %p113
        $region118: #{tpu_custom_call.1} parent=107 // pred_check_branch
          %925 = sbr.rel (%p923) target = $region120
        $region119: #{tpu_custom_call.1} parent=107 // pred_region
          %927 = dma.done [#allocation7], 128
        $region120: #{tpu_custom_call.1} parent=107 // pred_fallthru
          _
        // Predicated region
        $region121: #{tpu_custom_call.1} parent=107 // pred_check
          %p928 = pneg %p134
        $region122: #{tpu_custom_call.1} parent=107 // pred_check_branch
          %930 = sbr.rel (%p928) target = $region124
        $region123: #{tpu_custom_call.1} parent=107 // pred_region
          %932 = dma.done [#allocation10], 2048
        $region124: #{tpu_custom_call.1} parent=107 // pred_fallthru
          _
        // Predicated region
        $region125: #{tpu_custom_call.1} parent=107 // pred_check
          %p933 = pneg %p155
        $region126: #{tpu_custom_call.1} parent=107 // pred_check_branch
          %935 = sbr.rel (%p933) target = $region128
        $region127: #{tpu_custom_call.1} parent=107 // pred_region
          %937 = dma.done [#allocation10], 16
        $region128: #{tpu_custom_call.1} parent=107 // pred_fallthru
          _
        // Predicated region
        $region129: #{tpu_custom_call.1} parent=107 // pred_check
          %p938 = pneg %p176
        $region130: #{tpu_custom_call.1} parent=107 // pred_check_branch
          %940 = sbr.rel (%p938) target = $region132
        $region131: #{tpu_custom_call.1} parent=107 // pred_region
          %942 = dma.done [#allocation13], 16
        $region132: #{tpu_custom_call.1} parent=107 // pred_fallthru
          _
        %s943 = sand.u32 %s38, 1
        %s944 = scalar_lea.sflag [#allocation4], %s943
        %s945 = sand.u32 %s189, 1
        %s946 = scalar_lea.vmem [#allocation14], %s945
        // Predicated region
        $region133: #{tpu_custom_call.1} parent=107 // pred_check
          %p947 = pneg %p202
        $region134: #{tpu_custom_call.1} parent=107 // pred_check_branch
          %949 = sbr.rel (%p947) target = $region136
        $region135: #{tpu_custom_call.1} parent=107 // pred_region
          %951 = dma.done %s944, 16
        $region136: #{tpu_custom_call.1} parent=107 // pred_fallthru
          _
        %s952 = sand.u32 %s38, 1
        %s953 = scalar_lea.sflag [#allocation4], %s952
        %s954 = sand.u32 %s215, 1
        %s955 = scalar_lea.vmem [#allocation15], %s954
        // Predicated region
        $region137: #{tpu_custom_call.1} parent=107 // pred_check
          %p956 = pneg %p228
        $region138: #{tpu_custom_call.1} parent=107 // pred_check_branch
          %958 = sbr.rel (%p956) target = $region140
        $region139: #{tpu_custom_call.1} parent=107 // pred_region
          %960 = dma.done %s953, 16
        $region140: #{tpu_custom_call.1} parent=107 // pred_fallthru
          _
        %s961 = sand.u32 %s38, 1
        %s962 = scalar_lea.sflag [#allocation4], %s961
        %s963 = sand.u32 %s241, 1
        %s964 = smul.addr %s963, 192
        %s965 = scalar_lea.vmem [#allocation16], %s964
        // Predicated region
        $region141: #{tpu_custom_call.1} parent=107 // pred_check
          %p966 = pneg %p254
        $region142: #{tpu_custom_call.1} parent=107 // pred_check_branch
          %968 = sbr.rel (%p966) target = $region144
        $region143: #{tpu_custom_call.1} parent=107 // pred_region
          %970 = dma.done %s962, 3072
        $region144: #{tpu_custom_call.1} parent=107 // pred_fallthru
          _
        %s971 = sand.u32 %s38, 1
        %s972 = scalar_lea.sflag [#allocation4], %s971
        %s973 = sand.u32 %s293, 1
        %s974 = smul.addr %s973, 64
        %s975 = scalar_lea.vmem [#allocation17], %s974
        // Predicated region
        $region145: #{tpu_custom_call.1} parent=107 // pred_check
          %p976 = pneg %p306
        $region146: #{tpu_custom_call.1} parent=107 // pred_check_branch
          %978 = sbr.rel (%p976) target = $region148
        $region147: #{tpu_custom_call.1} parent=107 // pred_region
          %980 = dma.done %s972, 1024
        $region148: #{tpu_custom_call.1} parent=107 // pred_fallthru
          _
        %s981 = sand.u32 %s38, 1
        %s982 = scalar_lea.sflag [#allocation4], %s981
        %s983 = sand.u32 %s319, 1
        %s984 = scalar_lea.vmem [#allocation18], %s983
        // Predicated region
        $region149: #{tpu_custom_call.1} parent=107 // pred_check
          %p985 = pneg %p332
        $region150: #{tpu_custom_call.1} parent=107 // pred_check_branch
          %987 = sbr.rel (%p985) target = $region152
        $region151: #{tpu_custom_call.1} parent=107 // pred_region
          %989 = dma.done %s982, 16
        $region152: #{tpu_custom_call.1} parent=107 // pred_fallthru
          _
        %s990 = sand.u32 %s38, 1
        %s991 = scalar_lea.sflag [#allocation4], %s990
        %s992 = sand.u32 %s345, 1
        %s993 = scalar_lea.vmem [#allocation19], %s992
        // Predicated region
        $region153: #{tpu_custom_call.1} parent=107 // pred_check
          %p994 = pneg %p358
        $region154: #{tpu_custom_call.1} parent=107 // pred_check_branch
          %996 = sbr.rel (%p994) target = $region156
        $region155: #{tpu_custom_call.1} parent=107 // pred_region
          %998 = dma.done %s991, 16
        $region156: #{tpu_custom_call.1} parent=107 // pred_fallthru
          _
        %s999 = sand.u32 %s38, 1
        %s1000 = scalar_lea.sflag [#allocation4], %s999
        %s1001 = sand.u32 %s397, 1
        %s1002 = smul.addr %s1001, 128
        %s1003 = scalar_lea.vmem [#allocation20], %s1002
        // Predicated region
        $region157: #{tpu_custom_call.1} parent=107 // pred_check
          %p1004 = pneg %p410
        $region158: #{tpu_custom_call.1} parent=107 // pred_check_branch
          %1006 = sbr.rel (%p1004) target = $region160
        $region159: #{tpu_custom_call.1} parent=107 // pred_region
          %1008 = dma.done %s1000, 2048
        $region160: #{tpu_custom_call.1} parent=107 // pred_fallthru
          _
        %s1009 = sand.u32 %s38, 1
        %s1010 = scalar_lea.sflag [#allocation4], %s1009
        %s1011 = sand.u32 %s449, 1
        %s1012 = smul.addr %s1011, 128
        %s1013 = scalar_lea.vmem [#allocation21], %s1012
        // Predicated region
        $region161: #{tpu_custom_call.1} parent=107 // pred_check
          %p1014 = pneg %p462
        $region162: #{tpu_custom_call.1} parent=107 // pred_check_branch
          %1016 = sbr.rel (%p1014) target = $region164
        $region163: #{tpu_custom_call.1} parent=107 // pred_region
          %1018 = dma.done %s1010, 2048
        $region164: #{tpu_custom_call.1} parent=107 // pred_fallthru
          _
        // Predicated region
        $region165: #{tpu_custom_call.1} parent=107 // pred_check
          %p1019 = pneg %p551
        $region166: #{tpu_custom_call.1} parent=107 // pred_check_branch
          %1021 = sbr.rel (%p1019) target = $region168
        $region167: #{tpu_custom_call.1} parent=107 // pred_region
          %1023 = dma.done [#allocation7], 1024
        $region168: #{tpu_custom_call.1} parent=107 // pred_fallthru
          _
        %p1024 = pneg %p71
        %p1025 = pneg %p68
        %p1026 = pneg %p92
        %p1027 = pneg %p89
        %p1028 = pneg %p113
        %p1029 = pneg %p110
        %p1030 = pneg %p134
        %p1031 = pneg %p131
        %p1032 = pneg %p155
        %p1033 = pneg %p152
        %p1034 = pneg %p176
        %p1035 = pneg %p173
        %s1036 = sand.u32 %s38, 1
        %s1037 = scalar_lea.sflag [#allocation4], %s1036
        %s1038 = sand.u32 %s189, 1
        %s1039 = scalar_lea.vmem [#allocation14], %s1038
        %p1040 = pneg %p202
        %p1041 = pneg %p199
        %s1042 = sand.u32 %s38, 1
        %s1043 = scalar_lea.sflag [#allocation4], %s1042
        %s1044 = sand.u32 %s215, 1
        %s1045 = scalar_lea.vmem [#allocation15], %s1044
        %p1046 = pneg %p228
        %p1047 = pneg %p225
        %s1048 = sand.u32 %s38, 1
        %s1049 = scalar_lea.sflag [#allocation4], %s1048
        %s1050 = sand.u32 %s241, 1
        %s1051 = smul.addr %s1050, 192
        %s1052 = scalar_lea.vmem [#allocation16], %s1051
        %p1053 = pneg %p254
        %p1054 = pneg %p251
        %p1055 = scmp.lt.s32.totalorder %s43, 1
        %s1056 = scalar_select %p1055, %s43, 1
        %s1057 = smul.addr %s1056, 3
        %s1058 = scalar_lea.vmem %s9, %s1057
        %p1059 = pneg %p280
        %p1060 = pneg %p277
        %s1061 = sand.u32 %s38, 1
        %s1062 = scalar_lea.sflag [#allocation4], %s1061
        %s1063 = sand.u32 %s293, 1
        %s1064 = smul.addr %s1063, 64
        %s1065 = scalar_lea.vmem [#allocation17], %s1064
        %p1066 = pneg %p306
        %p1067 = pneg %p303
        %s1068 = sand.u32 %s38, 1
        %s1069 = scalar_lea.sflag [#allocation4], %s1068
        %s1070 = sand.u32 %s319, 1
        %s1071 = scalar_lea.vmem [#allocation18], %s1070
        %p1072 = pneg %p332
        %p1073 = pneg %p329
        %s1074 = sand.u32 %s38, 1
        %s1075 = scalar_lea.sflag [#allocation4], %s1074
        %s1076 = sand.u32 %s345, 1
        %s1077 = scalar_lea.vmem [#allocation19], %s1076
        %p1078 = pneg %p358
        %p1079 = pneg %p355
        %p1080 = scmp.lt.s32.totalorder %s43, 1
        %s1081 = scalar_select %p1080, %s43, 1
        %s1082 = scalar_lea.vmem %s13, %s1081
        %p1083 = pneg %p384
        %p1084 = pneg %p381
        %s1085 = sand.u32 %s38, 1
        %s1086 = scalar_lea.sflag [#allocation4], %s1085
        %s1087 = sand.u32 %s397, 1
        %s1088 = smul.addr %s1087, 128
        %s1089 = scalar_lea.vmem [#allocation20], %s1088
        %p1090 = pneg %p410
        %p1091 = pneg %p407
        %p1092 = scmp.lt.s32.totalorder %s43, 1
        %s1093 = scalar_select %p1092, %s43, 1
        %s1094 = smul.addr %s1093, 2
        %s1095 = scalar_lea.vmem %s15, %s1094
        %p1096 = pneg %p436
        %p1097 = pneg %p433
        %s1098 = sand.u32 %s38, 1
        %s1099 = scalar_lea.sflag [#allocation4], %s1098
        %s1100 = sand.u32 %s449, 1
        %s1101 = smul.addr %s1100, 128
        %s1102 = scalar_lea.vmem [#allocation21], %s1101
        %p1103 = pneg %p462
        %p1104 = pneg %p459
        %p1105 = scmp.lt.s32.totalorder %s43, 1
        %s1106 = scalar_select %p1105, %s43, 1
        %s1107 = scalar_lea.vmem %s17, %s1106
        %p1108 = pneg %p488
        %p1109 = pneg %p485
        %p1110 = pneg %p509
        %p1111 = pneg %p506
        %p1112 = pneg %p530
        %p1113 = pneg %p527
        %p1114 = pneg %p551
        %p1115 = pneg %p548
        %p1116 = pneg %p572
        %p1117 = pneg %p569
        %p1118 = pneg %p598
        %p1119 = pneg %p595
        %s1120 = smul.u32 4, %s42
        %p1121 = scmp.lt.s32.totalorder %s43, 1
        %s1122 = scalar_select %p1121, %s43, 1
        %s1123 = smul.addr %s1122, 3
        %s1124 = scalar_lea.vmem %s9, %s1123
        %p1125 = scmp.lt.s32.totalorder %s43, 1
        %s1126 = scalar_select %p1125, %s43, 1
        %s1127 = scalar_lea.vmem %s13, %s1126
        %p1128 = scmp.lt.s32.totalorder %s43, 1
        %s1129 = scalar_select %p1128, %s43, 1
        %s1130 = smul.addr %s1129, 2
        %s1131 = scalar_lea.vmem %s15, %s1130
        %p1132 = scmp.lt.s32.totalorder %s43, 1
        %s1133 = scalar_select %p1132, %s43, 1
        %s1134 = scalar_lea.vmem %s17, %s1133
        %s1135 = smul.u32 4, %s42
        %p1136 = scmp.eq.s32.totalorder %s43, 0
        // Predicated region
        $region169: #{tpu_custom_call.1} parent=107 // pred_check
          %p1137 = pneg %p1136
        $region170: #{tpu_custom_call.1} parent=107 // pred_check_branch
          %1139 = sbr.rel (%p1137) target = $region172
        $region171: #{tpu_custom_call.1} parent=107 // pred_region
          %v1140 = vld [vmem:[#allocation3] sm:$0xff]
          %v1141 = vld [vmem:[#allocation3 + $0x8] sm:$0xff]
          %v1142 = vld [vmem:[#allocation3 + $0x10] sm:$0xff]
          %v1143 = vld [vmem:[#allocation3 + $0x18] sm:$0xff]
          %v1144 = vld [vmem:[#allocation3 + $0x20] sm:$0xff]
          %v1145 = vld [vmem:[#allocation3 + $0x28] sm:$0xff]
          %v1146 = vld [vmem:[#allocation3 + $0x30] sm:$0xff]
          %v1147 = vld [vmem:[#allocation3 + $0x38] sm:$0xff]
          %v1148 = vld [vmem:[#allocation6] sm:$0xff]
          %v1149 = vld [vmem:[#allocation6 + $0x8] sm:$0xff]
          %v1150 = vadd.f32 %v1140, %v1148
          %v1151 = vadd.f32 %v1141, %v1149
          %v1152 = vadd.f32 %v1142, %v1148
          %v1153 = vadd.f32 %v1143, %v1149
          %v1154 = vadd.f32 %v1144, %v1148
          %v1155 = vadd.f32 %v1145, %v1149
          %v1156 = vadd.f32 %v1146, %v1148
          %v1157 = vadd.f32 %v1147, %v1149
          %v1158 = vld [vmem:[#allocation11] sm:$0x1]
          %v1159 = vld [vmem:[#allocation12] sm:$0x1]
          %1160 = vadd.xlane.f32.xlu0 %v1150
          %v1161 = vpop.xlane.xlu0 %1160
          %1162 = vadd.xlane.f32.xlu0 %v1151
          %v1163 = vpop.xlane.xlu0 %1162
          %1164 = vadd.xlane.f32.xlu0 %v1152
          %v1165 = vpop.xlane.xlu0 %1164
          %1166 = vadd.xlane.f32.xlu0 %v1153
          %v1167 = vpop.xlane.xlu0 %1166
          %1168 = vadd.xlane.f32.xlu0 %v1154
          %v1169 = vpop.xlane.xlu0 %1168
          %1170 = vadd.xlane.f32.xlu0 %v1155
          %v1171 = vpop.xlane.xlu0 %1170
          %1172 = vadd.xlane.f32.xlu0 %v1156
          %v1173 = vpop.xlane.xlu0 %1172
          %1174 = vadd.xlane.f32.xlu0 %v1157
          %v1175 = vpop.xlane.xlu0 %1174
          %v1176 = vrcp.pop 128.0
          %v1177 = vmul.f32 128.0, %v1176
          %v1178 = vsub.f32 1.0, %v1177
          %v1179 = vmul.f32 %v1176, %v1178
          %v1180 = vadd.f32 %v1176, %v1179
          %vm1181 = vweird.f32 %v1176
          %v1182 = vsel %vm1181, %v1176, %v1180
          %v1183 = vmul.f32 %v1161, %v1182
          %v1184 = vmul.f32 %v1163, %v1182
          %v1185 = vmul.f32 %v1165, %v1182
          %v1186 = vmul.f32 %v1167, %v1182
          %v1187 = vmul.f32 %v1169, %v1182
          %v1188 = vmul.f32 %v1171, %v1182
          %v1189 = vmul.f32 %v1173, %v1182
          %v1190 = vmul.f32 %v1175, %v1182
          %v1191 = vsub.f32 %v1150, %v1183
          %v1192 = vsub.f32 %v1151, %v1184
          %v1193 = vsub.f32 %v1152, %v1185
          %v1194 = vsub.f32 %v1153, %v1186
          %v1195 = vsub.f32 %v1154, %v1187
          %v1196 = vsub.f32 %v1155, %v1188
          %v1197 = vsub.f32 %v1156, %v1189
          %v1198 = vsub.f32 %v1157, %v1190
          %v1199 = vmul.f32 %v1191, %v1191
          %v1200 = vmul.f32 %v1192, %v1192
          %v1201 = vmul.f32 %v1193, %v1193
          %v1202 = vmul.f32 %v1194, %v1194
          %v1203 = vmul.f32 %v1195, %v1195
          %v1204 = vmul.f32 %v1196, %v1196
          %v1205 = vmul.f32 %v1197, %v1197
          %v1206 = vmul.f32 %v1198, %v1198
          %1207 = vadd.xlane.f32.xlu0 %v1199
          %v1208 = vpop.xlane.xlu0 %1207
          %1209 = vadd.xlane.f32.xlu0 %v1200
          %v1210 = vpop.xlane.xlu0 %1209
          %1211 = vadd.xlane.f32.xlu0 %v1201
          %v1212 = vpop.xlane.xlu0 %1211
          %1213 = vadd.xlane.f32.xlu0 %v1202
          %v1214 = vpop.xlane.xlu0 %1213
          %1215 = vadd.xlane.f32.xlu0 %v1203
          %v1216 = vpop.xlane.xlu0 %1215
          %1217 = vadd.xlane.f32.xlu0 %v1204
          %v1218 = vpop.xlane.xlu0 %1217
          %1219 = vadd.xlane.f32.xlu0 %v1205
          %v1220 = vpop.xlane.xlu0 %1219
          %1221 = vadd.xlane.f32.xlu0 %v1206
          %v1222 = vpop.xlane.xlu0 %1221
          %v1223 = vmul.f32 %v1208, %v1182
          %v1224 = vmul.f32 %v1210, %v1182
          %v1225 = vmul.f32 %v1212, %v1182
          %v1226 = vmul.f32 %v1214, %v1182
          %v1227 = vmul.f32 %v1216, %v1182
          %v1228 = vmul.f32 %v1218, %v1182
          %v1229 = vmul.f32 %v1220, %v1182
          %v1230 = vmul.f32 %v1222, %v1182
          %v1231 = vadd.f32 %v1223, 1e-05
          %v1232 = vadd.f32 %v1224, 1e-05
          %v1233 = vadd.f32 %v1225, 1e-05
          %v1234 = vadd.f32 %v1226, 1e-05
          %v1235 = vadd.f32 %v1227, 1e-05
          %v1236 = vadd.f32 %v1228, 1e-05
          %v1237 = vadd.f32 %v1229, 1e-05
          %v1238 = vadd.f32 %v1230, 1e-05
          %v1239 = vrsqrt.pop %v1231
          %v1240 = vmul.f32 %v1239, %v1231
          %v1241 = vmul.f32 %v1240, %v1239
          %v1242 = vmul.f32 0.5, %v1241
          %v1243 = vsub.f32 1.5, %v1242
          %v1244 = vmul.f32 %v1239, %v1243
          %vm1245 = vweird.f32 %v1231
          %vm1246 = vweird.f32 %v1239
          %vm1247 = vmor %vm1245, %vm1246
          %v1248 = vsel %vm1247, %v1239, %v1244
          %v1249 = vrsqrt.pop %v1232
          %v1250 = vmul.f32 %v1249, %v1232
          %v1251 = vmul.f32 %v1250, %v1249
          %v1252 = vmul.f32 0.5, %v1251
          %v1253 = vsub.f32 1.5, %v1252
          %v1254 = vmul.f32 %v1249, %v1253
          %vm1255 = vweird.f32 %v1232
          %vm1256 = vweird.f32 %v1249
          %vm1257 = vmor %vm1255, %vm1256
          %v1258 = vsel %vm1257, %v1249, %v1254
          %v1259 = vrsqrt.pop %v1233
          %v1260 = vmul.f32 %v1259, %v1233
          %v1261 = vmul.f32 %v1260, %v1259
          %v1262 = vmul.f32 0.5, %v1261
          %v1263 = vsub.f32 1.5, %v1262
          %v1264 = vmul.f32 %v1259, %v1263
          %vm1265 = vweird.f32 %v1233
          %vm1266 = vweird.f32 %v1259
          %vm1267 = vmor %vm1265, %vm1266
          %v1268 = vsel %vm1267, %v1259, %v1264
          %v1269 = vrsqrt.pop %v1234
          %v1270 = vmul.f32 %v1269, %v1234
          %v1271 = vmul.f32 %v1270, %v1269
          %v1272 = vmul.f32 0.5, %v1271
          %v1273 = vsub.f32 1.5, %v1272
          %v1274 = vmul.f32 %v1269, %v1273
          %vm1275 = vweird.f32 %v1234
          %vm1276 = vweird.f32 %v1269
          %vm1277 = vmor %vm1275, %vm1276
          %v1278 = vsel %vm1277, %v1269, %v1274
          %v1279 = vrsqrt.pop %v1235
          %v1280 = vmul.f32 %v1279, %v1235
          %v1281 = vmul.f32 %v1280, %v1279
          %v1282 = vmul.f32 0.5, %v1281
          %v1283 = vsub.f32 1.5, %v1282
          %v1284 = vmul.f32 %v1279, %v1283
          %vm1285 = vweird.f32 %v1235
          %vm1286 = vweird.f32 %v1279
          %vm1287 = vmor %vm1285, %vm1286
          %v1288 = vsel %vm1287, %v1279, %v1284
          %v1289 = vrsqrt.pop %v1236
          %v1290 = vmul.f32 %v1289, %v1236
          %v1291 = vmul.f32 %v1290, %v1289
          %v1292 = vmul.f32 0.5, %v1291
          %v1293 = vsub.f32 1.5, %v1292
          %v1294 = vmul.f32 %v1289, %v1293
          %vm1295 = vweird.f32 %v1236
          %vm1296 = vweird.f32 %v1289
          %vm1297 = vmor %vm1295, %vm1296
          %v1298 = vsel %vm1297, %v1289, %v1294
          %v1299 = vrsqrt.pop %v1237
          %v1300 = vmul.f32 %v1299, %v1237
          %v1301 = vmul.f32 %v1300, %v1299
          %v1302 = vmul.f32 0.5, %v1301
          %v1303 = vsub.f32 1.5, %v1302
          %v1304 = vmul.f32 %v1299, %v1303
          %vm1305 = vweird.f32 %v1237
          %vm1306 = vweird.f32 %v1299
          %vm1307 = vmor %vm1305, %vm1306
          %v1308 = vsel %vm1307, %v1299, %v1304
          %v1309 = vrsqrt.pop %v1238
          %v1310 = vmul.f32 %v1309, %v1238
          %v1311 = vmul.f32 %v1310, %v1309
          %v1312 = vmul.f32 0.5, %v1311
          %v1313 = vsub.f32 1.5, %v1312
          %v1314 = vmul.f32 %v1309, %v1313
          %vm1315 = vweird.f32 %v1238
          %vm1316 = vweird.f32 %v1309
          %vm1317 = vmor %vm1315, %vm1316
          %v1318 = vsel %vm1317, %v1309, %v1314
          %v1319 = vmul.f32 %v1191, %v1248
          %v1320 = vmul.f32 %v1192, %v1258
          %v1321 = vmul.f32 %v1193, %v1268
          %v1322 = vmul.f32 %v1194, %v1278
          %v1323 = vmul.f32 %v1195, %v1288
          %v1324 = vmul.f32 %v1196, %v1298
          %v1325 = vmul.f32 %v1197, %v1308
          %v1326 = vmul.f32 %v1198, %v1318
          %v1328 = vperm.slane %v1158, 0
          %v1330 = vmul.f32 %v1319, %v1328
          %v1331 = vmul.f32 %v1320, %v1328
          %v1332 = vmul.f32 %v1321, %v1328
          %v1333 = vmul.f32 %v1322, %v1328
          %v1334 = vmul.f32 %v1323, %v1328
          %v1335 = vmul.f32 %v1324, %v1328
          %v1336 = vmul.f32 %v1325, %v1328
          %v1337 = vmul.f32 %v1326, %v1328
          %v1339 = vperm.slane %v1159, 0
          %v1341 = vadd.f32 %v1330, %v1339
          %v1342 = vadd.f32 %v1331, %v1339
          %v1343 = vadd.f32 %v1332, %v1339
          %v1344 = vadd.f32 %v1333, %v1339
          %v1345 = vadd.f32 %v1334, %v1339
          %v1346 = vadd.f32 %v1335, %v1339
          %v1347 = vadd.f32 %v1336, %v1339
          %v1348 = vadd.f32 %v1337, %v1339
          %1349 = vst [vmem:[#allocation2] sm:$0xff] %v1341
          %1350 = vst [vmem:[#allocation2 + $0x8] sm:$0xff] %v1342
          %1351 = vst [vmem:[#allocation2 + $0x10] sm:$0xff] %v1343
          %1352 = vst [vmem:[#allocation2 + $0x18] sm:$0xff] %v1344
          %1353 = vst [vmem:[#allocation2 + $0x20] sm:$0xff] %v1345
          %1354 = vst [vmem:[#allocation2 + $0x28] sm:$0xff] %v1346
          %1355 = vst [vmem:[#allocation2 + $0x30] sm:$0xff] %v1347
          %1356 = vst [vmem:[#allocation2 + $0x38] sm:$0xff] %v1348
        $region172: #{tpu_custom_call.1} parent=107 // pred_fallthru
          _
        %v1357 = vld [vmem:[#allocation2] sm:$0xff]
        %v1358 = vld [vmem:[#allocation2 + $0x8] sm:$0xff]
        %v1359 = vld [vmem:[#allocation2 + $0x10] sm:$0xff]
        %v1360 = vld [vmem:[#allocation2 + $0x18] sm:$0xff]
        %v1361 = vld [vmem:[#allocation2 + $0x20] sm:$0xff]
        %v1362 = vld [vmem:[#allocation2 + $0x28] sm:$0xff]
        %v1363 = vld [vmem:[#allocation2 + $0x30] sm:$0xff]
        %v1364 = vld [vmem:[#allocation2 + $0x38] sm:$0xff]
        %v1365 = vld [vmem:[%s946] sm:$0x1]
        %v1366 = vld [vmem:[%s955] sm:$0x1]
        %1367 = vadd.xlane.f32.xlu0 %v1357
        %v1368 = vpop.xlane.xlu0 %1367
        %1369 = vadd.xlane.f32.xlu0 %v1358
        %v1370 = vpop.xlane.xlu0 %1369
        %1371 = vadd.xlane.f32.xlu0 %v1359
        %v1372 = vpop.xlane.xlu0 %1371
        %1373 = vadd.xlane.f32.xlu0 %v1360
        %v1374 = vpop.xlane.xlu0 %1373
        %1375 = vadd.xlane.f32.xlu0 %v1361
        %v1376 = vpop.xlane.xlu0 %1375
        %1377 = vadd.xlane.f32.xlu0 %v1362
        %v1378 = vpop.xlane.xlu0 %1377
        %1379 = vadd.xlane.f32.xlu0 %v1363
        %v1380 = vpop.xlane.xlu0 %1379
        %1381 = vadd.xlane.f32.xlu0 %v1364
        %v1382 = vpop.xlane.xlu0 %1381
        %v1383 = vrcp.pop 128.0
        %v1384 = vmul.f32 128.0, %v1383
        %v1385 = vsub.f32 1.0, %v1384
        %v1386 = vmul.f32 %v1383, %v1385
        %v1387 = vadd.f32 %v1383, %v1386
        %vm1388 = vweird.f32 %v1383
        %v1389 = vsel %vm1388, %v1383, %v1387
        %v1390 = vmul.f32 %v1368, %v1389
        %v1391 = vmul.f32 %v1370, %v1389
        %v1392 = vmul.f32 %v1372, %v1389
        %v1393 = vmul.f32 %v1374, %v1389
        %v1394 = vmul.f32 %v1376, %v1389
        %v1395 = vmul.f32 %v1378, %v1389
        %v1396 = vmul.f32 %v1380, %v1389
        %v1397 = vmul.f32 %v1382, %v1389
        %v1398 = vsub.f32 %v1357, %v1390
        %v1399 = vsub.f32 %v1358, %v1391
        %v1400 = vsub.f32 %v1359, %v1392
        %v1401 = vsub.f32 %v1360, %v1393
        %v1402 = vsub.f32 %v1361, %v1394
        %v1403 = vsub.f32 %v1362, %v1395
        %v1404 = vsub.f32 %v1363, %v1396
        %v1405 = vsub.f32 %v1364, %v1397
        %v1406 = vmul.f32 %v1398, %v1398
        %v1407 = vmul.f32 %v1399, %v1399
        %v1408 = vmul.f32 %v1400, %v1400
        %v1409 = vmul.f32 %v1401, %v1401
        %v1410 = vmul.f32 %v1402, %v1402
        %v1411 = vmul.f32 %v1403, %v1403
        %v1412 = vmul.f32 %v1404, %v1404
        %v1413 = vmul.f32 %v1405, %v1405
        %1414 = vadd.xlane.f32.xlu0 %v1406
        %v1415 = vpop.xlane.xlu0 %1414
        %1416 = vadd.xlane.f32.xlu0 %v1407
        %v1417 = vpop.xlane.xlu0 %1416
        %1418 = vadd.xlane.f32.xlu0 %v1408
        %v1419 = vpop.xlane.xlu0 %1418
        %1420 = vadd.xlane.f32.xlu0 %v1409
        %v1421 = vpop.xlane.xlu0 %1420
        %1422 = vadd.xlane.f32.xlu0 %v1410
        %v1423 = vpop.xlane.xlu0 %1422
        %1424 = vadd.xlane.f32.xlu0 %v1411
        %v1425 = vpop.xlane.xlu0 %1424
        %1426 = vadd.xlane.f32.xlu0 %v1412
        %v1427 = vpop.xlane.xlu0 %1426
        %1428 = vadd.xlane.f32.xlu0 %v1413
        %v1429 = vpop.xlane.xlu0 %1428
        %v1430 = vmul.f32 %v1415, %v1389
        %v1431 = vmul.f32 %v1417, %v1389
        %v1432 = vmul.f32 %v1419, %v1389
        %v1433 = vmul.f32 %v1421, %v1389
        %v1434 = vmul.f32 %v1423, %v1389
        %v1435 = vmul.f32 %v1425, %v1389
        %v1436 = vmul.f32 %v1427, %v1389
        %v1437 = vmul.f32 %v1429, %v1389
        %v1438 = vadd.f32 %v1430, 1e-05
        %v1439 = vadd.f32 %v1431, 1e-05
        %v1440 = vadd.f32 %v1432, 1e-05
        %v1441 = vadd.f32 %v1433, 1e-05
        %v1442 = vadd.f32 %v1434, 1e-05
        %v1443 = vadd.f32 %v1435, 1e-05
        %v1444 = vadd.f32 %v1436, 1e-05
        %v1445 = vadd.f32 %v1437, 1e-05
        %v1446 = vrsqrt.pop %v1438
        %v1447 = vmul.f32 %v1446, %v1438
        %v1448 = vmul.f32 %v1447, %v1446
        %v1449 = vmul.f32 0.5, %v1448
        %v1450 = vsub.f32 1.5, %v1449
        %v1451 = vmul.f32 %v1446, %v1450
        %vm1452 = vweird.f32 %v1438
        %vm1453 = vweird.f32 %v1446
        %vm1454 = vmor %vm1452, %vm1453
        %v1455 = vsel %vm1454, %v1446, %v1451
        %v1456 = vrsqrt.pop %v1439
        %v1457 = vmul.f32 %v1456, %v1439
        %v1458 = vmul.f32 %v1457, %v1456
        %v1459 = vmul.f32 0.5, %v1458
        %v1460 = vsub.f32 1.5, %v1459
        %v1461 = vmul.f32 %v1456, %v1460
        %vm1462 = vweird.f32 %v1439
        %vm1463 = vweird.f32 %v1456
        %vm1464 = vmor %vm1462, %vm1463
        %v1465 = vsel %vm1464, %v1456, %v1461
        %v1466 = vrsqrt.pop %v1440
        %v1467 = vmul.f32 %v1466, %v1440
        %v1468 = vmul.f32 %v1467, %v1466
        %v1469 = vmul.f32 0.5, %v1468
        %v1470 = vsub.f32 1.5, %v1469
        %v1471 = vmul.f32 %v1466, %v1470
        %vm1472 = vweird.f32 %v1440
        %vm1473 = vweird.f32 %v1466
        %vm1474 = vmor %vm1472, %vm1473
        %v1475 = vsel %vm1474, %v1466, %v1471
        %v1476 = vrsqrt.pop %v1441
        %v1477 = vmul.f32 %v1476, %v1441
        %v1478 = vmul.f32 %v1477, %v1476
        %v1479 = vmul.f32 0.5, %v1478
        %v1480 = vsub.f32 1.5, %v1479
        %v1481 = vmul.f32 %v1476, %v1480
        %vm1482 = vweird.f32 %v1441
        %vm1483 = vweird.f32 %v1476
        %vm1484 = vmor %vm1482, %vm1483
        %v1485 = vsel %vm1484, %v1476, %v1481
        %v1486 = vrsqrt.pop %v1442
        %v1487 = vmul.f32 %v1486, %v1442
        %v1488 = vmul.f32 %v1487, %v1486
        %v1489 = vmul.f32 0.5, %v1488
        %v1490 = vsub.f32 1.5, %v1489
        %v1491 = vmul.f32 %v1486, %v1490
        %vm1492 = vweird.f32 %v1442
        %vm1493 = vweird.f32 %v1486
        %vm1494 = vmor %vm1492, %vm1493
        %v1495 = vsel %vm1494, %v1486, %v1491
        %v1496 = vrsqrt.pop %v1443
        %v1497 = vmul.f32 %v1496, %v1443
        %v1498 = vmul.f32 %v1497, %v1496
        %v1499 = vmul.f32 0.5, %v1498
        %v1500 = vsub.f32 1.5, %v1499
        %v1501 = vmul.f32 %v1496, %v1500
        %vm1502 = vweird.f32 %v1443
        %vm1503 = vweird.f32 %v1496
        %vm1504 = vmor %vm1502, %vm1503
        %v1505 = vsel %vm1504, %v1496, %v1501
        %v1506 = vrsqrt.pop %v1444
        %v1507 = vmul.f32 %v1506, %v1444
        %v1508 = vmul.f32 %v1507, %v1506
        %v1509 = vmul.f32 0.5, %v1508
        %v1510 = vsub.f32 1.5, %v1509
        %v1511 = vmul.f32 %v1506, %v1510
        %vm1512 = vweird.f32 %v1444
        %vm1513 = vweird.f32 %v1506
        %vm1514 = vmor %vm1512, %vm1513
        %v1515 = vsel %vm1514, %v1506, %v1511
        %v1516 = vrsqrt.pop %v1445
        %v1517 = vmul.f32 %v1516, %v1445
        %v1518 = vmul.f32 %v1517, %v1516
        %v1519 = vmul.f32 0.5, %v1518
        %v1520 = vsub.f32 1.5, %v1519
        %v1521 = vmul.f32 %v1516, %v1520
        %vm1522 = vweird.f32 %v1445
        %vm1523 = vweird.f32 %v1516
        %vm1524 = vmor %vm1522, %vm1523
        %v1525 = vsel %vm1524, %v1516, %v1521
        %v1526 = vmul.f32 %v1398, %v1455
        %v1527 = vmul.f32 %v1399, %v1465
        %v1528 = vmul.f32 %v1400, %v1475
        %v1529 = vmul.f32 %v1401, %v1485
        %v1530 = vmul.f32 %v1402, %v1495
        %v1531 = vmul.f32 %v1403, %v1505
        %v1532 = vmul.f32 %v1404, %v1515
        %v1533 = vmul.f32 %v1405, %v1525
        %v1535 = vperm.slane %v1365, 0
        %v1537 = vmul.f32 %v1526, %v1535
        %v1538 = vmul.f32 %v1527, %v1535
        %v1539 = vmul.f32 %v1528, %v1535
        %v1540 = vmul.f32 %v1529, %v1535
        %v1541 = vmul.f32 %v1530, %v1535
        %v1542 = vmul.f32 %v1531, %v1535
        %v1543 = vmul.f32 %v1532, %v1535
        %v1544 = vmul.f32 %v1533, %v1535
        %v1546 = vperm.slane %v1366, 0
        %v1548 = vadd.f32 %v1537, %v1546
        %v1549 = vadd.f32 %v1538, %v1546
        %v1550 = vadd.f32 %v1539, %v1546
        %v1551 = vadd.f32 %v1540, %v1546
        %v1552 = vadd.f32 %v1541, %v1546
        %v1553 = vadd.f32 %v1542, %v1546
        %v1554 = vadd.f32 %v1543, %v1546
        %v1555 = vadd.f32 %v1544, %v1546
        %v1556 = vpack.c.bf16 %v1549, %v1548
        %v1557 = vpack.c.bf16 %v1551, %v1550
        %v1558 = vpack.c.bf16 %v1553, %v1552
        %v1559 = vpack.c.bf16 %v1555, %v1554
        %v1560 = vld [vmem:[%s965] sm:$0xff]
        %v1561 = vld [vmem:[%s965 + $0x8] sm:$0xf]
        %v1562 = vld [vmem:[%s965 + $0xc] sm:$0xff]
        %v1563 = vld [vmem:[%s965 + $0x14] sm:$0xf]
        %v1564 = vld [vmem:[%s965 + $0x18] sm:$0xff]
        %v1565 = vld [vmem:[%s965 + $0x20] sm:$0xf]
        %v1566 = vld [vmem:[%s965 + $0x24] sm:$0xff]
        %v1567 = vld [vmem:[%s965 + $0x2c] sm:$0xf]
        %v1568 = vld [vmem:[%s965 + $0x30] sm:$0xff]
        %v1569 = vld [vmem:[%s965 + $0x38] sm:$0xf]
        %v1570 = vld [vmem:[%s965 + $0x3c] sm:$0xff]
        %v1571 = vld [vmem:[%s965 + $0x44] sm:$0xf]
        %v1572 = vld [vmem:[%s965 + $0x48] sm:$0xff]
        %v1573 = vld [vmem:[%s965 + $0x50] sm:$0xf]
        %v1574 = vld [vmem:[%s965 + $0x54] sm:$0xff]
        %v1575 = vld [vmem:[%s965 + $0x5c] sm:$0xf]
        %v1576 = vld [vmem:[%s965 + $0x60] sm:$0xff]
        %v1577 = vld [vmem:[%s965 + $0x68] sm:$0xf]
        %v1578 = vld [vmem:[%s965 + $0x6c] sm:$0xff]
        %v1579 = vld [vmem:[%s965 + $0x74] sm:$0xf]
        %v1580 = vld [vmem:[%s965 + $0x78] sm:$0xff]
        %v1581 = vld [vmem:[%s965 + $0x80] sm:$0xf]
        %v1582 = vld [vmem:[%s965 + $0x84] sm:$0xff]
        %v1583 = vld [vmem:[%s965 + $0x8c] sm:$0xf]
        %v1584 = vld [vmem:[%s965 + $0x90] sm:$0xff]
        %v1585 = vld [vmem:[%s965 + $0x98] sm:$0xf]
        %v1586 = vld [vmem:[%s965 + $0x9c] sm:$0xff]
        %v1587 = vld [vmem:[%s965 + $0xa4] sm:$0xf]
        %v1588 = vld [vmem:[%s965 + $0xa8] sm:$0xff]
        %v1589 = vld [vmem:[%s965 + $0xb0] sm:$0xf]
        %v1590 = vld [vmem:[%s965 + $0xb4] sm:$0xff]
        %v1591 = vld [vmem:[%s965 + $0xbc] sm:$0xf]
        %v1592 = vld [vmem:[%s1124] sm:$0x7]
        %v1594 = vperm.slane %v1592, 0
        %v1595 = vperm.slane %v1592, 1
        %v1596 = vperm.slane %v1592, 2
        %v1632 = vunpack.c.l.b16 %v1560
        %v1633 = vunpack.c.h.b16 %v1560
        %v1634 = vunpack.c.l.b16 %v1561
        %v1635 = vunpack.c.l.b16 %v1562
        %v1636 = vunpack.c.h.b16 %v1562
        %v1637 = vunpack.c.l.b16 %v1563
        %v1638 = vunpack.c.l.b16 %v1564
        %v1639 = vunpack.c.h.b16 %v1564
        %v1640 = vunpack.c.l.b16 %v1565
        %v1641 = vunpack.c.l.b16 %v1566
        %v1642 = vunpack.c.h.b16 %v1566
        %v1643 = vunpack.c.l.b16 %v1567
        %v1644 = vunpack.c.l.b16 %v1568
        %v1645 = vunpack.c.h.b16 %v1568
        %v1646 = vunpack.c.l.b16 %v1569
        %v1647 = vunpack.c.l.b16 %v1570
        %v1648 = vunpack.c.h.b16 %v1570
        %v1649 = vunpack.c.l.b16 %v1571
        %v1650 = vunpack.c.l.b16 %v1572
        %v1651 = vunpack.c.h.b16 %v1572
        %v1652 = vunpack.c.l.b16 %v1573
        %v1653 = vunpack.c.l.b16 %v1574
        %v1654 = vunpack.c.h.b16 %v1574
        %v1655 = vunpack.c.l.b16 %v1575
        %v1656 = vunpack.c.l.b16 %v1576
        %v1657 = vunpack.c.h.b16 %v1576
        %v1658 = vunpack.c.l.b16 %v1577
        %v1659 = vunpack.c.l.b16 %v1578
        %v1660 = vunpack.c.h.b16 %v1578
        %v1661 = vunpack.c.l.b16 %v1579
        %v1662 = vunpack.c.l.b16 %v1580
        %v1663 = vunpack.c.h.b16 %v1580
        %v1664 = vunpack.c.l.b16 %v1581
        %v1665 = vunpack.c.l.b16 %v1582
        %v1666 = vunpack.c.h.b16 %v1582
        %v1667 = vunpack.c.l.b16 %v1583
        %v1668 = vunpack.c.l.b16 %v1584
        %v1669 = vunpack.c.h.b16 %v1584
        %v1670 = vunpack.c.l.b16 %v1585
        %v1671 = vunpack.c.l.b16 %v1586
        %v1672 = vunpack.c.h.b16 %v1586
        %v1673 = vunpack.c.l.b16 %v1587
        %v1674 = vunpack.c.l.b16 %v1588
        %v1675 = vunpack.c.h.b16 %v1588
        %v1676 = vunpack.c.l.b16 %v1589
        %v1677 = vunpack.c.l.b16 %v1590
        %v1678 = vunpack.c.h.b16 %v1590
        %v1679 = vunpack.c.l.b16 %v1591
        %v1680 = vpack.c.b16 %v1635, %v1632
        %v1681 = vpack.c.b16 %v1636, %v1633
        %v1682 = vpack.c.b16 %v1637, %v1634
        %v1683 = vpack.c.b16 %v1641, %v1638
        %v1684 = vpack.c.b16 %v1642, %v1639
        %v1685 = vpack.c.b16 %v1643, %v1640
        %v1686 = vpack.c.b16 %v1647, %v1644
        %v1687 = vpack.c.b16 %v1648, %v1645
        %v1688 = vpack.c.b16 %v1649, %v1646
        %v1689 = vpack.c.b16 %v1653, %v1650
        %v1690 = vpack.c.b16 %v1654, %v1651
        %v1691 = vpack.c.b16 %v1655, %v1652
        %v1692 = vpack.c.b16 %v1659, %v1656
        %v1693 = vpack.c.b16 %v1660, %v1657
        %v1694 = vpack.c.b16 %v1661, %v1658
        %v1695 = vpack.c.b16 %v1665, %v1662
        %v1696 = vpack.c.b16 %v1666, %v1663
        %v1697 = vpack.c.b16 %v1667, %v1664
        %v1698 = vpack.c.b16 %v1671, %v1668
        %v1699 = vpack.c.b16 %v1672, %v1669
        %v1700 = vpack.c.b16 %v1673, %v1670
        %v1701 = vpack.c.b16 %v1677, %v1674
        %v1702 = vpack.c.b16 %v1678, %v1675
        %v1703 = vpack.c.b16 %v1679, %v1676
        %1728 = vmatpush.bf16.msra.mxu0 %v1701
        %1729 = vmatpush.bf16.msra.mxu0 %v1698
        %1730 = vmatpush.bf16.msra.mxu0 %v1695
        %1731 = vmatpush.bf16.msra.mxu0 %v1692
        %1732 = vmatpush.bf16.msra.mxu0 %v1689
        %1733 = vmatpush.bf16.msra.mxu0 %v1686
        %1734 = vmatpush.bf16.msra.mxu0 %v1683
        %1735 = vmatpush.bf16.msra.mxu0 %v1680
        %1736 = vmatmul.bf16.gmra.mxu0 %v1556
        %v1737 = vpop.f32.mrf.mxu0
        %v1738 = vadd.f32 %v1594, %v1737
        %v1739 = vpop.f32.mrf.mxu0
        %v1740 = vadd.f32 %v1594, %v1739
        %1741 = vmatmul.bf16.gmra.mxu0 %v1557
        %v1742 = vpop.f32.mrf.mxu0
        %v1743 = vadd.f32 %v1594, %v1742
        %v1744 = vpop.f32.mrf.mxu0
        %v1745 = vadd.f32 %v1594, %v1744
        %1746 = vmatmul.bf16.gmra.mxu0 %v1558
        %v1747 = vpop.f32.mrf.mxu0
        %v1748 = vadd.f32 %v1594, %v1747
        %v1749 = vpop.f32.mrf.mxu0
        %v1750 = vadd.f32 %v1594, %v1749
        %1751 = vmatmul.bf16.gmra.mxu0 %v1559
        %v1752 = vpop.f32.mrf.mxu0
        %v1753 = vadd.f32 %v1594, %v1752
        %v1754 = vpop.f32.mrf.mxu0
        %v1755 = vadd.f32 %v1594, %v1754
        %1756 = vdwg.mxu0
        %1757 = vmatpush.bf16.msra.mxu0 %v1702
        %1758 = vmatpush.bf16.msra.mxu0 %v1699
        %1759 = vmatpush.bf16.msra.mxu0 %v1696
        %1760 = vmatpush.bf16.msra.mxu0 %v1693
        %1761 = vmatpush.bf16.msra.mxu0 %v1690
        %1762 = vmatpush.bf16.msra.mxu0 %v1687
        %1763 = vmatpush.bf16.msra.mxu0 %v1684
        %1764 = vmatpush.bf16.msra.mxu0 %v1681
        %1765 = vmatmul.bf16.gmra.mxu0 %v1556
        %v1766 = vpop.f32.mrf.mxu0
        %v1767 = vadd.f32 %v1595, %v1766
        %v1768 = vpop.f32.mrf.mxu0
        %v1769 = vadd.f32 %v1595, %v1768
        %1770 = vmatmul.bf16.gmra.mxu0 %v1557
        %v1771 = vpop.f32.mrf.mxu0
        %v1772 = vadd.f32 %v1595, %v1771
        %v1773 = vpop.f32.mrf.mxu0
        %v1774 = vadd.f32 %v1595, %v1773
        %1775 = vmatmul.bf16.gmra.mxu0 %v1558
        %v1776 = vpop.f32.mrf.mxu0
        %v1777 = vadd.f32 %v1595, %v1776
        %v1778 = vpop.f32.mrf.mxu0
        %v1779 = vadd.f32 %v1595, %v1778
        %1780 = vmatmul.bf16.gmra.mxu0 %v1559
        %v1781 = vpop.f32.mrf.mxu0
        %v1782 = vadd.f32 %v1595, %v1781
        %v1783 = vpop.f32.mrf.mxu0
        %v1784 = vadd.f32 %v1595, %v1783
        %1785 = vdwg.mxu0
        %1786 = vmatpush.bf16.msra.mxu0 %v1703
        %1787 = vmatpush.bf16.msra.mxu0 %v1700
        %1788 = vmatpush.bf16.msra.mxu0 %v1697
        %1789 = vmatpush.bf16.msra.mxu0 %v1694
        %1790 = vmatpush.bf16.msra.mxu0 %v1691
        %1791 = vmatpush.bf16.msra.mxu0 %v1688
        %1792 = vmatpush.bf16.msra.mxu0 %v1685
        %1793 = vmatpush.bf16.msra.mxu0 %v1682
        %1794 = vmatmul.bf16.gmra.mxu0 %v1556
        %v1795 = vpop.f32.mrf.mxu0
        %v1796 = vadd.f32 %v1596, %v1795
        %v1797 = vpop.f32.mrf.mxu0
        %v1798 = vadd.f32 %v1596, %v1797
        %1799 = vmatmul.bf16.gmra.mxu0 %v1557
        %v1800 = vpop.f32.mrf.mxu0
        %v1801 = vadd.f32 %v1596, %v1800
        %v1802 = vpop.f32.mrf.mxu0
        %v1803 = vadd.f32 %v1596, %v1802
        %1804 = vmatmul.bf16.gmra.mxu0 %v1558
        %v1805 = vpop.f32.mrf.mxu0
        %v1806 = vadd.f32 %v1596, %v1805
        %v1807 = vpop.f32.mrf.mxu0
        %v1808 = vadd.f32 %v1596, %v1807
        %1809 = vmatmul.bf16.gmra.mxu0 %v1559
        %v1810 = vpop.f32.mrf.mxu0
        %v1811 = vadd.f32 %v1596, %v1810
        %v1812 = vpop.f32.mrf.mxu0
        %v1813 = vadd.f32 %v1596, %v1812
        %1814 = vdwg.mxu0
        %v1815 = vld [vmem:[#allocation8] sm:$0x1]
        %v1816 = vld [vmem:[#allocation8 + $0x1] sm:$0x1]
        %v1817 = vld [vmem:[#allocation8 + $0x2] sm:$0x1]
        %v1818 = vld [vmem:[#allocation8 + $0x3] sm:$0x1]
        %v1819 = vld [vmem:[#allocation8 + $0x4] sm:$0x1]
        %v1820 = vld [vmem:[#allocation8 + $0x5] sm:$0x1]
        %v1821 = vld [vmem:[#allocation8 + $0x6] sm:$0x1]
        %v1822 = vld [vmem:[#allocation8 + $0x7] sm:$0x1]
        %v1831 = vperm.slane %v1815, 0
        %v1832 = vperm.slane %v1816, 0
        %v1833 = vperm.slane %v1817, 0
        %v1834 = vperm.slane %v1818, 0
        %v1835 = vperm.slane %v1819, 0
        %v1836 = vperm.slane %v1820, 0
        %v1837 = vperm.slane %v1821, 0
        %v1838 = vperm.slane %v1822, 0
        %v1847 = vmul.f32 %v1767, %v1831
        %v1848 = vmul.f32 %v1769, %v1831
        %v1849 = vmul.f32 %v1767, %v1832
        %v1850 = vmul.f32 %v1769, %v1832
        %v1851 = vmul.f32 %v1767, %v1833
        %v1852 = vmul.f32 %v1769, %v1833
        %v1853 = vmul.f32 %v1767, %v1834
        %v1854 = vmul.f32 %v1769, %v1834
        %v1855 = vmul.f32 %v1767, %v1835
        %v1856 = vmul.f32 %v1769, %v1835
        %v1857 = vmul.f32 %v1767, %v1836
        %v1858 = vmul.f32 %v1769, %v1836
        %v1859 = vmul.f32 %v1767, %v1837
        %v1860 = vmul.f32 %v1769, %v1837
        %v1861 = vmul.f32 %v1767, %v1838
        %v1862 = vmul.f32 %v1769, %v1838
        %v1863 = vmul.f32 %v1772, %v1831
        %v1864 = vmul.f32 %v1774, %v1831
        %v1865 = vmul.f32 %v1772, %v1832
        %v1866 = vmul.f32 %v1774, %v1832
        %v1867 = vmul.f32 %v1772, %v1833
        %v1868 = vmul.f32 %v1774, %v1833
        %v1869 = vmul.f32 %v1772, %v1834
        %v1870 = vmul.f32 %v1774, %v1834
        %v1871 = vmul.f32 %v1772, %v1835
        %v1872 = vmul.f32 %v1774, %v1835
        %v1873 = vmul.f32 %v1772, %v1836
        %v1874 = vmul.f32 %v1774, %v1836
        %v1875 = vmul.f32 %v1772, %v1837
        %v1876 = vmul.f32 %v1774, %v1837
        %v1877 = vmul.f32 %v1772, %v1838
        %v1878 = vmul.f32 %v1774, %v1838
        %v1879 = vmul.f32 %v1777, %v1831
        %v1880 = vmul.f32 %v1779, %v1831
        %v1881 = vmul.f32 %v1777, %v1832
        %v1882 = vmul.f32 %v1779, %v1832
        %v1883 = vmul.f32 %v1777, %v1833
        %v1884 = vmul.f32 %v1779, %v1833
        %v1885 = vmul.f32 %v1777, %v1834
        %v1886 = vmul.f32 %v1779, %v1834
        %v1887 = vmul.f32 %v1777, %v1835
        %v1888 = vmul.f32 %v1779, %v1835
        %v1889 = vmul.f32 %v1777, %v1836
        %v1890 = vmul.f32 %v1779, %v1836
        %v1891 = vmul.f32 %v1777, %v1837
        %v1892 = vmul.f32 %v1779, %v1837
        %v1893 = vmul.f32 %v1777, %v1838
        %v1894 = vmul.f32 %v1779, %v1838
        %v1895 = vmul.f32 %v1782, %v1831
        %v1896 = vmul.f32 %v1784, %v1831
        %v1897 = vmul.f32 %v1782, %v1832
        %v1898 = vmul.f32 %v1784, %v1832
        %v1899 = vmul.f32 %v1782, %v1833
        %v1900 = vmul.f32 %v1784, %v1833
        %v1901 = vmul.f32 %v1782, %v1834
        %v1902 = vmul.f32 %v1784, %v1834
        %v1903 = vmul.f32 %v1782, %v1835
        %v1904 = vmul.f32 %v1784, %v1835
        %v1905 = vmul.f32 %v1782, %v1836
        %v1906 = vmul.f32 %v1784, %v1836
        %v1907 = vmul.f32 %v1782, %v1837
        %v1908 = vmul.f32 %v1784, %v1837
        %v1909 = vmul.f32 %v1782, %v1838
        %v1910 = vmul.f32 %v1784, %v1838
        %v1911 = vpack.c.bf16 %v1847, %v1847
        %v1912 = vpack.c.bf16 %v1848, %v1848
        %v1913 = vpack.c.bf16 %v1849, %v1849
        %v1914 = vpack.c.bf16 %v1850, %v1850
        %v1915 = vpack.c.bf16 %v1851, %v1851
        %v1916 = vpack.c.bf16 %v1852, %v1852
        %v1917 = vpack.c.bf16 %v1853, %v1853
        %v1918 = vpack.c.bf16 %v1854, %v1854
        %v1919 = vpack.c.bf16 %v1855, %v1855
        %v1920 = vpack.c.bf16 %v1856, %v1856
        %v1921 = vpack.c.bf16 %v1857, %v1857
        %v1922 = vpack.c.bf16 %v1858, %v1858
        %v1923 = vpack.c.bf16 %v1859, %v1859
        %v1924 = vpack.c.bf16 %v1860, %v1860
        %v1925 = vpack.c.bf16 %v1861, %v1861
        %v1926 = vpack.c.bf16 %v1862, %v1862
        %v1927 = vpack.c.bf16 %v1863, %v1863
        %v1928 = vpack.c.bf16 %v1864, %v1864
        %v1929 = vpack.c.bf16 %v1865, %v1865
        %v1930 = vpack.c.bf16 %v1866, %v1866
        %v1931 = vpack.c.bf16 %v1867, %v1867
        %v1932 = vpack.c.bf16 %v1868, %v1868
        %v1933 = vpack.c.bf16 %v1869, %v1869
        %v1934 = vpack.c.bf16 %v1870, %v1870
        %v1935 = vpack.c.bf16 %v1871, %v1871
        %v1936 = vpack.c.bf16 %v1872, %v1872
        %v1937 = vpack.c.bf16 %v1873, %v1873
        %v1938 = vpack.c.bf16 %v1874, %v1874
        %v1939 = vpack.c.bf16 %v1875, %v1875
        %v1940 = vpack.c.bf16 %v1876, %v1876
        %v1941 = vpack.c.bf16 %v1877, %v1877
        %v1942 = vpack.c.bf16 %v1878, %v1878
        %v1943 = vpack.c.bf16 %v1879, %v1879
        %v1944 = vpack.c.bf16 %v1880, %v1880
        %v1945 = vpack.c.bf16 %v1881, %v1881
        %v1946 = vpack.c.bf16 %v1882, %v1882
        %v1947 = vpack.c.bf16 %v1883, %v1883
        %v1948 = vpack.c.bf16 %v1884, %v1884
        %v1949 = vpack.c.bf16 %v1885, %v1885
        %v1950 = vpack.c.bf16 %v1886, %v1886
        %v1951 = vpack.c.bf16 %v1887, %v1887
        %v1952 = vpack.c.bf16 %v1888, %v1888
        %v1953 = vpack.c.bf16 %v1889, %v1889
        %v1954 = vpack.c.bf16 %v1890, %v1890
        %v1955 = vpack.c.bf16 %v1891, %v1891
        %v1956 = vpack.c.bf16 %v1892, %v1892
        %v1957 = vpack.c.bf16 %v1893, %v1893
        %v1958 = vpack.c.bf16 %v1894, %v1894
        %v1959 = vpack.c.bf16 %v1895, %v1895
        %v1960 = vpack.c.bf16 %v1896, %v1896
        %v1961 = vpack.c.bf16 %v1897, %v1897
        %v1962 = vpack.c.bf16 %v1898, %v1898
        %v1963 = vpack.c.bf16 %v1899, %v1899
        %v1964 = vpack.c.bf16 %v1900, %v1900
        %v1965 = vpack.c.bf16 %v1901, %v1901
        %v1966 = vpack.c.bf16 %v1902, %v1902
        %v1967 = vpack.c.bf16 %v1903, %v1903
        %v1968 = vpack.c.bf16 %v1904, %v1904
        %v1969 = vpack.c.bf16 %v1905, %v1905
        %v1970 = vpack.c.bf16 %v1906, %v1906
        %v1971 = vpack.c.bf16 %v1907, %v1907
        %v1972 = vpack.c.bf16 %v1908, %v1908
        %v1973 = vpack.c.bf16 %v1909, %v1909
        %v1974 = vpack.c.bf16 %v1910, %v1910
        %v1975 = vmul.f32 %v1796, %v1831
        %v1976 = vmul.f32 %v1798, %v1831
        %v1977 = vmul.f32 %v1796, %v1832
        %v1978 = vmul.f32 %v1798, %v1832
        %v1979 = vmul.f32 %v1796, %v1833
        %v1980 = vmul.f32 %v1798, %v1833
        %v1981 = vmul.f32 %v1796, %v1834
        %v1982 = vmul.f32 %v1798, %v1834
        %v1983 = vmul.f32 %v1796, %v1835
        %v1984 = vmul.f32 %v1798, %v1835
        %v1985 = vmul.f32 %v1796, %v1836
        %v1986 = vmul.f32 %v1798, %v1836
        %v1987 = vmul.f32 %v1796, %v1837
        %v1988 = vmul.f32 %v1798, %v1837
        %v1989 = vmul.f32 %v1796, %v1838
        %v1990 = vmul.f32 %v1798, %v1838
        %v1991 = vmul.f32 %v1801, %v1831
        %v1992 = vmul.f32 %v1803, %v1831
        %v1993 = vmul.f32 %v1801, %v1832
        %v1994 = vmul.f32 %v1803, %v1832
        %v1995 = vmul.f32 %v1801, %v1833
        %v1996 = vmul.f32 %v1803, %v1833
        %v1997 = vmul.f32 %v1801, %v1834
        %v1998 = vmul.f32 %v1803, %v1834
        %v1999 = vmul.f32 %v1801, %v1835
        %v2000 = vmul.f32 %v1803, %v1835
        %v2001 = vmul.f32 %v1801, %v1836
        %v2002 = vmul.f32 %v1803, %v1836
        %v2003 = vmul.f32 %v1801, %v1837
        %v2004 = vmul.f32 %v1803, %v1837
        %v2005 = vmul.f32 %v1801, %v1838
        %v2006 = vmul.f32 %v1803, %v1838
        %v2007 = vmul.f32 %v1806, %v1831
        %v2008 = vmul.f32 %v1808, %v1831
        %v2009 = vmul.f32 %v1806, %v1832
        %v2010 = vmul.f32 %v1808, %v1832
        %v2011 = vmul.f32 %v1806, %v1833
        %v2012 = vmul.f32 %v1808, %v1833
        %v2013 = vmul.f32 %v1806, %v1834
        %v2014 = vmul.f32 %v1808, %v1834
        %v2015 = vmul.f32 %v1806, %v1835
        %v2016 = vmul.f32 %v1808, %v1835
        %v2017 = vmul.f32 %v1806, %v1836
        %v2018 = vmul.f32 %v1808, %v1836
        %v2019 = vmul.f32 %v1806, %v1837
        %v2020 = vmul.f32 %v1808, %v1837
        %v2021 = vmul.f32 %v1806, %v1838
        %v2022 = vmul.f32 %v1808, %v1838
        %v2023 = vmul.f32 %v1811, %v1831
        %v2024 = vmul.f32 %v1813, %v1831
        %v2025 = vmul.f32 %v1811, %v1832
        %v2026 = vmul.f32 %v1813, %v1832
        %v2027 = vmul.f32 %v1811, %v1833
        %v2028 = vmul.f32 %v1813, %v1833
        %v2029 = vmul.f32 %v1811, %v1834
        %v2030 = vmul.f32 %v1813, %v1834
        %v2031 = vmul.f32 %v1811, %v1835
        %v2032 = vmul.f32 %v1813, %v1835
        %v2033 = vmul.f32 %v1811, %v1836
        %v2034 = vmul.f32 %v1813, %v1836
        %v2035 = vmul.f32 %v1811, %v1837
        %v2036 = vmul.f32 %v1813, %v1837
        %v2037 = vmul.f32 %v1811, %v1838
        %v2038 = vmul.f32 %v1813, %v1838
        %v2039 = vpack.c.bf16 %v1975, %v1975
        %v2040 = vpack.c.bf16 %v1976, %v1976
        %v2041 = vpack.c.bf16 %v1977, %v1977
        %v2042 = vpack.c.bf16 %v1978, %v1978
        %v2043 = vpack.c.bf16 %v1979, %v1979
        %v2044 = vpack.c.bf16 %v1980, %v1980
        %v2045 = vpack.c.bf16 %v1981, %v1981
        %v2046 = vpack.c.bf16 %v1982, %v1982
        %v2047 = vpack.c.bf16 %v1983, %v1983
        %v2048 = vpack.c.bf16 %v1984, %v1984
        %v2049 = vpack.c.bf16 %v1985, %v1985
        %v2050 = vpack.c.bf16 %v1986, %v1986
        %v2051 = vpack.c.bf16 %v1987, %v1987
        %v2052 = vpack.c.bf16 %v1988, %v1988
        %v2053 = vpack.c.bf16 %v1989, %v1989
        %v2054 = vpack.c.bf16 %v1990, %v1990
        %v2055 = vpack.c.bf16 %v1991, %v1991
        %v2056 = vpack.c.bf16 %v1992, %v1992
        %v2057 = vpack.c.bf16 %v1993, %v1993
        %v2058 = vpack.c.bf16 %v1994, %v1994
        %v2059 = vpack.c.bf16 %v1995, %v1995
        %v2060 = vpack.c.bf16 %v1996, %v1996
        %v2061 = vpack.c.bf16 %v1997, %v1997
        %v2062 = vpack.c.bf16 %v1998, %v1998
        %v2063 = vpack.c.bf16 %v1999, %v1999
        %v2064 = vpack.c.bf16 %v2000, %v2000
        %v2065 = vpack.c.bf16 %v2001, %v2001
        %v2066 = vpack.c.bf16 %v2002, %v2002
        %v2067 = vpack.c.bf16 %v2003, %v2003
        %v2068 = vpack.c.bf16 %v2004, %v2004
        %v2069 = vpack.c.bf16 %v2005, %v2005
        %v2070 = vpack.c.bf16 %v2006, %v2006
        %v2071 = vpack.c.bf16 %v2007, %v2007
        %v2072 = vpack.c.bf16 %v2008, %v2008
        %v2073 = vpack.c.bf16 %v2009, %v2009
        %v2074 = vpack.c.bf16 %v2010, %v2010
        %v2075 = vpack.c.bf16 %v2011, %v2011
        %v2076 = vpack.c.bf16 %v2012, %v2012
        %v2077 = vpack.c.bf16 %v2013, %v2013
        %v2078 = vpack.c.bf16 %v2014, %v2014
        %v2079 = vpack.c.bf16 %v2015, %v2015
        %v2080 = vpack.c.bf16 %v2016, %v2016
        %v2081 = vpack.c.bf16 %v2017, %v2017
        %v2082 = vpack.c.bf16 %v2018, %v2018
        %v2083 = vpack.c.bf16 %v2019, %v2019
        %v2084 = vpack.c.bf16 %v2020, %v2020
        %v2085 = vpack.c.bf16 %v2021, %v2021
        %v2086 = vpack.c.bf16 %v2022, %v2022
        %v2087 = vpack.c.bf16 %v2023, %v2023
        %v2088 = vpack.c.bf16 %v2024, %v2024
        %v2089 = vpack.c.bf16 %v2025, %v2025
        %v2090 = vpack.c.bf16 %v2026, %v2026
        %v2091 = vpack.c.bf16 %v2027, %v2027
        %v2092 = vpack.c.bf16 %v2028, %v2028
        %v2093 = vpack.c.bf16 %v2029, %v2029
        %v2094 = vpack.c.bf16 %v2030, %v2030
        %v2095 = vpack.c.bf16 %v2031, %v2031
        %v2096 = vpack.c.bf16 %v2032, %v2032
        %v2097 = vpack.c.bf16 %v2033, %v2033
        %v2098 = vpack.c.bf16 %v2034, %v2034
        %v2099 = vpack.c.bf16 %v2035, %v2035
        %v2100 = vpack.c.bf16 %v2036, %v2036
        %v2101 = vpack.c.bf16 %v2037, %v2037
        %v2102 = vpack.c.bf16 %v2038, %v2038
        %v2103 = vpack.c.bf16 %v1738, %v1738
        %v2104 = vpack.c.bf16 %v1740, %v1740
        %v2105 = vpack.c.bf16 %v1743, %v1743
        %v2106 = vpack.c.bf16 %v1745, %v1745
        %v2107 = vpack.c.bf16 %v1748, %v1748
        %v2108 = vpack.c.bf16 %v1750, %v1750
        %v2109 = vpack.c.bf16 %v1753, %v1753
        %v2110 = vpack.c.bf16 %v1755, %v1755
        %v2113 = vunpack.c.l.b16 %v2103
        %v2114 = vunpack.c.l.b16 %v2104
        %v2115 = vpack.c.b16 %v2114, %v2113
        %v2133 = vunpack.c.l.b16 %v1911
        %v2134 = vunpack.c.l.b16 %v1912
        %v2135 = vunpack.c.l.b16 %v1913
        %v2136 = vunpack.c.l.b16 %v1914
        %v2137 = vunpack.c.l.b16 %v1915
        %v2138 = vunpack.c.l.b16 %v1916
        %v2139 = vunpack.c.l.b16 %v1917
        %v2140 = vunpack.c.l.b16 %v1918
        %v2141 = vunpack.c.l.b16 %v1919
        %v2142 = vunpack.c.l.b16 %v1920
        %v2143 = vunpack.c.l.b16 %v1921
        %v2144 = vunpack.c.l.b16 %v1922
        %v2145 = vunpack.c.l.b16 %v1923
        %v2146 = vunpack.c.l.b16 %v1924
        %v2147 = vunpack.c.l.b16 %v1925
        %v2148 = vunpack.c.l.b16 %v1926
        %v2149 = vpack.c.b16 %v2134, %v2133
        %v2150 = vpack.c.b16 %v2136, %v2135
        %v2151 = vpack.c.b16 %v2138, %v2137
        %v2152 = vpack.c.b16 %v2140, %v2139
        %v2153 = vpack.c.b16 %v2142, %v2141
        %v2154 = vpack.c.b16 %v2144, %v2143
        %v2155 = vpack.c.b16 %v2146, %v2145
        %v2156 = vpack.c.b16 %v2148, %v2147
        %2165 = vmatpush.bf16.xpose.msra.mxu0 %v2156
        %2166 = vmatpush.bf16.xpose.msra.mxu0 %v2155
        %2167 = vmatpush.bf16.xpose.msra.mxu0 %v2154
        %2168 = vmatpush.bf16.xpose.msra.mxu0 %v2153
        %2169 = vmatpush.bf16.xpose.msra.mxu0 %v2152
        %2170 = vmatpush.bf16.xpose.msra.mxu0 %v2151
        %2171 = vmatpush.bf16.xpose.msra.mxu0 %v2150
        %2172 = vmatpush.bf16.xpose.msra.mxu0 %v2149
        %2173 = vmatmul.bf16.gmra.mxu0 %v2115
        %v2174 = vpop.f32.mrf.mxu0
        %v2175 = vadd.f32 0.0, %v2174
        %v2176 = vpop.f32.mrf.mxu0
        %v2177 = vadd.f32 0.0, %v2176
        %2178 = vdwg.mxu0
        %v2181 = vunpack.c.l.b16 %v2105
        %v2182 = vunpack.c.l.b16 %v2106
        %v2183 = vpack.c.b16 %v2182, %v2181
        %v2201 = vunpack.c.l.b16 %v1927
        %v2202 = vunpack.c.l.b16 %v1928
        %v2203 = vunpack.c.l.b16 %v1929
        %v2204 = vunpack.c.l.b16 %v1930
        %v2205 = vunpack.c.l.b16 %v1931
        %v2206 = vunpack.c.l.b16 %v1932
        %v2207 = vunpack.c.l.b16 %v1933
        %v2208 = vunpack.c.l.b16 %v1934
        %v2209 = vunpack.c.l.b16 %v1935
        %v2210 = vunpack.c.l.b16 %v1936
        %v2211 = vunpack.c.l.b16 %v1937
        %v2212 = vunpack.c.l.b16 %v1938
        %v2213 = vunpack.c.l.b16 %v1939
        %v2214 = vunpack.c.l.b16 %v1940
        %v2215 = vunpack.c.l.b16 %v1941
        %v2216 = vunpack.c.l.b16 %v1942
        %v2217 = vpack.c.b16 %v2202, %v2201
        %v2218 = vpack.c.b16 %v2204, %v2203
        %v2219 = vpack.c.b16 %v2206, %v2205
        %v2220 = vpack.c.b16 %v2208, %v2207
        %v2221 = vpack.c.b16 %v2210, %v2209
        %v2222 = vpack.c.b16 %v2212, %v2211
        %v2223 = vpack.c.b16 %v2214, %v2213
        %v2224 = vpack.c.b16 %v2216, %v2215
        %2233 = vmatpush.bf16.xpose.msra.mxu0 %v2224
        %2234 = vmatpush.bf16.xpose.msra.mxu0 %v2223
        %2235 = vmatpush.bf16.xpose.msra.mxu0 %v2222
        %2236 = vmatpush.bf16.xpose.msra.mxu0 %v2221
        %2237 = vmatpush.bf16.xpose.msra.mxu0 %v2220
        %2238 = vmatpush.bf16.xpose.msra.mxu0 %v2219
        %2239 = vmatpush.bf16.xpose.msra.mxu0 %v2218
        %2240 = vmatpush.bf16.xpose.msra.mxu0 %v2217
        %2241 = vmatmul.bf16.gmra.mxu0 %v2183
        %v2242 = vpop.f32.mrf.mxu0
        %v2243 = vadd.f32 0.0, %v2242
        %v2244 = vpop.f32.mrf.mxu0
        %v2245 = vadd.f32 0.0, %v2244
        %2246 = vdwg.mxu0
        %v2249 = vunpack.c.l.b16 %v2107
        %v2250 = vunpack.c.l.b16 %v2108
        %v2251 = vpack.c.b16 %v2250, %v2249
        %v2269 = vunpack.c.l.b16 %v1943
        %v2270 = vunpack.c.l.b16 %v1944
        %v2271 = vunpack.c.l.b16 %v1945
        %v2272 = vunpack.c.l.b16 %v1946
        %v2273 = vunpack.c.l.b16 %v1947
        %v2274 = vunpack.c.l.b16 %v1948
        %v2275 = vunpack.c.l.b16 %v1949
        %v2276 = vunpack.c.l.b16 %v1950
        %v2277 = vunpack.c.l.b16 %v1951
        %v2278 = vunpack.c.l.b16 %v1952
        %v2279 = vunpack.c.l.b16 %v1953
        %v2280 = vunpack.c.l.b16 %v1954
        %v2281 = vunpack.c.l.b16 %v1955
        %v2282 = vunpack.c.l.b16 %v1956
        %v2283 = vunpack.c.l.b16 %v1957
        %v2284 = vunpack.c.l.b16 %v1958
        %v2285 = vpack.c.b16 %v2270, %v2269
        %v2286 = vpack.c.b16 %v2272, %v2271
        %v2287 = vpack.c.b16 %v2274, %v2273
        %v2288 = vpack.c.b16 %v2276, %v2275
        %v2289 = vpack.c.b16 %v2278, %v2277
        %v2290 = vpack.c.b16 %v2280, %v2279
        %v2291 = vpack.c.b16 %v2282, %v2281
        %v2292 = vpack.c.b16 %v2284, %v2283
        %2301 = vmatpush.bf16.xpose.msra.mxu0 %v2292
        %2302 = vmatpush.bf16.xpose.msra.mxu0 %v2291
        %2303 = vmatpush.bf16.xpose.msra.mxu0 %v2290
        %2304 = vmatpush.bf16.xpose.msra.mxu0 %v2289
        %2305 = vmatpush.bf16.xpose.msra.mxu0 %v2288
        %2306 = vmatpush.bf16.xpose.msra.mxu0 %v2287
        %2307 = vmatpush.bf16.xpose.msra.mxu0 %v2286
        %2308 = vmatpush.bf16.xpose.msra.mxu0 %v2285
        %2309 = vmatmul.bf16.gmra.mxu0 %v2251
        %v2310 = vpop.f32.mrf.mxu0
        %v2311 = vadd.f32 0.0, %v2310
        %v2312 = vpop.f32.mrf.mxu0
        %v2313 = vadd.f32 0.0, %v2312
        %2314 = vdwg.mxu0
        %v2317 = vunpack.c.l.b16 %v2109
        %v2318 = vunpack.c.l.b16 %v2110
        %v2319 = vpack.c.b16 %v2318, %v2317
        %v2337 = vunpack.c.l.b16 %v1959
        %v2338 = vunpack.c.l.b16 %v1960
        %v2339 = vunpack.c.l.b16 %v1961
        %v2340 = vunpack.c.l.b16 %v1962
        %v2341 = vunpack.c.l.b16 %v1963
        %v2342 = vunpack.c.l.b16 %v1964
        %v2343 = vunpack.c.l.b16 %v1965
        %v2344 = vunpack.c.l.b16 %v1966
        %v2345 = vunpack.c.l.b16 %v1967
        %v2346 = vunpack.c.l.b16 %v1968
        %v2347 = vunpack.c.l.b16 %v1969
        %v2348 = vunpack.c.l.b16 %v1970
        %v2349 = vunpack.c.l.b16 %v1971
        %v2350 = vunpack.c.l.b16 %v1972
        %v2351 = vunpack.c.l.b16 %v1973
        %v2352 = vunpack.c.l.b16 %v1974
        %v2353 = vpack.c.b16 %v2338, %v2337
        %v2354 = vpack.c.b16 %v2340, %v2339
        %v2355 = vpack.c.b16 %v2342, %v2341
        %v2356 = vpack.c.b16 %v2344, %v2343
        %v2357 = vpack.c.b16 %v2346, %v2345
        %v2358 = vpack.c.b16 %v2348, %v2347
        %v2359 = vpack.c.b16 %v2350, %v2349
        %v2360 = vpack.c.b16 %v2352, %v2351
        %2369 = vmatpush.bf16.xpose.msra.mxu0 %v2360
        %2370 = vmatpush.bf16.xpose.msra.mxu0 %v2359
        %2371 = vmatpush.bf16.xpose.msra.mxu0 %v2358
        %2372 = vmatpush.bf16.xpose.msra.mxu0 %v2357
        %2373 = vmatpush.bf16.xpose.msra.mxu0 %v2356
        %2374 = vmatpush.bf16.xpose.msra.mxu0 %v2355
        %2375 = vmatpush.bf16.xpose.msra.mxu0 %v2354
        %2376 = vmatpush.bf16.xpose.msra.mxu0 %v2353
        %2377 = vmatmul.bf16.gmra.mxu0 %v2319
        %v2378 = vpop.f32.mrf.mxu0
        %v2379 = vadd.f32 0.0, %v2378
        %v2380 = vpop.f32.mrf.mxu0
        %v2381 = vadd.f32 0.0, %v2380
        %2382 = vdwg.mxu0
        %2383 = vmax.xlane.f32.xlu0 %v2175
        %v2384 = vpop.xlane.xlu0 %2383
        %2385 = vmax.xlane.f32.xlu0 %v2177
        %v2386 = vpop.xlane.xlu0 %2385
        %2387 = vmax.xlane.f32.xlu0 %v2243
        %v2388 = vpop.xlane.xlu0 %2387
        %2389 = vmax.xlane.f32.xlu0 %v2245
        %v2390 = vpop.xlane.xlu0 %2389
        %2391 = vmax.xlane.f32.xlu0 %v2311
        %v2392 = vpop.xlane.xlu0 %2391
        %2393 = vmax.xlane.f32.xlu0 %v2313
        %v2394 = vpop.xlane.xlu0 %2393
        %2395 = vmax.xlane.f32.xlu0 %v2379
        %v2396 = vpop.xlane.xlu0 %2395
        %2397 = vmax.xlane.f32.xlu0 %v2381
        %v2398 = vpop.xlane.xlu0 %2397
        %v2399 = vsub.f32 %v2175, %v2384
        %v2400 = vsub.f32 %v2177, %v2386
        %v2401 = vsub.f32 %v2243, %v2388
        %v2402 = vsub.f32 %v2245, %v2390
        %v2403 = vsub.f32 %v2311, %v2392
        %v2404 = vsub.f32 %v2313, %v2394
        %v2405 = vsub.f32 %v2379, %v2396
        %v2406 = vsub.f32 %v2381, %v2398
        %v2407 = vmul.f32 %v2399, 1.442695
        %v2408 = vpow.pop %v2407
        %v2409 = vmul.f32 %v2400, 1.442695
        %v2410 = vpow.pop %v2409
        %v2411 = vmul.f32 %v2401, 1.442695
        %v2412 = vpow.pop %v2411
        %v2413 = vmul.f32 %v2402, 1.442695
        %v2414 = vpow.pop %v2413
        %v2415 = vmul.f32 %v2403, 1.442695
        %v2416 = vpow.pop %v2415
        %v2417 = vmul.f32 %v2404, 1.442695
        %v2418 = vpow.pop %v2417
        %v2419 = vmul.f32 %v2405, 1.442695
        %v2420 = vpow.pop %v2419
        %v2421 = vmul.f32 %v2406, 1.442695
        %v2422 = vpow.pop %v2421
        %v2423 = vld [vmem:[#allocation9] sm:$0xff]
        %v2424 = vld [vmem:[#allocation9 + $0x8] sm:$0xff]
        %v2425 = vld [vmem:[#allocation9 + $0x10] sm:$0xff]
        %v2426 = vld [vmem:[#allocation9 + $0x18] sm:$0xff]
        %v2427 = vld [vmem:[#allocation9 + $0x20] sm:$0xff]
        %v2428 = vld [vmem:[#allocation9 + $0x28] sm:$0xff]
        %v2429 = vld [vmem:[#allocation9 + $0x30] sm:$0xff]
        %v2430 = vld [vmem:[#allocation9 + $0x38] sm:$0xff]
        %v2431 = vld [vmem:[#allocation9 + $0x40] sm:$0xff]
        %v2432 = vld [vmem:[#allocation9 + $0x48] sm:$0xff]
        %v2433 = vld [vmem:[#allocation9 + $0x50] sm:$0xff]
        %v2434 = vld [vmem:[#allocation9 + $0x58] sm:$0xff]
        %v2435 = vld [vmem:[#allocation9 + $0x60] sm:$0xff]
        %v2436 = vld [vmem:[#allocation9 + $0x68] sm:$0xff]
        %v2437 = vld [vmem:[#allocation9 + $0x70] sm:$0xff]
        %v2438 = vld [vmem:[#allocation9 + $0x78] sm:$0xff]
        %2439 = vmatpush.msra.mxu0 %v2438
        %2440 = vmatpush.msra.mxu0 %v2437
        %2441 = vmatpush.msra.mxu0 %v2436
        %2442 = vmatpush.msra.mxu0 %v2435
        %2443 = vmatpush.msra.mxu0 %v2434
        %2444 = vmatpush.msra.mxu0 %v2433
        %2445 = vmatpush.msra.mxu0 %v2432
        %2446 = vmatpush.msra.mxu0 %v2431
        %2447 = vmatpush.msra.mxu0 %v2430
        %2448 = vmatpush.msra.mxu0 %v2429
        %2449 = vmatpush.msra.mxu0 %v2428
        %2450 = vmatpush.msra.mxu0 %v2427
        %2451 = vmatpush.msra.mxu0 %v2426
        %2452 = vmatpush.msra.mxu0 %v2425
        %2453 = vmatpush.msra.mxu0 %v2424
        %2454 = vmatpush.msra.mxu0 %v2423
        %2455 = vmatmul.f32.gmra.mxu0 %v2408
        %v2456 = vpop.f32.mrf.mxu0
        %v2457 = vadd.f32 0.0, %v2456
        %2458 = vmatmul.f32.gmra.mxu0 %v2410
        %v2459 = vpop.f32.mrf.mxu0
        %v2460 = vadd.f32 0.0, %v2459
        %2461 = vmatmul.f32.gmra.mxu0 %v2412
        %v2462 = vpop.f32.mrf.mxu0
        %v2463 = vadd.f32 0.0, %v2462
        %2464 = vmatmul.f32.gmra.mxu0 %v2414
        %v2465 = vpop.f32.mrf.mxu0
        %v2466 = vadd.f32 0.0, %v2465
        %2467 = vmatmul.f32.gmra.mxu0 %v2416
        %v2468 = vpop.f32.mrf.mxu0
        %v2469 = vadd.f32 0.0, %v2468
        %2470 = vmatmul.f32.gmra.mxu0 %v2418
        %v2471 = vpop.f32.mrf.mxu0
        %v2472 = vadd.f32 0.0, %v2471
        %2473 = vmatmul.f32.gmra.mxu0 %v2420
        %v2474 = vpop.f32.mrf.mxu0
        %v2475 = vadd.f32 0.0, %v2474
        %2476 = vmatmul.f32.gmra.mxu0 %v2422
        %v2477 = vpop.f32.mrf.mxu0
        %v2478 = vadd.f32 0.0, %v2477
        %2479 = vdwg.mxu0
        %v2480 = vrcp.pop %v2457
        %v2481 = vrcp.pop %v2460
        %v2482 = vrcp.pop %v2463
        %v2483 = vrcp.pop %v2466
        %v2484 = vrcp.pop %v2469
        %v2485 = vrcp.pop %v2472
        %v2486 = vrcp.pop %v2475
        %v2487 = vrcp.pop %v2478
        %v2488 = vmul.f32 %v2408, %v2480
        %v2489 = vmul.f32 %v2410, %v2481
        %v2490 = vmul.f32 %v2412, %v2482
        %v2491 = vmul.f32 %v2414, %v2483
        %v2492 = vmul.f32 %v2416, %v2484
        %v2493 = vmul.f32 %v2418, %v2485
        %v2494 = vmul.f32 %v2420, %v2486
        %v2495 = vmul.f32 %v2422, %v2487
        %v2496 = vpack.c.bf16 %v2488, %v2488
        %v2497 = vpack.c.bf16 %v2489, %v2489
        %v2498 = vpack.c.bf16 %v2490, %v2490
        %v2499 = vpack.c.bf16 %v2491, %v2491
        %v2500 = vpack.c.bf16 %v2492, %v2492
        %v2501 = vpack.c.bf16 %v2493, %v2493
        %v2502 = vpack.c.bf16 %v2494, %v2494
        %v2503 = vpack.c.bf16 %v2495, %v2495
        %v2506 = vunpack.c.l.b16 %v2496
        %v2507 = vunpack.c.l.b16 %v2497
        %v2508 = vpack.c.b16 %v2507, %v2506
        %v2526 = vunpack.c.l.b16 %v2039
        %v2527 = vunpack.c.l.b16 %v2040
        %v2528 = vunpack.c.l.b16 %v2041
        %v2529 = vunpack.c.l.b16 %v2042
        %v2530 = vunpack.c.l.b16 %v2043
        %v2531 = vunpack.c.l.b16 %v2044
        %v2532 = vunpack.c.l.b16 %v2045
        %v2533 = vunpack.c.l.b16 %v2046
        %v2534 = vunpack.c.l.b16 %v2047
        %v2535 = vunpack.c.l.b16 %v2048
        %v2536 = vunpack.c.l.b16 %v2049
        %v2537 = vunpack.c.l.b16 %v2050
        %v2538 = vunpack.c.l.b16 %v2051
        %v2539 = vunpack.c.l.b16 %v2052
        %v2540 = vunpack.c.l.b16 %v2053
        %v2541 = vunpack.c.l.b16 %v2054
        %v2542 = vpack.c.b16 %v2527, %v2526
        %v2543 = vpack.c.b16 %v2529, %v2528
        %v2544 = vpack.c.b16 %v2531, %v2530
        %v2545 = vpack.c.b16 %v2533, %v2532
        %v2546 = vpack.c.b16 %v2535, %v2534
        %v2547 = vpack.c.b16 %v2537, %v2536
        %v2548 = vpack.c.b16 %v2539, %v2538
        %v2549 = vpack.c.b16 %v2541, %v2540
        %2558 = vmatpush.bf16.msra.mxu0 %v2549
        %2559 = vmatpush.bf16.msra.mxu0 %v2548
        %2560 = vmatpush.bf16.msra.mxu0 %v2547
        %2561 = vmatpush.bf16.msra.mxu0 %v2546
        %2562 = vmatpush.bf16.msra.mxu0 %v2545
        %2563 = vmatpush.bf16.msra.mxu0 %v2544
        %2564 = vmatpush.bf16.msra.mxu0 %v2543
        %2565 = vmatpush.bf16.msra.mxu0 %v2542
        %2566 = vmatmul.bf16.gmra.mxu0 %v2508
        %v2567 = vpop.f32.mrf.mxu0
        %v2568 = vadd.f32 0.0, %v2567
        %v2569 = vpop.f32.mrf.mxu0
        %v2570 = vadd.f32 0.0, %v2569
        %2571 = vdwg.mxu0
        %v2574 = vunpack.c.l.b16 %v2498
        %v2575 = vunpack.c.l.b16 %v2499
        %v2576 = vpack.c.b16 %v2575, %v2574
        %v2594 = vunpack.c.l.b16 %v2055
        %v2595 = vunpack.c.l.b16 %v2056
        %v2596 = vunpack.c.l.b16 %v2057
        %v2597 = vunpack.c.l.b16 %v2058
        %v2598 = vunpack.c.l.b16 %v2059
        %v2599 = vunpack.c.l.b16 %v2060
        %v2600 = vunpack.c.l.b16 %v2061
        %v2601 = vunpack.c.l.b16 %v2062
        %v2602 = vunpack.c.l.b16 %v2063
        %v2603 = vunpack.c.l.b16 %v2064
        %v2604 = vunpack.c.l.b16 %v2065
        %v2605 = vunpack.c.l.b16 %v2066
        %v2606 = vunpack.c.l.b16 %v2067
        %v2607 = vunpack.c.l.b16 %v2068
        %v2608 = vunpack.c.l.b16 %v2069
        %v2609 = vunpack.c.l.b16 %v2070
        %v2610 = vpack.c.b16 %v2595, %v2594
        %v2611 = vpack.c.b16 %v2597, %v2596
        %v2612 = vpack.c.b16 %v2599, %v2598
        %v2613 = vpack.c.b16 %v2601, %v2600
        %v2614 = vpack.c.b16 %v2603, %v2602
        %v2615 = vpack.c.b16 %v2605, %v2604
        %v2616 = vpack.c.b16 %v2607, %v2606
        %v2617 = vpack.c.b16 %v2609, %v2608
        %2626 = vmatpush.bf16.msra.mxu0 %v2617
        %2627 = vmatpush.bf16.msra.mxu0 %v2616
        %2628 = vmatpush.bf16.msra.mxu0 %v2615
        %2629 = vmatpush.bf16.msra.mxu0 %v2614
        %2630 = vmatpush.bf16.msra.mxu0 %v2613
        %2631 = vmatpush.bf16.msra.mxu0 %v2612
        %2632 = vmatpush.bf16.msra.mxu0 %v2611
        %2633 = vmatpush.bf16.msra.mxu0 %v2610
        %2634 = vmatmul.bf16.gmra.mxu0 %v2576
        %v2635 = vpop.f32.mrf.mxu0
        %v2636 = vadd.f32 0.0, %v2635
        %v2637 = vpop.f32.mrf.mxu0
        %v2638 = vadd.f32 0.0, %v2637
        %2639 = vdwg.mxu0
        %v2642 = vunpack.c.l.b16 %v2500
        %v2643 = vunpack.c.l.b16 %v2501
        %v2644 = vpack.c.b16 %v2643, %v2642
        %v2662 = vunpack.c.l.b16 %v2071
        %v2663 = vunpack.c.l.b16 %v2072
        %v2664 = vunpack.c.l.b16 %v2073
        %v2665 = vunpack.c.l.b16 %v2074
        %v2666 = vunpack.c.l.b16 %v2075
        %v2667 = vunpack.c.l.b16 %v2076
        %v2668 = vunpack.c.l.b16 %v2077
        %v2669 = vunpack.c.l.b16 %v2078
        %v2670 = vunpack.c.l.b16 %v2079
        %v2671 = vunpack.c.l.b16 %v2080
        %v2672 = vunpack.c.l.b16 %v2081
        %v2673 = vunpack.c.l.b16 %v2082
        %v2674 = vunpack.c.l.b16 %v2083
        %v2675 = vunpack.c.l.b16 %v2084
        %v2676 = vunpack.c.l.b16 %v2085
        %v2677 = vunpack.c.l.b16 %v2086
        %v2678 = vpack.c.b16 %v2663, %v2662
        %v2679 = vpack.c.b16 %v2665, %v2664
        %v2680 = vpack.c.b16 %v2667, %v2666
        %v2681 = vpack.c.b16 %v2669, %v2668
        %v2682 = vpack.c.b16 %v2671, %v2670
        %v2683 = vpack.c.b16 %v2673, %v2672
        %v2684 = vpack.c.b16 %v2675, %v2674
        %v2685 = vpack.c.b16 %v2677, %v2676
        %2694 = vmatpush.bf16.msra.mxu0 %v2685
        %2695 = vmatpush.bf16.msra.mxu0 %v2684
        %2696 = vmatpush.bf16.msra.mxu0 %v2683
        %2697 = vmatpush.bf16.msra.mxu0 %v2682
        %2698 = vmatpush.bf16.msra.mxu0 %v2681
        %2699 = vmatpush.bf16.msra.mxu0 %v2680
        %2700 = vmatpush.bf16.msra.mxu0 %v2679
        %2701 = vmatpush.bf16.msra.mxu0 %v2678
        %2702 = vmatmul.bf16.gmra.mxu0 %v2644
        %v2703 = vpop.f32.mrf.mxu0
        %v2704 = vadd.f32 0.0, %v2703
        %v2705 = vpop.f32.mrf.mxu0
        %v2706 = vadd.f32 0.0, %v2705
        %2707 = vdwg.mxu0
        %v2710 = vunpack.c.l.b16 %v2502
        %v2711 = vunpack.c.l.b16 %v2503
        %v2712 = vpack.c.b16 %v2711, %v2710
        %v2730 = vunpack.c.l.b16 %v2087
        %v2731 = vunpack.c.l.b16 %v2088
        %v2732 = vunpack.c.l.b16 %v2089
        %v2733 = vunpack.c.l.b16 %v2090
        %v2734 = vunpack.c.l.b16 %v2091
        %v2735 = vunpack.c.l.b16 %v2092
        %v2736 = vunpack.c.l.b16 %v2093
        %v2737 = vunpack.c.l.b16 %v2094
        %v2738 = vunpack.c.l.b16 %v2095
        %v2739 = vunpack.c.l.b16 %v2096
        %v2740 = vunpack.c.l.b16 %v2097
        %v2741 = vunpack.c.l.b16 %v2098
        %v2742 = vunpack.c.l.b16 %v2099
        %v2743 = vunpack.c.l.b16 %v2100
        %v2744 = vunpack.c.l.b16 %v2101
        %v2745 = vunpack.c.l.b16 %v2102
        %v2746 = vpack.c.b16 %v2731, %v2730
        %v2747 = vpack.c.b16 %v2733, %v2732
        %v2748 = vpack.c.b16 %v2735, %v2734
        %v2749 = vpack.c.b16 %v2737, %v2736
        %v2750 = vpack.c.b16 %v2739, %v2738
        %v2751 = vpack.c.b16 %v2741, %v2740
        %v2752 = vpack.c.b16 %v2743, %v2742
        %v2753 = vpack.c.b16 %v2745, %v2744
        %2762 = vmatpush.bf16.msra.mxu0 %v2753
        %2763 = vmatpush.bf16.msra.mxu0 %v2752
        %2764 = vmatpush.bf16.msra.mxu0 %v2751
        %2765 = vmatpush.bf16.msra.mxu0 %v2750
        %2766 = vmatpush.bf16.msra.mxu0 %v2749
        %2767 = vmatpush.bf16.msra.mxu0 %v2748
        %2768 = vmatpush.bf16.msra.mxu0 %v2747
        %2769 = vmatpush.bf16.msra.mxu0 %v2746
        %2770 = vmatmul.bf16.gmra.mxu0 %v2712
        %v2771 = vpop.f32.mrf.mxu0
        %v2772 = vadd.f32 0.0, %v2771
        %v2773 = vpop.f32.mrf.mxu0
        %v2774 = vadd.f32 0.0, %v2773
        %2775 = vdwg.mxu0
        %v2776 = vpack.c.bf16 %v2570, %v2568
        %v2777 = vpack.c.bf16 %v2638, %v2636
        %v2778 = vpack.c.bf16 %v2706, %v2704
        %v2779 = vpack.c.bf16 %v2774, %v2772
        %v2780 = vld [vmem:[%s975] sm:$0xf]
        %v2781 = vld [vmem:[%s975 + $0x4] sm:$0xf]
        %v2782 = vld [vmem:[%s975 + $0x8] sm:$0xf]
        %v2783 = vld [vmem:[%s975 + $0xc] sm:$0xf]
        %v2784 = vld [vmem:[%s975 + $0x10] sm:$0xf]
        %v2785 = vld [vmem:[%s975 + $0x14] sm:$0xf]
        %v2786 = vld [vmem:[%s975 + $0x18] sm:$0xf]
        %v2787 = vld [vmem:[%s975 + $0x1c] sm:$0xf]
        %v2788 = vld [vmem:[%s975 + $0x20] sm:$0xf]
        %v2789 = vld [vmem:[%s975 + $0x24] sm:$0xf]
        %v2790 = vld [vmem:[%s975 + $0x28] sm:$0xf]
        %v2791 = vld [vmem:[%s975 + $0x2c] sm:$0xf]
        %v2792 = vld [vmem:[%s975 + $0x30] sm:$0xf]
        %v2793 = vld [vmem:[%s975 + $0x34] sm:$0xf]
        %v2794 = vld [vmem:[%s975 + $0x38] sm:$0xf]
        %v2795 = vld [vmem:[%s975 + $0x3c] sm:$0xf]
        %v2796 = vld [vmem:[%s984] sm:$0x1]
        %v2798 = vperm.slane %v2796, 0
        %v2816 = vunpack.c.l.b16 %v2780
        %v2817 = vunpack.c.l.b16 %v2781
        %v2818 = vunpack.c.l.b16 %v2782
        %v2819 = vunpack.c.l.b16 %v2783
        %v2820 = vunpack.c.l.b16 %v2784
        %v2821 = vunpack.c.l.b16 %v2785
        %v2822 = vunpack.c.l.b16 %v2786
        %v2823 = vunpack.c.l.b16 %v2787
        %v2824 = vunpack.c.l.b16 %v2788
        %v2825 = vunpack.c.l.b16 %v2789
        %v2826 = vunpack.c.l.b16 %v2790
        %v2827 = vunpack.c.l.b16 %v2791
        %v2828 = vunpack.c.l.b16 %v2792
        %v2829 = vunpack.c.l.b16 %v2793
        %v2830 = vunpack.c.l.b16 %v2794
        %v2831 = vunpack.c.l.b16 %v2795
        %v2832 = vpack.c.b16 %v2817, %v2816
        %v2833 = vpack.c.b16 %v2819, %v2818
        %v2834 = vpack.c.b16 %v2821, %v2820
        %v2835 = vpack.c.b16 %v2823, %v2822
        %v2836 = vpack.c.b16 %v2825, %v2824
        %v2837 = vpack.c.b16 %v2827, %v2826
        %v2838 = vpack.c.b16 %v2829, %v2828
        %v2839 = vpack.c.b16 %v2831, %v2830
        %2848 = vmatpush.bf16.msra.mxu0 %v2839
        %2849 = vmatpush.bf16.msra.mxu0 %v2838
        %2850 = vmatpush.bf16.msra.mxu0 %v2837
        %2851 = vmatpush.bf16.msra.mxu0 %v2836
        %2852 = vmatpush.bf16.msra.mxu0 %v2835
        %2853 = vmatpush.bf16.msra.mxu0 %v2834
        %2854 = vmatpush.bf16.msra.mxu0 %v2833
        %2855 = vmatpush.bf16.msra.mxu0 %v2832
        %2856 = vmatmul.bf16.gmra.mxu0 %v2776
        %v2857 = vpop.f32.mrf.mxu0
        %v2858 = vadd.f32 %v2798, %v2857
        %v2859 = vpop.f32.mrf.mxu0
        %v2860 = vadd.f32 %v2798, %v2859
        %2861 = vmatmul.bf16.gmra.mxu0 %v2777
        %v2862 = vpop.f32.mrf.mxu0
        %v2863 = vadd.f32 %v2798, %v2862
        %v2864 = vpop.f32.mrf.mxu0
        %v2865 = vadd.f32 %v2798, %v2864
        %2866 = vmatmul.bf16.gmra.mxu0 %v2778
        %v2867 = vpop.f32.mrf.mxu0
        %v2868 = vadd.f32 %v2798, %v2867
        %v2869 = vpop.f32.mrf.mxu0
        %v2870 = vadd.f32 %v2798, %v2869
        %2871 = vmatmul.bf16.gmra.mxu0 %v2779
        %v2872 = vpop.f32.mrf.mxu0
        %v2873 = vadd.f32 %v2798, %v2872
        %v2874 = vpop.f32.mrf.mxu0
        %v2875 = vadd.f32 %v2798, %v2874
        %2876 = vdwg.mxu0
        %v2877 = vadd.f32 %v1357, %v2858
        %v2878 = vadd.f32 %v1358, %v2860
        %v2879 = vadd.f32 %v1359, %v2863
        %v2880 = vadd.f32 %v1360, %v2865
        %v2881 = vadd.f32 %v1361, %v2868
        %v2882 = vadd.f32 %v1362, %v2870
        %v2883 = vadd.f32 %v1363, %v2873
        %v2884 = vadd.f32 %v1364, %v2875
        %v2885 = vld [vmem:[%s993] sm:$0x1]
        %v2886 = vld [vmem:[%s1127] sm:$0x1]
        %2887 = vadd.xlane.f32.xlu0 %v2877
        %v2888 = vpop.xlane.xlu0 %2887
        %2889 = vadd.xlane.f32.xlu0 %v2878
        %v2890 = vpop.xlane.xlu0 %2889
        %2891 = vadd.xlane.f32.xlu0 %v2879
        %v2892 = vpop.xlane.xlu0 %2891
        %2893 = vadd.xlane.f32.xlu0 %v2880
        %v2894 = vpop.xlane.xlu0 %2893
        %2895 = vadd.xlane.f32.xlu0 %v2881
        %v2896 = vpop.xlane.xlu0 %2895
        %2897 = vadd.xlane.f32.xlu0 %v2882
        %v2898 = vpop.xlane.xlu0 %2897
        %2899 = vadd.xlane.f32.xlu0 %v2883
        %v2900 = vpop.xlane.xlu0 %2899
        %2901 = vadd.xlane.f32.xlu0 %v2884
        %v2902 = vpop.xlane.xlu0 %2901
        %v2903 = vmul.f32 %v2888, %v1389
        %v2904 = vmul.f32 %v2890, %v1389
        %v2905 = vmul.f32 %v2892, %v1389
        %v2906 = vmul.f32 %v2894, %v1389
        %v2907 = vmul.f32 %v2896, %v1389
        %v2908 = vmul.f32 %v2898, %v1389
        %v2909 = vmul.f32 %v2900, %v1389
        %v2910 = vmul.f32 %v2902, %v1389
        %v2911 = vsub.f32 %v2877, %v2903
        %v2912 = vsub.f32 %v2878, %v2904
        %v2913 = vsub.f32 %v2879, %v2905
        %v2914 = vsub.f32 %v2880, %v2906
        %v2915 = vsub.f32 %v2881, %v2907
        %v2916 = vsub.f32 %v2882, %v2908
        %v2917 = vsub.f32 %v2883, %v2909
        %v2918 = vsub.f32 %v2884, %v2910
        %v2919 = vmul.f32 %v2911, %v2911
        %v2920 = vmul.f32 %v2912, %v2912
        %v2921 = vmul.f32 %v2913, %v2913
        %v2922 = vmul.f32 %v2914, %v2914
        %v2923 = vmul.f32 %v2915, %v2915
        %v2924 = vmul.f32 %v2916, %v2916
        %v2925 = vmul.f32 %v2917, %v2917
        %v2926 = vmul.f32 %v2918, %v2918
        %2927 = vadd.xlane.f32.xlu0 %v2919
        %v2928 = vpop.xlane.xlu0 %2927
        %2929 = vadd.xlane.f32.xlu0 %v2920
        %v2930 = vpop.xlane.xlu0 %2929
        %2931 = vadd.xlane.f32.xlu0 %v2921
        %v2932 = vpop.xlane.xlu0 %2931
        %2933 = vadd.xlane.f32.xlu0 %v2922
        %v2934 = vpop.xlane.xlu0 %2933
        %2935 = vadd.xlane.f32.xlu0 %v2923
        %v2936 = vpop.xlane.xlu0 %2935
        %2937 = vadd.xlane.f32.xlu0 %v2924
        %v2938 = vpop.xlane.xlu0 %2937
        %2939 = vadd.xlane.f32.xlu0 %v2925
        %v2940 = vpop.xlane.xlu0 %2939
        %2941 = vadd.xlane.f32.xlu0 %v2926
        %v2942 = vpop.xlane.xlu0 %2941
        %v2943 = vmul.f32 %v2928, %v1389
        %v2944 = vmul.f32 %v2930, %v1389
        %v2945 = vmul.f32 %v2932, %v1389
        %v2946 = vmul.f32 %v2934, %v1389
        %v2947 = vmul.f32 %v2936, %v1389
        %v2948 = vmul.f32 %v2938, %v1389
        %v2949 = vmul.f32 %v2940, %v1389
        %v2950 = vmul.f32 %v2942, %v1389
        %v2951 = vadd.f32 %v2943, 1e-05
        %v2952 = vadd.f32 %v2944, 1e-05
        %v2953 = vadd.f32 %v2945, 1e-05
        %v2954 = vadd.f32 %v2946, 1e-05
        %v2955 = vadd.f32 %v2947, 1e-05
        %v2956 = vadd.f32 %v2948, 1e-05
        %v2957 = vadd.f32 %v2949, 1e-05
        %v2958 = vadd.f32 %v2950, 1e-05
        %v2959 = vrsqrt.pop %v2951
        %v2960 = vmul.f32 %v2959, %v2951
        %v2961 = vmul.f32 %v2960, %v2959
        %v2962 = vmul.f32 0.5, %v2961
        %v2963 = vsub.f32 1.5, %v2962
        %v2964 = vmul.f32 %v2959, %v2963
        %vm2965 = vweird.f32 %v2951
        %vm2966 = vweird.f32 %v2959
        %vm2967 = vmor %vm2965, %vm2966
        %v2968 = vsel %vm2967, %v2959, %v2964
        %v2969 = vrsqrt.pop %v2952
        %v2970 = vmul.f32 %v2969, %v2952
        %v2971 = vmul.f32 %v2970, %v2969
        %v2972 = vmul.f32 0.5, %v2971
        %v2973 = vsub.f32 1.5, %v2972
        %v2974 = vmul.f32 %v2969, %v2973
        %vm2975 = vweird.f32 %v2952
        %vm2976 = vweird.f32 %v2969
        %vm2977 = vmor %vm2975, %vm2976
        %v2978 = vsel %vm2977, %v2969, %v2974
        %v2979 = vrsqrt.pop %v2953
        %v2980 = vmul.f32 %v2979, %v2953
        %v2981 = vmul.f32 %v2980, %v2979
        %v2982 = vmul.f32 0.5, %v2981
        %v2983 = vsub.f32 1.5, %v2982
        %v2984 = vmul.f32 %v2979, %v2983
        %vm2985 = vweird.f32 %v2953
        %vm2986 = vweird.f32 %v2979
        %vm2987 = vmor %vm2985, %vm2986
        %v2988 = vsel %vm2987, %v2979, %v2984
        %v2989 = vrsqrt.pop %v2954
        %v2990 = vmul.f32 %v2989, %v2954
        %v2991 = vmul.f32 %v2990, %v2989
        %v2992 = vmul.f32 0.5, %v2991
        %v2993 = vsub.f32 1.5, %v2992
        %v2994 = vmul.f32 %v2989, %v2993
        %vm2995 = vweird.f32 %v2954
        %vm2996 = vweird.f32 %v2989
        %vm2997 = vmor %vm2995, %vm2996
        %v2998 = vsel %vm2997, %v2989, %v2994
        %v2999 = vrsqrt.pop %v2955
        %v3000 = vmul.f32 %v2999, %v2955
        %v3001 = vmul.f32 %v3000, %v2999
        %v3002 = vmul.f32 0.5, %v3001
        %v3003 = vsub.f32 1.5, %v3002
        %v3004 = vmul.f32 %v2999, %v3003
        %vm3005 = vweird.f32 %v2955
        %vm3006 = vweird.f32 %v2999
        %vm3007 = vmor %vm3005, %vm3006
        %v3008 = vsel %vm3007, %v2999, %v3004
        %v3009 = vrsqrt.pop %v2956
        %v3010 = vmul.f32 %v3009, %v2956
        %v3011 = vmul.f32 %v3010, %v3009
        %v3012 = vmul.f32 0.5, %v3011
        %v3013 = vsub.f32 1.5, %v3012
        %v3014 = vmul.f32 %v3009, %v3013
        %vm3015 = vweird.f32 %v2956
        %vm3016 = vweird.f32 %v3009
        %vm3017 = vmor %vm3015, %vm3016
        %v3018 = vsel %vm3017, %v3009, %v3014
        %v3019 = vrsqrt.pop %v2957
        %v3020 = vmul.f32 %v3019, %v2957
        %v3021 = vmul.f32 %v3020, %v3019
        %v3022 = vmul.f32 0.5, %v3021
        %v3023 = vsub.f32 1.5, %v3022
        %v3024 = vmul.f32 %v3019, %v3023
        %vm3025 = vweird.f32 %v2957
        %vm3026 = vweird.f32 %v3019
        %vm3027 = vmor %vm3025, %vm3026
        %v3028 = vsel %vm3027, %v3019, %v3024
        %v3029 = vrsqrt.pop %v2958
        %v3030 = vmul.f32 %v3029, %v2958
        %v3031 = vmul.f32 %v3030, %v3029
        %v3032 = vmul.f32 0.5, %v3031
        %v3033 = vsub.f32 1.5, %v3032
        %v3034 = vmul.f32 %v3029, %v3033
        %vm3035 = vweird.f32 %v2958
        %vm3036 = vweird.f32 %v3029
        %vm3037 = vmor %vm3035, %vm3036
        %v3038 = vsel %vm3037, %v3029, %v3034
        %v3039 = vmul.f32 %v2911, %v2968
        %v3040 = vmul.f32 %v2912, %v2978
        %v3041 = vmul.f32 %v2913, %v2988
        %v3042 = vmul.f32 %v2914, %v2998
        %v3043 = vmul.f32 %v2915, %v3008
        %v3044 = vmul.f32 %v2916, %v3018
        %v3045 = vmul.f32 %v2917, %v3028
        %v3046 = vmul.f32 %v2918, %v3038
        %v3048 = vperm.slane %v2885, 0
        %v3050 = vmul.f32 %v3039, %v3048
        %v3051 = vmul.f32 %v3040, %v3048
        %v3052 = vmul.f32 %v3041, %v3048
        %v3053 = vmul.f32 %v3042, %v3048
        %v3054 = vmul.f32 %v3043, %v3048
        %v3055 = vmul.f32 %v3044, %v3048
        %v3056 = vmul.f32 %v3045, %v3048
        %v3057 = vmul.f32 %v3046, %v3048
        %v3059 = vperm.slane %v2886, 0
        %v3061 = vadd.f32 %v3050, %v3059
        %v3062 = vadd.f32 %v3051, %v3059
        %v3063 = vadd.f32 %v3052, %v3059
        %v3064 = vadd.f32 %v3053, %v3059
        %v3065 = vadd.f32 %v3054, %v3059
        %v3066 = vadd.f32 %v3055, %v3059
        %v3067 = vadd.f32 %v3056, %v3059
        %v3068 = vadd.f32 %v3057, %v3059
        %v3069 = vpack.c.bf16 %v3062, %v3061
        %v3070 = vpack.c.bf16 %v3064, %v3063
        %v3071 = vpack.c.bf16 %v3066, %v3065
        %v3072 = vpack.c.bf16 %v3068, %v3067
        %v3073 = vld [vmem:[%s1003] sm:$0xff]
        %v3074 = vld [vmem:[%s1003 + $0x8] sm:$0xff]
        %v3075 = vld [vmem:[%s1003 + $0x10] sm:$0xff]
        %v3076 = vld [vmem:[%s1003 + $0x18] sm:$0xff]
        %v3077 = vld [vmem:[%s1003 + $0x20] sm:$0xff]
        %v3078 = vld [vmem:[%s1003 + $0x28] sm:$0xff]
        %v3079 = vld [vmem:[%s1003 + $0x30] sm:$0xff]
        %v3080 = vld [vmem:[%s1003 + $0x38] sm:$0xff]
        %v3081 = vld [vmem:[%s1003 + $0x40] sm:$0xff]
        %v3082 = vld [vmem:[%s1003 + $0x48] sm:$0xff]
        %v3083 = vld [vmem:[%s1003 + $0x50] sm:$0xff]
        %v3084 = vld [vmem:[%s1003 + $0x58] sm:$0xff]
        %v3085 = vld [vmem:[%s1003 + $0x60] sm:$0xff]
        %v3086 = vld [vmem:[%s1003 + $0x68] sm:$0xff]
        %v3087 = vld [vmem:[%s1003 + $0x70] sm:$0xff]
        %v3088 = vld [vmem:[%s1003 + $0x78] sm:$0xff]
        %v3089 = vld [vmem:[%s1131] sm:$0x3]
        %v3091 = vperm.slane %v3089, 0
        %v3092 = vperm.slane %v3089, 1
        %v3111 = vunpack.c.l.b16 %v3073
        %v3112 = vunpack.c.h.b16 %v3073
        %v3113 = vunpack.c.l.b16 %v3074
        %v3114 = vunpack.c.h.b16 %v3074
        %v3115 = vunpack.c.l.b16 %v3075
        %v3116 = vunpack.c.h.b16 %v3075
        %v3117 = vunpack.c.l.b16 %v3076
        %v3118 = vunpack.c.h.b16 %v3076
        %v3119 = vunpack.c.l.b16 %v3077
        %v3120 = vunpack.c.h.b16 %v3077
        %v3121 = vunpack.c.l.b16 %v3078
        %v3122 = vunpack.c.h.b16 %v3078
        %v3123 = vunpack.c.l.b16 %v3079
        %v3124 = vunpack.c.h.b16 %v3079
        %v3125 = vunpack.c.l.b16 %v3080
        %v3126 = vunpack.c.h.b16 %v3080
        %v3127 = vunpack.c.l.b16 %v3081
        %v3128 = vunpack.c.h.b16 %v3081
        %v3129 = vunpack.c.l.b16 %v3082
        %v3130 = vunpack.c.h.b16 %v3082
        %v3131 = vunpack.c.l.b16 %v3083
        %v3132 = vunpack.c.h.b16 %v3083
        %v3133 = vunpack.c.l.b16 %v3084
        %v3134 = vunpack.c.h.b16 %v3084
        %v3135 = vunpack.c.l.b16 %v3085
        %v3136 = vunpack.c.h.b16 %v3085
        %v3137 = vunpack.c.l.b16 %v3086
        %v3138 = vunpack.c.h.b16 %v3086
        %v3139 = vunpack.c.l.b16 %v3087
        %v3140 = vunpack.c.h.b16 %v3087
        %v3141 = vunpack.c.l.b16 %v3088
        %v3142 = vunpack.c.h.b16 %v3088
        %v3143 = vpack.c.b16 %v3113, %v3111
        %v3144 = vpack.c.b16 %v3114, %v3112
        %v3145 = vpack.c.b16 %v3117, %v3115
        %v3146 = vpack.c.b16 %v3118, %v3116
        %v3147 = vpack.c.b16 %v3121, %v3119
        %v3148 = vpack.c.b16 %v3122, %v3120
        %v3149 = vpack.c.b16 %v3125, %v3123
        %v3150 = vpack.c.b16 %v3126, %v3124
        %v3151 = vpack.c.b16 %v3129, %v3127
        %v3152 = vpack.c.b16 %v3130, %v3128
        %v3153 = vpack.c.b16 %v3133, %v3131
        %v3154 = vpack.c.b16 %v3134, %v3132
        %v3155 = vpack.c.b16 %v3137, %v3135
        %v3156 = vpack.c.b16 %v3138, %v3136
        %v3157 = vpack.c.b16 %v3141, %v3139
        %v3158 = vpack.c.b16 %v3142, %v3140
        %3175 = vmatpush.bf16.msra.mxu0 %v3157
        %3176 = vmatpush.bf16.msra.mxu0 %v3155
        %3177 = vmatpush.bf16.msra.mxu0 %v3153
        %3178 = vmatpush.bf16.msra.mxu0 %v3151
        %3179 = vmatpush.bf16.msra.mxu0 %v3149
        %3180 = vmatpush.bf16.msra.mxu0 %v3147
        %3181 = vmatpush.bf16.msra.mxu0 %v3145
        %3182 = vmatpush.bf16.msra.mxu0 %v3143
        %3183 = vmatmul.bf16.gmra.mxu0 %v3069
        %v3184 = vpop.f32.mrf.mxu0
        %v3185 = vadd.f32 %v3091, %v3184
        %v3186 = vpop.f32.mrf.mxu0
        %v3187 = vadd.f32 %v3091, %v3186
        %3188 = vmatmul.bf16.gmra.mxu0 %v3070
        %v3189 = vpop.f32.mrf.mxu0
        %v3190 = vadd.f32 %v3091, %v3189
        %v3191 = vpop.f32.mrf.mxu0
        %v3192 = vadd.f32 %v3091, %v3191
        %3193 = vmatmul.bf16.gmra.mxu0 %v3071
        %v3194 = vpop.f32.mrf.mxu0
        %v3195 = vadd.f32 %v3091, %v3194
        %v3196 = vpop.f32.mrf.mxu0
        %v3197 = vadd.f32 %v3091, %v3196
        %3198 = vmatmul.bf16.gmra.mxu0 %v3072
        %v3199 = vpop.f32.mrf.mxu0
        %v3200 = vadd.f32 %v3091, %v3199
        %v3201 = vpop.f32.mrf.mxu0
        %v3202 = vadd.f32 %v3091, %v3201
        %3203 = vdwg.mxu0
        %3204 = vmatpush.bf16.msra.mxu0 %v3158
        %3205 = vmatpush.bf16.msra.mxu0 %v3156
        %3206 = vmatpush.bf16.msra.mxu0 %v3154
        %3207 = vmatpush.bf16.msra.mxu0 %v3152
        %3208 = vmatpush.bf16.msra.mxu0 %v3150
        %3209 = vmatpush.bf16.msra.mxu0 %v3148
        %3210 = vmatpush.bf16.msra.mxu0 %v3146
        %3211 = vmatpush.bf16.msra.mxu0 %v3144
        %3212 = vmatmul.bf16.gmra.mxu0 %v3069
        %v3213 = vpop.f32.mrf.mxu0
        %v3214 = vadd.f32 %v3092, %v3213
        %v3215 = vpop.f32.mrf.mxu0
        %v3216 = vadd.f32 %v3092, %v3215
        %3217 = vmatmul.bf16.gmra.mxu0 %v3070
        %v3218 = vpop.f32.mrf.mxu0
        %v3219 = vadd.f32 %v3092, %v3218
        %v3220 = vpop.f32.mrf.mxu0
        %v3221 = vadd.f32 %v3092, %v3220
        %3222 = vmatmul.bf16.gmra.mxu0 %v3071
        %v3223 = vpop.f32.mrf.mxu0
        %v3224 = vadd.f32 %v3092, %v3223
        %v3225 = vpop.f32.mrf.mxu0
        %v3226 = vadd.f32 %v3092, %v3225
        %3227 = vmatmul.bf16.gmra.mxu0 %v3072
        %v3228 = vpop.f32.mrf.mxu0
        %v3229 = vadd.f32 %v3092, %v3228
        %v3230 = vpop.f32.mrf.mxu0
        %v3231 = vadd.f32 %v3092, %v3230
        %3232 = vdwg.mxu0
        %v3233 = vmul.f32 %v3185, 0.5
        %v3234 = vmul.f32 %v3214, 0.5
        %v3235 = vmul.f32 %v3187, 0.5
        %v3236 = vmul.f32 %v3216, 0.5
        %v3237 = vmul.f32 %v3190, 0.5
        %v3238 = vmul.f32 %v3219, 0.5
        %v3239 = vmul.f32 %v3192, 0.5
        %v3240 = vmul.f32 %v3221, 0.5
        %v3241 = vmul.f32 %v3195, 0.5
        %v3242 = vmul.f32 %v3224, 0.5
        %v3243 = vmul.f32 %v3197, 0.5
        %v3244 = vmul.f32 %v3226, 0.5
        %v3245 = vmul.f32 %v3200, 0.5
        %v3246 = vmul.f32 %v3229, 0.5
        %v3247 = vmul.f32 %v3202, 0.5
        %v3248 = vmul.f32 %v3231, 0.5
        %v3249 = vmul.f32 %v3185, 0.044715
        %v3250 = vmul.f32 %v3214, 0.044715
        %v3251 = vmul.f32 %v3187, 0.044715
        %v3252 = vmul.f32 %v3216, 0.044715
        %v3253 = vmul.f32 %v3190, 0.044715
        %v3254 = vmul.f32 %v3219, 0.044715
        %v3255 = vmul.f32 %v3192, 0.044715
        %v3256 = vmul.f32 %v3221, 0.044715
        %v3257 = vmul.f32 %v3195, 0.044715
        %v3258 = vmul.f32 %v3224, 0.044715
        %v3259 = vmul.f32 %v3197, 0.044715
        %v3260 = vmul.f32 %v3226, 0.044715
        %v3261 = vmul.f32 %v3200, 0.044715
        %v3262 = vmul.f32 %v3229, 0.044715
        %v3263 = vmul.f32 %v3202, 0.044715
        %v3264 = vmul.f32 %v3231, 0.044715
        %v3265 = vmul.f32 %v3249, %v3185
        %v3266 = vmul.f32 %v3250, %v3214
        %v3267 = vmul.f32 %v3251, %v3187
        %v3268 = vmul.f32 %v3252, %v3216
        %v3269 = vmul.f32 %v3253, %v3190
        %v3270 = vmul.f32 %v3254, %v3219
        %v3271 = vmul.f32 %v3255, %v3192
        %v3272 = vmul.f32 %v3256, %v3221
        %v3273 = vmul.f32 %v3257, %v3195
        %v3274 = vmul.f32 %v3258, %v3224
        %v3275 = vmul.f32 %v3259, %v3197
        %v3276 = vmul.f32 %v3260, %v3226
        %v3277 = vmul.f32 %v3261, %v3200
        %v3278 = vmul.f32 %v3262, %v3229
        %v3279 = vmul.f32 %v3263, %v3202
        %v3280 = vmul.f32 %v3264, %v3231
        %v3281 = vmul.f32 %v3265, %v3185
        %v3282 = vmul.f32 %v3266, %v3214
        %v3283 = vmul.f32 %v3267, %v3187
        %v3284 = vmul.f32 %v3268, %v3216
        %v3285 = vmul.f32 %v3269, %v3190
        %v3286 = vmul.f32 %v3270, %v3219
        %v3287 = vmul.f32 %v3271, %v3192
        %v3288 = vmul.f32 %v3272, %v3221
        %v3289 = vmul.f32 %v3273, %v3195
        %v3290 = vmul.f32 %v3274, %v3224
        %v3291 = vmul.f32 %v3275, %v3197
        %v3292 = vmul.f32 %v3276, %v3226
        %v3293 = vmul.f32 %v3277, %v3200
        %v3294 = vmul.f32 %v3278, %v3229
        %v3295 = vmul.f32 %v3279, %v3202
        %v3296 = vmul.f32 %v3280, %v3231
        %v3297 = vadd.f32 %v3185, %v3281
        %v3298 = vadd.f32 %v3214, %v3282
        %v3299 = vadd.f32 %v3187, %v3283
        %v3300 = vadd.f32 %v3216, %v3284
        %v3301 = vadd.f32 %v3190, %v3285
        %v3302 = vadd.f32 %v3219, %v3286
        %v3303 = vadd.f32 %v3192, %v3287
        %v3304 = vadd.f32 %v3221, %v3288
        %v3305 = vadd.f32 %v3195, %v3289
        %v3306 = vadd.f32 %v3224, %v3290
        %v3307 = vadd.f32 %v3197, %v3291
        %v3308 = vadd.f32 %v3226, %v3292
        %v3309 = vadd.f32 %v3200, %v3293
        %v3310 = vadd.f32 %v3229, %v3294
        %v3311 = vadd.f32 %v3202, %v3295
        %v3312 = vadd.f32 %v3231, %v3296
        %v3313 = vmul.f32 %v3297, 0.7978846
        %v3314 = vmul.f32 %v3298, 0.7978846
        %v3315 = vmul.f32 %v3299, 0.7978846
        %v3316 = vmul.f32 %v3300, 0.7978846
        %v3317 = vmul.f32 %v3301, 0.7978846
        %v3318 = vmul.f32 %v3302, 0.7978846
        %v3319 = vmul.f32 %v3303, 0.7978846
        %v3320 = vmul.f32 %v3304, 0.7978846
        %v3321 = vmul.f32 %v3305, 0.7978846
        %v3322 = vmul.f32 %v3306, 0.7978846
        %v3323 = vmul.f32 %v3307, 0.7978846
        %v3324 = vmul.f32 %v3308, 0.7978846
        %v3325 = vmul.f32 %v3309, 0.7978846
        %v3326 = vmul.f32 %v3310, 0.7978846
        %v3327 = vmul.f32 %v3311, 0.7978846
        %v3328 = vmul.f32 %v3312, 0.7978846
        %v3329 = vtanh.pop %v3313
        %v3330 = vtanh.pop %v3314
        %v3331 = vtanh.pop %v3315
        %v3332 = vtanh.pop %v3316
        %v3333 = vtanh.pop %v3317
        %v3334 = vtanh.pop %v3318
        %v3335 = vtanh.pop %v3319
        %v3336 = vtanh.pop %v3320
        %v3337 = vtanh.pop %v3321
        %v3338 = vtanh.pop %v3322
        %v3339 = vtanh.pop %v3323
        %v3340 = vtanh.pop %v3324
        %v3341 = vtanh.pop %v3325
        %v3342 = vtanh.pop %v3326
        %v3343 = vtanh.pop %v3327
        %v3344 = vtanh.pop %v3328
        %v3345 = vadd.f32 %v3329, 1.0
        %v3346 = vadd.f32 %v3330, 1.0
        %v3347 = vadd.f32 %v3331, 1.0
        %v3348 = vadd.f32 %v3332, 1.0
        %v3349 = vadd.f32 %v3333, 1.0
        %v3350 = vadd.f32 %v3334, 1.0
        %v3351 = vadd.f32 %v3335, 1.0
        %v3352 = vadd.f32 %v3336, 1.0
        %v3353 = vadd.f32 %v3337, 1.0
        %v3354 = vadd.f32 %v3338, 1.0
        %v3355 = vadd.f32 %v3339, 1.0
        %v3356 = vadd.f32 %v3340, 1.0
        %v3357 = vadd.f32 %v3341, 1.0
        %v3358 = vadd.f32 %v3342, 1.0
        %v3359 = vadd.f32 %v3343, 1.0
        %v3360 = vadd.f32 %v3344, 1.0
        %v3361 = vmul.f32 %v3233, %v3345
        %v3362 = vmul.f32 %v3234, %v3346
        %v3363 = vmul.f32 %v3235, %v3347
        %v3364 = vmul.f32 %v3236, %v3348
        %v3365 = vmul.f32 %v3237, %v3349
        %v3366 = vmul.f32 %v3238, %v3350
        %v3367 = vmul.f32 %v3239, %v3351
        %v3368 = vmul.f32 %v3240, %v3352
        %v3369 = vmul.f32 %v3241, %v3353
        %v3370 = vmul.f32 %v3242, %v3354
        %v3371 = vmul.f32 %v3243, %v3355
        %v3372 = vmul.f32 %v3244, %v3356
        %v3373 = vmul.f32 %v3245, %v3357
        %v3374 = vmul.f32 %v3246, %v3358
        %v3375 = vmul.f32 %v3247, %v3359
        %v3376 = vmul.f32 %v3248, %v3360
        %v3377 = vpack.c.bf16 %v3363, %v3361
        %v3378 = vpack.c.bf16 %v3364, %v3362
        %v3379 = vpack.c.bf16 %v3367, %v3365
        %v3380 = vpack.c.bf16 %v3368, %v3366
        %v3381 = vpack.c.bf16 %v3371, %v3369
        %v3382 = vpack.c.bf16 %v3372, %v3370
        %v3383 = vpack.c.bf16 %v3375, %v3373
        %v3384 = vpack.c.bf16 %v3376, %v3374
        %v3385 = vld [vmem:[%s1013] sm:$0xf]
        %v3386 = vld [vmem:[%s1013 + $0x4] sm:$0xf]
        %v3387 = vld [vmem:[%s1013 + $0x8] sm:$0xf]
        %v3388 = vld [vmem:[%s1013 + $0xc] sm:$0xf]
        %v3389 = vld [vmem:[%s1013 + $0x10] sm:$0xf]
        %v3390 = vld [vmem:[%s1013 + $0x14] sm:$0xf]
        %v3391 = vld [vmem:[%s1013 + $0x18] sm:$0xf]
        %v3392 = vld [vmem:[%s1013 + $0x1c] sm:$0xf]
        %v3393 = vld [vmem:[%s1013 + $0x20] sm:$0xf]
        %v3394 = vld [vmem:[%s1013 + $0x24] sm:$0xf]
        %v3395 = vld [vmem:[%s1013 + $0x28] sm:$0xf]
        %v3396 = vld [vmem:[%s1013 + $0x2c] sm:$0xf]
        %v3397 = vld [vmem:[%s1013 + $0x30] sm:$0xf]
        %v3398 = vld [vmem:[%s1013 + $0x34] sm:$0xf]
        %v3399 = vld [vmem:[%s1013 + $0x38] sm:$0xf]
        %v3400 = vld [vmem:[%s1013 + $0x3c] sm:$0xf]
        %v3401 = vld [vmem:[%s1013 + $0x40] sm:$0xf]
        %v3402 = vld [vmem:[%s1013 + $0x44] sm:$0xf]
        %v3403 = vld [vmem:[%s1013 + $0x48] sm:$0xf]
        %v3404 = vld [vmem:[%s1013 + $0x4c] sm:$0xf]
        %v3405 = vld [vmem:[%s1013 + $0x50] sm:$0xf]
        %v3406 = vld [vmem:[%s1013 + $0x54] sm:$0xf]
        %v3407 = vld [vmem:[%s1013 + $0x58] sm:$0xf]
        %v3408 = vld [vmem:[%s1013 + $0x5c] sm:$0xf]
        %v3409 = vld [vmem:[%s1013 + $0x60] sm:$0xf]
        %v3410 = vld [vmem:[%s1013 + $0x64] sm:$0xf]
        %v3411 = vld [vmem:[%s1013 + $0x68] sm:$0xf]
        %v3412 = vld [vmem:[%s1013 + $0x6c] sm:$0xf]
        %v3413 = vld [vmem:[%s1013 + $0x70] sm:$0xf]
        %v3414 = vld [vmem:[%s1013 + $0x74] sm:$0xf]
        %v3415 = vld [vmem:[%s1013 + $0x78] sm:$0xf]
        %v3416 = vld [vmem:[%s1013 + $0x7c] sm:$0xf]
        %v3417 = vld [vmem:[%s1134] sm:$0x1]
        %v3419 = vperm.slane %v3417, 0
        %v3453 = vunpack.c.l.b16 %v3385
        %v3454 = vunpack.c.l.b16 %v3386
        %v3455 = vunpack.c.l.b16 %v3387
        %v3456 = vunpack.c.l.b16 %v3388
        %v3457 = vunpack.c.l.b16 %v3389
        %v3458 = vunpack.c.l.b16 %v3390
        %v3459 = vunpack.c.l.b16 %v3391
        %v3460 = vunpack.c.l.b16 %v3392
        %v3461 = vunpack.c.l.b16 %v3393
        %v3462 = vunpack.c.l.b16 %v3394
        %v3463 = vunpack.c.l.b16 %v3395
        %v3464 = vunpack.c.l.b16 %v3396
        %v3465 = vunpack.c.l.b16 %v3397
        %v3466 = vunpack.c.l.b16 %v3398
        %v3467 = vunpack.c.l.b16 %v3399
        %v3468 = vunpack.c.l.b16 %v3400
        %v3469 = vunpack.c.l.b16 %v3401
        %v3470 = vunpack.c.l.b16 %v3402
        %v3471 = vunpack.c.l.b16 %v3403
        %v3472 = vunpack.c.l.b16 %v3404
        %v3473 = vunpack.c.l.b16 %v3405
        %v3474 = vunpack.c.l.b16 %v3406
        %v3475 = vunpack.c.l.b16 %v3407
        %v3476 = vunpack.c.l.b16 %v3408
        %v3477 = vunpack.c.l.b16 %v3409
        %v3478 = vunpack.c.l.b16 %v3410
        %v3479 = vunpack.c.l.b16 %v3411
        %v3480 = vunpack.c.l.b16 %v3412
        %v3481 = vunpack.c.l.b16 %v3413
        %v3482 = vunpack.c.l.b16 %v3414
        %v3483 = vunpack.c.l.b16 %v3415
        %v3484 = vunpack.c.l.b16 %v3416
        %v3485 = vpack.c.b16 %v3454, %v3453
        %v3486 = vpack.c.b16 %v3456, %v3455
        %v3487 = vpack.c.b16 %v3458, %v3457
        %v3488 = vpack.c.b16 %v3460, %v3459
        %v3489 = vpack.c.b16 %v3462, %v3461
        %v3490 = vpack.c.b16 %v3464, %v3463
        %v3491 = vpack.c.b16 %v3466, %v3465
        %v3492 = vpack.c.b16 %v3468, %v3467
        %v3493 = vpack.c.b16 %v3470, %v3469
        %v3494 = vpack.c.b16 %v3472, %v3471
        %v3495 = vpack.c.b16 %v3474, %v3473
        %v3496 = vpack.c.b16 %v3476, %v3475
        %v3497 = vpack.c.b16 %v3478, %v3477
        %v3498 = vpack.c.b16 %v3480, %v3479
        %v3499 = vpack.c.b16 %v3482, %v3481
        %v3500 = vpack.c.b16 %v3484, %v3483
        %3517 = vmatpush.bf16.msra.mxu0 %v3492
        %3518 = vmatpush.bf16.msra.mxu0 %v3491
        %3519 = vmatpush.bf16.msra.mxu0 %v3490
        %3520 = vmatpush.bf16.msra.mxu0 %v3489
        %3521 = vmatpush.bf16.msra.mxu0 %v3488
        %3522 = vmatpush.bf16.msra.mxu0 %v3487
        %3523 = vmatpush.bf16.msra.mxu0 %v3486
        %3524 = vmatpush.bf16.msra.mxu0 %v3485
        %3525 = vmatmul.bf16.gmra.mxu0 %v3377
        %v3526 = vpop.f32.mrf.mxu0
        %v3527 = vadd.f32 %v3419, %v3526
        %v3528 = vpop.f32.mrf.mxu0
        %v3529 = vadd.f32 %v3419, %v3528
        %3530 = vmatmul.bf16.gmra.mxu0 %v3379
        %v3531 = vpop.f32.mrf.mxu0
        %v3532 = vadd.f32 %v3419, %v3531
        %v3533 = vpop.f32.mrf.mxu0
        %v3534 = vadd.f32 %v3419, %v3533
        %3535 = vmatmul.bf16.gmra.mxu0 %v3381
        %v3536 = vpop.f32.mrf.mxu0
        %v3537 = vadd.f32 %v3419, %v3536
        %v3538 = vpop.f32.mrf.mxu0
        %v3539 = vadd.f32 %v3419, %v3538
        %3540 = vmatmul.bf16.gmra.mxu0 %v3383
        %v3541 = vpop.f32.mrf.mxu0
        %v3542 = vadd.f32 %v3419, %v3541
        %v3543 = vpop.f32.mrf.mxu0
        %v3544 = vadd.f32 %v3419, %v3543
        %3545 = vdwg.mxu0
        %3546 = vmatpush.bf16.msra.mxu0 %v3500
        %3547 = vmatpush.bf16.msra.mxu0 %v3499
        %3548 = vmatpush.bf16.msra.mxu0 %v3498
        %3549 = vmatpush.bf16.msra.mxu0 %v3497
        %3550 = vmatpush.bf16.msra.mxu0 %v3496
        %3551 = vmatpush.bf16.msra.mxu0 %v3495
        %3552 = vmatpush.bf16.msra.mxu0 %v3494
        %3553 = vmatpush.bf16.msra.mxu0 %v3493
        %3554 = vmatmul.bf16.gmra.mxu0 %v3378
        %v3555 = vpop.f32.mrf.mxu0
        %v3556 = vadd.f32 %v3527, %v3555
        %v3557 = vpop.f32.mrf.mxu0
        %v3558 = vadd.f32 %v3529, %v3557
        %3559 = vmatmul.bf16.gmra.mxu0 %v3380
        %v3560 = vpop.f32.mrf.mxu0
        %v3561 = vadd.f32 %v3532, %v3560
        %v3562 = vpop.f32.mrf.mxu0
        %v3563 = vadd.f32 %v3534, %v3562
        %3564 = vmatmul.bf16.gmra.mxu0 %v3382
        %v3565 = vpop.f32.mrf.mxu0
        %v3566 = vadd.f32 %v3537, %v3565
        %v3567 = vpop.f32.mrf.mxu0
        %v3568 = vadd.f32 %v3539, %v3567
        %3569 = vmatmul.bf16.gmra.mxu0 %v3384
        %v3570 = vpop.f32.mrf.mxu0
        %v3571 = vadd.f32 %v3542, %v3570
        %v3572 = vpop.f32.mrf.mxu0
        %v3573 = vadd.f32 %v3544, %v3572
        %3574 = vdwg.mxu0
        %v3575 = vadd.f32 %v2877, %v3556
        %v3576 = vadd.f32 %v2878, %v3558
        %v3577 = vadd.f32 %v2879, %v3561
        %v3578 = vadd.f32 %v2880, %v3563
        %v3579 = vadd.f32 %v2881, %v3566
        %v3580 = vadd.f32 %v2882, %v3568
        %v3581 = vadd.f32 %v2883, %v3571
        %v3582 = vadd.f32 %v2884, %v3573
        %3583 = vst [vmem:[#allocation2] sm:$0xff] %v3575
        %3584 = vst [vmem:[#allocation2 + $0x8] sm:$0xff] %v3576
        %3585 = vst [vmem:[#allocation2 + $0x10] sm:$0xff] %v3577
        %3586 = vst [vmem:[#allocation2 + $0x18] sm:$0xff] %v3578
        %3587 = vst [vmem:[#allocation2 + $0x20] sm:$0xff] %v3579
        %3588 = vst [vmem:[#allocation2 + $0x28] sm:$0xff] %v3580
        %3589 = vst [vmem:[#allocation2 + $0x30] sm:$0xff] %v3581
        %3590 = vst [vmem:[#allocation2 + $0x38] sm:$0xff] %v3582
        %p3591 = scmp.eq.s32.totalorder %s43, 1
        // Predicated region
        $region173: #{tpu_custom_call.1} parent=107 // pred_check
          %p3592 = pneg %p3591
        $region174: #{tpu_custom_call.1} parent=107 // pred_check_branch
          %3594 = sbr.rel (%p3592) target = $region176
        $region175: #{tpu_custom_call.1} parent=107 // pred_region
          %v3595 = vld [vmem:[%s18] sm:$0x1]
          %v3596 = vld [vmem:[%s19] sm:$0x1]
          %3597 = vadd.xlane.f32.xlu0 %v3575
          %v3598 = vpop.xlane.xlu0 %3597
          %3599 = vadd.xlane.f32.xlu0 %v3576
          %v3600 = vpop.xlane.xlu0 %3599
          %3601 = vadd.xlane.f32.xlu0 %v3577
          %v3602 = vpop.xlane.xlu0 %3601
          %3603 = vadd.xlane.f32.xlu0 %v3578
          %v3604 = vpop.xlane.xlu0 %3603
          %3605 = vadd.xlane.f32.xlu0 %v3579
          %v3606 = vpop.xlane.xlu0 %3605
          %3607 = vadd.xlane.f32.xlu0 %v3580
          %v3608 = vpop.xlane.xlu0 %3607
          %3609 = vadd.xlane.f32.xlu0 %v3581
          %v3610 = vpop.xlane.xlu0 %3609
          %3611 = vadd.xlane.f32.xlu0 %v3582
          %v3612 = vpop.xlane.xlu0 %3611
          %v3613 = vmul.f32 %v3598, %v1389
          %v3614 = vmul.f32 %v3600, %v1389
          %v3615 = vmul.f32 %v3602, %v1389
          %v3616 = vmul.f32 %v3604, %v1389
          %v3617 = vmul.f32 %v3606, %v1389
          %v3618 = vmul.f32 %v3608, %v1389
          %v3619 = vmul.f32 %v3610, %v1389
          %v3620 = vmul.f32 %v3612, %v1389
          %v3621 = vsub.f32 %v3575, %v3613
          %v3622 = vsub.f32 %v3576, %v3614
          %v3623 = vsub.f32 %v3577, %v3615
          %v3624 = vsub.f32 %v3578, %v3616
          %v3625 = vsub.f32 %v3579, %v3617
          %v3626 = vsub.f32 %v3580, %v3618
          %v3627 = vsub.f32 %v3581, %v3619
          %v3628 = vsub.f32 %v3582, %v3620
          %v3629 = vmul.f32 %v3621, %v3621
          %v3630 = vmul.f32 %v3622, %v3622
          %v3631 = vmul.f32 %v3623, %v3623
          %v3632 = vmul.f32 %v3624, %v3624
          %v3633 = vmul.f32 %v3625, %v3625
          %v3634 = vmul.f32 %v3626, %v3626
          %v3635 = vmul.f32 %v3627, %v3627
          %v3636 = vmul.f32 %v3628, %v3628
          %3637 = vadd.xlane.f32.xlu0 %v3629
          %v3638 = vpop.xlane.xlu0 %3637
          %3639 = vadd.xlane.f32.xlu0 %v3630
          %v3640 = vpop.xlane.xlu0 %3639
          %3641 = vadd.xlane.f32.xlu0 %v3631
          %v3642 = vpop.xlane.xlu0 %3641
          %3643 = vadd.xlane.f32.xlu0 %v3632
          %v3644 = vpop.xlane.xlu0 %3643
          %3645 = vadd.xlane.f32.xlu0 %v3633
          %v3646 = vpop.xlane.xlu0 %3645
          %3647 = vadd.xlane.f32.xlu0 %v3634
          %v3648 = vpop.xlane.xlu0 %3647
          %3649 = vadd.xlane.f32.xlu0 %v3635
          %v3650 = vpop.xlane.xlu0 %3649
          %3651 = vadd.xlane.f32.xlu0 %v3636
          %v3652 = vpop.xlane.xlu0 %3651
          %v3653 = vmul.f32 %v3638, %v1389
          %v3654 = vmul.f32 %v3640, %v1389
          %v3655 = vmul.f32 %v3642, %v1389
          %v3656 = vmul.f32 %v3644, %v1389
          %v3657 = vmul.f32 %v3646, %v1389
          %v3658 = vmul.f32 %v3648, %v1389
          %v3659 = vmul.f32 %v3650, %v1389
          %v3660 = vmul.f32 %v3652, %v1389
          %v3661 = vadd.f32 %v3653, 1e-05
          %v3662 = vadd.f32 %v3654, 1e-05
          %v3663 = vadd.f32 %v3655, 1e-05
          %v3664 = vadd.f32 %v3656, 1e-05
          %v3665 = vadd.f32 %v3657, 1e-05
          %v3666 = vadd.f32 %v3658, 1e-05
          %v3667 = vadd.f32 %v3659, 1e-05
          %v3668 = vadd.f32 %v3660, 1e-05
          %v3669 = vrsqrt.pop %v3661
          %v3670 = vmul.f32 %v3669, %v3661
          %v3671 = vmul.f32 %v3670, %v3669
          %v3672 = vmul.f32 0.5, %v3671
          %v3673 = vsub.f32 1.5, %v3672
          %v3674 = vmul.f32 %v3669, %v3673
          %vm3675 = vweird.f32 %v3661
          %vm3676 = vweird.f32 %v3669
          %vm3677 = vmor %vm3675, %vm3676
          %v3678 = vsel %vm3677, %v3669, %v3674
          %v3679 = vrsqrt.pop %v3662
          %v3680 = vmul.f32 %v3679, %v3662
          %v3681 = vmul.f32 %v3680, %v3679
          %v3682 = vmul.f32 0.5, %v3681
          %v3683 = vsub.f32 1.5, %v3682
          %v3684 = vmul.f32 %v3679, %v3683
          %vm3685 = vweird.f32 %v3662
          %vm3686 = vweird.f32 %v3679
          %vm3687 = vmor %vm3685, %vm3686
          %v3688 = vsel %vm3687, %v3679, %v3684
          %v3689 = vrsqrt.pop %v3663
          %v3690 = vmul.f32 %v3689, %v3663
          %v3691 = vmul.f32 %v3690, %v3689
          %v3692 = vmul.f32 0.5, %v3691
          %v3693 = vsub.f32 1.5, %v3692
          %v3694 = vmul.f32 %v3689, %v3693
          %vm3695 = vweird.f32 %v3663
          %vm3696 = vweird.f32 %v3689
          %vm3697 = vmor %vm3695, %vm3696
          %v3698 = vsel %vm3697, %v3689, %v3694
          %v3699 = vrsqrt.pop %v3664
          %v3700 = vmul.f32 %v3699, %v3664
          %v3701 = vmul.f32 %v3700, %v3699
          %v3702 = vmul.f32 0.5, %v3701
          %v3703 = vsub.f32 1.5, %v3702
          %v3704 = vmul.f32 %v3699, %v3703
          %vm3705 = vweird.f32 %v3664
          %vm3706 = vweird.f32 %v3699
          %vm3707 = vmor %vm3705, %vm3706
          %v3708 = vsel %vm3707, %v3699, %v3704
          %v3709 = vrsqrt.pop %v3665
          %v3710 = vmul.f32 %v3709, %v3665
          %v3711 = vmul.f32 %v3710, %v3709
          %v3712 = vmul.f32 0.5, %v3711
          %v3713 = vsub.f32 1.5, %v3712
          %v3714 = vmul.f32 %v3709, %v3713
          %vm3715 = vweird.f32 %v3665
          %vm3716 = vweird.f32 %v3709
          %vm3717 = vmor %vm3715, %vm3716
          %v3718 = vsel %vm3717, %v3709, %v3714
          %v3719 = vrsqrt.pop %v3666
          %v3720 = vmul.f32 %v3719, %v3666
          %v3721 = vmul.f32 %v3720, %v3719
          %v3722 = vmul.f32 0.5, %v3721
          %v3723 = vsub.f32 1.5, %v3722
          %v3724 = vmul.f32 %v3719, %v3723
          %vm3725 = vweird.f32 %v3666
          %vm3726 = vweird.f32 %v3719
          %vm3727 = vmor %vm3725, %vm3726
          %v3728 = vsel %vm3727, %v3719, %v3724
          %v3729 = vrsqrt.pop %v3667
          %v3730 = vmul.f32 %v3729, %v3667
          %v3731 = vmul.f32 %v3730, %v3729
          %v3732 = vmul.f32 0.5, %v3731
          %v3733 = vsub.f32 1.5, %v3732
          %v3734 = vmul.f32 %v3729, %v3733
          %vm3735 = vweird.f32 %v3667
          %vm3736 = vweird.f32 %v3729
          %vm3737 = vmor %vm3735, %vm3736
          %v3738 = vsel %vm3737, %v3729, %v3734
          %v3739 = vrsqrt.pop %v3668
          %v3740 = vmul.f32 %v3739, %v3668
          %v3741 = vmul.f32 %v3740, %v3739
          %v3742 = vmul.f32 0.5, %v3741
          %v3743 = vsub.f32 1.5, %v3742
          %v3744 = vmul.f32 %v3739, %v3743
          %vm3745 = vweird.f32 %v3668
          %vm3746 = vweird.f32 %v3739
          %vm3747 = vmor %vm3745, %vm3746
          %v3748 = vsel %vm3747, %v3739, %v3744
          %v3749 = vmul.f32 %v3621, %v3678
          %v3750 = vmul.f32 %v3622, %v3688
          %v3751 = vmul.f32 %v3623, %v3698
          %v3752 = vmul.f32 %v3624, %v3708
          %v3753 = vmul.f32 %v3625, %v3718
          %v3754 = vmul.f32 %v3626, %v3728
          %v3755 = vmul.f32 %v3627, %v3738
          %v3756 = vmul.f32 %v3628, %v3748
          %v3758 = vperm.slane %v3595, 0
          %v3760 = vmul.f32 %v3749, %v3758
          %v3761 = vmul.f32 %v3750, %v3758
          %v3762 = vmul.f32 %v3751, %v3758
          %v3763 = vmul.f32 %v3752, %v3758
          %v3764 = vmul.f32 %v3753, %v3758
          %v3765 = vmul.f32 %v3754, %v3758
          %v3766 = vmul.f32 %v3755, %v3758
          %v3767 = vmul.f32 %v3756, %v3758
          %v3769 = vperm.slane %v3596, 0
          %v3771 = vadd.f32 %v3760, %v3769
          %v3772 = vadd.f32 %v3761, %v3769
          %v3773 = vadd.f32 %v3762, %v3769
          %v3774 = vadd.f32 %v3763, %v3769
          %v3775 = vadd.f32 %v3764, %v3769
          %v3776 = vadd.f32 %v3765, %v3769
          %v3777 = vadd.f32 %v3766, %v3769
          %v3778 = vadd.f32 %v3767, %v3769
          %v3779 = vpack.c.bf16 %v3772, %v3771
          %v3780 = vpack.c.bf16 %v3774, %v3773
          %v3781 = vpack.c.bf16 %v3776, %v3775
          %v3782 = vpack.c.bf16 %v3778, %v3777
          %v3783 = vld [vmem:[#allocation22] sm:$0xf]
          %v3784 = vld [vmem:[#allocation22 + $0x4] sm:$0xf]
          %v3785 = vld [vmem:[#allocation22 + $0x8] sm:$0xf]
          %v3786 = vld [vmem:[#allocation22 + $0xc] sm:$0xf]
          %v3787 = vld [vmem:[#allocation22 + $0x10] sm:$0xf]
          %v3788 = vld [vmem:[#allocation22 + $0x14] sm:$0xf]
          %v3789 = vld [vmem:[#allocation22 + $0x18] sm:$0xf]
          %v3790 = vld [vmem:[#allocation22 + $0x1c] sm:$0xf]
          %v3791 = vld [vmem:[#allocation22 + $0x20] sm:$0xf]
          %v3792 = vld [vmem:[#allocation22 + $0x24] sm:$0xf]
          %v3793 = vld [vmem:[#allocation22 + $0x28] sm:$0xf]
          %v3794 = vld [vmem:[#allocation22 + $0x2c] sm:$0xf]
          %v3795 = vld [vmem:[#allocation22 + $0x30] sm:$0xf]
          %v3796 = vld [vmem:[#allocation22 + $0x34] sm:$0xf]
          %v3797 = vld [vmem:[#allocation22 + $0x38] sm:$0xf]
          %v3798 = vld [vmem:[#allocation22 + $0x3c] sm:$0xf]
          %v3799 = vld [vmem:[%s21] sm:$0x1]
          %v3801 = vperm.slane %v3799, 0
          %v3819 = vunpack.c.l.b16 %v3783
          %v3820 = vunpack.c.l.b16 %v3784
          %v3821 = vunpack.c.l.b16 %v3785
          %v3822 = vunpack.c.l.b16 %v3786
          %v3823 = vunpack.c.l.b16 %v3787
          %v3824 = vunpack.c.l.b16 %v3788
          %v3825 = vunpack.c.l.b16 %v3789
          %v3826 = vunpack.c.l.b16 %v3790
          %v3827 = vunpack.c.l.b16 %v3791
          %v3828 = vunpack.c.l.b16 %v3792
          %v3829 = vunpack.c.l.b16 %v3793
          %v3830 = vunpack.c.l.b16 %v3794
          %v3831 = vunpack.c.l.b16 %v3795
          %v3832 = vunpack.c.l.b16 %v3796
          %v3833 = vunpack.c.l.b16 %v3797
          %v3834 = vunpack.c.l.b16 %v3798
          %v3835 = vpack.c.b16 %v3820, %v3819
          %v3836 = vpack.c.b16 %v3822, %v3821
          %v3837 = vpack.c.b16 %v3824, %v3823
          %v3838 = vpack.c.b16 %v3826, %v3825
          %v3839 = vpack.c.b16 %v3828, %v3827
          %v3840 = vpack.c.b16 %v3830, %v3829
          %v3841 = vpack.c.b16 %v3832, %v3831
          %v3842 = vpack.c.b16 %v3834, %v3833
          %3851 = vmatpush.bf16.msra.mxu0 %v3842
          %3852 = vmatpush.bf16.msra.mxu0 %v3841
          %3853 = vmatpush.bf16.msra.mxu0 %v3840
          %3854 = vmatpush.bf16.msra.mxu0 %v3839
          %3855 = vmatpush.bf16.msra.mxu0 %v3838
          %3856 = vmatpush.bf16.msra.mxu0 %v3837
          %3857 = vmatpush.bf16.msra.mxu0 %v3836
          %3858 = vmatpush.bf16.msra.mxu0 %v3835
          %3859 = vmatmul.bf16.gmra.mxu0 %v3779
          %v3860 = vpop.f32.mrf.mxu0
          %v3861 = vadd.f32 %v3801, %v3860
          %v3862 = vpop.f32.mrf.mxu0
          %v3863 = vadd.f32 %v3801, %v3862
          %3864 = vmatmul.bf16.gmra.mxu0 %v3780
          %v3865 = vpop.f32.mrf.mxu0
          %v3866 = vadd.f32 %v3801, %v3865
          %v3867 = vpop.f32.mrf.mxu0
          %v3868 = vadd.f32 %v3801, %v3867
          %3869 = vmatmul.bf16.gmra.mxu0 %v3781
          %v3870 = vpop.f32.mrf.mxu0
          %v3871 = vadd.f32 %v3801, %v3870
          %v3872 = vpop.f32.mrf.mxu0
          %v3873 = vadd.f32 %v3801, %v3872
          %3874 = vmatmul.bf16.gmra.mxu0 %v3782
          %v3875 = vpop.f32.mrf.mxu0
          %v3876 = vadd.f32 %v3801, %v3875
          %v3877 = vpop.f32.mrf.mxu0
          %v3878 = vadd.f32 %v3801, %v3877
          %3879 = vdwg.mxu0
          %3880 = vst [vmem:[#allocation23] sm:$0xff] %v3861
          %3881 = vst [vmem:[#allocation23 + $0x8] sm:$0xff] %v3863
          %3882 = vst [vmem:[#allocation23 + $0x10] sm:$0xff] %v3866
          %3883 = vst [vmem:[#allocation23 + $0x18] sm:$0xff] %v3868
          %3884 = vst [vmem:[#allocation23 + $0x20] sm:$0xff] %v3871
          %3885 = vst [vmem:[#allocation23 + $0x28] sm:$0xff] %v3873
          %3886 = vst [vmem:[#allocation23 + $0x30] sm:$0xff] %v3876
          %3887 = vst [vmem:[#allocation23 + $0x38] sm:$0xff] %v3878
        $region176: #{tpu_custom_call.1} parent=107 // pred_fallthru
          _
        // Predicated region
        $region177: #{tpu_custom_call.1} parent=107 // pred_check
          %p3888 = pneg %p595
        $region178: #{tpu_custom_call.1} parent=107 // pred_check_branch
          %3890 = sbr.rel (%p3888) target = $region180
        $region179: #{tpu_custom_call.1} parent=107 // pred_region
          %s3891 = smul.u32 4, %s42
          %3893 = vsyncadd [#allocation5], 0
          %s3894 = smul.addr %s3891, 2
          %s3895 = smul.addr %s3894, 8
          %s3896 = scalar_lea.hbm %s22, %s3895
          %s3897 = sshll.u32 [#allocation23], 4
          %s3898 = int_to_ptr.vmem [resolvable:$true] %s3897
          %s3899 = sshll.u32 %s3896, 4
          %s3900 = int_to_ptr.hbm [resolvable:$true] %s3899
          %3905 = dma.vmem_to_hbm [thread:$0]  %s3898, 1024, %s3900, [#allocation5], 128, 128, 8
        $region180: #{tpu_custom_call.1} parent=107 // pred_fallthru
          _
        // Predicated region
        $region181: #{tpu_custom_call.1} parent=107 // pred_check
          %p3906 = pneg %p595
        $region182: #{tpu_custom_call.1} parent=107 // pred_check_branch
          %3908 = sbr.rel (%p3906) target = $region184
        $region183: #{tpu_custom_call.1} parent=107 // pred_region
          %3910 = dma.done [#allocation5], 1024
        $region184: #{tpu_custom_call.1} parent=107 // pred_fallthru
          _
      $region108: #{tpu_custom_call.1} parent=5 // pred_fallthru
        _
      %p3911 = scmp.le.s32.totalorder 2, %s33
      // Predicated region
      $region185: #{tpu_custom_call.1} parent=5 // pred_check
        %p3912 = pneg %p3911
      $region186: #{tpu_custom_call.1} parent=5 // pred_check_branch
        %3914 = sbr.rel (%p3912) target = $region188
      $region187: #{tpu_custom_call.1} parent=5 // pred_region
        %s3915 = ssub.s32 %s33, 2
      $region188: #{tpu_custom_call.1} parent=5 // pred_fallthru
        _
    $region6: #{tpu_custom_call.1} parent=1 // loop_footer
      %s37 = sadd.s32 1, %s33
    $region7: #{tpu_custom_call.1} parent=1 // loop_footer_branch
      %32 = sbr.rel target = $region3
    $region8: #{tpu_custom_call.1} parent=1 // loop_exit
      _
    %3916 = vsyncpa [#allocation4], 1
    %s3917 = scalar_lea.sflag [#allocation4], 1
    %3918 = vsyncpa %s3917, 1
    %3919 = vsyncpa [#allocation7], 1
    %3920 = vsyncpa [#allocation10], 1
    %3921 = vsyncpa [#allocation13], 1
    %3922 = vsyncpa [#allocation5], 1
    %s3923 = scalar_lea.sflag [#allocation5], 1
    %3924 = vsyncpa %s3923, 1

</llo_original>
